<compile_context>
chip_gen: v7x
topology: tpu7x:2x2x1
jax: 0.10.0
libtpu: 0.0.40
codegen_flags: <defaults>
</compile_context>

<pallas_src>
import functools

import jax
import jax.numpy as jnp
from jax.experimental import pallas as pl
from jax.experimental.pallas import tpu as pltpu

# ---- HOG geometry implied by the module defaults -----------------------------
WIN_W, WIN_H = 128, 256          # cv2 Size(width, height)
BLOCK, STRIDE, CELL, NBINS = 32, 16, 16, 9
H, W = WIN_H, WIN_W              # image is H x W = 256 x 128
HC, WC = H // CELL, W // CELL    # cells: 16 x 8
BY = (H - BLOCK) // STRIDE + 1   # blocks along H: 15
BX = (W - BLOCK) // STRIDE + 1   # blocks along W: 7
BLOCK_LEN = 4 * NBINS            # 36 values per block
FEAT_LEN = BY * BX * BLOCK_LEN   # 3780
PAD_LEN = 4096
LANES = 128                      # HOG lane packing: lane = bin * WC + cell_col


def _lroll(x, shift):
    """Static lane-axis roll with jnp.roll semantics."""
    n = x.shape[-1]
    shift = shift % n
    if shift == 0:
        return x
    return pltpu.roll(x, shift, axis=x.ndim - 1)


def _hog_kernel(img_ref, ph_ref, pw_ref, out_ref, *, C, G):
    # img_ref : (G, C, H+2, W) f32   rows edge-padded by 1 on each side
    # ph_ref  : (2*HC, H)      bf16  rows 0..15 pool cell-row cy, 16..31 pool cy+1
    # pw_ref  : (W, LANES)     bf16  column x -> lane x // CELL
    # out_ref : (G, 4, HC, LANES) f32  [ci, cell_row, bin*WC + cell_col]
    ph2 = ph_ref[...]
    pw = pw_ref[...]

    col = jax.lax.broadcasted_iota(jnp.int32, (H, W), 1)
    first_col = col == 0
    last_col = col == (W - 1)

    for g in range(G):
        # ---- gradients ([-1,0,1], replicate border), dominant channel ---------
        best_dx = best_dy = best_m2 = None
        for c in range(C):
            xc = img_ref[g, c, pl.ds(1, H), :]
            yp = img_ref[g, c, pl.ds(2, H), :]
            ym = img_ref[g, c, pl.ds(0, H), :]
            xp = jnp.where(last_col, xc, _lroll(xc, -1))
            xm = jnp.where(first_col, xc, _lroll(xc, 1))
            dx = xp - xm
            dy = yp - ym
            m2 = dx * dx + dy * dy
            if best_m2 is None:
                best_dx, best_dy, best_m2 = dx, dy, m2
            else:
                sel = m2 > best_m2
                best_dx = jnp.where(sel, dx, best_dx)
                best_dy = jnp.where(sel, dy, best_dy)
                best_m2 = jnp.where(sel, m2, best_m2)
        mag = jnp.sqrt(best_m2)

        # ---- unsigned orientation in [0, pi) via polynomial atan ---------------
        ax = jnp.abs(best_dx)
        ay = jnp.abs(best_dy)
        mx = jnp.maximum(ax, ay)
        mn = jnp.minimum(ax, ay)
        a = mn * pl.reciprocal(mx + 1e-12, approx=True)
        s = a * a
        r = ((-0.0464964749 * s + 0.15931422) * s - 0.327622764) * s * a + a
        r = jnp.where(ay > ax, (jnp.pi / 2) - r, r)
        theta = jnp.where(best_dx * best_dy < 0.0, jnp.pi - r, r)
        theta = jnp.where(theta >= jnp.pi, theta - jnp.pi, theta)

        # ---- OpenCV-style soft orientation binning -----------------------------
        binf = theta * (NBINS / jnp.pi) - 0.5
        h0f = jnp.floor(binf)
        m1 = mag * (binf - h0f)                      # vote for bin (h0 + 1) % 9
        m0 = mag - m1                                # vote for bin h0
        h0 = h0f.astype(jnp.int32)
        h0 = jnp.where(h0 < 0, h0 + NBINS, h0)       # h0 in [0, NBINS)

        # ---- per-bin votes -> cell sums (tiny bf16 MXU matmuls) ----------------
        hps = []
        for b in range(NBINS):
            vb = (jnp.where(h0 == b, m0, 0.0)
                  + jnp.where(h0 == (b - 1) % NBINS, m1, 0.0))
            hp = jnp.dot(ph2, vb.astype(jnp.bfloat16),
                         preferred_element_type=jnp.float32)   # (2*HC, W)
            hps.append(hp.astype(jnp.bfloat16))
        hp_all = jnp.concatenate(hps, axis=0)                  # (NBINS*2*HC, W)
        cl_all = jnp.dot(hp_all, pw,
                         preferred_element_type=jnp.float32)   # lanes 0..WC-1 live

        # pack as lane = bin*WC + cell_col (rows = cell_row / cell_row+1)
        c00 = cl_all[0:HC, :]
        c10 = cl_all[HC:2 * HC, :]
        for b in range(1, NBINS):
            base = 2 * HC * b
            c00 = c00 + _lroll(cl_all[base:base + HC, :], WC * b)
            c10 = c10 + _lroll(cl_all[base + HC:base + 2 * HC, :], WC * b)
        c01 = _lroll(c00, -1)        # cell column + 1
        c11 = _lroll(c10, -1)

        # ---- 2x2-cell blocks (stride 1 cell) + L2-Hys normalization ------------
        # Block sums (over 9 bins x 4 cells) are broadcast to every lane of the
        # same lane class (lane mod WC) via a wrap-around strided roll/add tree;
        # lanes >= NBINS*WC are zero so the wrap is exact for valid blocks.
        sq = c00 * c00 + c01 * c01 + c10 * c10 + c11 * c11
        ssum = sq
        for sft in (WC, 2 * WC, 4 * WC, 8 * WC):
            ssum = ssum + _lroll(ssum, -sft)
        scale1 = pl.reciprocal(jnp.sqrt(ssum) + BLOCK_LEN * 0.1, approx=True)

        v00 = jnp.minimum(c00 * scale1, 0.2)         # L2-Hys clip at 0.2
        v01 = jnp.minimum(c01 * scale1, 0.2)
        v10 = jnp.minimum(c10 * scale1, 0.2)
        v11 = jnp.minimum(c11 * scale1, 0.2)

        sq2 = v00 * v00 + v01 * v01 + v10 * v10 + v11 * v11
        ssum2 = sq2
        for sft in (WC, 2 * WC, 4 * WC, 8 * WC):
            ssum2 = ssum2 + _lroll(ssum2, -sft)
        scale2 = pl.reciprocal(jnp.sqrt(ssum2) + 1e-3, approx=True)

        out_ref[g, 0, :, :] = v00 * scale2           # lane-dense (HC, 128) stores
        out_ref[g, 1, :, :] = v01 * scale2
        out_ref[g, 2, :, :] = v10 * scale2
        out_ref[g, 3, :, :] = v11 * scale2


def _pick_group(batch):
    for g in (4, 2):
        if batch % g == 0:
            return g
    return 1


@jax.jit
def hog_features(images_f32):
    """images_f32: (B, C, 256, 128) float32 (already uint8-quantized values)."""
    B, C, h, w = images_f32.shape
    assert (h, w) == (H, W), "window size implied by the module is 256x128 (HxW)"
    G = _pick_group(B)

    # replicate-pad rows only; columns are handled in-kernel with lane rolls
    xpad = jnp.pad(images_f32, ((0, 0), (0, 0), (1, 1), (0, 0)), mode="edge")

    # constant pooling operators (bf16 MXU operands, DMA'd once)
    ycell = jnp.arange(H, dtype=jnp.int32) // CELL
    cy = jnp.arange(HC, dtype=jnp.int32)
    ph2 = jnp.concatenate(
        [(ycell[None, :] == cy[:, None]),
         (ycell[None, :] == cy[:, None] + 1)],
        axis=0).astype(jnp.bfloat16)                                  # (2*HC, H)
    xcell = jnp.arange(W, dtype=jnp.int32) // CELL
    pw = (xcell[:, None] == jnp.arange(LANES, dtype=jnp.int32)[None, :]
          ).astype(jnp.bfloat16)                                      # (W, LANES)

    kernel = functools.partial(_hog_kernel, C=C, G=G)
    blocks = pl.pallas_call(
        kernel,
        out_shape=jax.ShapeDtypeStruct((B, 4, HC, LANES), jnp.float32),
        grid=(B // G,),
        in_specs=[
            pl.BlockSpec((G, C, H + 2, W), lambda i: (i, 0, 0, 0)),
            pl.BlockSpec((2 * HC, H), lambda i: (0, 0)),
            pl.BlockSpec((W, LANES), lambda i: (0, 0)),
        ],
        out_specs=pl.BlockSpec((G, 4, HC, LANES), lambda i: (i, 0, 0, 0)),
        compiler_params=pltpu.CompilerParams(dimension_semantics=("parallel",)),
    )(xpad, ph2, pw)

    # unpack (ci, cell_row, bin*WC + cell_col) -> OpenCV-like descriptor order
    x = blocks[:, :, :BY, : NBINS * WC]                 # (B, 4, BY, NBINS*WC)
    x = x.reshape(B, 2, 2, BY, NBINS, WC)[..., :BX]     # (B, cy, cx, by, bin, bx)
    x = jnp.transpose(x, (0, 5, 3, 2, 1, 4))            # (B, bx, by, cx, cy, bin)
    feat = x.reshape(B, FEAT_LEN)                       # (B, 3780)
    return jnp.pad(feat, ((0, 0), (0, PAD_LEN - FEAT_LEN)))


def hog_extractor_forward(batch):
    """Mirrors HOGExtractor.forward: returns (features, targets, camid, img_path)."""
    imgs = batch["images"]
    # mimic .numpy().astype(np.uint8): clip + truncate to integer pixel values
    imgs_q = jnp.floor(jnp.clip(imgs, 0.0, 255.0)).astype(jnp.float32)
    feats = hog_features(imgs_q)
    return feats, batch["targets"], batch["camid"], batch["img_path"]


if __name__ == "__main__":
    key = jax.random.PRNGKey(0)
    imgs = jax.random.uniform(key, (2, 3, H, W), minval=0.0, maxval=255.0,
                              dtype=jnp.float32)
    batch = {
        "images": imgs,
        "targets": jnp.arange(2, dtype=jnp.int32),
        "camid": jnp.zeros((2,), jnp.int32),
        "img_path": ["img0.jpg", "img1.jpg"],
    }
    feats, targets, camid, img_path = hog_extractor_forward(batch)
    feats = jax.block_until_ready(feats)
    assert feats.shape == (2, PAD_LEN) and feats.dtype == jnp.float32
    assert bool(jnp.all(feats[:, FEAT_LEN:] == 0.0))
    assert bool(jnp.all(jnp.isfinite(feats)))
    print("KERNEL_OK")
</pallas_src>

<mosaic_0001>
module attributes {stable_mosaic.version = 11 : i64} {
  func.func @_hog_kernel(%arg0: i32, %arg1: memref<2x3x258x128xf32, #tpu.memory_space<vmem>>, %arg2: memref<32x256xbf16, #tpu.memory_space<vmem>>, %arg3: memref<128x128xbf16, #tpu.memory_space<vmem>>, %arg4: memref<2x4x16x128xf32, #tpu.memory_space<vmem>>) attributes {dimension_semantics = [#tpu.dimension_semantics<parallel>], iteration_bounds = array<i64: 1>, scalar_prefetch = 0 : i64, scratch_operands = 0 : i64, tpu.core_type = #tpu.core_type<tc>, window_params = [{transform_indices = @transform_0, window_bounds = array<i64: 2, 3, 258, 128>}, {pipeline_mode = #tpu.pipeline_mode<synchronous>, transform_indices = @transform_1, window_bounds = array<i64: 32, 256>}, {pipeline_mode = #tpu.pipeline_mode<synchronous>, transform_indices = @transform_2, window_bounds = array<i64: 128, 128>}, {transform_indices = @transform_3, window_bounds = array<i64: 2, 4, 16, 128>}]} {
    %c0 = arith.constant 0 : index
    %c0_0 = arith.constant 0 : index
    %0 = vector.load %arg2[%c0, %c0_0] : memref<32x256xbf16, #tpu.memory_space<vmem>>, vector<32x256xbf16>
    %c0_1 = arith.constant 0 : index
    %c0_2 = arith.constant 0 : index
    %1 = vector.load %arg3[%c0_1, %c0_2] : memref<128x128xbf16, #tpu.memory_space<vmem>>, vector<128x128xbf16>
    %2 = tpu.iota {dimensions = array<i32: 1>} : vector<256x128xi32>
    %c0_i32 = arith.constant 0 : i32
    %3 = vector.broadcast %c0_i32 : i32 to vector<256x128xi32>
    %4 = arith.cmpi eq, %2, %3 : vector<256x128xi32>
    %c127_i32 = arith.constant 127 : i32
    %5 = vector.broadcast %c127_i32 : i32 to vector<256x128xi32>
    %6 = arith.cmpi eq, %2, %5 : vector<256x128xi32>
    %c0_3 = arith.constant 0 : index
    %c0_4 = arith.constant 0 : index
    %c1 = arith.constant 1 : index
    %c0_5 = arith.constant 0 : index
    %7 = vector.load %arg1[%c0_3, %c0_4, %c1, %c0_5] : memref<2x3x258x128xf32, #tpu.memory_space<vmem>>, vector<1x1x256x128xf32>
    %8 = vector.shape_cast %7 : vector<1x1x256x128xf32> to vector<256x128xf32>
    %c0_6 = arith.constant 0 : index
    %c0_7 = arith.constant 0 : index
    %c2 = arith.constant 2 : index
    %c0_8 = arith.constant 0 : index
    %9 = vector.load %arg1[%c0_6, %c0_7, %c2, %c0_8] : memref<2x3x258x128xf32, #tpu.memory_space<vmem>>, vector<1x1x256x128xf32>
    %10 = vector.shape_cast %9 : vector<1x1x256x128xf32> to vector<256x128xf32>
    %c0_9 = arith.constant 0 : index
    %c0_10 = arith.constant 0 : index
    %c0_11 = arith.constant 0 : index
    %c0_12 = arith.constant 0 : index
    %11 = vector.load %arg1[%c0_9, %c0_10, %c0_11, %c0_12] : memref<2x3x258x128xf32, #tpu.memory_space<vmem>>, vector<1x1x256x128xf32>
    %12 = vector.shape_cast %11 : vector<1x1x256x128xf32> to vector<256x128xf32>
    %c127_i32_13 = arith.constant 127 : i32
    %13 = tpu.dynamic_rotate %8 by %c127_i32_13 dim 1 : vector<256x128xf32>, i32 -> vector<256x128xf32>
    %14 = arith.select %6, %8, %13 : vector<256x128xi1>, vector<256x128xf32>
    %c1_i32 = arith.constant 1 : i32
    %15 = tpu.dynamic_rotate %8 by %c1_i32 dim 1 : vector<256x128xf32>, i32 -> vector<256x128xf32>
    %16 = arith.select %4, %8, %15 : vector<256x128xi1>, vector<256x128xf32>
    %17 = arith.subf %14, %16 : vector<256x128xf32>
    %18 = arith.subf %10, %12 : vector<256x128xf32>
    %19 = arith.mulf %17, %17 : vector<256x128xf32>
    %20 = arith.mulf %18, %18 : vector<256x128xf32>
    %21 = arith.addf %19, %20 : vector<256x128xf32>
    %c0_14 = arith.constant 0 : index
    %c1_15 = arith.constant 1 : index
    %c1_16 = arith.constant 1 : index
    %c0_17 = arith.constant 0 : index
    %22 = vector.load %arg1[%c0_14, %c1_15, %c1_16, %c0_17] : memref<2x3x258x128xf32, #tpu.memory_space<vmem>>, vector<1x1x256x128xf32>
    %23 = vector.shape_cast %22 : vector<1x1x256x128xf32> to vector<256x128xf32>
    %c0_18 = arith.constant 0 : index
    %c1_19 = arith.constant 1 : index
    %c2_20 = arith.constant 2 : index
    %c0_21 = arith.constant 0 : index
    %24 = vector.load %arg1[%c0_18, %c1_19, %c2_20, %c0_21] : memref<2x3x258x128xf32, #tpu.memory_space<vmem>>, vector<1x1x256x128xf32>
    %25 = vector.shape_cast %24 : vector<1x1x256x128xf32> to vector<256x128xf32>
    %c0_22 = arith.constant 0 : index
    %c1_23 = arith.constant 1 : index
    %c0_24 = arith.constant 0 : index
    %c0_25 = arith.constant 0 : index
    %26 = vector.load %arg1[%c0_22, %c1_23, %c0_24, %c0_25] : memref<2x3x258x128xf32, #tpu.memory_space<vmem>>, vector<1x1x256x128xf32>
    %27 = vector.shape_cast %26 : vector<1x1x256x128xf32> to vector<256x128xf32>
    %c127_i32_26 = arith.constant 127 : i32
    %28 = tpu.dynamic_rotate %23 by %c127_i32_26 dim 1 : vector<256x128xf32>, i32 -> vector<256x128xf32>
    %29 = arith.select %6, %23, %28 : vector<256x128xi1>, vector<256x128xf32>
    %c1_i32_27 = arith.constant 1 : i32
    %30 = tpu.dynamic_rotate %23 by %c1_i32_27 dim 1 : vector<256x128xf32>, i32 -> vector<256x128xf32>
    %31 = arith.select %4, %23, %30 : vector<256x128xi1>, vector<256x128xf32>
    %32 = arith.subf %29, %31 : vector<256x128xf32>
    %33 = arith.subf %25, %27 : vector<256x128xf32>
    %34 = arith.mulf %32, %32 : vector<256x128xf32>
    %35 = arith.mulf %33, %33 : vector<256x128xf32>
    %36 = arith.addf %34, %35 : vector<256x128xf32>
    %37 = arith.cmpf ogt, %36, %21 : vector<256x128xf32>
    %38 = arith.select %37, %32, %17 : vector<256x128xi1>, vector<256x128xf32>
    %39 = arith.select %37, %33, %18 : vector<256x128xi1>, vector<256x128xf32>
    %40 = arith.select %37, %36, %21 : vector<256x128xi1>, vector<256x128xf32>
    %c0_28 = arith.constant 0 : index
    %c2_29 = arith.constant 2 : index
    %c1_30 = arith.constant 1 : index
    %c0_31 = arith.constant 0 : index
    %41 = vector.load %arg1[%c0_28, %c2_29, %c1_30, %c0_31] : memref<2x3x258x128xf32, #tpu.memory_space<vmem>>, vector<1x1x256x128xf32>
    %42 = vector.shape_cast %41 : vector<1x1x256x128xf32> to vector<256x128xf32>
    %c0_32 = arith.constant 0 : index
    %c2_33 = arith.constant 2 : index
    %c2_34 = arith.constant 2 : index
    %c0_35 = arith.constant 0 : index
    %43 = vector.load %arg1[%c0_32, %c2_33, %c2_34, %c0_35] : memref<2x3x258x128xf32, #tpu.memory_space<vmem>>, vector<1x1x256x128xf32>
    %44 = vector.shape_cast %43 : vector<1x1x256x128xf32> to vector<256x128xf32>
    %c0_36 = arith.constant 0 : index
    %c2_37 = arith.constant 2 : index
    %c0_38 = arith.constant 0 : index
    %c0_39 = arith.constant 0 : index
    %45 = vector.load %arg1[%c0_36, %c2_37, %c0_38, %c0_39] : memref<2x3x258x128xf32, #tpu.memory_space<vmem>>, vector<1x1x256x128xf32>
    %46 = vector.shape_cast %45 : vector<1x1x256x128xf32> to vector<256x128xf32>
    %c127_i32_40 = arith.constant 127 : i32
    %47 = tpu.dynamic_rotate %42 by %c127_i32_40 dim 1 : vector<256x128xf32>, i32 -> vector<256x128xf32>
    %48 = arith.select %6, %42, %47 : vector<256x128xi1>, vector<256x128xf32>
    %c1_i32_41 = arith.constant 1 : i32
    %49 = tpu.dynamic_rotate %42 by %c1_i32_41 dim 1 : vector<256x128xf32>, i32 -> vector<256x128xf32>
    %50 = arith.select %4, %42, %49 : vector<256x128xi1>, vector<256x128xf32>
    %51 = arith.subf %48, %50 : vector<256x128xf32>
    %52 = arith.subf %44, %46 : vector<256x128xf32>
    %53 = arith.mulf %51, %51 : vector<256x128xf32>
    %54 = arith.mulf %52, %52 : vector<256x128xf32>
    %55 = arith.addf %53, %54 : vector<256x128xf32>
    %56 = arith.cmpf ogt, %55, %40 : vector<256x128xf32>
    %57 = arith.select %56, %51, %38 : vector<256x128xi1>, vector<256x128xf32>
    %58 = arith.select %56, %52, %39 : vector<256x128xi1>, vector<256x128xf32>
    %59 = arith.select %56, %55, %40 : vector<256x128xi1>, vector<256x128xf32>
    %60 = math.sqrt %59 : vector<256x128xf32>
    %61 = math.absf %57 : vector<256x128xf32>
    %62 = math.absf %58 : vector<256x128xf32>
    %63 = arith.maximumf %61, %62 : vector<256x128xf32>
    %64 = arith.minimumf %61, %62 : vector<256x128xf32>
    %cst = arith.constant 9.99999996E-13 : f32
    %65 = vector.broadcast %cst : f32 to vector<256x128xf32>
    %66 = arith.addf %63, %65 : vector<256x128xf32>
    %67 = tpu.reciprocal %66 {approx = true} : vector<256x128xf32> -> vector<256x128xf32>
    %68 = arith.mulf %64, %67 : vector<256x128xf32>
    %69 = arith.mulf %68, %68 : vector<256x128xf32>
    %cst_42 = arith.constant -0.0464964733 : f32
    %70 = vector.broadcast %cst_42 : f32 to vector<256x128xf32>
    %71 = arith.mulf %70, %69 : vector<256x128xf32>
    %cst_43 = arith.constant 0.159314215 : f32
    %72 = vector.broadcast %cst_43 : f32 to vector<256x128xf32>
    %73 = arith.addf %71, %72 : vector<256x128xf32>
    %74 = arith.mulf %73, %69 : vector<256x128xf32>
    %cst_44 = arith.constant 0.327622771 : f32
    %75 = vector.broadcast %cst_44 : f32 to vector<256x128xf32>
    %76 = arith.subf %74, %75 : vector<256x128xf32>
    %77 = arith.mulf %76, %69 : vector<256x128xf32>
    %78 = arith.mulf %77, %68 : vector<256x128xf32>
    %79 = arith.addf %78, %68 : vector<256x128xf32>
    %80 = arith.cmpf ogt, %62, %61 : vector<256x128xf32>
    %cst_45 = arith.constant 1.57079637 : f32
    %81 = vector.broadcast %cst_45 : f32 to vector<256x128xf32>
    %82 = arith.subf %81, %79 : vector<256x128xf32>
    %83 = arith.select %80, %82, %79 : vector<256x128xi1>, vector<256x128xf32>
    %84 = arith.mulf %57, %58 : vector<256x128xf32>
    %cst_46 = arith.constant 0.000000e+00 : f32
    %85 = vector.broadcast %cst_46 : f32 to vector<256x128xf32>
    %86 = arith.cmpf olt, %84, %85 : vector<256x128xf32>
    %cst_47 = arith.constant 3.14159274 : f32
    %87 = vector.broadcast %cst_47 : f32 to vector<256x128xf32>
    %88 = arith.subf %87, %83 : vector<256x128xf32>
    %89 = arith.select %86, %88, %83 : vector<256x128xi1>, vector<256x128xf32>
    %cst_48 = arith.constant 3.14159274 : f32
    %90 = vector.broadcast %cst_48 : f32 to vector<256x128xf32>
    %91 = arith.cmpf oge, %89, %90 : vector<256x128xf32>
    %cst_49 = arith.constant 3.14159274 : f32
    %92 = vector.broadcast %cst_49 : f32 to vector<256x128xf32>
    %93 = arith.subf %89, %92 : vector<256x128xf32>
    %94 = arith.select %91, %93, %89 : vector<256x128xi1>, vector<256x128xf32>
    %cst_50 = arith.constant 2.86478901 : f32
    %95 = vector.broadcast %cst_50 : f32 to vector<256x128xf32>
    %96 = arith.mulf %94, %95 : vector<256x128xf32>
    %cst_51 = arith.constant 5.000000e-01 : f32
    %97 = vector.broadcast %cst_51 : f32 to vector<256x128xf32>
    %98 = arith.subf %96, %97 : vector<256x128xf32>
    %99 = math.floor %98 : vector<256x128xf32>
    %100 = arith.subf %98, %99 : vector<256x128xf32>
    %101 = arith.mulf %60, %100 : vector<256x128xf32>
    %102 = arith.subf %60, %101 : vector<256x128xf32>
    %103 = arith.fptosi %99 : vector<256x128xf32> to vector<256x128xi32>
    %c0_i32_52 = arith.constant 0 : i32
    %104 = vector.broadcast %c0_i32_52 : i32 to vector<256x128xi32>
    %105 = arith.cmpi slt, %103, %104 : vector<256x128xi32>
    %c9_i32 = arith.constant 9 : i32
    %106 = vector.broadcast %c9_i32 : i32 to vector<256x128xi32>
    %107 = arith.addi %103, %106 : vector<256x128xi32>
    %108 = arith.select %105, %107, %103 : vector<256x128xi1>, vector<256x128xi32>
    %c0_i32_53 = arith.constant 0 : i32
    %109 = vector.broadcast %c0_i32_53 : i32 to vector<256x128xi32>
    %110 = arith.cmpi eq, %108, %109 : vector<256x128xi32>
    %cst_54 = arith.constant 0.000000e+00 : f32
    %111 = vector.broadcast %cst_54 : f32 to vector<256x128xf32>
    %112 = arith.select %110, %102, %111 : vector<256x128xi1>, vector<256x128xf32>
    %c8_i32 = arith.constant 8 : i32
    %113 = vector.broadcast %c8_i32 : i32 to vector<256x128xi32>
    %114 = arith.cmpi eq, %108, %113 : vector<256x128xi32>
    %cst_55 = arith.constant 0.000000e+00 : f32
    %115 = vector.broadcast %cst_55 : f32 to vector<256x128xf32>
    %116 = arith.select %114, %101, %115 : vector<256x128xi1>, vector<256x128xf32>
    %117 = arith.addf %112, %116 : vector<256x128xf32>
    %118 = arith.truncf %117 : vector<256x128xf32> to vector<256x128xbf16>
    %cst_56 = arith.constant dense<0.000000e+00> : vector<32x128xf32>
    %119 = tpu.matmul %0, %118, %cst_56 {dimension_numbers = #tpu.dot_dimension_numbers<[1], [0], [0], [1], [0, 0, 1, 1], [], []>} : vector<32x256xbf16>, vector<256x128xbf16>, vector<32x128xf32> -> vector<32x128xf32>
    %120 = arith.truncf %119 : vector<32x128xf32> to vector<32x128xbf16>
    %c1_i32_57 = arith.constant 1 : i32
    %121 = vector.broadcast %c1_i32_57 : i32 to vector<256x128xi32>
    %122 = arith.cmpi eq, %108, %121 : vector<256x128xi32>
    %cst_58 = arith.constant 0.000000e+00 : f32
    %123 = vector.broadcast %cst_58 : f32 to vector<256x128xf32>
    %124 = arith.select %122, %102, %123 : vector<256x128xi1>, vector<256x128xf32>
    %c0_i32_59 = arith.constant 0 : i32
    %125 = vector.broadcast %c0_i32_59 : i32 to vector<256x128xi32>
    %126 = arith.cmpi eq, %108, %125 : vector<256x128xi32>
    %cst_60 = arith.constant 0.000000e+00 : f32
    %127 = vector.broadcast %cst_60 : f32 to vector<256x128xf32>
    %128 = arith.select %126, %101, %127 : vector<256x128xi1>, vector<256x128xf32>
    %129 = arith.addf %124, %128 : vector<256x128xf32>
    %130 = arith.truncf %129 : vector<256x128xf32> to vector<256x128xbf16>
    %cst_61 = arith.constant dense<0.000000e+00> : vector<32x128xf32>
    %131 = tpu.matmul %0, %130, %cst_61 {dimension_numbers = #tpu.dot_dimension_numbers<[1], [0], [0], [1], [0, 0, 1, 1], [], []>} : vector<32x256xbf16>, vector<256x128xbf16>, vector<32x128xf32> -> vector<32x128xf32>
    %132 = arith.truncf %131 : vector<32x128xf32> to vector<32x128xbf16>
    %c2_i32 = arith.constant 2 : i32
    %133 = vector.broadcast %c2_i32 : i32 to vector<256x128xi32>
    %134 = arith.cmpi eq, %108, %133 : vector<256x128xi32>
    %cst_62 = arith.constant 0.000000e+00 : f32
    %135 = vector.broadcast %cst_62 : f32 to vector<256x128xf32>
    %136 = arith.select %134, %102, %135 : vector<256x128xi1>, vector<256x128xf32>
    %c1_i32_63 = arith.constant 1 : i32
    %137 = vector.broadcast %c1_i32_63 : i32 to vector<256x128xi32>
    %138 = arith.cmpi eq, %108, %137 : vector<256x128xi32>
    %cst_64 = arith.constant 0.000000e+00 : f32
    %139 = vector.broadcast %cst_64 : f32 to vector<256x128xf32>
    %140 = arith.select %138, %101, %139 : vector<256x128xi1>, vector<256x128xf32>
    %141 = arith.addf %136, %140 : vector<256x128xf32>
    %142 = arith.truncf %141 : vector<256x128xf32> to vector<256x128xbf16>
    %cst_65 = arith.constant dense<0.000000e+00> : vector<32x128xf32>
    %143 = tpu.matmul %0, %142, %cst_65 {dimension_numbers = #tpu.dot_dimension_numbers<[1], [0], [0], [1], [0, 0, 1, 1], [], []>} : vector<32x256xbf16>, vector<256x128xbf16>, vector<32x128xf32> -> vector<32x128xf32>
    %144 = arith.truncf %143 : vector<32x128xf32> to vector<32x128xbf16>
    %c3_i32 = arith.constant 3 : i32
    %145 = vector.broadcast %c3_i32 : i32 to vector<256x128xi32>
    %146 = arith.cmpi eq, %108, %145 : vector<256x128xi32>
    %cst_66 = arith.constant 0.000000e+00 : f32
    %147 = vector.broadcast %cst_66 : f32 to vector<256x128xf32>
    %148 = arith.select %146, %102, %147 : vector<256x128xi1>, vector<256x128xf32>
    %c2_i32_67 = arith.constant 2 : i32
    %149 = vector.broadcast %c2_i32_67 : i32 to vector<256x128xi32>
    %150 = arith.cmpi eq, %108, %149 : vector<256x128xi32>
    %cst_68 = arith.constant 0.000000e+00 : f32
    %151 = vector.broadcast %cst_68 : f32 to vector<256x128xf32>
    %152 = arith.select %150, %101, %151 : vector<256x128xi1>, vector<256x128xf32>
    %153 = arith.addf %148, %152 : vector<256x128xf32>
    %154 = arith.truncf %153 : vector<256x128xf32> to vector<256x128xbf16>
    %cst_69 = arith.constant dense<0.000000e+00> : vector<32x128xf32>
    %155 = tpu.matmul %0, %154, %cst_69 {dimension_numbers = #tpu.dot_dimension_numbers<[1], [0], [0], [1], [0, 0, 1, 1], [], []>} : vector<32x256xbf16>, vector<256x128xbf16>, vector<32x128xf32> -> vector<32x128xf32>
    %156 = arith.truncf %155 : vector<32x128xf32> to vector<32x128xbf16>
    %c4_i32 = arith.constant 4 : i32
    %157 = vector.broadcast %c4_i32 : i32 to vector<256x128xi32>
    %158 = arith.cmpi eq, %108, %157 : vector<256x128xi32>
    %cst_70 = arith.constant 0.000000e+00 : f32
    %159 = vector.broadcast %cst_70 : f32 to vector<256x128xf32>
    %160 = arith.select %158, %102, %159 : vector<256x128xi1>, vector<256x128xf32>
    %c3_i32_71 = arith.constant 3 : i32
    %161 = vector.broadcast %c3_i32_71 : i32 to vector<256x128xi32>
    %162 = arith.cmpi eq, %108, %161 : vector<256x128xi32>
    %cst_72 = arith.constant 0.000000e+00 : f32
    %163 = vector.broadcast %cst_72 : f32 to vector<256x128xf32>
    %164 = arith.select %162, %101, %163 : vector<256x128xi1>, vector<256x128xf32>
    %165 = arith.addf %160, %164 : vector<256x128xf32>
    %166 = arith.truncf %165 : vector<256x128xf32> to vector<256x128xbf16>
    %cst_73 = arith.constant dense<0.000000e+00> : vector<32x128xf32>
    %167 = tpu.matmul %0, %166, %cst_73 {dimension_numbers = #tpu.dot_dimension_numbers<[1], [0], [0], [1], [0, 0, 1, 1], [], []>} : vector<32x256xbf16>, vector<256x128xbf16>, vector<32x128xf32> -> vector<32x128xf32>
    %168 = arith.truncf %167 : vector<32x128xf32> to vector<32x128xbf16>
    %c5_i32 = arith.constant 5 : i32
    %169 = vector.broadcast %c5_i32 : i32 to vector<256x128xi32>
    %170 = arith.cmpi eq, %108, %169 : vector<256x128xi32>
    %cst_74 = arith.constant 0.000000e+00 : f32
    %171 = vector.broadcast %cst_74 : f32 to vector<256x128xf32>
    %172 = arith.select %170, %102, %171 : vector<256x128xi1>, vector<256x128xf32>
    %c4_i32_75 = arith.constant 4 : i32
    %173 = vector.broadcast %c4_i32_75 : i32 to vector<256x128xi32>
    %174 = arith.cmpi eq, %108, %173 : vector<256x128xi32>
    %cst_76 = arith.constant 0.000000e+00 : f32
    %175 = vector.broadcast %cst_76 : f32 to vector<256x128xf32>
    %176 = arith.select %174, %101, %175 : vector<256x128xi1>, vector<256x128xf32>
    %177 = arith.addf %172, %176 : vector<256x128xf32>
    %178 = arith.truncf %177 : vector<256x128xf32> to vector<256x128xbf16>
    %cst_77 = arith.constant dense<0.000000e+00> : vector<32x128xf32>
    %179 = tpu.matmul %0, %178, %cst_77 {dimension_numbers = #tpu.dot_dimension_numbers<[1], [0], [0], [1], [0, 0, 1, 1], [], []>} : vector<32x256xbf16>, vector<256x128xbf16>, vector<32x128xf32> -> vector<32x128xf32>
    %180 = arith.truncf %179 : vector<32x128xf32> to vector<32x128xbf16>
    %c6_i32 = arith.constant 6 : i32
    %181 = vector.broadcast %c6_i32 : i32 to vector<256x128xi32>
    %182 = arith.cmpi eq, %108, %181 : vector<256x128xi32>
    %cst_78 = arith.constant 0.000000e+00 : f32
    %183 = vector.broadcast %cst_78 : f32 to vector<256x128xf32>
    %184 = arith.select %182, %102, %183 : vector<256x128xi1>, vector<256x128xf32>
    %c5_i32_79 = arith.constant 5 : i32
    %185 = vector.broadcast %c5_i32_79 : i32 to vector<256x128xi32>
    %186 = arith.cmpi eq, %108, %185 : vector<256x128xi32>
    %cst_80 = arith.constant 0.000000e+00 : f32
    %187 = vector.broadcast %cst_80 : f32 to vector<256x128xf32>
    %188 = arith.select %186, %101, %187 : vector<256x128xi1>, vector<256x128xf32>
    %189 = arith.addf %184, %188 : vector<256x128xf32>
    %190 = arith.truncf %189 : vector<256x128xf32> to vector<256x128xbf16>
    %cst_81 = arith.constant dense<0.000000e+00> : vector<32x128xf32>
    %191 = tpu.matmul %0, %190, %cst_81 {dimension_numbers = #tpu.dot_dimension_numbers<[1], [0], [0], [1], [0, 0, 1, 1], [], []>} : vector<32x256xbf16>, vector<256x128xbf16>, vector<32x128xf32> -> vector<32x128xf32>
    %192 = arith.truncf %191 : vector<32x128xf32> to vector<32x128xbf16>
    %c7_i32 = arith.constant 7 : i32
    %193 = vector.broadcast %c7_i32 : i32 to vector<256x128xi32>
    %194 = arith.cmpi eq, %108, %193 : vector<256x128xi32>
    %cst_82 = arith.constant 0.000000e+00 : f32
    %195 = vector.broadcast %cst_82 : f32 to vector<256x128xf32>
    %196 = arith.select %194, %102, %195 : vector<256x128xi1>, vector<256x128xf32>
    %c6_i32_83 = arith.constant 6 : i32
    %197 = vector.broadcast %c6_i32_83 : i32 to vector<256x128xi32>
    %198 = arith.cmpi eq, %108, %197 : vector<256x128xi32>
    %cst_84 = arith.constant 0.000000e+00 : f32
    %199 = vector.broadcast %cst_84 : f32 to vector<256x128xf32>
    %200 = arith.select %198, %101, %199 : vector<256x128xi1>, vector<256x128xf32>
    %201 = arith.addf %196, %200 : vector<256x128xf32>
    %202 = arith.truncf %201 : vector<256x128xf32> to vector<256x128xbf16>
    %cst_85 = arith.constant dense<0.000000e+00> : vector<32x128xf32>
    %203 = tpu.matmul %0, %202, %cst_85 {dimension_numbers = #tpu.dot_dimension_numbers<[1], [0], [0], [1], [0, 0, 1, 1], [], []>} : vector<32x256xbf16>, vector<256x128xbf16>, vector<32x128xf32> -> vector<32x128xf32>
    %204 = arith.truncf %203 : vector<32x128xf32> to vector<32x128xbf16>
    %c8_i32_86 = arith.constant 8 : i32
    %205 = vector.broadcast %c8_i32_86 : i32 to vector<256x128xi32>
    %206 = arith.cmpi eq, %108, %205 : vector<256x128xi32>
    %cst_87 = arith.constant 0.000000e+00 : f32
    %207 = vector.broadcast %cst_87 : f32 to vector<256x128xf32>
    %208 = arith.select %206, %102, %207 : vector<256x128xi1>, vector<256x128xf32>
    %c7_i32_88 = arith.constant 7 : i32
    %209 = vector.broadcast %c7_i32_88 : i32 to vector<256x128xi32>
    %210 = arith.cmpi eq, %108, %209 : vector<256x128xi32>
    %cst_89 = arith.constant 0.000000e+00 : f32
    %211 = vector.broadcast %cst_89 : f32 to vector<256x128xf32>
    %212 = arith.select %210, %101, %211 : vector<256x128xi1>, vector<256x128xf32>
    %213 = arith.addf %208, %212 : vector<256x128xf32>
    %214 = arith.truncf %213 : vector<256x128xf32> to vector<256x128xbf16>
    %cst_90 = arith.constant dense<0.000000e+00> : vector<32x128xf32>
    %215 = tpu.matmul %0, %214, %cst_90 {dimension_numbers = #tpu.dot_dimension_numbers<[1], [0], [0], [1], [0, 0, 1, 1], [], []>} : vector<32x256xbf16>, vector<256x128xbf16>, vector<32x128xf32> -> vector<32x128xf32>
    %216 = arith.truncf %215 : vector<32x128xf32> to vector<32x128xbf16>
    %217 = tpu.concatenate %120, %132, %144, %156, %168, %180, %192, %204, %216 in 0 : vector<32x128xbf16>, vector<32x128xbf16>, vector<32x128xbf16>, vector<32x128xbf16>, vector<32x128xbf16>, vector<32x128xbf16>, vector<32x128xbf16>, vector<32x128xbf16>, vector<32x128xbf16> -> vector<288x128xbf16>
    %cst_91 = arith.constant dense<0.000000e+00> : vector<288x128xf32>
    %218 = tpu.matmul %217, %1, %cst_91 {dimension_numbers = #tpu.dot_dimension_numbers<[1], [0], [0], [1], [0, 0, 1, 1], [], []>} : vector<288x128xbf16>, vector<128x128xbf16>, vector<288x128xf32> -> vector<288x128xf32>
    %219 = vector.extract_strided_slice %218 {offsets = [0, 0], sizes = [16, 128], strides = [1, 1]} : vector<288x128xf32> to vector<16x128xf32>
    %220 = vector.extract_strided_slice %218 {offsets = [16, 0], sizes = [16, 128], strides = [1, 1]} : vector<288x128xf32> to vector<16x128xf32>
    %221 = vector.extract_strided_slice %218 {offsets = [32, 0], sizes = [16, 128], strides = [1, 1]} : vector<288x128xf32> to vector<16x128xf32>
    %c8_i32_92 = arith.constant 8 : i32
    %222 = tpu.dynamic_rotate %221 by %c8_i32_92 dim 1 : vector<16x128xf32>, i32 -> vector<16x128xf32>
    %223 = arith.addf %219, %222 : vector<16x128xf32>
    %224 = vector.extract_strided_slice %218 {offsets = [48, 0], sizes = [16, 128], strides = [1, 1]} : vector<288x128xf32> to vector<16x128xf32>
    %c8_i32_93 = arith.constant 8 : i32
    %225 = tpu.dynamic_rotate %224 by %c8_i32_93 dim 1 : vector<16x128xf32>, i32 -> vector<16x128xf32>
    %226 = arith.addf %220, %225 : vector<16x128xf32>
    %227 = vector.extract_strided_slice %218 {offsets = [64, 0], sizes = [16, 128], strides = [1, 1]} : vector<288x128xf32> to vector<16x128xf32>
    %c16_i32 = arith.constant 16 : i32
    %228 = tpu.dynamic_rotate %227 by %c16_i32 dim 1 : vector<16x128xf32>, i32 -> vector<16x128xf32>
    %229 = arith.addf %223, %228 : vector<16x128xf32>
    %230 = vector.extract_strided_slice %218 {offsets = [80, 0], sizes = [16, 128], strides = [1, 1]} : vector<288x128xf32> to vector<16x128xf32>
    %c16_i32_94 = arith.constant 16 : i32
    %231 = tpu.dynamic_rotate %230 by %c16_i32_94 dim 1 : vector<16x128xf32>, i32 -> vector<16x128xf32>
    %232 = arith.addf %226, %231 : vector<16x128xf32>
    %233 = vector.extract_strided_slice %218 {offsets = [96, 0], sizes = [16, 128], strides = [1, 1]} : vector<288x128xf32> to vector<16x128xf32>
    %c24_i32 = arith.constant 24 : i32
    %234 = tpu.dynamic_rotate %233 by %c24_i32 dim 1 : vector<16x128xf32>, i32 -> vector<16x128xf32>
    %235 = arith.addf %229, %234 : vector<16x128xf32>
    %236 = vector.extract_strided_slice %218 {offsets = [112, 0], sizes = [16, 128], strides = [1, 1]} : vector<288x128xf32> to vector<16x128xf32>
    %c24_i32_95 = arith.constant 24 : i32
    %237 = tpu.dynamic_rotate %236 by %c24_i32_95 dim 1 : vector<16x128xf32>, i32 -> vector<16x128xf32>
    %238 = arith.addf %232, %237 : vector<16x128xf32>
    %239 = vector.extract_strided_slice %218 {offsets = [128, 0], sizes = [16, 128], strides = [1, 1]} : vector<288x128xf32> to vector<16x128xf32>
    %c32_i32 = arith.constant 32 : i32
    %240 = tpu.dynamic_rotate %239 by %c32_i32 dim 1 : vector<16x128xf32>, i32 -> vector<16x128xf32>
    %241 = arith.addf %235, %240 : vector<16x128xf32>
    %242 = vector.extract_strided_slice %218 {offsets = [144, 0], sizes = [16, 128], strides = [1, 1]} : vector<288x128xf32> to vector<16x128xf32>
    %c32_i32_96 = arith.constant 32 : i32
    %243 = tpu.dynamic_rotate %242 by %c32_i32_96 dim 1 : vector<16x128xf32>, i32 -> vector<16x128xf32>
    %244 = arith.addf %238, %243 : vector<16x128xf32>
    %245 = vector.extract_strided_slice %218 {offsets = [160, 0], sizes = [16, 128], strides = [1, 1]} : vector<288x128xf32> to vector<16x128xf32>
    %c40_i32 = arith.constant 40 : i32
    %246 = tpu.dynamic_rotate %245 by %c40_i32 dim 1 : vector<16x128xf32>, i32 -> vector<16x128xf32>
    %247 = arith.addf %241, %246 : vector<16x128xf32>
    %248 = vector.extract_strided_slice %218 {offsets = [176, 0], sizes = [16, 128], strides = [1, 1]} : vector<288x128xf32> to vector<16x128xf32>
    %c40_i32_97 = arith.constant 40 : i32
    %249 = tpu.dynamic_rotate %248 by %c40_i32_97 dim 1 : vector<16x128xf32>, i32 -> vector<16x128xf32>
    %250 = arith.addf %244, %249 : vector<16x128xf32>
    %251 = vector.extract_strided_slice %218 {offsets = [192, 0], sizes = [16, 128], strides = [1, 1]} : vector<288x128xf32> to vector<16x128xf32>
    %c48_i32 = arith.constant 48 : i32
    %252 = tpu.dynamic_rotate %251 by %c48_i32 dim 1 : vector<16x128xf32>, i32 -> vector<16x128xf32>
    %253 = arith.addf %247, %252 : vector<16x128xf32>
    %254 = vector.extract_strided_slice %218 {offsets = [208, 0], sizes = [16, 128], strides = [1, 1]} : vector<288x128xf32> to vector<16x128xf32>
    %c48_i32_98 = arith.constant 48 : i32
    %255 = tpu.dynamic_rotate %254 by %c48_i32_98 dim 1 : vector<16x128xf32>, i32 -> vector<16x128xf32>
    %256 = arith.addf %250, %255 : vector<16x128xf32>
    %257 = vector.extract_strided_slice %218 {offsets = [224, 0], sizes = [16, 128], strides = [1, 1]} : vector<288x128xf32> to vector<16x128xf32>
    %c56_i32 = arith.constant 56 : i32
    %258 = tpu.dynamic_rotate %257 by %c56_i32 dim 1 : vector<16x128xf32>, i32 -> vector<16x128xf32>
    %259 = arith.addf %253, %258 : vector<16x128xf32>
    %260 = vector.extract_strided_slice %218 {offsets = [240, 0], sizes = [16, 128], strides = [1, 1]} : vector<288x128xf32> to vector<16x128xf32>
    %c56_i32_99 = arith.constant 56 : i32
    %261 = tpu.dynamic_rotate %260 by %c56_i32_99 dim 1 : vector<16x128xf32>, i32 -> vector<16x128xf32>
    %262 = arith.addf %256, %261 : vector<16x128xf32>
    %263 = vector.extract_strided_slice %218 {offsets = [256, 0], sizes = [16, 128], strides = [1, 1]} : vector<288x128xf32> to vector<16x128xf32>
    %c64_i32 = arith.constant 64 : i32
    %264 = tpu.dynamic_rotate %263 by %c64_i32 dim 1 : vector<16x128xf32>, i32 -> vector<16x128xf32>
    %265 = arith.addf %259, %264 : vector<16x128xf32>
    %266 = vector.extract_strided_slice %218 {offsets = [272, 0], sizes = [16, 128], strides = [1, 1]} : vector<288x128xf32> to vector<16x128xf32>
    %c64_i32_100 = arith.constant 64 : i32
    %267 = tpu.dynamic_rotate %266 by %c64_i32_100 dim 1 : vector<16x128xf32>, i32 -> vector<16x128xf32>
    %268 = arith.addf %262, %267 : vector<16x128xf32>
    %c127_i32_101 = arith.constant 127 : i32
    %269 = tpu.dynamic_rotate %265 by %c127_i32_101 dim 1 : vector<16x128xf32>, i32 -> vector<16x128xf32>
    %c127_i32_102 = arith.constant 127 : i32
    %270 = tpu.dynamic_rotate %268 by %c127_i32_102 dim 1 : vector<16x128xf32>, i32 -> vector<16x128xf32>
    %271 = arith.mulf %265, %265 : vector<16x128xf32>
    %272 = arith.mulf %269, %269 : vector<16x128xf32>
    %273 = arith.addf %271, %272 : vector<16x128xf32>
    %274 = arith.mulf %268, %268 : vector<16x128xf32>
    %275 = arith.addf %273, %274 : vector<16x128xf32>
    %276 = arith.mulf %270, %270 : vector<16x128xf32>
    %277 = arith.addf %275, %276 : vector<16x128xf32>
    %c120_i32 = arith.constant 120 : i32
    %278 = tpu.dynamic_rotate %277 by %c120_i32 dim 1 : vector<16x128xf32>, i32 -> vector<16x128xf32>
    %279 = arith.addf %277, %278 : vector<16x128xf32>
    %c112_i32 = arith.constant 112 : i32
    %280 = tpu.dynamic_rotate %279 by %c112_i32 dim 1 : vector<16x128xf32>, i32 -> vector<16x128xf32>
    %281 = arith.addf %279, %280 : vector<16x128xf32>
    %c96_i32 = arith.constant 96 : i32
    %282 = tpu.dynamic_rotate %281 by %c96_i32 dim 1 : vector<16x128xf32>, i32 -> vector<16x128xf32>
    %283 = arith.addf %281, %282 : vector<16x128xf32>
    %c64_i32_103 = arith.constant 64 : i32
    %284 = tpu.dynamic_rotate %283 by %c64_i32_103 dim 1 : vector<16x128xf32>, i32 -> vector<16x128xf32>
    %285 = arith.addf %283, %284 : vector<16x128xf32>
    %286 = math.sqrt %285 : vector<16x128xf32>
    %cst_104 = arith.constant 3.600000e+00 : f32
    %287 = vector.broadcast %cst_104 : f32 to vector<16x128xf32>
    %288 = arith.addf %286, %287 : vector<16x128xf32>
    %289 = tpu.reciprocal %288 {approx = true} : vector<16x128xf32> -> vector<16x128xf32>
    %290 = arith.mulf %265, %289 : vector<16x128xf32>
    %cst_105 = arith.constant 2.000000e-01 : f32
    %291 = vector.broadcast %cst_105 : f32 to vector<16x128xf32>
    %292 = arith.minimumf %290, %291 : vector<16x128xf32>
    %293 = arith.mulf %269, %289 : vector<16x128xf32>
    %cst_106 = arith.constant 2.000000e-01 : f32
    %294 = vector.broadcast %cst_106 : f32 to vector<16x128xf32>
    %295 = arith.minimumf %293, %294 : vector<16x128xf32>
    %296 = arith.mulf %268, %289 : vector<16x128xf32>
    %cst_107 = arith.constant 2.000000e-01 : f32
    %297 = vector.broadcast %cst_107 : f32 to vector<16x128xf32>
    %298 = arith.minimumf %296, %297 : vector<16x128xf32>
    %299 = arith.mulf %270, %289 : vector<16x128xf32>
    %cst_108 = arith.constant 2.000000e-01 : f32
    %300 = vector.broadcast %cst_108 : f32 to vector<16x128xf32>
    %301 = arith.minimumf %299, %300 : vector<16x128xf32>
    %302 = arith.mulf %292, %292 : vector<16x128xf32>
    %303 = arith.mulf %295, %295 : vector<16x128xf32>
    %304 = arith.addf %302, %303 : vector<16x128xf32>
    %305 = arith.mulf %298, %298 : vector<16x128xf32>
    %306 = arith.addf %304, %305 : vector<16x128xf32>
    %307 = arith.mulf %301, %301 : vector<16x128xf32>
    %308 = arith.addf %306, %307 : vector<16x128xf32>
    %c120_i32_109 = arith.constant 120 : i32
    %309 = tpu.dynamic_rotate %308 by %c120_i32_109 dim 1 : vector<16x128xf32>, i32 -> vector<16x128xf32>
    %310 = arith.addf %308, %309 : vector<16x128xf32>
    %c112_i32_110 = arith.constant 112 : i32
    %311 = tpu.dynamic_rotate %310 by %c112_i32_110 dim 1 : vector<16x128xf32>, i32 -> vector<16x128xf32>
    %312 = arith.addf %310, %311 : vector<16x128xf32>
    %c96_i32_111 = arith.constant 96 : i32
    %313 = tpu.dynamic_rotate %312 by %c96_i32_111 dim 1 : vector<16x128xf32>, i32 -> vector<16x128xf32>
    %314 = arith.addf %312, %313 : vector<16x128xf32>
    %c64_i32_112 = arith.constant 64 : i32
    %315 = tpu.dynamic_rotate %314 by %c64_i32_112 dim 1 : vector<16x128xf32>, i32 -> vector<16x128xf32>
    %316 = arith.addf %314, %315 : vector<16x128xf32>
    %317 = math.sqrt %316 : vector<16x128xf32>
    %cst_113 = arith.constant 1.000000e-03 : f32
    %318 = vector.broadcast %cst_113 : f32 to vector<16x128xf32>
    %319 = arith.addf %317, %318 : vector<16x128xf32>
    %320 = tpu.reciprocal %319 {approx = true} : vector<16x128xf32> -> vector<16x128xf32>
    %321 = arith.mulf %292, %320 : vector<16x128xf32>
    %c0_114 = arith.constant 0 : index
    %c0_115 = arith.constant 0 : index
    %c0_116 = arith.constant 0 : index
    %c0_117 = arith.constant 0 : index
    %322 = vector.load %arg4[%c0_114, %c0_115, %c0_116, %c0_117] : memref<2x4x16x128xf32, #tpu.memory_space<vmem>>, vector<1x1x16x128xf32>
    %323 = vector.shape_cast %322 : vector<1x1x16x128xf32> to vector<16x128xf32>
    %324 = vector.shape_cast %321 : vector<16x128xf32> to vector<1x1x16x128xf32>
    tpu.vector_store %arg4[%c0_114, %c0_115, %c0_116, %c0_117], %324 {strides = array<i32>} : memref<2x4x16x128xf32, #tpu.memory_space<vmem>>, vector<1x1x16x128xf32>,
    %325 = arith.mulf %295, %320 : vector<16x128xf32>
    %c0_118 = arith.constant 0 : index
    %c1_119 = arith.constant 1 : index
    %c0_120 = arith.constant 0 : index
    %c0_121 = arith.constant 0 : index
    %326 = vector.load %arg4[%c0_118, %c1_119, %c0_120, %c0_121] : memref<2x4x16x128xf32, #tpu.memory_space<vmem>>, vector<1x1x16x128xf32>
    %327 = vector.shape_cast %326 : vector<1x1x16x128xf32> to vector<16x128xf32>
    %328 = vector.shape_cast %325 : vector<16x128xf32> to vector<1x1x16x128xf32>
    tpu.vector_store %arg4[%c0_118, %c1_119, %c0_120, %c0_121], %328 {strides = array<i32>} : memref<2x4x16x128xf32, #tpu.memory_space<vmem>>, vector<1x1x16x128xf32>,
    %329 = arith.mulf %298, %320 : vector<16x128xf32>
    %c0_122 = arith.constant 0 : index
    %c2_123 = arith.constant 2 : index
    %c0_124 = arith.constant 0 : index
    %c0_125 = arith.constant 0 : index
    %330 = vector.load %arg4[%c0_122, %c2_123, %c0_124, %c0_125] : memref<2x4x16x128xf32, #tpu.memory_space<vmem>>, vector<1x1x16x128xf32>
    %331 = vector.shape_cast %330 : vector<1x1x16x128xf32> to vector<16x128xf32>
    %332 = vector.shape_cast %329 : vector<16x128xf32> to vector<1x1x16x128xf32>
    tpu.vector_store %arg4[%c0_122, %c2_123, %c0_124, %c0_125], %332 {strides = array<i32>} : memref<2x4x16x128xf32, #tpu.memory_space<vmem>>, vector<1x1x16x128xf32>,
    %333 = arith.mulf %301, %320 : vector<16x128xf32>
    %c0_126 = arith.constant 0 : index
    %c3 = arith.constant 3 : index
    %c0_127 = arith.constant 0 : index
    %c0_128 = arith.constant 0 : index
    %334 = vector.load %arg4[%c0_126, %c3, %c0_127, %c0_128] : memref<2x4x16x128xf32, #tpu.memory_space<vmem>>, vector<1x1x16x128xf32>
    %335 = vector.shape_cast %334 : vector<1x1x16x128xf32> to vector<16x128xf32>
    %336 = vector.shape_cast %333 : vector<16x128xf32> to vector<1x1x16x128xf32>
    tpu.vector_store %arg4[%c0_126, %c3, %c0_127, %c0_128], %336 {strides = array<i32>} : memref<2x4x16x128xf32, #tpu.memory_space<vmem>>, vector<1x1x16x128xf32>,
    %c1_129 = arith.constant 1 : index
    %c0_130 = arith.constant 0 : index
    %c1_131 = arith.constant 1 : index
    %c0_132 = arith.constant 0 : index
    %337 = vector.load %arg1[%c1_129, %c0_130, %c1_131, %c0_132] : memref<2x3x258x128xf32, #tpu.memory_space<vmem>>, vector<1x1x256x128xf32>
    %338 = vector.shape_cast %337 : vector<1x1x256x128xf32> to vector<256x128xf32>
    %c1_133 = arith.constant 1 : index
    %c0_134 = arith.constant 0 : index
    %c2_135 = arith.constant 2 : index
    %c0_136 = arith.constant 0 : index
    %339 = vector.load %arg1[%c1_133, %c0_134, %c2_135, %c0_136] : memref<2x3x258x128xf32, #tpu.memory_space<vmem>>, vector<1x1x256x128xf32>
    %340 = vector.shape_cast %339 : vector<1x1x256x128xf32> to vector<256x128xf32>
    %c1_137 = arith.constant 1 : index
    %c0_138 = arith.constant 0 : index
    %c0_139 = arith.constant 0 : index
    %c0_140 = arith.constant 0 : index
    %341 = vector.load %arg1[%c1_137, %c0_138, %c0_139, %c0_140] : memref<2x3x258x128xf32, #tpu.memory_space<vmem>>, vector<1x1x256x128xf32>
    %342 = vector.shape_cast %341 : vector<1x1x256x128xf32> to vector<256x128xf32>
    %c127_i32_141 = arith.constant 127 : i32
    %343 = tpu.dynamic_rotate %338 by %c127_i32_141 dim 1 : vector<256x128xf32>, i32 -> vector<256x128xf32>
    %344 = arith.select %6, %338, %343 : vector<256x128xi1>, vector<256x128xf32>
    %c1_i32_142 = arith.constant 1 : i32
    %345 = tpu.dynamic_rotate %338 by %c1_i32_142 dim 1 : vector<256x128xf32>, i32 -> vector<256x128xf32>
    %346 = arith.select %4, %338, %345 : vector<256x128xi1>, vector<256x128xf32>
    %347 = arith.subf %344, %346 : vector<256x128xf32>
    %348 = arith.subf %340, %342 : vector<256x128xf32>
    %349 = arith.mulf %347, %347 : vector<256x128xf32>
    %350 = arith.mulf %348, %348 : vector<256x128xf32>
    %351 = arith.addf %349, %350 : vector<256x128xf32>
    %c1_143 = arith.constant 1 : index
    %c1_144 = arith.constant 1 : index
    %c1_145 = arith.constant 1 : index
    %c0_146 = arith.constant 0 : index
    %352 = vector.load %arg1[%c1_143, %c1_144, %c1_145, %c0_146] : memref<2x3x258x128xf32, #tpu.memory_space<vmem>>, vector<1x1x256x128xf32>
    %353 = vector.shape_cast %352 : vector<1x1x256x128xf32> to vector<256x128xf32>
    %c1_147 = arith.constant 1 : index
    %c1_148 = arith.constant 1 : index
    %c2_149 = arith.constant 2 : index
    %c0_150 = arith.constant 0 : index
    %354 = vector.load %arg1[%c1_147, %c1_148, %c2_149, %c0_150] : memref<2x3x258x128xf32, #tpu.memory_space<vmem>>, vector<1x1x256x128xf32>
    %355 = vector.shape_cast %354 : vector<1x1x256x128xf32> to vector<256x128xf32>
    %c1_151 = arith.constant 1 : index
    %c1_152 = arith.constant 1 : index
    %c0_153 = arith.constant 0 : index
    %c0_154 = arith.constant 0 : index
    %356 = vector.load %arg1[%c1_151, %c1_152, %c0_153, %c0_154] : memref<2x3x258x128xf32, #tpu.memory_space<vmem>>, vector<1x1x256x128xf32>
    %357 = vector.shape_cast %356 : vector<1x1x256x128xf32> to vector<256x128xf32>
    %c127_i32_155 = arith.constant 127 : i32
    %358 = tpu.dynamic_rotate %353 by %c127_i32_155 dim 1 : vector<256x128xf32>, i32 -> vector<256x128xf32>
    %359 = arith.select %6, %353, %358 : vector<256x128xi1>, vector<256x128xf32>
    %c1_i32_156 = arith.constant 1 : i32
    %360 = tpu.dynamic_rotate %353 by %c1_i32_156 dim 1 : vector<256x128xf32>, i32 -> vector<256x128xf32>
    %361 = arith.select %4, %353, %360 : vector<256x128xi1>, vector<256x128xf32>
    %362 = arith.subf %359, %361 : vector<256x128xf32>
    %363 = arith.subf %355, %357 : vector<256x128xf32>
    %364 = arith.mulf %362, %362 : vector<256x128xf32>
    %365 = arith.mulf %363, %363 : vector<256x128xf32>
    %366 = arith.addf %364, %365 : vector<256x128xf32>
    %367 = arith.cmpf ogt, %366, %351 : vector<256x128xf32>
    %368 = arith.select %367, %362, %347 : vector<256x128xi1>, vector<256x128xf32>
    %369 = arith.select %367, %363, %348 : vector<256x128xi1>, vector<256x128xf32>
    %370 = arith.select %367, %366, %351 : vector<256x128xi1>, vector<256x128xf32>
    %c1_157 = arith.constant 1 : index
    %c2_158 = arith.constant 2 : index
    %c1_159 = arith.constant 1 : index
    %c0_160 = arith.constant 0 : index
    %371 = vector.load %arg1[%c1_157, %c2_158, %c1_159, %c0_160] : memref<2x3x258x128xf32, #tpu.memory_space<vmem>>, vector<1x1x256x128xf32>
    %372 = vector.shape_cast %371 : vector<1x1x256x128xf32> to vector<256x128xf32>
    %c1_161 = arith.constant 1 : index
    %c2_162 = arith.constant 2 : index
    %c2_163 = arith.constant 2 : index
    %c0_164 = arith.constant 0 : index
    %373 = vector.load %arg1[%c1_161, %c2_162, %c2_163, %c0_164] : memref<2x3x258x128xf32, #tpu.memory_space<vmem>>, vector<1x1x256x128xf32>
    %374 = vector.shape_cast %373 : vector<1x1x256x128xf32> to vector<256x128xf32>
    %c1_165 = arith.constant 1 : index
    %c2_166 = arith.constant 2 : index
    %c0_167 = arith.constant 0 : index
    %c0_168 = arith.constant 0 : index
    %375 = vector.load %arg1[%c1_165, %c2_166, %c0_167, %c0_168] : memref<2x3x258x128xf32, #tpu.memory_space<vmem>>, vector<1x1x256x128xf32>
    %376 = vector.shape_cast %375 : vector<1x1x256x128xf32> to vector<256x128xf32>
    %c127_i32_169 = arith.constant 127 : i32
    %377 = tpu.dynamic_rotate %372 by %c127_i32_169 dim 1 : vector<256x128xf32>, i32 -> vector<256x128xf32>
    %378 = arith.select %6, %372, %377 : vector<256x128xi1>, vector<256x128xf32>
    %c1_i32_170 = arith.constant 1 : i32
    %379 = tpu.dynamic_rotate %372 by %c1_i32_170 dim 1 : vector<256x128xf32>, i32 -> vector<256x128xf32>
    %380 = arith.select %4, %372, %379 : vector<256x128xi1>, vector<256x128xf32>
    %381 = arith.subf %378, %380 : vector<256x128xf32>
    %382 = arith.subf %374, %376 : vector<256x128xf32>
    %383 = arith.mulf %381, %381 : vector<256x128xf32>
    %384 = arith.mulf %382, %382 : vector<256x128xf32>
    %385 = arith.addf %383, %384 : vector<256x128xf32>
    %386 = arith.cmpf ogt, %385, %370 : vector<256x128xf32>
    %387 = arith.select %386, %381, %368 : vector<256x128xi1>, vector<256x128xf32>
    %388 = arith.select %386, %382, %369 : vector<256x128xi1>, vector<256x128xf32>
    %389 = arith.select %386, %385, %370 : vector<256x128xi1>, vector<256x128xf32>
    %390 = math.sqrt %389 : vector<256x128xf32>
    %391 = math.absf %387 : vector<256x128xf32>
    %392 = math.absf %388 : vector<256x128xf32>
    %393 = arith.maximumf %391, %392 : vector<256x128xf32>
    %394 = arith.minimumf %391, %392 : vector<256x128xf32>
    %cst_171 = arith.constant 9.99999996E-13 : f32
    %395 = vector.broadcast %cst_171 : f32 to vector<256x128xf32>
    %396 = arith.addf %393, %395 : vector<256x128xf32>
    %397 = tpu.reciprocal %396 {approx = true} : vector<256x128xf32> -> vector<256x128xf32>
    %398 = arith.mulf %394, %397 : vector<256x128xf32>
    %399 = arith.mulf %398, %398 : vector<256x128xf32>
    %cst_172 = arith.constant -0.0464964733 : f32
    %400 = vector.broadcast %cst_172 : f32 to vector<256x128xf32>
    %401 = arith.mulf %400, %399 : vector<256x128xf32>
    %cst_173 = arith.constant 0.159314215 : f32
    %402 = vector.broadcast %cst_173 : f32 to vector<256x128xf32>
    %403 = arith.addf %401, %402 : vector<256x128xf32>
    %404 = arith.mulf %403, %399 : vector<256x128xf32>
    %cst_174 = arith.constant 0.327622771 : f32
    %405 = vector.broadcast %cst_174 : f32 to vector<256x128xf32>
    %406 = arith.subf %404, %405 : vector<256x128xf32>
    %407 = arith.mulf %406, %399 : vector<256x128xf32>
    %408 = arith.mulf %407, %398 : vector<256x128xf32>
    %409 = arith.addf %408, %398 : vector<256x128xf32>
    %410 = arith.cmpf ogt, %392, %391 : vector<256x128xf32>
    %cst_175 = arith.constant 1.57079637 : f32
    %411 = vector.broadcast %cst_175 : f32 to vector<256x128xf32>
    %412 = arith.subf %411, %409 : vector<256x128xf32>
    %413 = arith.select %410, %412, %409 : vector<256x128xi1>, vector<256x128xf32>
    %414 = arith.mulf %387, %388 : vector<256x128xf32>
    %cst_176 = arith.constant 0.000000e+00 : f32
    %415 = vector.broadcast %cst_176 : f32 to vector<256x128xf32>
    %416 = arith.cmpf olt, %414, %415 : vector<256x128xf32>
    %cst_177 = arith.constant 3.14159274 : f32
    %417 = vector.broadcast %cst_177 : f32 to vector<256x128xf32>
    %418 = arith.subf %417, %413 : vector<256x128xf32>
    %419 = arith.select %416, %418, %413 : vector<256x128xi1>, vector<256x128xf32>
    %cst_178 = arith.constant 3.14159274 : f32
    %420 = vector.broadcast %cst_178 : f32 to vector<256x128xf32>
    %421 = arith.cmpf oge, %419, %420 : vector<256x128xf32>
    %cst_179 = arith.constant 3.14159274 : f32
    %422 = vector.broadcast %cst_179 : f32 to vector<256x128xf32>
    %423 = arith.subf %419, %422 : vector<256x128xf32>
    %424 = arith.select %421, %423, %419 : vector<256x128xi1>, vector<256x128xf32>
    %cst_180 = arith.constant 2.86478901 : f32
    %425 = vector.broadcast %cst_180 : f32 to vector<256x128xf32>
    %426 = arith.mulf %424, %425 : vector<256x128xf32>
    %cst_181 = arith.constant 5.000000e-01 : f32
    %427 = vector.broadcast %cst_181 : f32 to vector<256x128xf32>
    %428 = arith.subf %426, %427 : vector<256x128xf32>
    %429 = math.floor %428 : vector<256x128xf32>
    %430 = arith.subf %428, %429 : vector<256x128xf32>
    %431 = arith.mulf %390, %430 : vector<256x128xf32>
    %432 = arith.subf %390, %431 : vector<256x128xf32>
    %433 = arith.fptosi %429 : vector<256x128xf32> to vector<256x128xi32>
    %c0_i32_182 = arith.constant 0 : i32
    %434 = vector.broadcast %c0_i32_182 : i32 to vector<256x128xi32>
    %435 = arith.cmpi slt, %433, %434 : vector<256x128xi32>
    %c9_i32_183 = arith.constant 9 : i32
    %436 = vector.broadcast %c9_i32_183 : i32 to vector<256x128xi32>
    %437 = arith.addi %433, %436 : vector<256x128xi32>
    %438 = arith.select %435, %437, %433 : vector<256x128xi1>, vector<256x128xi32>
    %c0_i32_184 = arith.constant 0 : i32
    %439 = vector.broadcast %c0_i32_184 : i32 to vector<256x128xi32>
    %440 = arith.cmpi eq, %438, %439 : vector<256x128xi32>
    %cst_185 = arith.constant 0.000000e+00 : f32
    %441 = vector.broadcast %cst_185 : f32 to vector<256x128xf32>
    %442 = arith.select %440, %432, %441 : vector<256x128xi1>, vector<256x128xf32>
    %c8_i32_186 = arith.constant 8 : i32
    %443 = vector.broadcast %c8_i32_186 : i32 to vector<256x128xi32>
    %444 = arith.cmpi eq, %438, %443 : vector<256x128xi32>
    %cst_187 = arith.constant 0.000000e+00 : f32
    %445 = vector.broadcast %cst_187 : f32 to vector<256x128xf32>
    %446 = arith.select %444, %431, %445 : vector<256x128xi1>, vector<256x128xf32>
    %447 = arith.addf %442, %446 : vector<256x128xf32>
    %448 = arith.truncf %447 : vector<256x128xf32> to vector<256x128xbf16>
    %cst_188 = arith.constant dense<0.000000e+00> : vector<32x128xf32>
    %449 = tpu.matmul %0, %448, %cst_188 {dimension_numbers = #tpu.dot_dimension_numbers<[1], [0], [0], [1], [0, 0, 1, 1], [], []>} : vector<32x256xbf16>, vector<256x128xbf16>, vector<32x128xf32> -> vector<32x128xf32>
    %450 = arith.truncf %449 : vector<32x128xf32> to vector<32x128xbf16>
    %c1_i32_189 = arith.constant 1 : i32
    %451 = vector.broadcast %c1_i32_189 : i32 to vector<256x128xi32>
    %452 = arith.cmpi eq, %438, %451 : vector<256x128xi32>
    %cst_190 = arith.constant 0.000000e+00 : f32
    %453 = vector.broadcast %cst_190 : f32 to vector<256x128xf32>
    %454 = arith.select %452, %432, %453 : vector<256x128xi1>, vector<256x128xf32>
    %c0_i32_191 = arith.constant 0 : i32
    %455 = vector.broadcast %c0_i32_191 : i32 to vector<256x128xi32>
    %456 = arith.cmpi eq, %438, %455 : vector<256x128xi32>
    %cst_192 = arith.constant 0.000000e+00 : f32
    %457 = vector.broadcast %cst_192 : f32 to vector<256x128xf32>
    %458 = arith.select %456, %431, %457 : vector<256x128xi1>, vector<256x128xf32>
    %459 = arith.addf %454, %458 : vector<256x128xf32>
    %460 = arith.truncf %459 : vector<256x128xf32> to vector<256x128xbf16>
    %cst_193 = arith.constant dense<0.000000e+00> : vector<32x128xf32>
    %461 = tpu.matmul %0, %460, %cst_193 {dimension_numbers = #tpu.dot_dimension_numbers<[1], [0], [0], [1], [0, 0, 1, 1], [], []>} : vector<32x256xbf16>, vector<256x128xbf16>, vector<32x128xf32> -> vector<32x128xf32>
    %462 = arith.truncf %461 : vector<32x128xf32> to vector<32x128xbf16>
    %c2_i32_194 = arith.constant 2 : i32
    %463 = vector.broadcast %c2_i32_194 : i32 to vector<256x128xi32>
    %464 = arith.cmpi eq, %438, %463 : vector<256x128xi32>
    %cst_195 = arith.constant 0.000000e+00 : f32
    %465 = vector.broadcast %cst_195 : f32 to vector<256x128xf32>
    %466 = arith.select %464, %432, %465 : vector<256x128xi1>, vector<256x128xf32>
    %c1_i32_196 = arith.constant 1 : i32
    %467 = vector.broadcast %c1_i32_196 : i32 to vector<256x128xi32>
    %468 = arith.cmpi eq, %438, %467 : vector<256x128xi32>
    %cst_197 = arith.constant 0.000000e+00 : f32
    %469 = vector.broadcast %cst_197 : f32 to vector<256x128xf32>
    %470 = arith.select %468, %431, %469 : vector<256x128xi1>, vector<256x128xf32>
    %471 = arith.addf %466, %470 : vector<256x128xf32>
    %472 = arith.truncf %471 : vector<256x128xf32> to vector<256x128xbf16>
    %cst_198 = arith.constant dense<0.000000e+00> : vector<32x128xf32>
    %473 = tpu.matmul %0, %472, %cst_198 {dimension_numbers = #tpu.dot_dimension_numbers<[1], [0], [0], [1], [0, 0, 1, 1], [], []>} : vector<32x256xbf16>, vector<256x128xbf16>, vector<32x128xf32> -> vector<32x128xf32>
    %474 = arith.truncf %473 : vector<32x128xf32> to vector<32x128xbf16>
    %c3_i32_199 = arith.constant 3 : i32
    %475 = vector.broadcast %c3_i32_199 : i32 to vector<256x128xi32>
    %476 = arith.cmpi eq, %438, %475 : vector<256x128xi32>
    %cst_200 = arith.constant 0.000000e+00 : f32
    %477 = vector.broadcast %cst_200 : f32 to vector<256x128xf32>
    %478 = arith.select %476, %432, %477 : vector<256x128xi1>, vector<256x128xf32>
    %c2_i32_201 = arith.constant 2 : i32
    %479 = vector.broadcast %c2_i32_201 : i32 to vector<256x128xi32>
    %480 = arith.cmpi eq, %438, %479 : vector<256x128xi32>
    %cst_202 = arith.constant 0.000000e+00 : f32
    %481 = vector.broadcast %cst_202 : f32 to vector<256x128xf32>
    %482 = arith.select %480, %431, %481 : vector<256x128xi1>, vector<256x128xf32>
    %483 = arith.addf %478, %482 : vector<256x128xf32>
    %484 = arith.truncf %483 : vector<256x128xf32> to vector<256x128xbf16>
    %cst_203 = arith.constant dense<0.000000e+00> : vector<32x128xf32>
    %485 = tpu.matmul %0, %484, %cst_203 {dimension_numbers = #tpu.dot_dimension_numbers<[1], [0], [0], [1], [0, 0, 1, 1], [], []>} : vector<32x256xbf16>, vector<256x128xbf16>, vector<32x128xf32> -> vector<32x128xf32>
    %486 = arith.truncf %485 : vector<32x128xf32> to vector<32x128xbf16>
    %c4_i32_204 = arith.constant 4 : i32
    %487 = vector.broadcast %c4_i32_204 : i32 to vector<256x128xi32>
    %488 = arith.cmpi eq, %438, %487 : vector<256x128xi32>
    %cst_205 = arith.constant 0.000000e+00 : f32
    %489 = vector.broadcast %cst_205 : f32 to vector<256x128xf32>
    %490 = arith.select %488, %432, %489 : vector<256x128xi1>, vector<256x128xf32>
    %c3_i32_206 = arith.constant 3 : i32
    %491 = vector.broadcast %c3_i32_206 : i32 to vector<256x128xi32>
    %492 = arith.cmpi eq, %438, %491 : vector<256x128xi32>
    %cst_207 = arith.constant 0.000000e+00 : f32
    %493 = vector.broadcast %cst_207 : f32 to vector<256x128xf32>
    %494 = arith.select %492, %431, %493 : vector<256x128xi1>, vector<256x128xf32>
    %495 = arith.addf %490, %494 : vector<256x128xf32>
    %496 = arith.truncf %495 : vector<256x128xf32> to vector<256x128xbf16>
    %cst_208 = arith.constant dense<0.000000e+00> : vector<32x128xf32>
    %497 = tpu.matmul %0, %496, %cst_208 {dimension_numbers = #tpu.dot_dimension_numbers<[1], [0], [0], [1], [0, 0, 1, 1], [], []>} : vector<32x256xbf16>, vector<256x128xbf16>, vector<32x128xf32> -> vector<32x128xf32>
    %498 = arith.truncf %497 : vector<32x128xf32> to vector<32x128xbf16>
    %c5_i32_209 = arith.constant 5 : i32
    %499 = vector.broadcast %c5_i32_209 : i32 to vector<256x128xi32>
    %500 = arith.cmpi eq, %438, %499 : vector<256x128xi32>
    %cst_210 = arith.constant 0.000000e+00 : f32
    %501 = vector.broadcast %cst_210 : f32 to vector<256x128xf32>
    %502 = arith.select %500, %432, %501 : vector<256x128xi1>, vector<256x128xf32>
    %c4_i32_211 = arith.constant 4 : i32
    %503 = vector.broadcast %c4_i32_211 : i32 to vector<256x128xi32>
    %504 = arith.cmpi eq, %438, %503 : vector<256x128xi32>
    %cst_212 = arith.constant 0.000000e+00 : f32
    %505 = vector.broadcast %cst_212 : f32 to vector<256x128xf32>
    %506 = arith.select %504, %431, %505 : vector<256x128xi1>, vector<256x128xf32>
    %507 = arith.addf %502, %506 : vector<256x128xf32>
    %508 = arith.truncf %507 : vector<256x128xf32> to vector<256x128xbf16>
    %cst_213 = arith.constant dense<0.000000e+00> : vector<32x128xf32>
    %509 = tpu.matmul %0, %508, %cst_213 {dimension_numbers = #tpu.dot_dimension_numbers<[1], [0], [0], [1], [0, 0, 1, 1], [], []>} : vector<32x256xbf16>, vector<256x128xbf16>, vector<32x128xf32> -> vector<32x128xf32>
    %510 = arith.truncf %509 : vector<32x128xf32> to vector<32x128xbf16>
    %c6_i32_214 = arith.constant 6 : i32
    %511 = vector.broadcast %c6_i32_214 : i32 to vector<256x128xi32>
    %512 = arith.cmpi eq, %438, %511 : vector<256x128xi32>
    %cst_215 = arith.constant 0.000000e+00 : f32
    %513 = vector.broadcast %cst_215 : f32 to vector<256x128xf32>
    %514 = arith.select %512, %432, %513 : vector<256x128xi1>, vector<256x128xf32>
    %c5_i32_216 = arith.constant 5 : i32
    %515 = vector.broadcast %c5_i32_216 : i32 to vector<256x128xi32>
    %516 = arith.cmpi eq, %438, %515 : vector<256x128xi32>
    %cst_217 = arith.constant 0.000000e+00 : f32
    %517 = vector.broadcast %cst_217 : f32 to vector<256x128xf32>
    %518 = arith.select %516, %431, %517 : vector<256x128xi1>, vector<256x128xf32>
    %519 = arith.addf %514, %518 : vector<256x128xf32>
    %520 = arith.truncf %519 : vector<256x128xf32> to vector<256x128xbf16>
    %cst_218 = arith.constant dense<0.000000e+00> : vector<32x128xf32>
    %521 = tpu.matmul %0, %520, %cst_218 {dimension_numbers = #tpu.dot_dimension_numbers<[1], [0], [0], [1], [0, 0, 1, 1], [], []>} : vector<32x256xbf16>, vector<256x128xbf16>, vector<32x128xf32> -> vector<32x128xf32>
    %522 = arith.truncf %521 : vector<32x128xf32> to vector<32x128xbf16>
    %c7_i32_219 = arith.constant 7 : i32
    %523 = vector.broadcast %c7_i32_219 : i32 to vector<256x128xi32>
    %524 = arith.cmpi eq, %438, %523 : vector<256x128xi32>
    %cst_220 = arith.constant 0.000000e+00 : f32
    %525 = vector.broadcast %cst_220 : f32 to vector<256x128xf32>
    %526 = arith.select %524, %432, %525 : vector<256x128xi1>, vector<256x128xf32>
    %c6_i32_221 = arith.constant 6 : i32
    %527 = vector.broadcast %c6_i32_221 : i32 to vector<256x128xi32>
    %528 = arith.cmpi eq, %438, %527 : vector<256x128xi32>
    %cst_222 = arith.constant 0.000000e+00 : f32
    %529 = vector.broadcast %cst_222 : f32 to vector<256x128xf32>
    %530 = arith.select %528, %431, %529 : vector<256x128xi1>, vector<256x128xf32>
    %531 = arith.addf %526, %530 : vector<256x128xf32>
    %532 = arith.truncf %531 : vector<256x128xf32> to vector<256x128xbf16>
    %cst_223 = arith.constant dense<0.000000e+00> : vector<32x128xf32>
    %533 = tpu.matmul %0, %532, %cst_223 {dimension_numbers = #tpu.dot_dimension_numbers<[1], [0], [0], [1], [0, 0, 1, 1], [], []>} : vector<32x256xbf16>, vector<256x128xbf16>, vector<32x128xf32> -> vector<32x128xf32>
    %534 = arith.truncf %533 : vector<32x128xf32> to vector<32x128xbf16>
    %c8_i32_224 = arith.constant 8 : i32
    %535 = vector.broadcast %c8_i32_224 : i32 to vector<256x128xi32>
    %536 = arith.cmpi eq, %438, %535 : vector<256x128xi32>
    %cst_225 = arith.constant 0.000000e+00 : f32
    %537 = vector.broadcast %cst_225 : f32 to vector<256x128xf32>
    %538 = arith.select %536, %432, %537 : vector<256x128xi1>, vector<256x128xf32>
    %c7_i32_226 = arith.constant 7 : i32
    %539 = vector.broadcast %c7_i32_226 : i32 to vector<256x128xi32>
    %540 = arith.cmpi eq, %438, %539 : vector<256x128xi32>
    %cst_227 = arith.constant 0.000000e+00 : f32
    %541 = vector.broadcast %cst_227 : f32 to vector<256x128xf32>
    %542 = arith.select %540, %431, %541 : vector<256x128xi1>, vector<256x128xf32>
    %543 = arith.addf %538, %542 : vector<256x128xf32>
    %544 = arith.truncf %543 : vector<256x128xf32> to vector<256x128xbf16>
    %cst_228 = arith.constant dense<0.000000e+00> : vector<32x128xf32>
    %545 = tpu.matmul %0, %544, %cst_228 {dimension_numbers = #tpu.dot_dimension_numbers<[1], [0], [0], [1], [0, 0, 1, 1], [], []>} : vector<32x256xbf16>, vector<256x128xbf16>, vector<32x128xf32> -> vector<32x128xf32>
    %546 = arith.truncf %545 : vector<32x128xf32> to vector<32x128xbf16>
    %547 = tpu.concatenate %450, %462, %474, %486, %498, %510, %522, %534, %546 in 0 : vector<32x128xbf16>, vector<32x128xbf16>, vector<32x128xbf16>, vector<32x128xbf16>, vector<32x128xbf16>, vector<32x128xbf16>, vector<32x128xbf16>, vector<32x128xbf16>, vector<32x128xbf16> -> vector<288x128xbf16>
    %cst_229 = arith.constant dense<0.000000e+00> : vector<288x128xf32>
    %548 = tpu.matmul %547, %1, %cst_229 {dimension_numbers = #tpu.dot_dimension_numbers<[1], [0], [0], [1], [0, 0, 1, 1], [], []>} : vector<288x128xbf16>, vector<128x128xbf16>, vector<288x128xf32> -> vector<288x128xf32>
    %549 = vector.extract_strided_slice %548 {offsets = [0, 0], sizes = [16, 128], strides = [1, 1]} : vector<288x128xf32> to vector<16x128xf32>
    %550 = vector.extract_strided_slice %548 {offsets = [16, 0], sizes = [16, 128], strides = [1, 1]} : vector<288x128xf32> to vector<16x128xf32>
    %551 = vector.extract_strided_slice %548 {offsets = [32, 0], sizes = [16, 128], strides = [1, 1]} : vector<288x128xf32> to vector<16x128xf32>
    %c8_i32_230 = arith.constant 8 : i32
    %552 = tpu.dynamic_rotate %551 by %c8_i32_230 dim 1 : vector<16x128xf32>, i32 -> vector<16x128xf32>
    %553 = arith.addf %549, %552 : vector<16x128xf32>
    %554 = vector.extract_strided_slice %548 {offsets = [48, 0], sizes = [16, 128], strides = [1, 1]} : vector<288x128xf32> to vector<16x128xf32>
    %c8_i32_231 = arith.constant 8 : i32
    %555 = tpu.dynamic_rotate %554 by %c8_i32_231 dim 1 : vector<16x128xf32>, i32 -> vector<16x128xf32>
    %556 = arith.addf %550, %555 : vector<16x128xf32>
    %557 = vector.extract_strided_slice %548 {offsets = [64, 0], sizes = [16, 128], strides = [1, 1]} : vector<288x128xf32> to vector<16x128xf32>
    %c16_i32_232 = arith.constant 16 : i32
    %558 = tpu.dynamic_rotate %557 by %c16_i32_232 dim 1 : vector<16x128xf32>, i32 -> vector<16x128xf32>
    %559 = arith.addf %553, %558 : vector<16x128xf32>
    %560 = vector.extract_strided_slice %548 {offsets = [80, 0], sizes = [16, 128], strides = [1, 1]} : vector<288x128xf32> to vector<16x128xf32>
    %c16_i32_233 = arith.constant 16 : i32
    %561 = tpu.dynamic_rotate %560 by %c16_i32_233 dim 1 : vector<16x128xf32>, i32 -> vector<16x128xf32>
    %562 = arith.addf %556, %561 : vector<16x128xf32>
    %563 = vector.extract_strided_slice %548 {offsets = [96, 0], sizes = [16, 128], strides = [1, 1]} : vector<288x128xf32> to vector<16x128xf32>
    %c24_i32_234 = arith.constant 24 : i32
    %564 = tpu.dynamic_rotate %563 by %c24_i32_234 dim 1 : vector<16x128xf32>, i32 -> vector<16x128xf32>
    %565 = arith.addf %559, %564 : vector<16x128xf32>
    %566 = vector.extract_strided_slice %548 {offsets = [112, 0], sizes = [16, 128], strides = [1, 1]} : vector<288x128xf32> to vector<16x128xf32>
    %c24_i32_235 = arith.constant 24 : i32
    %567 = tpu.dynamic_rotate %566 by %c24_i32_235 dim 1 : vector<16x128xf32>, i32 -> vector<16x128xf32>
    %568 = arith.addf %562, %567 : vector<16x128xf32>
    %569 = vector.extract_strided_slice %548 {offsets = [128, 0], sizes = [16, 128], strides = [1, 1]} : vector<288x128xf32> to vector<16x128xf32>
    %c32_i32_236 = arith.constant 32 : i32
    %570 = tpu.dynamic_rotate %569 by %c32_i32_236 dim 1 : vector<16x128xf32>, i32 -> vector<16x128xf32>
    %571 = arith.addf %565, %570 : vector<16x128xf32>
    %572 = vector.extract_strided_slice %548 {offsets = [144, 0], sizes = [16, 128], strides = [1, 1]} : vector<288x128xf32> to vector<16x128xf32>
    %c32_i32_237 = arith.constant 32 : i32
    %573 = tpu.dynamic_rotate %572 by %c32_i32_237 dim 1 : vector<16x128xf32>, i32 -> vector<16x128xf32>
    %574 = arith.addf %568, %573 : vector<16x128xf32>
    %575 = vector.extract_strided_slice %548 {offsets = [160, 0], sizes = [16, 128], strides = [1, 1]} : vector<288x128xf32> to vector<16x128xf32>
    %c40_i32_238 = arith.constant 40 : i32
    %576 = tpu.dynamic_rotate %575 by %c40_i32_238 dim 1 : vector<16x128xf32>, i32 -> vector<16x128xf32>
    %577 = arith.addf %571, %576 : vector<16x128xf32>
    %578 = vector.extract_strided_slice %548 {offsets = [176, 0], sizes = [16, 128], strides = [1, 1]} : vector<288x128xf32> to vector<16x128xf32>
    %c40_i32_239 = arith.constant 40 : i32
    %579 = tpu.dynamic_rotate %578 by %c40_i32_239 dim 1 : vector<16x128xf32>, i32 -> vector<16x128xf32>
    %580 = arith.addf %574, %579 : vector<16x128xf32>
    %581 = vector.extract_strided_slice %548 {offsets = [192, 0], sizes = [16, 128], strides = [1, 1]} : vector<288x128xf32> to vector<16x128xf32>
    %c48_i32_240 = arith.constant 48 : i32
    %582 = tpu.dynamic_rotate %581 by %c48_i32_240 dim 1 : vector<16x128xf32>, i32 -> vector<16x128xf32>
    %583 = arith.addf %577, %582 : vector<16x128xf32>
    %584 = vector.extract_strided_slice %548 {offsets = [208, 0], sizes = [16, 128], strides = [1, 1]} : vector<288x128xf32> to vector<16x128xf32>
    %c48_i32_241 = arith.constant 48 : i32
    %585 = tpu.dynamic_rotate %584 by %c48_i32_241 dim 1 : vector<16x128xf32>, i32 -> vector<16x128xf32>
    %586 = arith.addf %580, %585 : vector<16x128xf32>
    %587 = vector.extract_strided_slice %548 {offsets = [224, 0], sizes = [16, 128], strides = [1, 1]} : vector<288x128xf32> to vector<16x128xf32>
    %c56_i32_242 = arith.constant 56 : i32
    %588 = tpu.dynamic_rotate %587 by %c56_i32_242 dim 1 : vector<16x128xf32>, i32 -> vector<16x128xf32>
    %589 = arith.addf %583, %588 : vector<16x128xf32>
    %590 = vector.extract_strided_slice %548 {offsets = [240, 0], sizes = [16, 128], strides = [1, 1]} : vector<288x128xf32> to vector<16x128xf32>
    %c56_i32_243 = arith.constant 56 : i32
    %591 = tpu.dynamic_rotate %590 by %c56_i32_243 dim 1 : vector<16x128xf32>, i32 -> vector<16x128xf32>
    %592 = arith.addf %586, %591 : vector<16x128xf32>
    %593 = vector.extract_strided_slice %548 {offsets = [256, 0], sizes = [16, 128], strides = [1, 1]} : vector<288x128xf32> to vector<16x128xf32>
    %c64_i32_244 = arith.constant 64 : i32
    %594 = tpu.dynamic_rotate %593 by %c64_i32_244 dim 1 : vector<16x128xf32>, i32 -> vector<16x128xf32>
    %595 = arith.addf %589, %594 : vector<16x128xf32>
    %596 = vector.extract_strided_slice %548 {offsets = [272, 0], sizes = [16, 128], strides = [1, 1]} : vector<288x128xf32> to vector<16x128xf32>
    %c64_i32_245 = arith.constant 64 : i32
    %597 = tpu.dynamic_rotate %596 by %c64_i32_245 dim 1 : vector<16x128xf32>, i32 -> vector<16x128xf32>
    %598 = arith.addf %592, %597 : vector<16x128xf32>
    %c127_i32_246 = arith.constant 127 : i32
    %599 = tpu.dynamic_rotate %595 by %c127_i32_246 dim 1 : vector<16x128xf32>, i32 -> vector<16x128xf32>
    %c127_i32_247 = arith.constant 127 : i32
    %600 = tpu.dynamic_rotate %598 by %c127_i32_247 dim 1 : vector<16x128xf32>, i32 -> vector<16x128xf32>
    %601 = arith.mulf %595, %595 : vector<16x128xf32>
    %602 = arith.mulf %599, %599 : vector<16x128xf32>
    %603 = arith.addf %601, %602 : vector<16x128xf32>
    %604 = arith.mulf %598, %598 : vector<16x128xf32>
    %605 = arith.addf %603, %604 : vector<16x128xf32>
    %606 = arith.mulf %600, %600 : vector<16x128xf32>
    %607 = arith.addf %605, %606 : vector<16x128xf32>
    %c120_i32_248 = arith.constant 120 : i32
    %608 = tpu.dynamic_rotate %607 by %c120_i32_248 dim 1 : vector<16x128xf32>, i32 -> vector<16x128xf32>
    %609 = arith.addf %607, %608 : vector<16x128xf32>
    %c112_i32_249 = arith.constant 112 : i32
    %610 = tpu.dynamic_rotate %609 by %c112_i32_249 dim 1 : vector<16x128xf32>, i32 -> vector<16x128xf32>
    %611 = arith.addf %609, %610 : vector<16x128xf32>
    %c96_i32_250 = arith.constant 96 : i32
    %612 = tpu.dynamic_rotate %611 by %c96_i32_250 dim 1 : vector<16x128xf32>, i32 -> vector<16x128xf32>
    %613 = arith.addf %611, %612 : vector<16x128xf32>
    %c64_i32_251 = arith.constant 64 : i32
    %614 = tpu.dynamic_rotate %613 by %c64_i32_251 dim 1 : vector<16x128xf32>, i32 -> vector<16x128xf32>
    %615 = arith.addf %613, %614 : vector<16x128xf32>
    %616 = math.sqrt %615 : vector<16x128xf32>
    %cst_252 = arith.constant 3.600000e+00 : f32
    %617 = vector.broadcast %cst_252 : f32 to vector<16x128xf32>
    %618 = arith.addf %616, %617 : vector<16x128xf32>
    %619 = tpu.reciprocal %618 {approx = true} : vector<16x128xf32> -> vector<16x128xf32>
    %620 = arith.mulf %595, %619 : vector<16x128xf32>
    %cst_253 = arith.constant 2.000000e-01 : f32
    %621 = vector.broadcast %cst_253 : f32 to vector<16x128xf32>
    %622 = arith.minimumf %620, %621 : vector<16x128xf32>
    %623 = arith.mulf %599, %619 : vector<16x128xf32>
    %cst_254 = arith.constant 2.000000e-01 : f32
    %624 = vector.broadcast %cst_254 : f32 to vector<16x128xf32>
    %625 = arith.minimumf %623, %624 : vector<16x128xf32>
    %626 = arith.mulf %598, %619 : vector<16x128xf32>
    %cst_255 = arith.constant 2.000000e-01 : f32
    %627 = vector.broadcast %cst_255 : f32 to vector<16x128xf32>
    %628 = arith.minimumf %626, %627 : vector<16x128xf32>
    %629 = arith.mulf %600, %619 : vector<16x128xf32>
    %cst_256 = arith.constant 2.000000e-01 : f32
    %630 = vector.broadcast %cst_256 : f32 to vector<16x128xf32>
    %631 = arith.minimumf %629, %630 : vector<16x128xf32>
    %632 = arith.mulf %622, %622 : vector<16x128xf32>
    %633 = arith.mulf %625, %625 : vector<16x128xf32>
    %634 = arith.addf %632, %633 : vector<16x128xf32>
    %635 = arith.mulf %628, %628 : vector<16x128xf32>
    %636 = arith.addf %634, %635 : vector<16x128xf32>
    %637 = arith.mulf %631, %631 : vector<16x128xf32>
    %638 = arith.addf %636, %637 : vector<16x128xf32>
    %c120_i32_257 = arith.constant 120 : i32
    %639 = tpu.dynamic_rotate %638 by %c120_i32_257 dim 1 : vector<16x128xf32>, i32 -> vector<16x128xf32>
    %640 = arith.addf %638, %639 : vector<16x128xf32>
    %c112_i32_258 = arith.constant 112 : i32
    %641 = tpu.dynamic_rotate %640 by %c112_i32_258 dim 1 : vector<16x128xf32>, i32 -> vector<16x128xf32>
    %642 = arith.addf %640, %641 : vector<16x128xf32>
    %c96_i32_259 = arith.constant 96 : i32
    %643 = tpu.dynamic_rotate %642 by %c96_i32_259 dim 1 : vector<16x128xf32>, i32 -> vector<16x128xf32>
    %644 = arith.addf %642, %643 : vector<16x128xf32>
    %c64_i32_260 = arith.constant 64 : i32
    %645 = tpu.dynamic_rotate %644 by %c64_i32_260 dim 1 : vector<16x128xf32>, i32 -> vector<16x128xf32>
    %646 = arith.addf %644, %645 : vector<16x128xf32>
    %647 = math.sqrt %646 : vector<16x128xf32>
    %cst_261 = arith.constant 1.000000e-03 : f32
    %648 = vector.broadcast %cst_261 : f32 to vector<16x128xf32>
    %649 = arith.addf %647, %648 : vector<16x128xf32>
    %650 = tpu.reciprocal %649 {approx = true} : vector<16x128xf32> -> vector<16x128xf32>
    %651 = arith.mulf %622, %650 : vector<16x128xf32>
    %c1_262 = arith.constant 1 : index
    %c0_263 = arith.constant 0 : index
    %c0_264 = arith.constant 0 : index
    %c0_265 = arith.constant 0 : index
    %652 = vector.load %arg4[%c1_262, %c0_263, %c0_264, %c0_265] : memref<2x4x16x128xf32, #tpu.memory_space<vmem>>, vector<1x1x16x128xf32>
    %653 = vector.shape_cast %652 : vector<1x1x16x128xf32> to vector<16x128xf32>
    %654 = vector.shape_cast %651 : vector<16x128xf32> to vector<1x1x16x128xf32>
    tpu.vector_store %arg4[%c1_262, %c0_263, %c0_264, %c0_265], %654 {strides = array<i32>} : memref<2x4x16x128xf32, #tpu.memory_space<vmem>>, vector<1x1x16x128xf32>,
    %655 = arith.mulf %625, %650 : vector<16x128xf32>
    %c1_266 = arith.constant 1 : index
    %c1_267 = arith.constant 1 : index
    %c0_268 = arith.constant 0 : index
    %c0_269 = arith.constant 0 : index
    %656 = vector.load %arg4[%c1_266, %c1_267, %c0_268, %c0_269] : memref<2x4x16x128xf32, #tpu.memory_space<vmem>>, vector<1x1x16x128xf32>
    %657 = vector.shape_cast %656 : vector<1x1x16x128xf32> to vector<16x128xf32>
    %658 = vector.shape_cast %655 : vector<16x128xf32> to vector<1x1x16x128xf32>
    tpu.vector_store %arg4[%c1_266, %c1_267, %c0_268, %c0_269], %658 {strides = array<i32>} : memref<2x4x16x128xf32, #tpu.memory_space<vmem>>, vector<1x1x16x128xf32>,
    %659 = arith.mulf %628, %650 : vector<16x128xf32>
    %c1_270 = arith.constant 1 : index
    %c2_271 = arith.constant 2 : index
    %c0_272 = arith.constant 0 : index
    %c0_273 = arith.constant 0 : index
    %660 = vector.load %arg4[%c1_270, %c2_271, %c0_272, %c0_273] : memref<2x4x16x128xf32, #tpu.memory_space<vmem>>, vector<1x1x16x128xf32>
    %661 = vector.shape_cast %660 : vector<1x1x16x128xf32> to vector<16x128xf32>
    %662 = vector.shape_cast %659 : vector<16x128xf32> to vector<1x1x16x128xf32>
    tpu.vector_store %arg4[%c1_270, %c2_271, %c0_272, %c0_273], %662 {strides = array<i32>} : memref<2x4x16x128xf32, #tpu.memory_space<vmem>>, vector<1x1x16x128xf32>,
    %663 = arith.mulf %631, %650 : vector<16x128xf32>
    %c1_274 = arith.constant 1 : index
    %c3_275 = arith.constant 3 : index
    %c0_276 = arith.constant 0 : index
    %c0_277 = arith.constant 0 : index
    %664 = vector.load %arg4[%c1_274, %c3_275, %c0_276, %c0_277] : memref<2x4x16x128xf32, #tpu.memory_space<vmem>>, vector<1x1x16x128xf32>
    %665 = vector.shape_cast %664 : vector<1x1x16x128xf32> to vector<16x128xf32>
    %666 = vector.shape_cast %663 : vector<16x128xf32> to vector<1x1x16x128xf32>
    tpu.vector_store %arg4[%c1_274, %c3_275, %c0_276, %c0_277], %666 {strides = array<i32>} : memref<2x4x16x128xf32, #tpu.memory_space<vmem>>, vector<1x1x16x128xf32>,
    return
  }
  func.func @transform_0(%arg0: i32) -> (i32, i32, i32, i32) {
    %c0_i32 = arith.constant 0 : i32
    %c0_i32_0 = arith.constant 0 : i32
    %c0_i32_1 = arith.constant 0 : i32
    %c0_i32_2 = arith.constant 0 : i32
    return %arg0, %c0_i32, %c0_i32_0, %c0_i32_1 : i32, i32, i32, i32
  }
  func.func @transform_1(%arg0: i32) -> (i32, i32) {
    %c0_i32 = arith.constant 0 : i32
    %c0_i32_0 = arith.constant 0 : i32
    %c0_i32_1 = arith.constant 0 : i32
    return %c0_i32, %c0_i32_0 : i32, i32
  }
  func.func @transform_2(%arg0: i32) -> (i32, i32) {
    %c0_i32 = arith.constant 0 : i32
    %c0_i32_0 = arith.constant 0 : i32
    %c0_i32_1 = arith.constant 0 : i32
    return %c0_i32, %c0_i32_0 : i32, i32
  }
  func.func @transform_3(%arg0: i32) -> (i32, i32, i32, i32) {
    %c0_i32 = arith.constant 0 : i32
    %c0_i32_0 = arith.constant 0 : i32
    %c0_i32_1 = arith.constant 0 : i32
    %c0_i32_2 = arith.constant 0 : i32
    return %arg0, %c0_i32, %c0_i32_0, %c0_i32_1 : i32, i32, i32, i32
  }
}

</mosaic_0001>

<llo_original>
// kernel: hog_features.1
$region0: #{hog_features.1}
  #allocation0 [shape = 'u32[]', space=smem, size = 0x4, offset = 0x4, fixed_abs, tag = 'smem constant byte address 0x4 - core index']
  #allocation1 [shape = 'u32[144,128]{1,0:T(1,128)}', space=vmem, size = 0x12000, scoped, tag = 'internal scratch']
  %s0 = inlined_call_operand.vmem [shape: f32[2,3,258,128], index: 0, kind: input, shape index: {}]
  %s1 = inlined_call_operand.vmem [shape: bf16[32,256], index: 1, kind: input, shape index: {}]
  %s2 = inlined_call_operand.vmem [shape: bf16[128,128], index: 2, kind: input, shape index: {}]
  %s3 = inlined_call_operand.vmem [shape: f32[2,4,16,128], index: 3, kind: output, shape index: {}]
  %s4 = sld [smem:[#allocation0]]
  $region22: #{hog_features.1} parent=0
    _
  %s6 = ssub.s32 1, %s4
  %s7 = scalar_select 0, %s6, %s4
  // Predicated region
  $region2: #{hog_features.1} parent=0 // pred_check
    _
  $region3: #{hog_features.1} parent=0 // pred_check_branch
    %9 = sbr.rel (0) target = $region5
  $region4: #{hog_features.1} parent=0 // pred_region
    _
  $region5: #{hog_features.1} parent=0 // pred_fallthru
    _
  // Predicated region
  $region6: #{hog_features.1} parent=0 // pred_check
    _
  $region7: #{hog_features.1} parent=0 // pred_check_branch
    %11 = sbr.rel (0) target = $region9
  $region8: #{hog_features.1} parent=0 // pred_region
    _
  $region9: #{hog_features.1} parent=0 // pred_fallthru
    _
  // Predicated region
  $region10: #{hog_features.1} parent=0 // pred_check
    _
  $region11: #{hog_features.1} parent=0 // pred_check_branch
    %13 = sbr.rel (0) target = $region13
  $region12: #{hog_features.1} parent=0 // pred_region
    _
  $region13: #{hog_features.1} parent=0 // pred_fallthru
    _
  %v15 = vld [vmem:[%s1] sm:$0xff]
  %v16 = vld [vmem:[%s1 + $0x8] sm:$0xff]
  %v17 = vld [vmem:[%s1 + $0x10] sm:$0xff]
  %v18 = vld [vmem:[%s1 + $0x18] sm:$0xff]
  %v19 = vld [vmem:[%s2] sm:$0xf]
  %v20 = vld [vmem:[%s2 + $0x4] sm:$0xf]
  %v21 = vld [vmem:[%s2 + $0x8] sm:$0xf]
  %v22 = vld [vmem:[%s2 + $0xc] sm:$0xf]
  %v23 = vld [vmem:[%s2 + $0x10] sm:$0xf]
  %v24 = vld [vmem:[%s2 + $0x14] sm:$0xf]
  %v25 = vld [vmem:[%s2 + $0x18] sm:$0xf]
  %v26 = vld [vmem:[%s2 + $0x1c] sm:$0xf]
  %v27 = vld [vmem:[%s2 + $0x20] sm:$0xf]
  %v28 = vld [vmem:[%s2 + $0x24] sm:$0xf]
  %v29 = vld [vmem:[%s2 + $0x28] sm:$0xf]
  %v30 = vld [vmem:[%s2 + $0x2c] sm:$0xf]
  %v31 = vld [vmem:[%s2 + $0x30] sm:$0xf]
  %v32 = vld [vmem:[%s2 + $0x34] sm:$0xf]
  %v33 = vld [vmem:[%s2 + $0x38] sm:$0xf]
  %v34 = vld [vmem:[%s2 + $0x3c] sm:$0xf]
  %v35 = vlaneseq
  %v36 = vand.u32 %v35, 127
  %vm37 = vcmp.eq.s32.totalorder %v36, 0
  %vm38 = vcmp.eq.s32.totalorder %v36, 127
  %v39 = vld [vmem:[%s0 + $0x1] sm:$0xff]
  %v40 = vld [vmem:[%s0 + $0x9] sm:$0xff]
  %v41 = vld [vmem:[%s0 + $0x11] sm:$0xff]
  %v42 = vld [vmem:[%s0 + $0x19] sm:$0xff]
  %v43 = vld [vmem:[%s0 + $0x21] sm:$0xff]
  %v44 = vld [vmem:[%s0 + $0x29] sm:$0xff]
  %v45 = vld [vmem:[%s0 + $0x31] sm:$0xff]
  %v46 = vld [vmem:[%s0 + $0x39] sm:$0xff]
  %v47 = vld [vmem:[%s0 + $0x41] sm:$0xff]
  %v48 = vld [vmem:[%s0 + $0x49] sm:$0xff]
  %v49 = vld [vmem:[%s0 + $0x51] sm:$0xff]
  %v50 = vld [vmem:[%s0 + $0x59] sm:$0xff]
  %v51 = vld [vmem:[%s0 + $0x61] sm:$0xff]
  %v52 = vld [vmem:[%s0 + $0x69] sm:$0xff]
  %v53 = vld [vmem:[%s0 + $0x71] sm:$0xff]
  %v54 = vld [vmem:[%s0 + $0x79] sm:$0xff]
  %v55 = vld [vmem:[%s0 + $0x81] sm:$0xff]
  %v56 = vld [vmem:[%s0 + $0x89] sm:$0xff]
  %v57 = vld [vmem:[%s0 + $0x91] sm:$0xff]
  %v58 = vld [vmem:[%s0 + $0x99] sm:$0xff]
  %v59 = vld [vmem:[%s0 + $0xa1] sm:$0xff]
  %v60 = vld [vmem:[%s0 + $0xa9] sm:$0xff]
  %v61 = vld [vmem:[%s0 + $0xb1] sm:$0xff]
  %v62 = vld [vmem:[%s0 + $0xb9] sm:$0xff]
  %v63 = vld [vmem:[%s0 + $0xc1] sm:$0xff]
  %v64 = vld [vmem:[%s0 + $0xc9] sm:$0xff]
  %v65 = vld [vmem:[%s0 + $0xd1] sm:$0xff]
  %v66 = vld [vmem:[%s0 + $0xd9] sm:$0xff]
  %v67 = vld [vmem:[%s0 + $0xe1] sm:$0xff]
  %v68 = vld [vmem:[%s0 + $0xe9] sm:$0xff]
  %v69 = vld [vmem:[%s0 + $0xf1] sm:$0xff]
  %v70 = vld [vmem:[%s0 + $0xf9] sm:$0xff]
  %v71 = vld [vmem:[%s0 + $0x2] sm:$0xff]
  %v72 = vld [vmem:[%s0 + $0xa] sm:$0xff]
  %v73 = vld [vmem:[%s0 + $0x12] sm:$0xff]
  %v74 = vld [vmem:[%s0 + $0x1a] sm:$0xff]
  %v75 = vld [vmem:[%s0 + $0x22] sm:$0xff]
  %v76 = vld [vmem:[%s0 + $0x2a] sm:$0xff]
  %v77 = vld [vmem:[%s0 + $0x32] sm:$0xff]
  %v78 = vld [vmem:[%s0 + $0x3a] sm:$0xff]
  %v79 = vld [vmem:[%s0 + $0x42] sm:$0xff]
  %v80 = vld [vmem:[%s0 + $0x4a] sm:$0xff]
  %v81 = vld [vmem:[%s0 + $0x52] sm:$0xff]
  %v82 = vld [vmem:[%s0 + $0x5a] sm:$0xff]
  %v83 = vld [vmem:[%s0 + $0x62] sm:$0xff]
  %v84 = vld [vmem:[%s0 + $0x6a] sm:$0xff]
  %v85 = vld [vmem:[%s0 + $0x72] sm:$0xff]
  %v86 = vld [vmem:[%s0 + $0x7a] sm:$0xff]
  %v87 = vld [vmem:[%s0 + $0x82] sm:$0xff]
  %v88 = vld [vmem:[%s0 + $0x8a] sm:$0xff]
  %v89 = vld [vmem:[%s0 + $0x92] sm:$0xff]
  %v90 = vld [vmem:[%s0 + $0x9a] sm:$0xff]
  %v91 = vld [vmem:[%s0 + $0xa2] sm:$0xff]
  %v92 = vld [vmem:[%s0 + $0xaa] sm:$0xff]
  %v93 = vld [vmem:[%s0 + $0xb2] sm:$0xff]
  %v94 = vld [vmem:[%s0 + $0xba] sm:$0xff]
  %v95 = vld [vmem:[%s0 + $0xc2] sm:$0xff]
  %v96 = vld [vmem:[%s0 + $0xca] sm:$0xff]
  %v97 = vld [vmem:[%s0 + $0xd2] sm:$0xff]
  %v98 = vld [vmem:[%s0 + $0xda] sm:$0xff]
  %v99 = vld [vmem:[%s0 + $0xe2] sm:$0xff]
  %v100 = vld [vmem:[%s0 + $0xea] sm:$0xff]
  %v101 = vld [vmem:[%s0 + $0xf2] sm:$0xff]
  %v102 = vld [vmem:[%s0 + $0xfa] sm:$0xff]
  %v103 = vld [vmem:[%s0] sm:$0xff]
  %v104 = vld [vmem:[%s0 + $0x8] sm:$0xff]
  %v105 = vld [vmem:[%s0 + $0x10] sm:$0xff]
  %v106 = vld [vmem:[%s0 + $0x18] sm:$0xff]
  %v107 = vld [vmem:[%s0 + $0x20] sm:$0xff]
  %v108 = vld [vmem:[%s0 + $0x28] sm:$0xff]
  %v109 = vld [vmem:[%s0 + $0x30] sm:$0xff]
  %v110 = vld [vmem:[%s0 + $0x38] sm:$0xff]
  %v111 = vld [vmem:[%s0 + $0x40] sm:$0xff]
  %v112 = vld [vmem:[%s0 + $0x48] sm:$0xff]
  %v113 = vld [vmem:[%s0 + $0x50] sm:$0xff]
  %v114 = vld [vmem:[%s0 + $0x58] sm:$0xff]
  %v115 = vld [vmem:[%s0 + $0x60] sm:$0xff]
  %v116 = vld [vmem:[%s0 + $0x68] sm:$0xff]
  %v117 = vld [vmem:[%s0 + $0x70] sm:$0xff]
  %v118 = vld [vmem:[%s0 + $0x78] sm:$0xff]
  %v119 = vld [vmem:[%s0 + $0x80] sm:$0xff]
  %v120 = vld [vmem:[%s0 + $0x88] sm:$0xff]
  %v121 = vld [vmem:[%s0 + $0x90] sm:$0xff]
  %v122 = vld [vmem:[%s0 + $0x98] sm:$0xff]
  %v123 = vld [vmem:[%s0 + $0xa0] sm:$0xff]
  %v124 = vld [vmem:[%s0 + $0xa8] sm:$0xff]
  %v125 = vld [vmem:[%s0 + $0xb0] sm:$0xff]
  %v126 = vld [vmem:[%s0 + $0xb8] sm:$0xff]
  %v127 = vld [vmem:[%s0 + $0xc0] sm:$0xff]
  %v128 = vld [vmem:[%s0 + $0xc8] sm:$0xff]
  %v129 = vld [vmem:[%s0 + $0xd0] sm:$0xff]
  %v130 = vld [vmem:[%s0 + $0xd8] sm:$0xff]
  %v131 = vld [vmem:[%s0 + $0xe0] sm:$0xff]
  %v132 = vld [vmem:[%s0 + $0xe8] sm:$0xff]
  %v133 = vld [vmem:[%s0 + $0xf0] sm:$0xff]
  %v134 = vld [vmem:[%s0 + $0xf8] sm:$0xff]
  %135 = vrot.lane.b32.xlu0 %v39, 127
  %v136 = vpop.permute.xlu0 %135
  %137 = vrot.lane.b32.xlu0 %v40, 127
  %v138 = vpop.permute.xlu0 %137
  %139 = vrot.lane.b32.xlu0 %v41, 127
  %v140 = vpop.permute.xlu0 %139
  %141 = vrot.lane.b32.xlu0 %v42, 127
  %v142 = vpop.permute.xlu0 %141
  %143 = vrot.lane.b32.xlu0 %v43, 127
  %v144 = vpop.permute.xlu0 %143
  %145 = vrot.lane.b32.xlu0 %v44, 127
  %v146 = vpop.permute.xlu0 %145
  %147 = vrot.lane.b32.xlu0 %v45, 127
  %v148 = vpop.permute.xlu0 %147
  %149 = vrot.lane.b32.xlu0 %v46, 127
  %v150 = vpop.permute.xlu0 %149
  %151 = vrot.lane.b32.xlu0 %v47, 127
  %v152 = vpop.permute.xlu0 %151
  %153 = vrot.lane.b32.xlu0 %v48, 127
  %v154 = vpop.permute.xlu0 %153
  %155 = vrot.lane.b32.xlu0 %v49, 127
  %v156 = vpop.permute.xlu0 %155
  %157 = vrot.lane.b32.xlu0 %v50, 127
  %v158 = vpop.permute.xlu0 %157
  %159 = vrot.lane.b32.xlu0 %v51, 127
  %v160 = vpop.permute.xlu0 %159
  %161 = vrot.lane.b32.xlu0 %v52, 127
  %v162 = vpop.permute.xlu0 %161
  %163 = vrot.lane.b32.xlu0 %v53, 127
  %v164 = vpop.permute.xlu0 %163
  %165 = vrot.lane.b32.xlu0 %v54, 127
  %v166 = vpop.permute.xlu0 %165
  %167 = vrot.lane.b32.xlu0 %v55, 127
  %v168 = vpop.permute.xlu0 %167
  %169 = vrot.lane.b32.xlu0 %v56, 127
  %v170 = vpop.permute.xlu0 %169
  %171 = vrot.lane.b32.xlu0 %v57, 127
  %v172 = vpop.permute.xlu0 %171
  %173 = vrot.lane.b32.xlu0 %v58, 127
  %v174 = vpop.permute.xlu0 %173
  %175 = vrot.lane.b32.xlu0 %v59, 127
  %v176 = vpop.permute.xlu0 %175
  %177 = vrot.lane.b32.xlu0 %v60, 127
  %v178 = vpop.permute.xlu0 %177
  %179 = vrot.lane.b32.xlu0 %v61, 127
  %v180 = vpop.permute.xlu0 %179
  %181 = vrot.lane.b32.xlu0 %v62, 127
  %v182 = vpop.permute.xlu0 %181
  %183 = vrot.lane.b32.xlu0 %v63, 127
  %v184 = vpop.permute.xlu0 %183
  %185 = vrot.lane.b32.xlu0 %v64, 127
  %v186 = vpop.permute.xlu0 %185
  %187 = vrot.lane.b32.xlu0 %v65, 127
  %v188 = vpop.permute.xlu0 %187
  %189 = vrot.lane.b32.xlu0 %v66, 127
  %v190 = vpop.permute.xlu0 %189
  %191 = vrot.lane.b32.xlu0 %v67, 127
  %v192 = vpop.permute.xlu0 %191
  %193 = vrot.lane.b32.xlu0 %v68, 127
  %v194 = vpop.permute.xlu0 %193
  %195 = vrot.lane.b32.xlu0 %v69, 127
  %v196 = vpop.permute.xlu0 %195
  %197 = vrot.lane.b32.xlu0 %v70, 127
  %v198 = vpop.permute.xlu0 %197
  %v199 = vsel %vm38, %v39, %v136
  %v200 = vsel %vm38, %v40, %v138
  %v201 = vsel %vm38, %v41, %v140
  %v202 = vsel %vm38, %v42, %v142
  %v203 = vsel %vm38, %v43, %v144
  %v204 = vsel %vm38, %v44, %v146
  %v205 = vsel %vm38, %v45, %v148
  %v206 = vsel %vm38, %v46, %v150
  %v207 = vsel %vm38, %v47, %v152
  %v208 = vsel %vm38, %v48, %v154
  %v209 = vsel %vm38, %v49, %v156
  %v210 = vsel %vm38, %v50, %v158
  %v211 = vsel %vm38, %v51, %v160
  %v212 = vsel %vm38, %v52, %v162
  %v213 = vsel %vm38, %v53, %v164
  %v214 = vsel %vm38, %v54, %v166
  %v215 = vsel %vm38, %v55, %v168
  %v216 = vsel %vm38, %v56, %v170
  %v217 = vsel %vm38, %v57, %v172
  %v218 = vsel %vm38, %v58, %v174
  %v219 = vsel %vm38, %v59, %v176
  %v220 = vsel %vm38, %v60, %v178
  %v221 = vsel %vm38, %v61, %v180
  %v222 = vsel %vm38, %v62, %v182
  %v223 = vsel %vm38, %v63, %v184
  %v224 = vsel %vm38, %v64, %v186
  %v225 = vsel %vm38, %v65, %v188
  %v226 = vsel %vm38, %v66, %v190
  %v227 = vsel %vm38, %v67, %v192
  %v228 = vsel %vm38, %v68, %v194
  %v229 = vsel %vm38, %v69, %v196
  %v230 = vsel %vm38, %v70, %v198
  %231 = vrot.lane.b32.xlu0 %v39, 1
  %v232 = vpop.permute.xlu0 %231
  %233 = vrot.lane.b32.xlu0 %v40, 1
  %v234 = vpop.permute.xlu0 %233
  %235 = vrot.lane.b32.xlu0 %v41, 1
  %v236 = vpop.permute.xlu0 %235
  %237 = vrot.lane.b32.xlu0 %v42, 1
  %v238 = vpop.permute.xlu0 %237
  %239 = vrot.lane.b32.xlu0 %v43, 1
  %v240 = vpop.permute.xlu0 %239
  %241 = vrot.lane.b32.xlu0 %v44, 1
  %v242 = vpop.permute.xlu0 %241
  %243 = vrot.lane.b32.xlu0 %v45, 1
  %v244 = vpop.permute.xlu0 %243
  %245 = vrot.lane.b32.xlu0 %v46, 1
  %v246 = vpop.permute.xlu0 %245
  %247 = vrot.lane.b32.xlu0 %v47, 1
  %v248 = vpop.permute.xlu0 %247
  %249 = vrot.lane.b32.xlu0 %v48, 1
  %v250 = vpop.permute.xlu0 %249
  %251 = vrot.lane.b32.xlu0 %v49, 1
  %v252 = vpop.permute.xlu0 %251
  %253 = vrot.lane.b32.xlu0 %v50, 1
  %v254 = vpop.permute.xlu0 %253
  %255 = vrot.lane.b32.xlu0 %v51, 1
  %v256 = vpop.permute.xlu0 %255
  %257 = vrot.lane.b32.xlu0 %v52, 1
  %v258 = vpop.permute.xlu0 %257
  %259 = vrot.lane.b32.xlu0 %v53, 1
  %v260 = vpop.permute.xlu0 %259
  %261 = vrot.lane.b32.xlu0 %v54, 1
  %v262 = vpop.permute.xlu0 %261
  %263 = vrot.lane.b32.xlu0 %v55, 1
  %v264 = vpop.permute.xlu0 %263
  %265 = vrot.lane.b32.xlu0 %v56, 1
  %v266 = vpop.permute.xlu0 %265
  %267 = vrot.lane.b32.xlu0 %v57, 1
  %v268 = vpop.permute.xlu0 %267
  %269 = vrot.lane.b32.xlu0 %v58, 1
  %v270 = vpop.permute.xlu0 %269
  %271 = vrot.lane.b32.xlu0 %v59, 1
  %v272 = vpop.permute.xlu0 %271
  %273 = vrot.lane.b32.xlu0 %v60, 1
  %v274 = vpop.permute.xlu0 %273
  %275 = vrot.lane.b32.xlu0 %v61, 1
  %v276 = vpop.permute.xlu0 %275
  %277 = vrot.lane.b32.xlu0 %v62, 1
  %v278 = vpop.permute.xlu0 %277
  %279 = vrot.lane.b32.xlu0 %v63, 1
  %v280 = vpop.permute.xlu0 %279
  %281 = vrot.lane.b32.xlu0 %v64, 1
  %v282 = vpop.permute.xlu0 %281
  %283 = vrot.lane.b32.xlu0 %v65, 1
  %v284 = vpop.permute.xlu0 %283
  %285 = vrot.lane.b32.xlu0 %v66, 1
  %v286 = vpop.permute.xlu0 %285
  %287 = vrot.lane.b32.xlu0 %v67, 1
  %v288 = vpop.permute.xlu0 %287
  %289 = vrot.lane.b32.xlu0 %v68, 1
  %v290 = vpop.permute.xlu0 %289
  %291 = vrot.lane.b32.xlu0 %v69, 1
  %v292 = vpop.permute.xlu0 %291
  %293 = vrot.lane.b32.xlu0 %v70, 1
  %v294 = vpop.permute.xlu0 %293
  %v295 = vsel %vm37, %v39, %v232
  %v296 = vsel %vm37, %v40, %v234
  %v297 = vsel %vm37, %v41, %v236
  %v298 = vsel %vm37, %v42, %v238
  %v299 = vsel %vm37, %v43, %v240
  %v300 = vsel %vm37, %v44, %v242
  %v301 = vsel %vm37, %v45, %v244
  %v302 = vsel %vm37, %v46, %v246
  %v303 = vsel %vm37, %v47, %v248
  %v304 = vsel %vm37, %v48, %v250
  %v305 = vsel %vm37, %v49, %v252
  %v306 = vsel %vm37, %v50, %v254
  %v307 = vsel %vm37, %v51, %v256
  %v308 = vsel %vm37, %v52, %v258
  %v309 = vsel %vm37, %v53, %v260
  %v310 = vsel %vm37, %v54, %v262
  %v311 = vsel %vm37, %v55, %v264
  %v312 = vsel %vm37, %v56, %v266
  %v313 = vsel %vm37, %v57, %v268
  %v314 = vsel %vm37, %v58, %v270
  %v315 = vsel %vm37, %v59, %v272
  %v316 = vsel %vm37, %v60, %v274
  %v317 = vsel %vm37, %v61, %v276
  %v318 = vsel %vm37, %v62, %v278
  %v319 = vsel %vm37, %v63, %v280
  %v320 = vsel %vm37, %v64, %v282
  %v321 = vsel %vm37, %v65, %v284
  %v322 = vsel %vm37, %v66, %v286
  %v323 = vsel %vm37, %v67, %v288
  %v324 = vsel %vm37, %v68, %v290
  %v325 = vsel %vm37, %v69, %v292
  %v326 = vsel %vm37, %v70, %v294
  %v327 = vsub.f32 %v199, %v295
  %v328 = vsub.f32 %v200, %v296
  %v329 = vsub.f32 %v201, %v297
  %v330 = vsub.f32 %v202, %v298
  %v331 = vsub.f32 %v203, %v299
  %v332 = vsub.f32 %v204, %v300
  %v333 = vsub.f32 %v205, %v301
  %v334 = vsub.f32 %v206, %v302
  %v335 = vsub.f32 %v207, %v303
  %v336 = vsub.f32 %v208, %v304
  %v337 = vsub.f32 %v209, %v305
  %v338 = vsub.f32 %v210, %v306
  %v339 = vsub.f32 %v211, %v307
  %v340 = vsub.f32 %v212, %v308
  %v341 = vsub.f32 %v213, %v309
  %v342 = vsub.f32 %v214, %v310
  %v343 = vsub.f32 %v215, %v311
  %v344 = vsub.f32 %v216, %v312
  %v345 = vsub.f32 %v217, %v313
  %v346 = vsub.f32 %v218, %v314
  %v347 = vsub.f32 %v219, %v315
  %v348 = vsub.f32 %v220, %v316
  %v349 = vsub.f32 %v221, %v317
  %v350 = vsub.f32 %v222, %v318
  %v351 = vsub.f32 %v223, %v319
  %v352 = vsub.f32 %v224, %v320
  %v353 = vsub.f32 %v225, %v321
  %v354 = vsub.f32 %v226, %v322
  %v355 = vsub.f32 %v227, %v323
  %v356 = vsub.f32 %v228, %v324
  %v357 = vsub.f32 %v229, %v325
  %v358 = vsub.f32 %v230, %v326
  %v359 = vsub.f32 %v71, %v103
  %v360 = vsub.f32 %v72, %v104
  %v361 = vsub.f32 %v73, %v105
  %v362 = vsub.f32 %v74, %v106
  %v363 = vsub.f32 %v75, %v107
  %v364 = vsub.f32 %v76, %v108
  %v365 = vsub.f32 %v77, %v109
  %v366 = vsub.f32 %v78, %v110
  %v367 = vsub.f32 %v79, %v111
  %v368 = vsub.f32 %v80, %v112
  %v369 = vsub.f32 %v81, %v113
  %v370 = vsub.f32 %v82, %v114
  %v371 = vsub.f32 %v83, %v115
  %v372 = vsub.f32 %v84, %v116
  %v373 = vsub.f32 %v85, %v117
  %v374 = vsub.f32 %v86, %v118
  %v375 = vsub.f32 %v87, %v119
  %v376 = vsub.f32 %v88, %v120
  %v377 = vsub.f32 %v89, %v121
  %v378 = vsub.f32 %v90, %v122
  %v379 = vsub.f32 %v91, %v123
  %v380 = vsub.f32 %v92, %v124
  %v381 = vsub.f32 %v93, %v125
  %v382 = vsub.f32 %v94, %v126
  %v383 = vsub.f32 %v95, %v127
  %v384 = vsub.f32 %v96, %v128
  %v385 = vsub.f32 %v97, %v129
  %v386 = vsub.f32 %v98, %v130
  %v387 = vsub.f32 %v99, %v131
  %v388 = vsub.f32 %v100, %v132
  %v389 = vsub.f32 %v101, %v133
  %v390 = vsub.f32 %v102, %v134
  %v391 = vmul.f32 %v327, %v327
  %v392 = vmul.f32 %v328, %v328
  %v393 = vmul.f32 %v329, %v329
  %v394 = vmul.f32 %v330, %v330
  %v395 = vmul.f32 %v331, %v331
  %v396 = vmul.f32 %v332, %v332
  %v397 = vmul.f32 %v333, %v333
  %v398 = vmul.f32 %v334, %v334
  %v399 = vmul.f32 %v335, %v335
  %v400 = vmul.f32 %v336, %v336
  %v401 = vmul.f32 %v337, %v337
  %v402 = vmul.f32 %v338, %v338
  %v403 = vmul.f32 %v339, %v339
  %v404 = vmul.f32 %v340, %v340
  %v405 = vmul.f32 %v341, %v341
  %v406 = vmul.f32 %v342, %v342
  %v407 = vmul.f32 %v343, %v343
  %v408 = vmul.f32 %v344, %v344
  %v409 = vmul.f32 %v345, %v345
  %v410 = vmul.f32 %v346, %v346
  %v411 = vmul.f32 %v347, %v347
  %v412 = vmul.f32 %v348, %v348
  %v413 = vmul.f32 %v349, %v349
  %v414 = vmul.f32 %v350, %v350
  %v415 = vmul.f32 %v351, %v351
  %v416 = vmul.f32 %v352, %v352
  %v417 = vmul.f32 %v353, %v353
  %v418 = vmul.f32 %v354, %v354
  %v419 = vmul.f32 %v355, %v355
  %v420 = vmul.f32 %v356, %v356
  %v421 = vmul.f32 %v357, %v357
  %v422 = vmul.f32 %v358, %v358
  %v423 = vmul.f32 %v359, %v359
  %v424 = vmul.f32 %v360, %v360
  %v425 = vmul.f32 %v361, %v361
  %v426 = vmul.f32 %v362, %v362
  %v427 = vmul.f32 %v363, %v363
  %v428 = vmul.f32 %v364, %v364
  %v429 = vmul.f32 %v365, %v365
  %v430 = vmul.f32 %v366, %v366
  %v431 = vmul.f32 %v367, %v367
  %v432 = vmul.f32 %v368, %v368
  %v433 = vmul.f32 %v369, %v369
  %v434 = vmul.f32 %v370, %v370
  %v435 = vmul.f32 %v371, %v371
  %v436 = vmul.f32 %v372, %v372
  %v437 = vmul.f32 %v373, %v373
  %v438 = vmul.f32 %v374, %v374
  %v439 = vmul.f32 %v375, %v375
  %v440 = vmul.f32 %v376, %v376
  %v441 = vmul.f32 %v377, %v377
  %v442 = vmul.f32 %v378, %v378
  %v443 = vmul.f32 %v379, %v379
  %v444 = vmul.f32 %v380, %v380
  %v445 = vmul.f32 %v381, %v381
  %v446 = vmul.f32 %v382, %v382
  %v447 = vmul.f32 %v383, %v383
  %v448 = vmul.f32 %v384, %v384
  %v449 = vmul.f32 %v385, %v385
  %v450 = vmul.f32 %v386, %v386
  %v451 = vmul.f32 %v387, %v387
  %v452 = vmul.f32 %v388, %v388
  %v453 = vmul.f32 %v389, %v389
  %v454 = vmul.f32 %v390, %v390
  %v455 = vadd.f32 %v391, %v423
  %v456 = vadd.f32 %v392, %v424
  %v457 = vadd.f32 %v393, %v425
  %v458 = vadd.f32 %v394, %v426
  %v459 = vadd.f32 %v395, %v427
  %v460 = vadd.f32 %v396, %v428
  %v461 = vadd.f32 %v397, %v429
  %v462 = vadd.f32 %v398, %v430
  %v463 = vadd.f32 %v399, %v431
  %v464 = vadd.f32 %v400, %v432
  %v465 = vadd.f32 %v401, %v433
  %v466 = vadd.f32 %v402, %v434
  %v467 = vadd.f32 %v403, %v435
  %v468 = vadd.f32 %v404, %v436
  %v469 = vadd.f32 %v405, %v437
  %v470 = vadd.f32 %v406, %v438
  %v471 = vadd.f32 %v407, %v439
  %v472 = vadd.f32 %v408, %v440
  %v473 = vadd.f32 %v409, %v441
  %v474 = vadd.f32 %v410, %v442
  %v475 = vadd.f32 %v411, %v443
  %v476 = vadd.f32 %v412, %v444
  %v477 = vadd.f32 %v413, %v445
  %v478 = vadd.f32 %v414, %v446
  %v479 = vadd.f32 %v415, %v447
  %v480 = vadd.f32 %v416, %v448
  %v481 = vadd.f32 %v417, %v449
  %v482 = vadd.f32 %v418, %v450
  %v483 = vadd.f32 %v419, %v451
  %v484 = vadd.f32 %v420, %v452
  %v485 = vadd.f32 %v421, %v453
  %v486 = vadd.f32 %v422, %v454
  %s487 = scalar_lea.vmem %s0, 264
  %v488 = vld [vmem:[%s487 + $0x1] sm:$0xff]
  %v489 = vld [vmem:[%s487 + $0x9] sm:$0xff]
  %v490 = vld [vmem:[%s487 + $0x11] sm:$0xff]
  %v491 = vld [vmem:[%s487 + $0x19] sm:$0xff]
  %v492 = vld [vmem:[%s487 + $0x21] sm:$0xff]
  %v493 = vld [vmem:[%s487 + $0x29] sm:$0xff]
  %v494 = vld [vmem:[%s487 + $0x31] sm:$0xff]
  %v495 = vld [vmem:[%s487 + $0x39] sm:$0xff]
  %v496 = vld [vmem:[%s487 + $0x41] sm:$0xff]
  %v497 = vld [vmem:[%s487 + $0x49] sm:$0xff]
  %v498 = vld [vmem:[%s487 + $0x51] sm:$0xff]
  %v499 = vld [vmem:[%s487 + $0x59] sm:$0xff]
  %v500 = vld [vmem:[%s487 + $0x61] sm:$0xff]
  %v501 = vld [vmem:[%s487 + $0x69] sm:$0xff]
  %v502 = vld [vmem:[%s487 + $0x71] sm:$0xff]
  %v503 = vld [vmem:[%s487 + $0x79] sm:$0xff]
  %v504 = vld [vmem:[%s487 + $0x81] sm:$0xff]
  %v505 = vld [vmem:[%s487 + $0x89] sm:$0xff]
  %v506 = vld [vmem:[%s487 + $0x91] sm:$0xff]
  %v507 = vld [vmem:[%s487 + $0x99] sm:$0xff]
  %v508 = vld [vmem:[%s487 + $0xa1] sm:$0xff]
  %v509 = vld [vmem:[%s487 + $0xa9] sm:$0xff]
  %v510 = vld [vmem:[%s487 + $0xb1] sm:$0xff]
  %v511 = vld [vmem:[%s487 + $0xb9] sm:$0xff]
  %v512 = vld [vmem:[%s487 + $0xc1] sm:$0xff]
  %v513 = vld [vmem:[%s487 + $0xc9] sm:$0xff]
  %v514 = vld [vmem:[%s487 + $0xd1] sm:$0xff]
  %v515 = vld [vmem:[%s487 + $0xd9] sm:$0xff]
  %v516 = vld [vmem:[%s487 + $0xe1] sm:$0xff]
  %v517 = vld [vmem:[%s487 + $0xe9] sm:$0xff]
  %v518 = vld [vmem:[%s487 + $0xf1] sm:$0xff]
  %v519 = vld [vmem:[%s487 + $0xf9] sm:$0xff]
  %v520 = vld [vmem:[%s487 + $0x2] sm:$0xff]
  %v521 = vld [vmem:[%s487 + $0xa] sm:$0xff]
  %v522 = vld [vmem:[%s487 + $0x12] sm:$0xff]
  %v523 = vld [vmem:[%s487 + $0x1a] sm:$0xff]
  %v524 = vld [vmem:[%s487 + $0x22] sm:$0xff]
  %v525 = vld [vmem:[%s487 + $0x2a] sm:$0xff]
  %v526 = vld [vmem:[%s487 + $0x32] sm:$0xff]
  %v527 = vld [vmem:[%s487 + $0x3a] sm:$0xff]
  %v528 = vld [vmem:[%s487 + $0x42] sm:$0xff]
  %v529 = vld [vmem:[%s487 + $0x4a] sm:$0xff]
  %v530 = vld [vmem:[%s487 + $0x52] sm:$0xff]
  %v531 = vld [vmem:[%s487 + $0x5a] sm:$0xff]
  %v532 = vld [vmem:[%s487 + $0x62] sm:$0xff]
  %v533 = vld [vmem:[%s487 + $0x6a] sm:$0xff]
  %v534 = vld [vmem:[%s487 + $0x72] sm:$0xff]
  %v535 = vld [vmem:[%s487 + $0x7a] sm:$0xff]
  %v536 = vld [vmem:[%s487 + $0x82] sm:$0xff]
  %v537 = vld [vmem:[%s487 + $0x8a] sm:$0xff]
  %v538 = vld [vmem:[%s487 + $0x92] sm:$0xff]
  %v539 = vld [vmem:[%s487 + $0x9a] sm:$0xff]
  %v540 = vld [vmem:[%s487 + $0xa2] sm:$0xff]
  %v541 = vld [vmem:[%s487 + $0xaa] sm:$0xff]
  %v542 = vld [vmem:[%s487 + $0xb2] sm:$0xff]
  %v543 = vld [vmem:[%s487 + $0xba] sm:$0xff]
  %v544 = vld [vmem:[%s487 + $0xc2] sm:$0xff]
  %v545 = vld [vmem:[%s487 + $0xca] sm:$0xff]
  %v546 = vld [vmem:[%s487 + $0xd2] sm:$0xff]
  %v547 = vld [vmem:[%s487 + $0xda] sm:$0xff]
  %v548 = vld [vmem:[%s487 + $0xe2] sm:$0xff]
  %v549 = vld [vmem:[%s487 + $0xea] sm:$0xff]
  %v550 = vld [vmem:[%s487 + $0xf2] sm:$0xff]
  %v551 = vld [vmem:[%s487 + $0xfa] sm:$0xff]
  %v552 = vld [vmem:[%s487] sm:$0xff]
  %v553 = vld [vmem:[%s487 + $0x8] sm:$0xff]
  %v554 = vld [vmem:[%s487 + $0x10] sm:$0xff]
  %v555 = vld [vmem:[%s487 + $0x18] sm:$0xff]
  %v556 = vld [vmem:[%s487 + $0x20] sm:$0xff]
  %v557 = vld [vmem:[%s487 + $0x28] sm:$0xff]
  %v558 = vld [vmem:[%s487 + $0x30] sm:$0xff]
  %v559 = vld [vmem:[%s487 + $0x38] sm:$0xff]
  %v560 = vld [vmem:[%s487 + $0x40] sm:$0xff]
  %v561 = vld [vmem:[%s487 + $0x48] sm:$0xff]
  %v562 = vld [vmem:[%s487 + $0x50] sm:$0xff]
  %v563 = vld [vmem:[%s487 + $0x58] sm:$0xff]
  %v564 = vld [vmem:[%s487 + $0x60] sm:$0xff]
  %v565 = vld [vmem:[%s487 + $0x68] sm:$0xff]
  %v566 = vld [vmem:[%s487 + $0x70] sm:$0xff]
  %v567 = vld [vmem:[%s487 + $0x78] sm:$0xff]
  %v568 = vld [vmem:[%s487 + $0x80] sm:$0xff]
  %v569 = vld [vmem:[%s487 + $0x88] sm:$0xff]
  %v570 = vld [vmem:[%s487 + $0x90] sm:$0xff]
  %v571 = vld [vmem:[%s487 + $0x98] sm:$0xff]
  %v572 = vld [vmem:[%s487 + $0xa0] sm:$0xff]
  %v573 = vld [vmem:[%s487 + $0xa8] sm:$0xff]
  %v574 = vld [vmem:[%s487 + $0xb0] sm:$0xff]
  %v575 = vld [vmem:[%s487 + $0xb8] sm:$0xff]
  %v576 = vld [vmem:[%s487 + $0xc0] sm:$0xff]
  %v577 = vld [vmem:[%s487 + $0xc8] sm:$0xff]
  %v578 = vld [vmem:[%s487 + $0xd0] sm:$0xff]
  %v579 = vld [vmem:[%s487 + $0xd8] sm:$0xff]
  %v580 = vld [vmem:[%s487 + $0xe0] sm:$0xff]
  %v581 = vld [vmem:[%s487 + $0xe8] sm:$0xff]
  %v582 = vld [vmem:[%s487 + $0xf0] sm:$0xff]
  %v583 = vld [vmem:[%s487 + $0xf8] sm:$0xff]
  %584 = vrot.lane.b32.xlu0 %v488, 127
  %v585 = vpop.permute.xlu0 %584
  %586 = vrot.lane.b32.xlu0 %v489, 127
  %v587 = vpop.permute.xlu0 %586
  %588 = vrot.lane.b32.xlu0 %v490, 127
  %v589 = vpop.permute.xlu0 %588
  %590 = vrot.lane.b32.xlu0 %v491, 127
  %v591 = vpop.permute.xlu0 %590
  %592 = vrot.lane.b32.xlu0 %v492, 127
  %v593 = vpop.permute.xlu0 %592
  %594 = vrot.lane.b32.xlu0 %v493, 127
  %v595 = vpop.permute.xlu0 %594
  %596 = vrot.lane.b32.xlu0 %v494, 127
  %v597 = vpop.permute.xlu0 %596
  %598 = vrot.lane.b32.xlu0 %v495, 127
  %v599 = vpop.permute.xlu0 %598
  %600 = vrot.lane.b32.xlu0 %v496, 127
  %v601 = vpop.permute.xlu0 %600
  %602 = vrot.lane.b32.xlu0 %v497, 127
  %v603 = vpop.permute.xlu0 %602
  %604 = vrot.lane.b32.xlu0 %v498, 127
  %v605 = vpop.permute.xlu0 %604
  %606 = vrot.lane.b32.xlu0 %v499, 127
  %v607 = vpop.permute.xlu0 %606
  %608 = vrot.lane.b32.xlu0 %v500, 127
  %v609 = vpop.permute.xlu0 %608
  %610 = vrot.lane.b32.xlu0 %v501, 127
  %v611 = vpop.permute.xlu0 %610
  %612 = vrot.lane.b32.xlu0 %v502, 127
  %v613 = vpop.permute.xlu0 %612
  %614 = vrot.lane.b32.xlu0 %v503, 127
  %v615 = vpop.permute.xlu0 %614
  %616 = vrot.lane.b32.xlu0 %v504, 127
  %v617 = vpop.permute.xlu0 %616
  %618 = vrot.lane.b32.xlu0 %v505, 127
  %v619 = vpop.permute.xlu0 %618
  %620 = vrot.lane.b32.xlu0 %v506, 127
  %v621 = vpop.permute.xlu0 %620
  %622 = vrot.lane.b32.xlu0 %v507, 127
  %v623 = vpop.permute.xlu0 %622
  %624 = vrot.lane.b32.xlu0 %v508, 127
  %v625 = vpop.permute.xlu0 %624
  %626 = vrot.lane.b32.xlu0 %v509, 127
  %v627 = vpop.permute.xlu0 %626
  %628 = vrot.lane.b32.xlu0 %v510, 127
  %v629 = vpop.permute.xlu0 %628
  %630 = vrot.lane.b32.xlu0 %v511, 127
  %v631 = vpop.permute.xlu0 %630
  %632 = vrot.lane.b32.xlu0 %v512, 127
  %v633 = vpop.permute.xlu0 %632
  %634 = vrot.lane.b32.xlu0 %v513, 127
  %v635 = vpop.permute.xlu0 %634
  %636 = vrot.lane.b32.xlu0 %v514, 127
  %v637 = vpop.permute.xlu0 %636
  %638 = vrot.lane.b32.xlu0 %v515, 127
  %v639 = vpop.permute.xlu0 %638
  %640 = vrot.lane.b32.xlu0 %v516, 127
  %v641 = vpop.permute.xlu0 %640
  %642 = vrot.lane.b32.xlu0 %v517, 127
  %v643 = vpop.permute.xlu0 %642
  %644 = vrot.lane.b32.xlu0 %v518, 127
  %v645 = vpop.permute.xlu0 %644
  %646 = vrot.lane.b32.xlu0 %v519, 127
  %v647 = vpop.permute.xlu0 %646
  %v648 = vsel %vm38, %v488, %v585
  %v649 = vsel %vm38, %v489, %v587
  %v650 = vsel %vm38, %v490, %v589
  %v651 = vsel %vm38, %v491, %v591
  %v652 = vsel %vm38, %v492, %v593
  %v653 = vsel %vm38, %v493, %v595
  %v654 = vsel %vm38, %v494, %v597
  %v655 = vsel %vm38, %v495, %v599
  %v656 = vsel %vm38, %v496, %v601
  %v657 = vsel %vm38, %v497, %v603
  %v658 = vsel %vm38, %v498, %v605
  %v659 = vsel %vm38, %v499, %v607
  %v660 = vsel %vm38, %v500, %v609
  %v661 = vsel %vm38, %v501, %v611
  %v662 = vsel %vm38, %v502, %v613
  %v663 = vsel %vm38, %v503, %v615
  %v664 = vsel %vm38, %v504, %v617
  %v665 = vsel %vm38, %v505, %v619
  %v666 = vsel %vm38, %v506, %v621
  %v667 = vsel %vm38, %v507, %v623
  %v668 = vsel %vm38, %v508, %v625
  %v669 = vsel %vm38, %v509, %v627
  %v670 = vsel %vm38, %v510, %v629
  %v671 = vsel %vm38, %v511, %v631
  %v672 = vsel %vm38, %v512, %v633
  %v673 = vsel %vm38, %v513, %v635
  %v674 = vsel %vm38, %v514, %v637
  %v675 = vsel %vm38, %v515, %v639
  %v676 = vsel %vm38, %v516, %v641
  %v677 = vsel %vm38, %v517, %v643
  %v678 = vsel %vm38, %v518, %v645
  %v679 = vsel %vm38, %v519, %v647
  %680 = vrot.lane.b32.xlu0 %v488, 1
  %v681 = vpop.permute.xlu0 %680
  %682 = vrot.lane.b32.xlu0 %v489, 1
  %v683 = vpop.permute.xlu0 %682
  %684 = vrot.lane.b32.xlu0 %v490, 1
  %v685 = vpop.permute.xlu0 %684
  %686 = vrot.lane.b32.xlu0 %v491, 1
  %v687 = vpop.permute.xlu0 %686
  %688 = vrot.lane.b32.xlu0 %v492, 1
  %v689 = vpop.permute.xlu0 %688
  %690 = vrot.lane.b32.xlu0 %v493, 1
  %v691 = vpop.permute.xlu0 %690
  %692 = vrot.lane.b32.xlu0 %v494, 1
  %v693 = vpop.permute.xlu0 %692
  %694 = vrot.lane.b32.xlu0 %v495, 1
  %v695 = vpop.permute.xlu0 %694
  %696 = vrot.lane.b32.xlu0 %v496, 1
  %v697 = vpop.permute.xlu0 %696
  %698 = vrot.lane.b32.xlu0 %v497, 1
  %v699 = vpop.permute.xlu0 %698
  %700 = vrot.lane.b32.xlu0 %v498, 1
  %v701 = vpop.permute.xlu0 %700
  %702 = vrot.lane.b32.xlu0 %v499, 1
  %v703 = vpop.permute.xlu0 %702
  %704 = vrot.lane.b32.xlu0 %v500, 1
  %v705 = vpop.permute.xlu0 %704
  %706 = vrot.lane.b32.xlu0 %v501, 1
  %v707 = vpop.permute.xlu0 %706
  %708 = vrot.lane.b32.xlu0 %v502, 1
  %v709 = vpop.permute.xlu0 %708
  %710 = vrot.lane.b32.xlu0 %v503, 1
  %v711 = vpop.permute.xlu0 %710
  %712 = vrot.lane.b32.xlu0 %v504, 1
  %v713 = vpop.permute.xlu0 %712
  %714 = vrot.lane.b32.xlu0 %v505, 1
  %v715 = vpop.permute.xlu0 %714
  %716 = vrot.lane.b32.xlu0 %v506, 1
  %v717 = vpop.permute.xlu0 %716
  %718 = vrot.lane.b32.xlu0 %v507, 1
  %v719 = vpop.permute.xlu0 %718
  %720 = vrot.lane.b32.xlu0 %v508, 1
  %v721 = vpop.permute.xlu0 %720
  %722 = vrot.lane.b32.xlu0 %v509, 1
  %v723 = vpop.permute.xlu0 %722
  %724 = vrot.lane.b32.xlu0 %v510, 1
  %v725 = vpop.permute.xlu0 %724
  %726 = vrot.lane.b32.xlu0 %v511, 1
  %v727 = vpop.permute.xlu0 %726
  %728 = vrot.lane.b32.xlu0 %v512, 1
  %v729 = vpop.permute.xlu0 %728
  %730 = vrot.lane.b32.xlu0 %v513, 1
  %v731 = vpop.permute.xlu0 %730
  %732 = vrot.lane.b32.xlu0 %v514, 1
  %v733 = vpop.permute.xlu0 %732
  %734 = vrot.lane.b32.xlu0 %v515, 1
  %v735 = vpop.permute.xlu0 %734
  %736 = vrot.lane.b32.xlu0 %v516, 1
  %v737 = vpop.permute.xlu0 %736
  %738 = vrot.lane.b32.xlu0 %v517, 1
  %v739 = vpop.permute.xlu0 %738
  %740 = vrot.lane.b32.xlu0 %v518, 1
  %v741 = vpop.permute.xlu0 %740
  %742 = vrot.lane.b32.xlu0 %v519, 1
  %v743 = vpop.permute.xlu0 %742
  %v744 = vsel %vm37, %v488, %v681
  %v745 = vsel %vm37, %v489, %v683
  %v746 = vsel %vm37, %v490, %v685
  %v747 = vsel %vm37, %v491, %v687
  %v748 = vsel %vm37, %v492, %v689
  %v749 = vsel %vm37, %v493, %v691
  %v750 = vsel %vm37, %v494, %v693
  %v751 = vsel %vm37, %v495, %v695
  %v752 = vsel %vm37, %v496, %v697
  %v753 = vsel %vm37, %v497, %v699
  %v754 = vsel %vm37, %v498, %v701
  %v755 = vsel %vm37, %v499, %v703
  %v756 = vsel %vm37, %v500, %v705
  %v757 = vsel %vm37, %v501, %v707
  %v758 = vsel %vm37, %v502, %v709
  %v759 = vsel %vm37, %v503, %v711
  %v760 = vsel %vm37, %v504, %v713
  %v761 = vsel %vm37, %v505, %v715
  %v762 = vsel %vm37, %v506, %v717
  %v763 = vsel %vm37, %v507, %v719
  %v764 = vsel %vm37, %v508, %v721
  %v765 = vsel %vm37, %v509, %v723
  %v766 = vsel %vm37, %v510, %v725
  %v767 = vsel %vm37, %v511, %v727
  %v768 = vsel %vm37, %v512, %v729
  %v769 = vsel %vm37, %v513, %v731
  %v770 = vsel %vm37, %v514, %v733
  %v771 = vsel %vm37, %v515, %v735
  %v772 = vsel %vm37, %v516, %v737
  %v773 = vsel %vm37, %v517, %v739
  %v774 = vsel %vm37, %v518, %v741
  %v775 = vsel %vm37, %v519, %v743
  %v776 = vsub.f32 %v648, %v744
  %v777 = vsub.f32 %v649, %v745
  %v778 = vsub.f32 %v650, %v746
  %v779 = vsub.f32 %v651, %v747
  %v780 = vsub.f32 %v652, %v748
  %v781 = vsub.f32 %v653, %v749
  %v782 = vsub.f32 %v654, %v750
  %v783 = vsub.f32 %v655, %v751
  %v784 = vsub.f32 %v656, %v752
  %v785 = vsub.f32 %v657, %v753
  %v786 = vsub.f32 %v658, %v754
  %v787 = vsub.f32 %v659, %v755
  %v788 = vsub.f32 %v660, %v756
  %v789 = vsub.f32 %v661, %v757
  %v790 = vsub.f32 %v662, %v758
  %v791 = vsub.f32 %v663, %v759
  %v792 = vsub.f32 %v664, %v760
  %v793 = vsub.f32 %v665, %v761
  %v794 = vsub.f32 %v666, %v762
  %v795 = vsub.f32 %v667, %v763
  %v796 = vsub.f32 %v668, %v764
  %v797 = vsub.f32 %v669, %v765
  %v798 = vsub.f32 %v670, %v766
  %v799 = vsub.f32 %v671, %v767
  %v800 = vsub.f32 %v672, %v768
  %v801 = vsub.f32 %v673, %v769
  %v802 = vsub.f32 %v674, %v770
  %v803 = vsub.f32 %v675, %v771
  %v804 = vsub.f32 %v676, %v772
  %v805 = vsub.f32 %v677, %v773
  %v806 = vsub.f32 %v678, %v774
  %v807 = vsub.f32 %v679, %v775
  %v808 = vsub.f32 %v520, %v552
  %v809 = vsub.f32 %v521, %v553
  %v810 = vsub.f32 %v522, %v554
  %v811 = vsub.f32 %v523, %v555
  %v812 = vsub.f32 %v524, %v556
  %v813 = vsub.f32 %v525, %v557
  %v814 = vsub.f32 %v526, %v558
  %v815 = vsub.f32 %v527, %v559
  %v816 = vsub.f32 %v528, %v560
  %v817 = vsub.f32 %v529, %v561
  %v818 = vsub.f32 %v530, %v562
  %v819 = vsub.f32 %v531, %v563
  %v820 = vsub.f32 %v532, %v564
  %v821 = vsub.f32 %v533, %v565
  %v822 = vsub.f32 %v534, %v566
  %v823 = vsub.f32 %v535, %v567
  %v824 = vsub.f32 %v536, %v568
  %v825 = vsub.f32 %v537, %v569
  %v826 = vsub.f32 %v538, %v570
  %v827 = vsub.f32 %v539, %v571
  %v828 = vsub.f32 %v540, %v572
  %v829 = vsub.f32 %v541, %v573
  %v830 = vsub.f32 %v542, %v574
  %v831 = vsub.f32 %v543, %v575
  %v832 = vsub.f32 %v544, %v576
  %v833 = vsub.f32 %v545, %v577
  %v834 = vsub.f32 %v546, %v578
  %v835 = vsub.f32 %v547, %v579
  %v836 = vsub.f32 %v548, %v580
  %v837 = vsub.f32 %v549, %v581
  %v838 = vsub.f32 %v550, %v582
  %v839 = vsub.f32 %v551, %v583
  %v840 = vmul.f32 %v776, %v776
  %v841 = vmul.f32 %v777, %v777
  %v842 = vmul.f32 %v778, %v778
  %v843 = vmul.f32 %v779, %v779
  %v844 = vmul.f32 %v780, %v780
  %v845 = vmul.f32 %v781, %v781
  %v846 = vmul.f32 %v782, %v782
  %v847 = vmul.f32 %v783, %v783
  %v848 = vmul.f32 %v784, %v784
  %v849 = vmul.f32 %v785, %v785
  %v850 = vmul.f32 %v786, %v786
  %v851 = vmul.f32 %v787, %v787
  %v852 = vmul.f32 %v788, %v788
  %v853 = vmul.f32 %v789, %v789
  %v854 = vmul.f32 %v790, %v790
  %v855 = vmul.f32 %v791, %v791
  %v856 = vmul.f32 %v792, %v792
  %v857 = vmul.f32 %v793, %v793
  %v858 = vmul.f32 %v794, %v794
  %v859 = vmul.f32 %v795, %v795
  %v860 = vmul.f32 %v796, %v796
  %v861 = vmul.f32 %v797, %v797
  %v862 = vmul.f32 %v798, %v798
  %v863 = vmul.f32 %v799, %v799
  %v864 = vmul.f32 %v800, %v800
  %v865 = vmul.f32 %v801, %v801
  %v866 = vmul.f32 %v802, %v802
  %v867 = vmul.f32 %v803, %v803
  %v868 = vmul.f32 %v804, %v804
  %v869 = vmul.f32 %v805, %v805
  %v870 = vmul.f32 %v806, %v806
  %v871 = vmul.f32 %v807, %v807
  %v872 = vmul.f32 %v808, %v808
  %v873 = vmul.f32 %v809, %v809
  %v874 = vmul.f32 %v810, %v810
  %v875 = vmul.f32 %v811, %v811
  %v876 = vmul.f32 %v812, %v812
  %v877 = vmul.f32 %v813, %v813
  %v878 = vmul.f32 %v814, %v814
  %v879 = vmul.f32 %v815, %v815
  %v880 = vmul.f32 %v816, %v816
  %v881 = vmul.f32 %v817, %v817
  %v882 = vmul.f32 %v818, %v818
  %v883 = vmul.f32 %v819, %v819
  %v884 = vmul.f32 %v820, %v820
  %v885 = vmul.f32 %v821, %v821
  %v886 = vmul.f32 %v822, %v822
  %v887 = vmul.f32 %v823, %v823
  %v888 = vmul.f32 %v824, %v824
  %v889 = vmul.f32 %v825, %v825
  %v890 = vmul.f32 %v826, %v826
  %v891 = vmul.f32 %v827, %v827
  %v892 = vmul.f32 %v828, %v828
  %v893 = vmul.f32 %v829, %v829
  %v894 = vmul.f32 %v830, %v830
  %v895 = vmul.f32 %v831, %v831
  %v896 = vmul.f32 %v832, %v832
  %v897 = vmul.f32 %v833, %v833
  %v898 = vmul.f32 %v834, %v834
  %v899 = vmul.f32 %v835, %v835
  %v900 = vmul.f32 %v836, %v836
  %v901 = vmul.f32 %v837, %v837
  %v902 = vmul.f32 %v838, %v838
  %v903 = vmul.f32 %v839, %v839
  %v904 = vadd.f32 %v840, %v872
  %v905 = vadd.f32 %v841, %v873
  %v906 = vadd.f32 %v842, %v874
  %v907 = vadd.f32 %v843, %v875
  %v908 = vadd.f32 %v844, %v876
  %v909 = vadd.f32 %v845, %v877
  %v910 = vadd.f32 %v846, %v878
  %v911 = vadd.f32 %v847, %v879
  %v912 = vadd.f32 %v848, %v880
  %v913 = vadd.f32 %v849, %v881
  %v914 = vadd.f32 %v850, %v882
  %v915 = vadd.f32 %v851, %v883
  %v916 = vadd.f32 %v852, %v884
  %v917 = vadd.f32 %v853, %v885
  %v918 = vadd.f32 %v854, %v886
  %v919 = vadd.f32 %v855, %v887
  %v920 = vadd.f32 %v856, %v888
  %v921 = vadd.f32 %v857, %v889
  %v922 = vadd.f32 %v858, %v890
  %v923 = vadd.f32 %v859, %v891
  %v924 = vadd.f32 %v860, %v892
  %v925 = vadd.f32 %v861, %v893
  %v926 = vadd.f32 %v862, %v894
  %v927 = vadd.f32 %v863, %v895
  %v928 = vadd.f32 %v864, %v896
  %v929 = vadd.f32 %v865, %v897
  %v930 = vadd.f32 %v866, %v898
  %v931 = vadd.f32 %v867, %v899
  %v932 = vadd.f32 %v868, %v900
  %v933 = vadd.f32 %v869, %v901
  %v934 = vadd.f32 %v870, %v902
  %v935 = vadd.f32 %v871, %v903
  %vm936 = vcmp.gt.f32.partialorder %v904, %v455
  %vm937 = vcmp.gt.f32.partialorder %v905, %v456
  %vm938 = vcmp.gt.f32.partialorder %v906, %v457
  %vm939 = vcmp.gt.f32.partialorder %v907, %v458
  %vm940 = vcmp.gt.f32.partialorder %v908, %v459
  %vm941 = vcmp.gt.f32.partialorder %v909, %v460
  %vm942 = vcmp.gt.f32.partialorder %v910, %v461
  %vm943 = vcmp.gt.f32.partialorder %v911, %v462
  %vm944 = vcmp.gt.f32.partialorder %v912, %v463
  %vm945 = vcmp.gt.f32.partialorder %v913, %v464
  %vm946 = vcmp.gt.f32.partialorder %v914, %v465
  %vm947 = vcmp.gt.f32.partialorder %v915, %v466
  %vm948 = vcmp.gt.f32.partialorder %v916, %v467
  %vm949 = vcmp.gt.f32.partialorder %v917, %v468
  %vm950 = vcmp.gt.f32.partialorder %v918, %v469
  %vm951 = vcmp.gt.f32.partialorder %v919, %v470
  %vm952 = vcmp.gt.f32.partialorder %v920, %v471
  %vm953 = vcmp.gt.f32.partialorder %v921, %v472
  %vm954 = vcmp.gt.f32.partialorder %v922, %v473
  %vm955 = vcmp.gt.f32.partialorder %v923, %v474
  %vm956 = vcmp.gt.f32.partialorder %v924, %v475
  %vm957 = vcmp.gt.f32.partialorder %v925, %v476
  %vm958 = vcmp.gt.f32.partialorder %v926, %v477
  %vm959 = vcmp.gt.f32.partialorder %v927, %v478
  %vm960 = vcmp.gt.f32.partialorder %v928, %v479
  %vm961 = vcmp.gt.f32.partialorder %v929, %v480
  %vm962 = vcmp.gt.f32.partialorder %v930, %v481
  %vm963 = vcmp.gt.f32.partialorder %v931, %v482
  %vm964 = vcmp.gt.f32.partialorder %v932, %v483
  %vm965 = vcmp.gt.f32.partialorder %v933, %v484
  %vm966 = vcmp.gt.f32.partialorder %v934, %v485
  %vm967 = vcmp.gt.f32.partialorder %v935, %v486
  %v968 = vsel %vm936, %v776, %v327
  %v969 = vsel %vm937, %v777, %v328
  %v970 = vsel %vm938, %v778, %v329
  %v971 = vsel %vm939, %v779, %v330
  %v972 = vsel %vm940, %v780, %v331
  %v973 = vsel %vm941, %v781, %v332
  %v974 = vsel %vm942, %v782, %v333
  %v975 = vsel %vm943, %v783, %v334
  %v976 = vsel %vm944, %v784, %v335
  %v977 = vsel %vm945, %v785, %v336
  %v978 = vsel %vm946, %v786, %v337
  %v979 = vsel %vm947, %v787, %v338
  %v980 = vsel %vm948, %v788, %v339
  %v981 = vsel %vm949, %v789, %v340
  %v982 = vsel %vm950, %v790, %v341
  %v983 = vsel %vm951, %v791, %v342
  %v984 = vsel %vm952, %v792, %v343
  %v985 = vsel %vm953, %v793, %v344
  %v986 = vsel %vm954, %v794, %v345
  %v987 = vsel %vm955, %v795, %v346
  %v988 = vsel %vm956, %v796, %v347
  %v989 = vsel %vm957, %v797, %v348
  %v990 = vsel %vm958, %v798, %v349
  %v991 = vsel %vm959, %v799, %v350
  %v992 = vsel %vm960, %v800, %v351
  %v993 = vsel %vm961, %v801, %v352
  %v994 = vsel %vm962, %v802, %v353
  %v995 = vsel %vm963, %v803, %v354
  %v996 = vsel %vm964, %v804, %v355
  %v997 = vsel %vm965, %v805, %v356
  %v998 = vsel %vm966, %v806, %v357
  %v999 = vsel %vm967, %v807, %v358
  %v1000 = vsel %vm936, %v808, %v359
  %v1001 = vsel %vm937, %v809, %v360
  %v1002 = vsel %vm938, %v810, %v361
  %v1003 = vsel %vm939, %v811, %v362
  %v1004 = vsel %vm940, %v812, %v363
  %v1005 = vsel %vm941, %v813, %v364
  %v1006 = vsel %vm942, %v814, %v365
  %v1007 = vsel %vm943, %v815, %v366
  %v1008 = vsel %vm944, %v816, %v367
  %v1009 = vsel %vm945, %v817, %v368
  %v1010 = vsel %vm946, %v818, %v369
  %v1011 = vsel %vm947, %v819, %v370
  %v1012 = vsel %vm948, %v820, %v371
  %v1013 = vsel %vm949, %v821, %v372
  %v1014 = vsel %vm950, %v822, %v373
  %v1015 = vsel %vm951, %v823, %v374
  %v1016 = vsel %vm952, %v824, %v375
  %v1017 = vsel %vm953, %v825, %v376
  %v1018 = vsel %vm954, %v826, %v377
  %v1019 = vsel %vm955, %v827, %v378
  %v1020 = vsel %vm956, %v828, %v379
  %v1021 = vsel %vm957, %v829, %v380
  %v1022 = vsel %vm958, %v830, %v381
  %v1023 = vsel %vm959, %v831, %v382
  %v1024 = vsel %vm960, %v832, %v383
  %v1025 = vsel %vm961, %v833, %v384
  %v1026 = vsel %vm962, %v834, %v385
  %v1027 = vsel %vm963, %v835, %v386
  %v1028 = vsel %vm964, %v836, %v387
  %v1029 = vsel %vm965, %v837, %v388
  %v1030 = vsel %vm966, %v838, %v389
  %v1031 = vsel %vm967, %v839, %v390
  %v1032 = vsel %vm936, %v904, %v455
  %v1033 = vsel %vm937, %v905, %v456
  %v1034 = vsel %vm938, %v906, %v457
  %v1035 = vsel %vm939, %v907, %v458
  %v1036 = vsel %vm940, %v908, %v459
  %v1037 = vsel %vm941, %v909, %v460
  %v1038 = vsel %vm942, %v910, %v461
  %v1039 = vsel %vm943, %v911, %v462
  %v1040 = vsel %vm944, %v912, %v463
  %v1041 = vsel %vm945, %v913, %v464
  %v1042 = vsel %vm946, %v914, %v465
  %v1043 = vsel %vm947, %v915, %v466
  %v1044 = vsel %vm948, %v916, %v467
  %v1045 = vsel %vm949, %v917, %v468
  %v1046 = vsel %vm950, %v918, %v469
  %v1047 = vsel %vm951, %v919, %v470
  %v1048 = vsel %vm952, %v920, %v471
  %v1049 = vsel %vm953, %v921, %v472
  %v1050 = vsel %vm954, %v922, %v473
  %v1051 = vsel %vm955, %v923, %v474
  %v1052 = vsel %vm956, %v924, %v475
  %v1053 = vsel %vm957, %v925, %v476
  %v1054 = vsel %vm958, %v926, %v477
  %v1055 = vsel %vm959, %v927, %v478
  %v1056 = vsel %vm960, %v928, %v479
  %v1057 = vsel %vm961, %v929, %v480
  %v1058 = vsel %vm962, %v930, %v481
  %v1059 = vsel %vm963, %v931, %v482
  %v1060 = vsel %vm964, %v932, %v483
  %v1061 = vsel %vm965, %v933, %v484
  %v1062 = vsel %vm966, %v934, %v485
  %v1063 = vsel %vm967, %v935, %v486
  %s1064 = scalar_lea.vmem %s0, 528
  %v1065 = vld [vmem:[%s1064 + $0x1] sm:$0xff]
  %v1066 = vld [vmem:[%s1064 + $0x9] sm:$0xff]
  %v1067 = vld [vmem:[%s1064 + $0x11] sm:$0xff]
  %v1068 = vld [vmem:[%s1064 + $0x19] sm:$0xff]
  %v1069 = vld [vmem:[%s1064 + $0x21] sm:$0xff]
  %v1070 = vld [vmem:[%s1064 + $0x29] sm:$0xff]
  %v1071 = vld [vmem:[%s1064 + $0x31] sm:$0xff]
  %v1072 = vld [vmem:[%s1064 + $0x39] sm:$0xff]
  %v1073 = vld [vmem:[%s1064 + $0x41] sm:$0xff]
  %v1074 = vld [vmem:[%s1064 + $0x49] sm:$0xff]
  %v1075 = vld [vmem:[%s1064 + $0x51] sm:$0xff]
  %v1076 = vld [vmem:[%s1064 + $0x59] sm:$0xff]
  %v1077 = vld [vmem:[%s1064 + $0x61] sm:$0xff]
  %v1078 = vld [vmem:[%s1064 + $0x69] sm:$0xff]
  %v1079 = vld [vmem:[%s1064 + $0x71] sm:$0xff]
  %v1080 = vld [vmem:[%s1064 + $0x79] sm:$0xff]
  %v1081 = vld [vmem:[%s1064 + $0x81] sm:$0xff]
  %v1082 = vld [vmem:[%s1064 + $0x89] sm:$0xff]
  %v1083 = vld [vmem:[%s1064 + $0x91] sm:$0xff]
  %v1084 = vld [vmem:[%s1064 + $0x99] sm:$0xff]
  %v1085 = vld [vmem:[%s1064 + $0xa1] sm:$0xff]
  %v1086 = vld [vmem:[%s1064 + $0xa9] sm:$0xff]
  %v1087 = vld [vmem:[%s1064 + $0xb1] sm:$0xff]
  %v1088 = vld [vmem:[%s1064 + $0xb9] sm:$0xff]
  %v1089 = vld [vmem:[%s1064 + $0xc1] sm:$0xff]
  %v1090 = vld [vmem:[%s1064 + $0xc9] sm:$0xff]
  %v1091 = vld [vmem:[%s1064 + $0xd1] sm:$0xff]
  %v1092 = vld [vmem:[%s1064 + $0xd9] sm:$0xff]
  %v1093 = vld [vmem:[%s1064 + $0xe1] sm:$0xff]
  %v1094 = vld [vmem:[%s1064 + $0xe9] sm:$0xff]
  %v1095 = vld [vmem:[%s1064 + $0xf1] sm:$0xff]
  %v1096 = vld [vmem:[%s1064 + $0xf9] sm:$0xff]
  %v1097 = vld [vmem:[%s1064 + $0x2] sm:$0xff]
  %v1098 = vld [vmem:[%s1064 + $0xa] sm:$0xff]
  %v1099 = vld [vmem:[%s1064 + $0x12] sm:$0xff]
  %v1100 = vld [vmem:[%s1064 + $0x1a] sm:$0xff]
  %v1101 = vld [vmem:[%s1064 + $0x22] sm:$0xff]
  %v1102 = vld [vmem:[%s1064 + $0x2a] sm:$0xff]
  %v1103 = vld [vmem:[%s1064 + $0x32] sm:$0xff]
  %v1104 = vld [vmem:[%s1064 + $0x3a] sm:$0xff]
  %v1105 = vld [vmem:[%s1064 + $0x42] sm:$0xff]
  %v1106 = vld [vmem:[%s1064 + $0x4a] sm:$0xff]
  %v1107 = vld [vmem:[%s1064 + $0x52] sm:$0xff]
  %v1108 = vld [vmem:[%s1064 + $0x5a] sm:$0xff]
  %v1109 = vld [vmem:[%s1064 + $0x62] sm:$0xff]
  %v1110 = vld [vmem:[%s1064 + $0x6a] sm:$0xff]
  %v1111 = vld [vmem:[%s1064 + $0x72] sm:$0xff]
  %v1112 = vld [vmem:[%s1064 + $0x7a] sm:$0xff]
  %v1113 = vld [vmem:[%s1064 + $0x82] sm:$0xff]
  %v1114 = vld [vmem:[%s1064 + $0x8a] sm:$0xff]
  %v1115 = vld [vmem:[%s1064 + $0x92] sm:$0xff]
  %v1116 = vld [vmem:[%s1064 + $0x9a] sm:$0xff]
  %v1117 = vld [vmem:[%s1064 + $0xa2] sm:$0xff]
  %v1118 = vld [vmem:[%s1064 + $0xaa] sm:$0xff]
  %v1119 = vld [vmem:[%s1064 + $0xb2] sm:$0xff]
  %v1120 = vld [vmem:[%s1064 + $0xba] sm:$0xff]
  %v1121 = vld [vmem:[%s1064 + $0xc2] sm:$0xff]
  %v1122 = vld [vmem:[%s1064 + $0xca] sm:$0xff]
  %v1123 = vld [vmem:[%s1064 + $0xd2] sm:$0xff]
  %v1124 = vld [vmem:[%s1064 + $0xda] sm:$0xff]
  %v1125 = vld [vmem:[%s1064 + $0xe2] sm:$0xff]
  %v1126 = vld [vmem:[%s1064 + $0xea] sm:$0xff]
  %v1127 = vld [vmem:[%s1064 + $0xf2] sm:$0xff]
  %v1128 = vld [vmem:[%s1064 + $0xfa] sm:$0xff]
  %v1129 = vld [vmem:[%s1064] sm:$0xff]
  %v1130 = vld [vmem:[%s1064 + $0x8] sm:$0xff]
  %v1131 = vld [vmem:[%s1064 + $0x10] sm:$0xff]
  %v1132 = vld [vmem:[%s1064 + $0x18] sm:$0xff]
  %v1133 = vld [vmem:[%s1064 + $0x20] sm:$0xff]
  %v1134 = vld [vmem:[%s1064 + $0x28] sm:$0xff]
  %v1135 = vld [vmem:[%s1064 + $0x30] sm:$0xff]
  %v1136 = vld [vmem:[%s1064 + $0x38] sm:$0xff]
  %v1137 = vld [vmem:[%s1064 + $0x40] sm:$0xff]
  %v1138 = vld [vmem:[%s1064 + $0x48] sm:$0xff]
  %v1139 = vld [vmem:[%s1064 + $0x50] sm:$0xff]
  %v1140 = vld [vmem:[%s1064 + $0x58] sm:$0xff]
  %v1141 = vld [vmem:[%s1064 + $0x60] sm:$0xff]
  %v1142 = vld [vmem:[%s1064 + $0x68] sm:$0xff]
  %v1143 = vld [vmem:[%s1064 + $0x70] sm:$0xff]
  %v1144 = vld [vmem:[%s1064 + $0x78] sm:$0xff]
  %v1145 = vld [vmem:[%s1064 + $0x80] sm:$0xff]
  %v1146 = vld [vmem:[%s1064 + $0x88] sm:$0xff]
  %v1147 = vld [vmem:[%s1064 + $0x90] sm:$0xff]
  %v1148 = vld [vmem:[%s1064 + $0x98] sm:$0xff]
  %v1149 = vld [vmem:[%s1064 + $0xa0] sm:$0xff]
  %v1150 = vld [vmem:[%s1064 + $0xa8] sm:$0xff]
  %v1151 = vld [vmem:[%s1064 + $0xb0] sm:$0xff]
  %v1152 = vld [vmem:[%s1064 + $0xb8] sm:$0xff]
  %v1153 = vld [vmem:[%s1064 + $0xc0] sm:$0xff]
  %v1154 = vld [vmem:[%s1064 + $0xc8] sm:$0xff]
  %v1155 = vld [vmem:[%s1064 + $0xd0] sm:$0xff]
  %v1156 = vld [vmem:[%s1064 + $0xd8] sm:$0xff]
  %v1157 = vld [vmem:[%s1064 + $0xe0] sm:$0xff]
  %v1158 = vld [vmem:[%s1064 + $0xe8] sm:$0xff]
  %v1159 = vld [vmem:[%s1064 + $0xf0] sm:$0xff]
  %v1160 = vld [vmem:[%s1064 + $0xf8] sm:$0xff]
  %1161 = vrot.lane.b32.xlu0 %v1065, 127
  %v1162 = vpop.permute.xlu0 %1161
  %1163 = vrot.lane.b32.xlu0 %v1066, 127
  %v1164 = vpop.permute.xlu0 %1163
  %1165 = vrot.lane.b32.xlu0 %v1067, 127
  %v1166 = vpop.permute.xlu0 %1165
  %1167 = vrot.lane.b32.xlu0 %v1068, 127
  %v1168 = vpop.permute.xlu0 %1167
  %1169 = vrot.lane.b32.xlu0 %v1069, 127
  %v1170 = vpop.permute.xlu0 %1169
  %1171 = vrot.lane.b32.xlu0 %v1070, 127
  %v1172 = vpop.permute.xlu0 %1171
  %1173 = vrot.lane.b32.xlu0 %v1071, 127
  %v1174 = vpop.permute.xlu0 %1173
  %1175 = vrot.lane.b32.xlu0 %v1072, 127
  %v1176 = vpop.permute.xlu0 %1175
  %1177 = vrot.lane.b32.xlu0 %v1073, 127
  %v1178 = vpop.permute.xlu0 %1177
  %1179 = vrot.lane.b32.xlu0 %v1074, 127
  %v1180 = vpop.permute.xlu0 %1179
  %1181 = vrot.lane.b32.xlu0 %v1075, 127
  %v1182 = vpop.permute.xlu0 %1181
  %1183 = vrot.lane.b32.xlu0 %v1076, 127
  %v1184 = vpop.permute.xlu0 %1183
  %1185 = vrot.lane.b32.xlu0 %v1077, 127
  %v1186 = vpop.permute.xlu0 %1185
  %1187 = vrot.lane.b32.xlu0 %v1078, 127
  %v1188 = vpop.permute.xlu0 %1187
  %1189 = vrot.lane.b32.xlu0 %v1079, 127
  %v1190 = vpop.permute.xlu0 %1189
  %1191 = vrot.lane.b32.xlu0 %v1080, 127
  %v1192 = vpop.permute.xlu0 %1191
  %1193 = vrot.lane.b32.xlu0 %v1081, 127
  %v1194 = vpop.permute.xlu0 %1193
  %1195 = vrot.lane.b32.xlu0 %v1082, 127
  %v1196 = vpop.permute.xlu0 %1195
  %1197 = vrot.lane.b32.xlu0 %v1083, 127
  %v1198 = vpop.permute.xlu0 %1197
  %1199 = vrot.lane.b32.xlu0 %v1084, 127
  %v1200 = vpop.permute.xlu0 %1199
  %1201 = vrot.lane.b32.xlu0 %v1085, 127
  %v1202 = vpop.permute.xlu0 %1201
  %1203 = vrot.lane.b32.xlu0 %v1086, 127
  %v1204 = vpop.permute.xlu0 %1203
  %1205 = vrot.lane.b32.xlu0 %v1087, 127
  %v1206 = vpop.permute.xlu0 %1205
  %1207 = vrot.lane.b32.xlu0 %v1088, 127
  %v1208 = vpop.permute.xlu0 %1207
  %1209 = vrot.lane.b32.xlu0 %v1089, 127
  %v1210 = vpop.permute.xlu0 %1209
  %1211 = vrot.lane.b32.xlu0 %v1090, 127
  %v1212 = vpop.permute.xlu0 %1211
  %1213 = vrot.lane.b32.xlu0 %v1091, 127
  %v1214 = vpop.permute.xlu0 %1213
  %1215 = vrot.lane.b32.xlu0 %v1092, 127
  %v1216 = vpop.permute.xlu0 %1215
  %1217 = vrot.lane.b32.xlu0 %v1093, 127
  %v1218 = vpop.permute.xlu0 %1217
  %1219 = vrot.lane.b32.xlu0 %v1094, 127
  %v1220 = vpop.permute.xlu0 %1219
  %1221 = vrot.lane.b32.xlu0 %v1095, 127
  %v1222 = vpop.permute.xlu0 %1221
  %1223 = vrot.lane.b32.xlu0 %v1096, 127
  %v1224 = vpop.permute.xlu0 %1223
  %v1225 = vsel %vm38, %v1065, %v1162
  %v1226 = vsel %vm38, %v1066, %v1164
  %v1227 = vsel %vm38, %v1067, %v1166
  %v1228 = vsel %vm38, %v1068, %v1168
  %v1229 = vsel %vm38, %v1069, %v1170
  %v1230 = vsel %vm38, %v1070, %v1172
  %v1231 = vsel %vm38, %v1071, %v1174
  %v1232 = vsel %vm38, %v1072, %v1176
  %v1233 = vsel %vm38, %v1073, %v1178
  %v1234 = vsel %vm38, %v1074, %v1180
  %v1235 = vsel %vm38, %v1075, %v1182
  %v1236 = vsel %vm38, %v1076, %v1184
  %v1237 = vsel %vm38, %v1077, %v1186
  %v1238 = vsel %vm38, %v1078, %v1188
  %v1239 = vsel %vm38, %v1079, %v1190
  %v1240 = vsel %vm38, %v1080, %v1192
  %v1241 = vsel %vm38, %v1081, %v1194
  %v1242 = vsel %vm38, %v1082, %v1196
  %v1243 = vsel %vm38, %v1083, %v1198
  %v1244 = vsel %vm38, %v1084, %v1200
  %v1245 = vsel %vm38, %v1085, %v1202
  %v1246 = vsel %vm38, %v1086, %v1204
  %v1247 = vsel %vm38, %v1087, %v1206
  %v1248 = vsel %vm38, %v1088, %v1208
  %v1249 = vsel %vm38, %v1089, %v1210
  %v1250 = vsel %vm38, %v1090, %v1212
  %v1251 = vsel %vm38, %v1091, %v1214
  %v1252 = vsel %vm38, %v1092, %v1216
  %v1253 = vsel %vm38, %v1093, %v1218
  %v1254 = vsel %vm38, %v1094, %v1220
  %v1255 = vsel %vm38, %v1095, %v1222
  %v1256 = vsel %vm38, %v1096, %v1224
  %1257 = vrot.lane.b32.xlu0 %v1065, 1
  %v1258 = vpop.permute.xlu0 %1257
  %1259 = vrot.lane.b32.xlu0 %v1066, 1
  %v1260 = vpop.permute.xlu0 %1259
  %1261 = vrot.lane.b32.xlu0 %v1067, 1
  %v1262 = vpop.permute.xlu0 %1261
  %1263 = vrot.lane.b32.xlu0 %v1068, 1
  %v1264 = vpop.permute.xlu0 %1263
  %1265 = vrot.lane.b32.xlu0 %v1069, 1
  %v1266 = vpop.permute.xlu0 %1265
  %1267 = vrot.lane.b32.xlu0 %v1070, 1
  %v1268 = vpop.permute.xlu0 %1267
  %1269 = vrot.lane.b32.xlu0 %v1071, 1
  %v1270 = vpop.permute.xlu0 %1269
  %1271 = vrot.lane.b32.xlu0 %v1072, 1
  %v1272 = vpop.permute.xlu0 %1271
  %1273 = vrot.lane.b32.xlu0 %v1073, 1
  %v1274 = vpop.permute.xlu0 %1273
  %1275 = vrot.lane.b32.xlu0 %v1074, 1
  %v1276 = vpop.permute.xlu0 %1275
  %1277 = vrot.lane.b32.xlu0 %v1075, 1
  %v1278 = vpop.permute.xlu0 %1277
  %1279 = vrot.lane.b32.xlu0 %v1076, 1
  %v1280 = vpop.permute.xlu0 %1279
  %1281 = vrot.lane.b32.xlu0 %v1077, 1
  %v1282 = vpop.permute.xlu0 %1281
  %1283 = vrot.lane.b32.xlu0 %v1078, 1
  %v1284 = vpop.permute.xlu0 %1283
  %1285 = vrot.lane.b32.xlu0 %v1079, 1
  %v1286 = vpop.permute.xlu0 %1285
  %1287 = vrot.lane.b32.xlu0 %v1080, 1
  %v1288 = vpop.permute.xlu0 %1287
  %1289 = vrot.lane.b32.xlu0 %v1081, 1
  %v1290 = vpop.permute.xlu0 %1289
  %1291 = vrot.lane.b32.xlu0 %v1082, 1
  %v1292 = vpop.permute.xlu0 %1291
  %1293 = vrot.lane.b32.xlu0 %v1083, 1
  %v1294 = vpop.permute.xlu0 %1293
  %1295 = vrot.lane.b32.xlu0 %v1084, 1
  %v1296 = vpop.permute.xlu0 %1295
  %1297 = vrot.lane.b32.xlu0 %v1085, 1
  %v1298 = vpop.permute.xlu0 %1297
  %1299 = vrot.lane.b32.xlu0 %v1086, 1
  %v1300 = vpop.permute.xlu0 %1299
  %1301 = vrot.lane.b32.xlu0 %v1087, 1
  %v1302 = vpop.permute.xlu0 %1301
  %1303 = vrot.lane.b32.xlu0 %v1088, 1
  %v1304 = vpop.permute.xlu0 %1303
  %1305 = vrot.lane.b32.xlu0 %v1089, 1
  %v1306 = vpop.permute.xlu0 %1305
  %1307 = vrot.lane.b32.xlu0 %v1090, 1
  %v1308 = vpop.permute.xlu0 %1307
  %1309 = vrot.lane.b32.xlu0 %v1091, 1
  %v1310 = vpop.permute.xlu0 %1309
  %1311 = vrot.lane.b32.xlu0 %v1092, 1
  %v1312 = vpop.permute.xlu0 %1311
  %1313 = vrot.lane.b32.xlu0 %v1093, 1
  %v1314 = vpop.permute.xlu0 %1313
  %1315 = vrot.lane.b32.xlu0 %v1094, 1
  %v1316 = vpop.permute.xlu0 %1315
  %1317 = vrot.lane.b32.xlu0 %v1095, 1
  %v1318 = vpop.permute.xlu0 %1317
  %1319 = vrot.lane.b32.xlu0 %v1096, 1
  %v1320 = vpop.permute.xlu0 %1319
  %v1321 = vsel %vm37, %v1065, %v1258
  %v1322 = vsel %vm37, %v1066, %v1260
  %v1323 = vsel %vm37, %v1067, %v1262
  %v1324 = vsel %vm37, %v1068, %v1264
  %v1325 = vsel %vm37, %v1069, %v1266
  %v1326 = vsel %vm37, %v1070, %v1268
  %v1327 = vsel %vm37, %v1071, %v1270
  %v1328 = vsel %vm37, %v1072, %v1272
  %v1329 = vsel %vm37, %v1073, %v1274
  %v1330 = vsel %vm37, %v1074, %v1276
  %v1331 = vsel %vm37, %v1075, %v1278
  %v1332 = vsel %vm37, %v1076, %v1280
  %v1333 = vsel %vm37, %v1077, %v1282
  %v1334 = vsel %vm37, %v1078, %v1284
  %v1335 = vsel %vm37, %v1079, %v1286
  %v1336 = vsel %vm37, %v1080, %v1288
  %v1337 = vsel %vm37, %v1081, %v1290
  %v1338 = vsel %vm37, %v1082, %v1292
  %v1339 = vsel %vm37, %v1083, %v1294
  %v1340 = vsel %vm37, %v1084, %v1296
  %v1341 = vsel %vm37, %v1085, %v1298
  %v1342 = vsel %vm37, %v1086, %v1300
  %v1343 = vsel %vm37, %v1087, %v1302
  %v1344 = vsel %vm37, %v1088, %v1304
  %v1345 = vsel %vm37, %v1089, %v1306
  %v1346 = vsel %vm37, %v1090, %v1308
  %v1347 = vsel %vm37, %v1091, %v1310
  %v1348 = vsel %vm37, %v1092, %v1312
  %v1349 = vsel %vm37, %v1093, %v1314
  %v1350 = vsel %vm37, %v1094, %v1316
  %v1351 = vsel %vm37, %v1095, %v1318
  %v1352 = vsel %vm37, %v1096, %v1320
  %v1353 = vsub.f32 %v1225, %v1321
  %v1354 = vsub.f32 %v1226, %v1322
  %v1355 = vsub.f32 %v1227, %v1323
  %v1356 = vsub.f32 %v1228, %v1324
  %v1357 = vsub.f32 %v1229, %v1325
  %v1358 = vsub.f32 %v1230, %v1326
  %v1359 = vsub.f32 %v1231, %v1327
  %v1360 = vsub.f32 %v1232, %v1328
  %v1361 = vsub.f32 %v1233, %v1329
  %v1362 = vsub.f32 %v1234, %v1330
  %v1363 = vsub.f32 %v1235, %v1331
  %v1364 = vsub.f32 %v1236, %v1332
  %v1365 = vsub.f32 %v1237, %v1333
  %v1366 = vsub.f32 %v1238, %v1334
  %v1367 = vsub.f32 %v1239, %v1335
  %v1368 = vsub.f32 %v1240, %v1336
  %v1369 = vsub.f32 %v1241, %v1337
  %v1370 = vsub.f32 %v1242, %v1338
  %v1371 = vsub.f32 %v1243, %v1339
  %v1372 = vsub.f32 %v1244, %v1340
  %v1373 = vsub.f32 %v1245, %v1341
  %v1374 = vsub.f32 %v1246, %v1342
  %v1375 = vsub.f32 %v1247, %v1343
  %v1376 = vsub.f32 %v1248, %v1344
  %v1377 = vsub.f32 %v1249, %v1345
  %v1378 = vsub.f32 %v1250, %v1346
  %v1379 = vsub.f32 %v1251, %v1347
  %v1380 = vsub.f32 %v1252, %v1348
  %v1381 = vsub.f32 %v1253, %v1349
  %v1382 = vsub.f32 %v1254, %v1350
  %v1383 = vsub.f32 %v1255, %v1351
  %v1384 = vsub.f32 %v1256, %v1352
  %v1385 = vsub.f32 %v1097, %v1129
  %v1386 = vsub.f32 %v1098, %v1130
  %v1387 = vsub.f32 %v1099, %v1131
  %v1388 = vsub.f32 %v1100, %v1132
  %v1389 = vsub.f32 %v1101, %v1133
  %v1390 = vsub.f32 %v1102, %v1134
  %v1391 = vsub.f32 %v1103, %v1135
  %v1392 = vsub.f32 %v1104, %v1136
  %v1393 = vsub.f32 %v1105, %v1137
  %v1394 = vsub.f32 %v1106, %v1138
  %v1395 = vsub.f32 %v1107, %v1139
  %v1396 = vsub.f32 %v1108, %v1140
  %v1397 = vsub.f32 %v1109, %v1141
  %v1398 = vsub.f32 %v1110, %v1142
  %v1399 = vsub.f32 %v1111, %v1143
  %v1400 = vsub.f32 %v1112, %v1144
  %v1401 = vsub.f32 %v1113, %v1145
  %v1402 = vsub.f32 %v1114, %v1146
  %v1403 = vsub.f32 %v1115, %v1147
  %v1404 = vsub.f32 %v1116, %v1148
  %v1405 = vsub.f32 %v1117, %v1149
  %v1406 = vsub.f32 %v1118, %v1150
  %v1407 = vsub.f32 %v1119, %v1151
  %v1408 = vsub.f32 %v1120, %v1152
  %v1409 = vsub.f32 %v1121, %v1153
  %v1410 = vsub.f32 %v1122, %v1154
  %v1411 = vsub.f32 %v1123, %v1155
  %v1412 = vsub.f32 %v1124, %v1156
  %v1413 = vsub.f32 %v1125, %v1157
  %v1414 = vsub.f32 %v1126, %v1158
  %v1415 = vsub.f32 %v1127, %v1159
  %v1416 = vsub.f32 %v1128, %v1160
  %v1417 = vmul.f32 %v1353, %v1353
  %v1418 = vmul.f32 %v1354, %v1354
  %v1419 = vmul.f32 %v1355, %v1355
  %v1420 = vmul.f32 %v1356, %v1356
  %v1421 = vmul.f32 %v1357, %v1357
  %v1422 = vmul.f32 %v1358, %v1358
  %v1423 = vmul.f32 %v1359, %v1359
  %v1424 = vmul.f32 %v1360, %v1360
  %v1425 = vmul.f32 %v1361, %v1361
  %v1426 = vmul.f32 %v1362, %v1362
  %v1427 = vmul.f32 %v1363, %v1363
  %v1428 = vmul.f32 %v1364, %v1364
  %v1429 = vmul.f32 %v1365, %v1365
  %v1430 = vmul.f32 %v1366, %v1366
  %v1431 = vmul.f32 %v1367, %v1367
  %v1432 = vmul.f32 %v1368, %v1368
  %v1433 = vmul.f32 %v1369, %v1369
  %v1434 = vmul.f32 %v1370, %v1370
  %v1435 = vmul.f32 %v1371, %v1371
  %v1436 = vmul.f32 %v1372, %v1372
  %v1437 = vmul.f32 %v1373, %v1373
  %v1438 = vmul.f32 %v1374, %v1374
  %v1439 = vmul.f32 %v1375, %v1375
  %v1440 = vmul.f32 %v1376, %v1376
  %v1441 = vmul.f32 %v1377, %v1377
  %v1442 = vmul.f32 %v1378, %v1378
  %v1443 = vmul.f32 %v1379, %v1379
  %v1444 = vmul.f32 %v1380, %v1380
  %v1445 = vmul.f32 %v1381, %v1381
  %v1446 = vmul.f32 %v1382, %v1382
  %v1447 = vmul.f32 %v1383, %v1383
  %v1448 = vmul.f32 %v1384, %v1384
  %v1449 = vmul.f32 %v1385, %v1385
  %v1450 = vmul.f32 %v1386, %v1386
  %v1451 = vmul.f32 %v1387, %v1387
  %v1452 = vmul.f32 %v1388, %v1388
  %v1453 = vmul.f32 %v1389, %v1389
  %v1454 = vmul.f32 %v1390, %v1390
  %v1455 = vmul.f32 %v1391, %v1391
  %v1456 = vmul.f32 %v1392, %v1392
  %v1457 = vmul.f32 %v1393, %v1393
  %v1458 = vmul.f32 %v1394, %v1394
  %v1459 = vmul.f32 %v1395, %v1395
  %v1460 = vmul.f32 %v1396, %v1396
  %v1461 = vmul.f32 %v1397, %v1397
  %v1462 = vmul.f32 %v1398, %v1398
  %v1463 = vmul.f32 %v1399, %v1399
  %v1464 = vmul.f32 %v1400, %v1400
  %v1465 = vmul.f32 %v1401, %v1401
  %v1466 = vmul.f32 %v1402, %v1402
  %v1467 = vmul.f32 %v1403, %v1403
  %v1468 = vmul.f32 %v1404, %v1404
  %v1469 = vmul.f32 %v1405, %v1405
  %v1470 = vmul.f32 %v1406, %v1406
  %v1471 = vmul.f32 %v1407, %v1407
  %v1472 = vmul.f32 %v1408, %v1408
  %v1473 = vmul.f32 %v1409, %v1409
  %v1474 = vmul.f32 %v1410, %v1410
  %v1475 = vmul.f32 %v1411, %v1411
  %v1476 = vmul.f32 %v1412, %v1412
  %v1477 = vmul.f32 %v1413, %v1413
  %v1478 = vmul.f32 %v1414, %v1414
  %v1479 = vmul.f32 %v1415, %v1415
  %v1480 = vmul.f32 %v1416, %v1416
  %v1481 = vadd.f32 %v1417, %v1449
  %v1482 = vadd.f32 %v1418, %v1450
  %v1483 = vadd.f32 %v1419, %v1451
  %v1484 = vadd.f32 %v1420, %v1452
  %v1485 = vadd.f32 %v1421, %v1453
  %v1486 = vadd.f32 %v1422, %v1454
  %v1487 = vadd.f32 %v1423, %v1455
  %v1488 = vadd.f32 %v1424, %v1456
  %v1489 = vadd.f32 %v1425, %v1457
  %v1490 = vadd.f32 %v1426, %v1458
  %v1491 = vadd.f32 %v1427, %v1459
  %v1492 = vadd.f32 %v1428, %v1460
  %v1493 = vadd.f32 %v1429, %v1461
  %v1494 = vadd.f32 %v1430, %v1462
  %v1495 = vadd.f32 %v1431, %v1463
  %v1496 = vadd.f32 %v1432, %v1464
  %v1497 = vadd.f32 %v1433, %v1465
  %v1498 = vadd.f32 %v1434, %v1466
  %v1499 = vadd.f32 %v1435, %v1467
  %v1500 = vadd.f32 %v1436, %v1468
  %v1501 = vadd.f32 %v1437, %v1469
  %v1502 = vadd.f32 %v1438, %v1470
  %v1503 = vadd.f32 %v1439, %v1471
  %v1504 = vadd.f32 %v1440, %v1472
  %v1505 = vadd.f32 %v1441, %v1473
  %v1506 = vadd.f32 %v1442, %v1474
  %v1507 = vadd.f32 %v1443, %v1475
  %v1508 = vadd.f32 %v1444, %v1476
  %v1509 = vadd.f32 %v1445, %v1477
  %v1510 = vadd.f32 %v1446, %v1478
  %v1511 = vadd.f32 %v1447, %v1479
  %v1512 = vadd.f32 %v1448, %v1480
  %vm1513 = vcmp.gt.f32.partialorder %v1481, %v1032
  %vm1514 = vcmp.gt.f32.partialorder %v1482, %v1033
  %vm1515 = vcmp.gt.f32.partialorder %v1483, %v1034
  %vm1516 = vcmp.gt.f32.partialorder %v1484, %v1035
  %vm1517 = vcmp.gt.f32.partialorder %v1485, %v1036
  %vm1518 = vcmp.gt.f32.partialorder %v1486, %v1037
  %vm1519 = vcmp.gt.f32.partialorder %v1487, %v1038
  %vm1520 = vcmp.gt.f32.partialorder %v1488, %v1039
  %vm1521 = vcmp.gt.f32.partialorder %v1489, %v1040
  %vm1522 = vcmp.gt.f32.partialorder %v1490, %v1041
  %vm1523 = vcmp.gt.f32.partialorder %v1491, %v1042
  %vm1524 = vcmp.gt.f32.partialorder %v1492, %v1043
  %vm1525 = vcmp.gt.f32.partialorder %v1493, %v1044
  %vm1526 = vcmp.gt.f32.partialorder %v1494, %v1045
  %vm1527 = vcmp.gt.f32.partialorder %v1495, %v1046
  %vm1528 = vcmp.gt.f32.partialorder %v1496, %v1047
  %vm1529 = vcmp.gt.f32.partialorder %v1497, %v1048
  %vm1530 = vcmp.gt.f32.partialorder %v1498, %v1049
  %vm1531 = vcmp.gt.f32.partialorder %v1499, %v1050
  %vm1532 = vcmp.gt.f32.partialorder %v1500, %v1051
  %vm1533 = vcmp.gt.f32.partialorder %v1501, %v1052
  %vm1534 = vcmp.gt.f32.partialorder %v1502, %v1053
  %vm1535 = vcmp.gt.f32.partialorder %v1503, %v1054
  %vm1536 = vcmp.gt.f32.partialorder %v1504, %v1055
  %vm1537 = vcmp.gt.f32.partialorder %v1505, %v1056
  %vm1538 = vcmp.gt.f32.partialorder %v1506, %v1057
  %vm1539 = vcmp.gt.f32.partialorder %v1507, %v1058
  %vm1540 = vcmp.gt.f32.partialorder %v1508, %v1059
  %vm1541 = vcmp.gt.f32.partialorder %v1509, %v1060
  %vm1542 = vcmp.gt.f32.partialorder %v1510, %v1061
  %vm1543 = vcmp.gt.f32.partialorder %v1511, %v1062
  %vm1544 = vcmp.gt.f32.partialorder %v1512, %v1063
  %v1545 = vsel %vm1513, %v1353, %v968
  %v1546 = vsel %vm1514, %v1354, %v969
  %v1547 = vsel %vm1515, %v1355, %v970
  %v1548 = vsel %vm1516, %v1356, %v971
  %v1549 = vsel %vm1517, %v1357, %v972
  %v1550 = vsel %vm1518, %v1358, %v973
  %v1551 = vsel %vm1519, %v1359, %v974
  %v1552 = vsel %vm1520, %v1360, %v975
  %v1553 = vsel %vm1521, %v1361, %v976
  %v1554 = vsel %vm1522, %v1362, %v977
  %v1555 = vsel %vm1523, %v1363, %v978
  %v1556 = vsel %vm1524, %v1364, %v979
  %v1557 = vsel %vm1525, %v1365, %v980
  %v1558 = vsel %vm1526, %v1366, %v981
  %v1559 = vsel %vm1527, %v1367, %v982
  %v1560 = vsel %vm1528, %v1368, %v983
  %v1561 = vsel %vm1529, %v1369, %v984
  %v1562 = vsel %vm1530, %v1370, %v985
  %v1563 = vsel %vm1531, %v1371, %v986
  %v1564 = vsel %vm1532, %v1372, %v987
  %v1565 = vsel %vm1533, %v1373, %v988
  %v1566 = vsel %vm1534, %v1374, %v989
  %v1567 = vsel %vm1535, %v1375, %v990
  %v1568 = vsel %vm1536, %v1376, %v991
  %v1569 = vsel %vm1537, %v1377, %v992
  %v1570 = vsel %vm1538, %v1378, %v993
  %v1571 = vsel %vm1539, %v1379, %v994
  %v1572 = vsel %vm1540, %v1380, %v995
  %v1573 = vsel %vm1541, %v1381, %v996
  %v1574 = vsel %vm1542, %v1382, %v997
  %v1575 = vsel %vm1543, %v1383, %v998
  %v1576 = vsel %vm1544, %v1384, %v999
  %v1577 = vsel %vm1513, %v1385, %v1000
  %v1578 = vsel %vm1514, %v1386, %v1001
  %v1579 = vsel %vm1515, %v1387, %v1002
  %v1580 = vsel %vm1516, %v1388, %v1003
  %v1581 = vsel %vm1517, %v1389, %v1004
  %v1582 = vsel %vm1518, %v1390, %v1005
  %v1583 = vsel %vm1519, %v1391, %v1006
  %v1584 = vsel %vm1520, %v1392, %v1007
  %v1585 = vsel %vm1521, %v1393, %v1008
  %v1586 = vsel %vm1522, %v1394, %v1009
  %v1587 = vsel %vm1523, %v1395, %v1010
  %v1588 = vsel %vm1524, %v1396, %v1011
  %v1589 = vsel %vm1525, %v1397, %v1012
  %v1590 = vsel %vm1526, %v1398, %v1013
  %v1591 = vsel %vm1527, %v1399, %v1014
  %v1592 = vsel %vm1528, %v1400, %v1015
  %v1593 = vsel %vm1529, %v1401, %v1016
  %v1594 = vsel %vm1530, %v1402, %v1017
  %v1595 = vsel %vm1531, %v1403, %v1018
  %v1596 = vsel %vm1532, %v1404, %v1019
  %v1597 = vsel %vm1533, %v1405, %v1020
  %v1598 = vsel %vm1534, %v1406, %v1021
  %v1599 = vsel %vm1535, %v1407, %v1022
  %v1600 = vsel %vm1536, %v1408, %v1023
  %v1601 = vsel %vm1537, %v1409, %v1024
  %v1602 = vsel %vm1538, %v1410, %v1025
  %v1603 = vsel %vm1539, %v1411, %v1026
  %v1604 = vsel %vm1540, %v1412, %v1027
  %v1605 = vsel %vm1541, %v1413, %v1028
  %v1606 = vsel %vm1542, %v1414, %v1029
  %v1607 = vsel %vm1543, %v1415, %v1030
  %v1608 = vsel %vm1544, %v1416, %v1031
  %v1609 = vsel %vm1513, %v1481, %v1032
  %v1610 = vsel %vm1514, %v1482, %v1033
  %v1611 = vsel %vm1515, %v1483, %v1034
  %v1612 = vsel %vm1516, %v1484, %v1035
  %v1613 = vsel %vm1517, %v1485, %v1036
  %v1614 = vsel %vm1518, %v1486, %v1037
  %v1615 = vsel %vm1519, %v1487, %v1038
  %v1616 = vsel %vm1520, %v1488, %v1039
  %v1617 = vsel %vm1521, %v1489, %v1040
  %v1618 = vsel %vm1522, %v1490, %v1041
  %v1619 = vsel %vm1523, %v1491, %v1042
  %v1620 = vsel %vm1524, %v1492, %v1043
  %v1621 = vsel %vm1525, %v1493, %v1044
  %v1622 = vsel %vm1526, %v1494, %v1045
  %v1623 = vsel %vm1527, %v1495, %v1046
  %v1624 = vsel %vm1528, %v1496, %v1047
  %v1625 = vsel %vm1529, %v1497, %v1048
  %v1626 = vsel %vm1530, %v1498, %v1049
  %v1627 = vsel %vm1531, %v1499, %v1050
  %v1628 = vsel %vm1532, %v1500, %v1051
  %v1629 = vsel %vm1533, %v1501, %v1052
  %v1630 = vsel %vm1534, %v1502, %v1053
  %v1631 = vsel %vm1535, %v1503, %v1054
  %v1632 = vsel %vm1536, %v1504, %v1055
  %v1633 = vsel %vm1537, %v1505, %v1056
  %v1634 = vsel %vm1538, %v1506, %v1057
  %v1635 = vsel %vm1539, %v1507, %v1058
  %v1636 = vsel %vm1540, %v1508, %v1059
  %v1637 = vsel %vm1541, %v1509, %v1060
  %v1638 = vsel %vm1542, %v1510, %v1061
  %v1639 = vsel %vm1543, %v1511, %v1062
  %v1640 = vsel %vm1544, %v1512, %v1063
  %v1641 = vrsqrt.pop %v1609
  %v1642 = vmul.f32 %v1609, %v1641
  %vm1643 = vcmp.eq.f32.partialorder %v1609, inf
  %v1644 = vsel %vm1643, %v1609, %v1642
  %vm1645 = vcmp.eq.f32.partialorder %v1609, 0.0
  %v1646 = vand.u32 %v1609, 2147483648
  %v1647 = vsel %vm1645, %v1646, %v1644
  %v1648 = vrsqrt.pop %v1610
  %v1649 = vmul.f32 %v1610, %v1648
  %vm1650 = vcmp.eq.f32.partialorder %v1610, inf
  %v1651 = vsel %vm1650, %v1610, %v1649
  %vm1652 = vcmp.eq.f32.partialorder %v1610, 0.0
  %v1653 = vand.u32 %v1610, 2147483648
  %v1654 = vsel %vm1652, %v1653, %v1651
  %v1655 = vrsqrt.pop %v1611
  %v1656 = vmul.f32 %v1611, %v1655
  %vm1657 = vcmp.eq.f32.partialorder %v1611, inf
  %v1658 = vsel %vm1657, %v1611, %v1656
  %vm1659 = vcmp.eq.f32.partialorder %v1611, 0.0
  %v1660 = vand.u32 %v1611, 2147483648
  %v1661 = vsel %vm1659, %v1660, %v1658
  %v1662 = vrsqrt.pop %v1612
  %v1663 = vmul.f32 %v1612, %v1662
  %vm1664 = vcmp.eq.f32.partialorder %v1612, inf
  %v1665 = vsel %vm1664, %v1612, %v1663
  %vm1666 = vcmp.eq.f32.partialorder %v1612, 0.0
  %v1667 = vand.u32 %v1612, 2147483648
  %v1668 = vsel %vm1666, %v1667, %v1665
  %v1669 = vrsqrt.pop %v1613
  %v1670 = vmul.f32 %v1613, %v1669
  %vm1671 = vcmp.eq.f32.partialorder %v1613, inf
  %v1672 = vsel %vm1671, %v1613, %v1670
  %vm1673 = vcmp.eq.f32.partialorder %v1613, 0.0
  %v1674 = vand.u32 %v1613, 2147483648
  %v1675 = vsel %vm1673, %v1674, %v1672
  %v1676 = vrsqrt.pop %v1614
  %v1677 = vmul.f32 %v1614, %v1676
  %vm1678 = vcmp.eq.f32.partialorder %v1614, inf
  %v1679 = vsel %vm1678, %v1614, %v1677
  %vm1680 = vcmp.eq.f32.partialorder %v1614, 0.0
  %v1681 = vand.u32 %v1614, 2147483648
  %v1682 = vsel %vm1680, %v1681, %v1679
  %v1683 = vrsqrt.pop %v1615
  %v1684 = vmul.f32 %v1615, %v1683
  %vm1685 = vcmp.eq.f32.partialorder %v1615, inf
  %v1686 = vsel %vm1685, %v1615, %v1684
  %vm1687 = vcmp.eq.f32.partialorder %v1615, 0.0
  %v1688 = vand.u32 %v1615, 2147483648
  %v1689 = vsel %vm1687, %v1688, %v1686
  %v1690 = vrsqrt.pop %v1616
  %v1691 = vmul.f32 %v1616, %v1690
  %vm1692 = vcmp.eq.f32.partialorder %v1616, inf
  %v1693 = vsel %vm1692, %v1616, %v1691
  %vm1694 = vcmp.eq.f32.partialorder %v1616, 0.0
  %v1695 = vand.u32 %v1616, 2147483648
  %v1696 = vsel %vm1694, %v1695, %v1693
  %v1697 = vrsqrt.pop %v1617
  %v1698 = vmul.f32 %v1617, %v1697
  %vm1699 = vcmp.eq.f32.partialorder %v1617, inf
  %v1700 = vsel %vm1699, %v1617, %v1698
  %vm1701 = vcmp.eq.f32.partialorder %v1617, 0.0
  %v1702 = vand.u32 %v1617, 2147483648
  %v1703 = vsel %vm1701, %v1702, %v1700
  %v1704 = vrsqrt.pop %v1618
  %v1705 = vmul.f32 %v1618, %v1704
  %vm1706 = vcmp.eq.f32.partialorder %v1618, inf
  %v1707 = vsel %vm1706, %v1618, %v1705
  %vm1708 = vcmp.eq.f32.partialorder %v1618, 0.0
  %v1709 = vand.u32 %v1618, 2147483648
  %v1710 = vsel %vm1708, %v1709, %v1707
  %v1711 = vrsqrt.pop %v1619
  %v1712 = vmul.f32 %v1619, %v1711
  %vm1713 = vcmp.eq.f32.partialorder %v1619, inf
  %v1714 = vsel %vm1713, %v1619, %v1712
  %vm1715 = vcmp.eq.f32.partialorder %v1619, 0.0
  %v1716 = vand.u32 %v1619, 2147483648
  %v1717 = vsel %vm1715, %v1716, %v1714
  %v1718 = vrsqrt.pop %v1620
  %v1719 = vmul.f32 %v1620, %v1718
  %vm1720 = vcmp.eq.f32.partialorder %v1620, inf
  %v1721 = vsel %vm1720, %v1620, %v1719
  %vm1722 = vcmp.eq.f32.partialorder %v1620, 0.0
  %v1723 = vand.u32 %v1620, 2147483648
  %v1724 = vsel %vm1722, %v1723, %v1721
  %v1725 = vrsqrt.pop %v1621
  %v1726 = vmul.f32 %v1621, %v1725
  %vm1727 = vcmp.eq.f32.partialorder %v1621, inf
  %v1728 = vsel %vm1727, %v1621, %v1726
  %vm1729 = vcmp.eq.f32.partialorder %v1621, 0.0
  %v1730 = vand.u32 %v1621, 2147483648
  %v1731 = vsel %vm1729, %v1730, %v1728
  %v1732 = vrsqrt.pop %v1622
  %v1733 = vmul.f32 %v1622, %v1732
  %vm1734 = vcmp.eq.f32.partialorder %v1622, inf
  %v1735 = vsel %vm1734, %v1622, %v1733
  %vm1736 = vcmp.eq.f32.partialorder %v1622, 0.0
  %v1737 = vand.u32 %v1622, 2147483648
  %v1738 = vsel %vm1736, %v1737, %v1735
  %v1739 = vrsqrt.pop %v1623
  %v1740 = vmul.f32 %v1623, %v1739
  %vm1741 = vcmp.eq.f32.partialorder %v1623, inf
  %v1742 = vsel %vm1741, %v1623, %v1740
  %vm1743 = vcmp.eq.f32.partialorder %v1623, 0.0
  %v1744 = vand.u32 %v1623, 2147483648
  %v1745 = vsel %vm1743, %v1744, %v1742
  %v1746 = vrsqrt.pop %v1624
  %v1747 = vmul.f32 %v1624, %v1746
  %vm1748 = vcmp.eq.f32.partialorder %v1624, inf
  %v1749 = vsel %vm1748, %v1624, %v1747
  %vm1750 = vcmp.eq.f32.partialorder %v1624, 0.0
  %v1751 = vand.u32 %v1624, 2147483648
  %v1752 = vsel %vm1750, %v1751, %v1749
  %v1753 = vrsqrt.pop %v1625
  %v1754 = vmul.f32 %v1625, %v1753
  %vm1755 = vcmp.eq.f32.partialorder %v1625, inf
  %v1756 = vsel %vm1755, %v1625, %v1754
  %vm1757 = vcmp.eq.f32.partialorder %v1625, 0.0
  %v1758 = vand.u32 %v1625, 2147483648
  %v1759 = vsel %vm1757, %v1758, %v1756
  %v1760 = vrsqrt.pop %v1626
  %v1761 = vmul.f32 %v1626, %v1760
  %vm1762 = vcmp.eq.f32.partialorder %v1626, inf
  %v1763 = vsel %vm1762, %v1626, %v1761
  %vm1764 = vcmp.eq.f32.partialorder %v1626, 0.0
  %v1765 = vand.u32 %v1626, 2147483648
  %v1766 = vsel %vm1764, %v1765, %v1763
  %v1767 = vrsqrt.pop %v1627
  %v1768 = vmul.f32 %v1627, %v1767
  %vm1769 = vcmp.eq.f32.partialorder %v1627, inf
  %v1770 = vsel %vm1769, %v1627, %v1768
  %vm1771 = vcmp.eq.f32.partialorder %v1627, 0.0
  %v1772 = vand.u32 %v1627, 2147483648
  %v1773 = vsel %vm1771, %v1772, %v1770
  %v1774 = vrsqrt.pop %v1628
  %v1775 = vmul.f32 %v1628, %v1774
  %vm1776 = vcmp.eq.f32.partialorder %v1628, inf
  %v1777 = vsel %vm1776, %v1628, %v1775
  %vm1778 = vcmp.eq.f32.partialorder %v1628, 0.0
  %v1779 = vand.u32 %v1628, 2147483648
  %v1780 = vsel %vm1778, %v1779, %v1777
  %v1781 = vrsqrt.pop %v1629
  %v1782 = vmul.f32 %v1629, %v1781
  %vm1783 = vcmp.eq.f32.partialorder %v1629, inf
  %v1784 = vsel %vm1783, %v1629, %v1782
  %vm1785 = vcmp.eq.f32.partialorder %v1629, 0.0
  %v1786 = vand.u32 %v1629, 2147483648
  %v1787 = vsel %vm1785, %v1786, %v1784
  %v1788 = vrsqrt.pop %v1630
  %v1789 = vmul.f32 %v1630, %v1788
  %vm1790 = vcmp.eq.f32.partialorder %v1630, inf
  %v1791 = vsel %vm1790, %v1630, %v1789
  %vm1792 = vcmp.eq.f32.partialorder %v1630, 0.0
  %v1793 = vand.u32 %v1630, 2147483648
  %v1794 = vsel %vm1792, %v1793, %v1791
  %v1795 = vrsqrt.pop %v1631
  %v1796 = vmul.f32 %v1631, %v1795
  %vm1797 = vcmp.eq.f32.partialorder %v1631, inf
  %v1798 = vsel %vm1797, %v1631, %v1796
  %vm1799 = vcmp.eq.f32.partialorder %v1631, 0.0
  %v1800 = vand.u32 %v1631, 2147483648
  %v1801 = vsel %vm1799, %v1800, %v1798
  %v1802 = vrsqrt.pop %v1632
  %v1803 = vmul.f32 %v1632, %v1802
  %vm1804 = vcmp.eq.f32.partialorder %v1632, inf
  %v1805 = vsel %vm1804, %v1632, %v1803
  %vm1806 = vcmp.eq.f32.partialorder %v1632, 0.0
  %v1807 = vand.u32 %v1632, 2147483648
  %v1808 = vsel %vm1806, %v1807, %v1805
  %v1809 = vrsqrt.pop %v1633
  %v1810 = vmul.f32 %v1633, %v1809
  %vm1811 = vcmp.eq.f32.partialorder %v1633, inf
  %v1812 = vsel %vm1811, %v1633, %v1810
  %vm1813 = vcmp.eq.f32.partialorder %v1633, 0.0
  %v1814 = vand.u32 %v1633, 2147483648
  %v1815 = vsel %vm1813, %v1814, %v1812
  %v1816 = vrsqrt.pop %v1634
  %v1817 = vmul.f32 %v1634, %v1816
  %vm1818 = vcmp.eq.f32.partialorder %v1634, inf
  %v1819 = vsel %vm1818, %v1634, %v1817
  %vm1820 = vcmp.eq.f32.partialorder %v1634, 0.0
  %v1821 = vand.u32 %v1634, 2147483648
  %v1822 = vsel %vm1820, %v1821, %v1819
  %v1823 = vrsqrt.pop %v1635
  %v1824 = vmul.f32 %v1635, %v1823
  %vm1825 = vcmp.eq.f32.partialorder %v1635, inf
  %v1826 = vsel %vm1825, %v1635, %v1824
  %vm1827 = vcmp.eq.f32.partialorder %v1635, 0.0
  %v1828 = vand.u32 %v1635, 2147483648
  %v1829 = vsel %vm1827, %v1828, %v1826
  %v1830 = vrsqrt.pop %v1636
  %v1831 = vmul.f32 %v1636, %v1830
  %vm1832 = vcmp.eq.f32.partialorder %v1636, inf
  %v1833 = vsel %vm1832, %v1636, %v1831
  %vm1834 = vcmp.eq.f32.partialorder %v1636, 0.0
  %v1835 = vand.u32 %v1636, 2147483648
  %v1836 = vsel %vm1834, %v1835, %v1833
  %v1837 = vrsqrt.pop %v1637
  %v1838 = vmul.f32 %v1637, %v1837
  %vm1839 = vcmp.eq.f32.partialorder %v1637, inf
  %v1840 = vsel %vm1839, %v1637, %v1838
  %vm1841 = vcmp.eq.f32.partialorder %v1637, 0.0
  %v1842 = vand.u32 %v1637, 2147483648
  %v1843 = vsel %vm1841, %v1842, %v1840
  %v1844 = vrsqrt.pop %v1638
  %v1845 = vmul.f32 %v1638, %v1844
  %vm1846 = vcmp.eq.f32.partialorder %v1638, inf
  %v1847 = vsel %vm1846, %v1638, %v1845
  %vm1848 = vcmp.eq.f32.partialorder %v1638, 0.0
  %v1849 = vand.u32 %v1638, 2147483648
  %v1850 = vsel %vm1848, %v1849, %v1847
  %v1851 = vrsqrt.pop %v1639
  %v1852 = vmul.f32 %v1639, %v1851
  %vm1853 = vcmp.eq.f32.partialorder %v1639, inf
  %v1854 = vsel %vm1853, %v1639, %v1852
  %vm1855 = vcmp.eq.f32.partialorder %v1639, 0.0
  %v1856 = vand.u32 %v1639, 2147483648
  %v1857 = vsel %vm1855, %v1856, %v1854
  %v1858 = vrsqrt.pop %v1640
  %v1859 = vmul.f32 %v1640, %v1858
  %vm1860 = vcmp.eq.f32.partialorder %v1640, inf
  %v1861 = vsel %vm1860, %v1640, %v1859
  %vm1862 = vcmp.eq.f32.partialorder %v1640, 0.0
  %v1863 = vand.u32 %v1640, 2147483648
  %v1864 = vsel %vm1862, %v1863, %v1861
  %v1865 = vand.u32 2147483647, %v1545
  %v1866 = vand.u32 2147483647, %v1546
  %v1867 = vand.u32 2147483647, %v1547
  %v1868 = vand.u32 2147483647, %v1548
  %v1869 = vand.u32 2147483647, %v1549
  %v1870 = vand.u32 2147483647, %v1550
  %v1871 = vand.u32 2147483647, %v1551
  %v1872 = vand.u32 2147483647, %v1552
  %v1873 = vand.u32 2147483647, %v1553
  %v1874 = vand.u32 2147483647, %v1554
  %v1875 = vand.u32 2147483647, %v1555
  %v1876 = vand.u32 2147483647, %v1556
  %v1877 = vand.u32 2147483647, %v1557
  %v1878 = vand.u32 2147483647, %v1558
  %v1879 = vand.u32 2147483647, %v1559
  %v1880 = vand.u32 2147483647, %v1560
  %v1881 = vand.u32 2147483647, %v1561
  %v1882 = vand.u32 2147483647, %v1562
  %v1883 = vand.u32 2147483647, %v1563
  %v1884 = vand.u32 2147483647, %v1564
  %v1885 = vand.u32 2147483647, %v1565
  %v1886 = vand.u32 2147483647, %v1566
  %v1887 = vand.u32 2147483647, %v1567
  %v1888 = vand.u32 2147483647, %v1568
  %v1889 = vand.u32 2147483647, %v1569
  %v1890 = vand.u32 2147483647, %v1570
  %v1891 = vand.u32 2147483647, %v1571
  %v1892 = vand.u32 2147483647, %v1572
  %v1893 = vand.u32 2147483647, %v1573
  %v1894 = vand.u32 2147483647, %v1574
  %v1895 = vand.u32 2147483647, %v1575
  %v1896 = vand.u32 2147483647, %v1576
  %v1897 = vand.u32 2147483647, %v1577
  %v1898 = vand.u32 2147483647, %v1578
  %v1899 = vand.u32 2147483647, %v1579
  %v1900 = vand.u32 2147483647, %v1580
  %v1901 = vand.u32 2147483647, %v1581
  %v1902 = vand.u32 2147483647, %v1582
  %v1903 = vand.u32 2147483647, %v1583
  %v1904 = vand.u32 2147483647, %v1584
  %v1905 = vand.u32 2147483647, %v1585
  %v1906 = vand.u32 2147483647, %v1586
  %v1907 = vand.u32 2147483647, %v1587
  %v1908 = vand.u32 2147483647, %v1588
  %v1909 = vand.u32 2147483647, %v1589
  %v1910 = vand.u32 2147483647, %v1590
  %v1911 = vand.u32 2147483647, %v1591
  %v1912 = vand.u32 2147483647, %v1592
  %v1913 = vand.u32 2147483647, %v1593
  %v1914 = vand.u32 2147483647, %v1594
  %v1915 = vand.u32 2147483647, %v1595
  %v1916 = vand.u32 2147483647, %v1596
  %v1917 = vand.u32 2147483647, %v1597
  %v1918 = vand.u32 2147483647, %v1598
  %v1919 = vand.u32 2147483647, %v1599
  %v1920 = vand.u32 2147483647, %v1600
  %v1921 = vand.u32 2147483647, %v1601
  %v1922 = vand.u32 2147483647, %v1602
  %v1923 = vand.u32 2147483647, %v1603
  %v1924 = vand.u32 2147483647, %v1604
  %v1925 = vand.u32 2147483647, %v1605
  %v1926 = vand.u32 2147483647, %v1606
  %v1927 = vand.u32 2147483647, %v1607
  %v1928 = vand.u32 2147483647, %v1608
  %v1929 = vmax.f32 %v1865, %v1897
  %v1930 = vmax.f32 %v1866, %v1898
  %v1931 = vmax.f32 %v1867, %v1899
  %v1932 = vmax.f32 %v1868, %v1900
  %v1933 = vmax.f32 %v1869, %v1901
  %v1934 = vmax.f32 %v1870, %v1902
  %v1935 = vmax.f32 %v1871, %v1903
  %v1936 = vmax.f32 %v1872, %v1904
  %v1937 = vmax.f32 %v1873, %v1905
  %v1938 = vmax.f32 %v1874, %v1906
  %v1939 = vmax.f32 %v1875, %v1907
  %v1940 = vmax.f32 %v1876, %v1908
  %v1941 = vmax.f32 %v1877, %v1909
  %v1942 = vmax.f32 %v1878, %v1910
  %v1943 = vmax.f32 %v1879, %v1911
  %v1944 = vmax.f32 %v1880, %v1912
  %v1945 = vmax.f32 %v1881, %v1913
  %v1946 = vmax.f32 %v1882, %v1914
  %v1947 = vmax.f32 %v1883, %v1915
  %v1948 = vmax.f32 %v1884, %v1916
  %v1949 = vmax.f32 %v1885, %v1917
  %v1950 = vmax.f32 %v1886, %v1918
  %v1951 = vmax.f32 %v1887, %v1919
  %v1952 = vmax.f32 %v1888, %v1920
  %v1953 = vmax.f32 %v1889, %v1921
  %v1954 = vmax.f32 %v1890, %v1922
  %v1955 = vmax.f32 %v1891, %v1923
  %v1956 = vmax.f32 %v1892, %v1924
  %v1957 = vmax.f32 %v1893, %v1925
  %v1958 = vmax.f32 %v1894, %v1926
  %v1959 = vmax.f32 %v1895, %v1927
  %v1960 = vmax.f32 %v1896, %v1928
  %v1961 = vmin.f32 %v1865, %v1897
  %v1962 = vmin.f32 %v1866, %v1898
  %v1963 = vmin.f32 %v1867, %v1899
  %v1964 = vmin.f32 %v1868, %v1900
  %v1965 = vmin.f32 %v1869, %v1901
  %v1966 = vmin.f32 %v1870, %v1902
  %v1967 = vmin.f32 %v1871, %v1903
  %v1968 = vmin.f32 %v1872, %v1904
  %v1969 = vmin.f32 %v1873, %v1905
  %v1970 = vmin.f32 %v1874, %v1906
  %v1971 = vmin.f32 %v1875, %v1907
  %v1972 = vmin.f32 %v1876, %v1908
  %v1973 = vmin.f32 %v1877, %v1909
  %v1974 = vmin.f32 %v1878, %v1910
  %v1975 = vmin.f32 %v1879, %v1911
  %v1976 = vmin.f32 %v1880, %v1912
  %v1977 = vmin.f32 %v1881, %v1913
  %v1978 = vmin.f32 %v1882, %v1914
  %v1979 = vmin.f32 %v1883, %v1915
  %v1980 = vmin.f32 %v1884, %v1916
  %v1981 = vmin.f32 %v1885, %v1917
  %v1982 = vmin.f32 %v1886, %v1918
  %v1983 = vmin.f32 %v1887, %v1919
  %v1984 = vmin.f32 %v1888, %v1920
  %v1985 = vmin.f32 %v1889, %v1921
  %v1986 = vmin.f32 %v1890, %v1922
  %v1987 = vmin.f32 %v1891, %v1923
  %v1988 = vmin.f32 %v1892, %v1924
  %v1989 = vmin.f32 %v1893, %v1925
  %v1990 = vmin.f32 %v1894, %v1926
  %v1991 = vmin.f32 %v1895, %v1927
  %v1992 = vmin.f32 %v1896, %v1928
  %v1993 = vadd.f32 %v1929, 1e-12
  %v1994 = vadd.f32 %v1930, 1e-12
  %v1995 = vadd.f32 %v1931, 1e-12
  %v1996 = vadd.f32 %v1932, 1e-12
  %v1997 = vadd.f32 %v1933, 1e-12
  %v1998 = vadd.f32 %v1934, 1e-12
  %v1999 = vadd.f32 %v1935, 1e-12
  %v2000 = vadd.f32 %v1936, 1e-12
  %v2001 = vadd.f32 %v1937, 1e-12
  %v2002 = vadd.f32 %v1938, 1e-12
  %v2003 = vadd.f32 %v1939, 1e-12
  %v2004 = vadd.f32 %v1940, 1e-12
  %v2005 = vadd.f32 %v1941, 1e-12
  %v2006 = vadd.f32 %v1942, 1e-12
  %v2007 = vadd.f32 %v1943, 1e-12
  %v2008 = vadd.f32 %v1944, 1e-12
  %v2009 = vadd.f32 %v1945, 1e-12
  %v2010 = vadd.f32 %v1946, 1e-12
  %v2011 = vadd.f32 %v1947, 1e-12
  %v2012 = vadd.f32 %v1948, 1e-12
  %v2013 = vadd.f32 %v1949, 1e-12
  %v2014 = vadd.f32 %v1950, 1e-12
  %v2015 = vadd.f32 %v1951, 1e-12
  %v2016 = vadd.f32 %v1952, 1e-12
  %v2017 = vadd.f32 %v1953, 1e-12
  %v2018 = vadd.f32 %v1954, 1e-12
  %v2019 = vadd.f32 %v1955, 1e-12
  %v2020 = vadd.f32 %v1956, 1e-12
  %v2021 = vadd.f32 %v1957, 1e-12
  %v2022 = vadd.f32 %v1958, 1e-12
  %v2023 = vadd.f32 %v1959, 1e-12
  %v2024 = vadd.f32 %v1960, 1e-12
  %v2025 = vrcp.pop %v1993
  %v2026 = vrcp.pop %v1994
  %v2027 = vrcp.pop %v1995
  %v2028 = vrcp.pop %v1996
  %v2029 = vrcp.pop %v1997
  %v2030 = vrcp.pop %v1998
  %v2031 = vrcp.pop %v1999
  %v2032 = vrcp.pop %v2000
  %v2033 = vrcp.pop %v2001
  %v2034 = vrcp.pop %v2002
  %v2035 = vrcp.pop %v2003
  %v2036 = vrcp.pop %v2004
  %v2037 = vrcp.pop %v2005
  %v2038 = vrcp.pop %v2006
  %v2039 = vrcp.pop %v2007
  %v2040 = vrcp.pop %v2008
  %v2041 = vrcp.pop %v2009
  %v2042 = vrcp.pop %v2010
  %v2043 = vrcp.pop %v2011
  %v2044 = vrcp.pop %v2012
  %v2045 = vrcp.pop %v2013
  %v2046 = vrcp.pop %v2014
  %v2047 = vrcp.pop %v2015
  %v2048 = vrcp.pop %v2016
  %v2049 = vrcp.pop %v2017
  %v2050 = vrcp.pop %v2018
  %v2051 = vrcp.pop %v2019
  %v2052 = vrcp.pop %v2020
  %v2053 = vrcp.pop %v2021
  %v2054 = vrcp.pop %v2022
  %v2055 = vrcp.pop %v2023
  %v2056 = vrcp.pop %v2024
  %v2057 = vmul.f32 %v1961, %v2025
  %v2058 = vmul.f32 %v1962, %v2026
  %v2059 = vmul.f32 %v1963, %v2027
  %v2060 = vmul.f32 %v1964, %v2028
  %v2061 = vmul.f32 %v1965, %v2029
  %v2062 = vmul.f32 %v1966, %v2030
  %v2063 = vmul.f32 %v1967, %v2031
  %v2064 = vmul.f32 %v1968, %v2032
  %v2065 = vmul.f32 %v1969, %v2033
  %v2066 = vmul.f32 %v1970, %v2034
  %v2067 = vmul.f32 %v1971, %v2035
  %v2068 = vmul.f32 %v1972, %v2036
  %v2069 = vmul.f32 %v1973, %v2037
  %v2070 = vmul.f32 %v1974, %v2038
  %v2071 = vmul.f32 %v1975, %v2039
  %v2072 = vmul.f32 %v1976, %v2040
  %v2073 = vmul.f32 %v1977, %v2041
  %v2074 = vmul.f32 %v1978, %v2042
  %v2075 = vmul.f32 %v1979, %v2043
  %v2076 = vmul.f32 %v1980, %v2044
  %v2077 = vmul.f32 %v1981, %v2045
  %v2078 = vmul.f32 %v1982, %v2046
  %v2079 = vmul.f32 %v1983, %v2047
  %v2080 = vmul.f32 %v1984, %v2048
  %v2081 = vmul.f32 %v1985, %v2049
  %v2082 = vmul.f32 %v1986, %v2050
  %v2083 = vmul.f32 %v1987, %v2051
  %v2084 = vmul.f32 %v1988, %v2052
  %v2085 = vmul.f32 %v1989, %v2053
  %v2086 = vmul.f32 %v1990, %v2054
  %v2087 = vmul.f32 %v1991, %v2055
  %v2088 = vmul.f32 %v1992, %v2056
  %v2089 = vmul.f32 %v2057, %v2057
  %v2090 = vmul.f32 %v2058, %v2058
  %v2091 = vmul.f32 %v2059, %v2059
  %v2092 = vmul.f32 %v2060, %v2060
  %v2093 = vmul.f32 %v2061, %v2061
  %v2094 = vmul.f32 %v2062, %v2062
  %v2095 = vmul.f32 %v2063, %v2063
  %v2096 = vmul.f32 %v2064, %v2064
  %v2097 = vmul.f32 %v2065, %v2065
  %v2098 = vmul.f32 %v2066, %v2066
  %v2099 = vmul.f32 %v2067, %v2067
  %v2100 = vmul.f32 %v2068, %v2068
  %v2101 = vmul.f32 %v2069, %v2069
  %v2102 = vmul.f32 %v2070, %v2070
  %v2103 = vmul.f32 %v2071, %v2071
  %v2104 = vmul.f32 %v2072, %v2072
  %v2105 = vmul.f32 %v2073, %v2073
  %v2106 = vmul.f32 %v2074, %v2074
  %v2107 = vmul.f32 %v2075, %v2075
  %v2108 = vmul.f32 %v2076, %v2076
  %v2109 = vmul.f32 %v2077, %v2077
  %v2110 = vmul.f32 %v2078, %v2078
  %v2111 = vmul.f32 %v2079, %v2079
  %v2112 = vmul.f32 %v2080, %v2080
  %v2113 = vmul.f32 %v2081, %v2081
  %v2114 = vmul.f32 %v2082, %v2082
  %v2115 = vmul.f32 %v2083, %v2083
  %v2116 = vmul.f32 %v2084, %v2084
  %v2117 = vmul.f32 %v2085, %v2085
  %v2118 = vmul.f32 %v2086, %v2086
  %v2119 = vmul.f32 %v2087, %v2087
  %v2120 = vmul.f32 %v2088, %v2088
  %v2121 = vmul.f32 %v2089, -0.046496473
  %v2122 = vmul.f32 %v2090, -0.046496473
  %v2123 = vmul.f32 %v2091, -0.046496473
  %v2124 = vmul.f32 %v2092, -0.046496473
  %v2125 = vmul.f32 %v2093, -0.046496473
  %v2126 = vmul.f32 %v2094, -0.046496473
  %v2127 = vmul.f32 %v2095, -0.046496473
  %v2128 = vmul.f32 %v2096, -0.046496473
  %v2129 = vmul.f32 %v2097, -0.046496473
  %v2130 = vmul.f32 %v2098, -0.046496473
  %v2131 = vmul.f32 %v2099, -0.046496473
  %v2132 = vmul.f32 %v2100, -0.046496473
  %v2133 = vmul.f32 %v2101, -0.046496473
  %v2134 = vmul.f32 %v2102, -0.046496473
  %v2135 = vmul.f32 %v2103, -0.046496473
  %v2136 = vmul.f32 %v2104, -0.046496473
  %v2137 = vmul.f32 %v2105, -0.046496473
  %v2138 = vmul.f32 %v2106, -0.046496473
  %v2139 = vmul.f32 %v2107, -0.046496473
  %v2140 = vmul.f32 %v2108, -0.046496473
  %v2141 = vmul.f32 %v2109, -0.046496473
  %v2142 = vmul.f32 %v2110, -0.046496473
  %v2143 = vmul.f32 %v2111, -0.046496473
  %v2144 = vmul.f32 %v2112, -0.046496473
  %v2145 = vmul.f32 %v2113, -0.046496473
  %v2146 = vmul.f32 %v2114, -0.046496473
  %v2147 = vmul.f32 %v2115, -0.046496473
  %v2148 = vmul.f32 %v2116, -0.046496473
  %v2149 = vmul.f32 %v2117, -0.046496473
  %v2150 = vmul.f32 %v2118, -0.046496473
  %v2151 = vmul.f32 %v2119, -0.046496473
  %v2152 = vmul.f32 %v2120, -0.046496473
  %v2153 = vadd.f32 %v2121, 0.15931422
  %v2154 = vadd.f32 %v2122, 0.15931422
  %v2155 = vadd.f32 %v2123, 0.15931422
  %v2156 = vadd.f32 %v2124, 0.15931422
  %v2157 = vadd.f32 %v2125, 0.15931422
  %v2158 = vadd.f32 %v2126, 0.15931422
  %v2159 = vadd.f32 %v2127, 0.15931422
  %v2160 = vadd.f32 %v2128, 0.15931422
  %v2161 = vadd.f32 %v2129, 0.15931422
  %v2162 = vadd.f32 %v2130, 0.15931422
  %v2163 = vadd.f32 %v2131, 0.15931422
  %v2164 = vadd.f32 %v2132, 0.15931422
  %v2165 = vadd.f32 %v2133, 0.15931422
  %v2166 = vadd.f32 %v2134, 0.15931422
  %v2167 = vadd.f32 %v2135, 0.15931422
  %v2168 = vadd.f32 %v2136, 0.15931422
  %v2169 = vadd.f32 %v2137, 0.15931422
  %v2170 = vadd.f32 %v2138, 0.15931422
  %v2171 = vadd.f32 %v2139, 0.15931422
  %v2172 = vadd.f32 %v2140, 0.15931422
  %v2173 = vadd.f32 %v2141, 0.15931422
  %v2174 = vadd.f32 %v2142, 0.15931422
  %v2175 = vadd.f32 %v2143, 0.15931422
  %v2176 = vadd.f32 %v2144, 0.15931422
  %v2177 = vadd.f32 %v2145, 0.15931422
  %v2178 = vadd.f32 %v2146, 0.15931422
  %v2179 = vadd.f32 %v2147, 0.15931422
  %v2180 = vadd.f32 %v2148, 0.15931422
  %v2181 = vadd.f32 %v2149, 0.15931422
  %v2182 = vadd.f32 %v2150, 0.15931422
  %v2183 = vadd.f32 %v2151, 0.15931422
  %v2184 = vadd.f32 %v2152, 0.15931422
  %v2185 = vmul.f32 %v2153, %v2089
  %v2186 = vmul.f32 %v2154, %v2090
  %v2187 = vmul.f32 %v2155, %v2091
  %v2188 = vmul.f32 %v2156, %v2092
  %v2189 = vmul.f32 %v2157, %v2093
  %v2190 = vmul.f32 %v2158, %v2094
  %v2191 = vmul.f32 %v2159, %v2095
  %v2192 = vmul.f32 %v2160, %v2096
  %v2193 = vmul.f32 %v2161, %v2097
  %v2194 = vmul.f32 %v2162, %v2098
  %v2195 = vmul.f32 %v2163, %v2099
  %v2196 = vmul.f32 %v2164, %v2100
  %v2197 = vmul.f32 %v2165, %v2101
  %v2198 = vmul.f32 %v2166, %v2102
  %v2199 = vmul.f32 %v2167, %v2103
  %v2200 = vmul.f32 %v2168, %v2104
  %v2201 = vmul.f32 %v2169, %v2105
  %v2202 = vmul.f32 %v2170, %v2106
  %v2203 = vmul.f32 %v2171, %v2107
  %v2204 = vmul.f32 %v2172, %v2108
  %v2205 = vmul.f32 %v2173, %v2109
  %v2206 = vmul.f32 %v2174, %v2110
  %v2207 = vmul.f32 %v2175, %v2111
  %v2208 = vmul.f32 %v2176, %v2112
  %v2209 = vmul.f32 %v2177, %v2113
  %v2210 = vmul.f32 %v2178, %v2114
  %v2211 = vmul.f32 %v2179, %v2115
  %v2212 = vmul.f32 %v2180, %v2116
  %v2213 = vmul.f32 %v2181, %v2117
  %v2214 = vmul.f32 %v2182, %v2118
  %v2215 = vmul.f32 %v2183, %v2119
  %v2216 = vmul.f32 %v2184, %v2120
  %v2217 = vsub.f32 %v2185, 0.32762277
  %v2218 = vsub.f32 %v2186, 0.32762277
  %v2219 = vsub.f32 %v2187, 0.32762277
  %v2220 = vsub.f32 %v2188, 0.32762277
  %v2221 = vsub.f32 %v2189, 0.32762277
  %v2222 = vsub.f32 %v2190, 0.32762277
  %v2223 = vsub.f32 %v2191, 0.32762277
  %v2224 = vsub.f32 %v2192, 0.32762277
  %v2225 = vsub.f32 %v2193, 0.32762277
  %v2226 = vsub.f32 %v2194, 0.32762277
  %v2227 = vsub.f32 %v2195, 0.32762277
  %v2228 = vsub.f32 %v2196, 0.32762277
  %v2229 = vsub.f32 %v2197, 0.32762277
  %v2230 = vsub.f32 %v2198, 0.32762277
  %v2231 = vsub.f32 %v2199, 0.32762277
  %v2232 = vsub.f32 %v2200, 0.32762277
  %v2233 = vsub.f32 %v2201, 0.32762277
  %v2234 = vsub.f32 %v2202, 0.32762277
  %v2235 = vsub.f32 %v2203, 0.32762277
  %v2236 = vsub.f32 %v2204, 0.32762277
  %v2237 = vsub.f32 %v2205, 0.32762277
  %v2238 = vsub.f32 %v2206, 0.32762277
  %v2239 = vsub.f32 %v2207, 0.32762277
  %v2240 = vsub.f32 %v2208, 0.32762277
  %v2241 = vsub.f32 %v2209, 0.32762277
  %v2242 = vsub.f32 %v2210, 0.32762277
  %v2243 = vsub.f32 %v2211, 0.32762277
  %v2244 = vsub.f32 %v2212, 0.32762277
  %v2245 = vsub.f32 %v2213, 0.32762277
  %v2246 = vsub.f32 %v2214, 0.32762277
  %v2247 = vsub.f32 %v2215, 0.32762277
  %v2248 = vsub.f32 %v2216, 0.32762277
  %v2249 = vmul.f32 %v2217, %v2089
  %v2250 = vmul.f32 %v2218, %v2090
  %v2251 = vmul.f32 %v2219, %v2091
  %v2252 = vmul.f32 %v2220, %v2092
  %v2253 = vmul.f32 %v2221, %v2093
  %v2254 = vmul.f32 %v2222, %v2094
  %v2255 = vmul.f32 %v2223, %v2095
  %v2256 = vmul.f32 %v2224, %v2096
  %v2257 = vmul.f32 %v2225, %v2097
  %v2258 = vmul.f32 %v2226, %v2098
  %v2259 = vmul.f32 %v2227, %v2099
  %v2260 = vmul.f32 %v2228, %v2100
  %v2261 = vmul.f32 %v2229, %v2101
  %v2262 = vmul.f32 %v2230, %v2102
  %v2263 = vmul.f32 %v2231, %v2103
  %v2264 = vmul.f32 %v2232, %v2104
  %v2265 = vmul.f32 %v2233, %v2105
  %v2266 = vmul.f32 %v2234, %v2106
  %v2267 = vmul.f32 %v2235, %v2107
  %v2268 = vmul.f32 %v2236, %v2108
  %v2269 = vmul.f32 %v2237, %v2109
  %v2270 = vmul.f32 %v2238, %v2110
  %v2271 = vmul.f32 %v2239, %v2111
  %v2272 = vmul.f32 %v2240, %v2112
  %v2273 = vmul.f32 %v2241, %v2113
  %v2274 = vmul.f32 %v2242, %v2114
  %v2275 = vmul.f32 %v2243, %v2115
  %v2276 = vmul.f32 %v2244, %v2116
  %v2277 = vmul.f32 %v2245, %v2117
  %v2278 = vmul.f32 %v2246, %v2118
  %v2279 = vmul.f32 %v2247, %v2119
  %v2280 = vmul.f32 %v2248, %v2120
  %v2281 = vmul.f32 %v2249, %v2057
  %v2282 = vmul.f32 %v2250, %v2058
  %v2283 = vmul.f32 %v2251, %v2059
  %v2284 = vmul.f32 %v2252, %v2060
  %v2285 = vmul.f32 %v2253, %v2061
  %v2286 = vmul.f32 %v2254, %v2062
  %v2287 = vmul.f32 %v2255, %v2063
  %v2288 = vmul.f32 %v2256, %v2064
  %v2289 = vmul.f32 %v2257, %v2065
  %v2290 = vmul.f32 %v2258, %v2066
  %v2291 = vmul.f32 %v2259, %v2067
  %v2292 = vmul.f32 %v2260, %v2068
  %v2293 = vmul.f32 %v2261, %v2069
  %v2294 = vmul.f32 %v2262, %v2070
  %v2295 = vmul.f32 %v2263, %v2071
  %v2296 = vmul.f32 %v2264, %v2072
  %v2297 = vmul.f32 %v2265, %v2073
  %v2298 = vmul.f32 %v2266, %v2074
  %v2299 = vmul.f32 %v2267, %v2075
  %v2300 = vmul.f32 %v2268, %v2076
  %v2301 = vmul.f32 %v2269, %v2077
  %v2302 = vmul.f32 %v2270, %v2078
  %v2303 = vmul.f32 %v2271, %v2079
  %v2304 = vmul.f32 %v2272, %v2080
  %v2305 = vmul.f32 %v2273, %v2081
  %v2306 = vmul.f32 %v2274, %v2082
  %v2307 = vmul.f32 %v2275, %v2083
  %v2308 = vmul.f32 %v2276, %v2084
  %v2309 = vmul.f32 %v2277, %v2085
  %v2310 = vmul.f32 %v2278, %v2086
  %v2311 = vmul.f32 %v2279, %v2087
  %v2312 = vmul.f32 %v2280, %v2088
  %v2313 = vadd.f32 %v2281, %v2057
  %v2314 = vadd.f32 %v2282, %v2058
  %v2315 = vadd.f32 %v2283, %v2059
  %v2316 = vadd.f32 %v2284, %v2060
  %v2317 = vadd.f32 %v2285, %v2061
  %v2318 = vadd.f32 %v2286, %v2062
  %v2319 = vadd.f32 %v2287, %v2063
  %v2320 = vadd.f32 %v2288, %v2064
  %v2321 = vadd.f32 %v2289, %v2065
  %v2322 = vadd.f32 %v2290, %v2066
  %v2323 = vadd.f32 %v2291, %v2067
  %v2324 = vadd.f32 %v2292, %v2068
  %v2325 = vadd.f32 %v2293, %v2069
  %v2326 = vadd.f32 %v2294, %v2070
  %v2327 = vadd.f32 %v2295, %v2071
  %v2328 = vadd.f32 %v2296, %v2072
  %v2329 = vadd.f32 %v2297, %v2073
  %v2330 = vadd.f32 %v2298, %v2074
  %v2331 = vadd.f32 %v2299, %v2075
  %v2332 = vadd.f32 %v2300, %v2076
  %v2333 = vadd.f32 %v2301, %v2077
  %v2334 = vadd.f32 %v2302, %v2078
  %v2335 = vadd.f32 %v2303, %v2079
  %v2336 = vadd.f32 %v2304, %v2080
  %v2337 = vadd.f32 %v2305, %v2081
  %v2338 = vadd.f32 %v2306, %v2082
  %v2339 = vadd.f32 %v2307, %v2083
  %v2340 = vadd.f32 %v2308, %v2084
  %v2341 = vadd.f32 %v2309, %v2085
  %v2342 = vadd.f32 %v2310, %v2086
  %v2343 = vadd.f32 %v2311, %v2087
  %v2344 = vadd.f32 %v2312, %v2088
  %vm2345 = vcmp.gt.f32.partialorder %v1897, %v1865
  %vm2346 = vcmp.gt.f32.partialorder %v1898, %v1866
  %vm2347 = vcmp.gt.f32.partialorder %v1899, %v1867
  %vm2348 = vcmp.gt.f32.partialorder %v1900, %v1868
  %vm2349 = vcmp.gt.f32.partialorder %v1901, %v1869
  %vm2350 = vcmp.gt.f32.partialorder %v1902, %v1870
  %vm2351 = vcmp.gt.f32.partialorder %v1903, %v1871
  %vm2352 = vcmp.gt.f32.partialorder %v1904, %v1872
  %vm2353 = vcmp.gt.f32.partialorder %v1905, %v1873
  %vm2354 = vcmp.gt.f32.partialorder %v1906, %v1874
  %vm2355 = vcmp.gt.f32.partialorder %v1907, %v1875
  %vm2356 = vcmp.gt.f32.partialorder %v1908, %v1876
  %vm2357 = vcmp.gt.f32.partialorder %v1909, %v1877
  %vm2358 = vcmp.gt.f32.partialorder %v1910, %v1878
  %vm2359 = vcmp.gt.f32.partialorder %v1911, %v1879
  %vm2360 = vcmp.gt.f32.partialorder %v1912, %v1880
  %vm2361 = vcmp.gt.f32.partialorder %v1913, %v1881
  %vm2362 = vcmp.gt.f32.partialorder %v1914, %v1882
  %vm2363 = vcmp.gt.f32.partialorder %v1915, %v1883
  %vm2364 = vcmp.gt.f32.partialorder %v1916, %v1884
  %vm2365 = vcmp.gt.f32.partialorder %v1917, %v1885
  %vm2366 = vcmp.gt.f32.partialorder %v1918, %v1886
  %vm2367 = vcmp.gt.f32.partialorder %v1919, %v1887
  %vm2368 = vcmp.gt.f32.partialorder %v1920, %v1888
  %vm2369 = vcmp.gt.f32.partialorder %v1921, %v1889
  %vm2370 = vcmp.gt.f32.partialorder %v1922, %v1890
  %vm2371 = vcmp.gt.f32.partialorder %v1923, %v1891
  %vm2372 = vcmp.gt.f32.partialorder %v1924, %v1892
  %vm2373 = vcmp.gt.f32.partialorder %v1925, %v1893
  %vm2374 = vcmp.gt.f32.partialorder %v1926, %v1894
  %vm2375 = vcmp.gt.f32.partialorder %v1927, %v1895
  %vm2376 = vcmp.gt.f32.partialorder %v1928, %v1896
  %v2377 = vsub.f32 1.5707964, %v2313
  %v2378 = vsub.f32 1.5707964, %v2314
  %v2379 = vsub.f32 1.5707964, %v2315
  %v2380 = vsub.f32 1.5707964, %v2316
  %v2381 = vsub.f32 1.5707964, %v2317
  %v2382 = vsub.f32 1.5707964, %v2318
  %v2383 = vsub.f32 1.5707964, %v2319
  %v2384 = vsub.f32 1.5707964, %v2320
  %v2385 = vsub.f32 1.5707964, %v2321
  %v2386 = vsub.f32 1.5707964, %v2322
  %v2387 = vsub.f32 1.5707964, %v2323
  %v2388 = vsub.f32 1.5707964, %v2324
  %v2389 = vsub.f32 1.5707964, %v2325
  %v2390 = vsub.f32 1.5707964, %v2326
  %v2391 = vsub.f32 1.5707964, %v2327
  %v2392 = vsub.f32 1.5707964, %v2328
  %v2393 = vsub.f32 1.5707964, %v2329
  %v2394 = vsub.f32 1.5707964, %v2330
  %v2395 = vsub.f32 1.5707964, %v2331
  %v2396 = vsub.f32 1.5707964, %v2332
  %v2397 = vsub.f32 1.5707964, %v2333
  %v2398 = vsub.f32 1.5707964, %v2334
  %v2399 = vsub.f32 1.5707964, %v2335
  %v2400 = vsub.f32 1.5707964, %v2336
  %v2401 = vsub.f32 1.5707964, %v2337
  %v2402 = vsub.f32 1.5707964, %v2338
  %v2403 = vsub.f32 1.5707964, %v2339
  %v2404 = vsub.f32 1.5707964, %v2340
  %v2405 = vsub.f32 1.5707964, %v2341
  %v2406 = vsub.f32 1.5707964, %v2342
  %v2407 = vsub.f32 1.5707964, %v2343
  %v2408 = vsub.f32 1.5707964, %v2344
  %v2409 = vsel %vm2345, %v2377, %v2313
  %v2410 = vsel %vm2346, %v2378, %v2314
  %v2411 = vsel %vm2347, %v2379, %v2315
  %v2412 = vsel %vm2348, %v2380, %v2316
  %v2413 = vsel %vm2349, %v2381, %v2317
  %v2414 = vsel %vm2350, %v2382, %v2318
  %v2415 = vsel %vm2351, %v2383, %v2319
  %v2416 = vsel %vm2352, %v2384, %v2320
  %v2417 = vsel %vm2353, %v2385, %v2321
  %v2418 = vsel %vm2354, %v2386, %v2322
  %v2419 = vsel %vm2355, %v2387, %v2323
  %v2420 = vsel %vm2356, %v2388, %v2324
  %v2421 = vsel %vm2357, %v2389, %v2325
  %v2422 = vsel %vm2358, %v2390, %v2326
  %v2423 = vsel %vm2359, %v2391, %v2327
  %v2424 = vsel %vm2360, %v2392, %v2328
  %v2425 = vsel %vm2361, %v2393, %v2329
  %v2426 = vsel %vm2362, %v2394, %v2330
  %v2427 = vsel %vm2363, %v2395, %v2331
  %v2428 = vsel %vm2364, %v2396, %v2332
  %v2429 = vsel %vm2365, %v2397, %v2333
  %v2430 = vsel %vm2366, %v2398, %v2334
  %v2431 = vsel %vm2367, %v2399, %v2335
  %v2432 = vsel %vm2368, %v2400, %v2336
  %v2433 = vsel %vm2369, %v2401, %v2337
  %v2434 = vsel %vm2370, %v2402, %v2338
  %v2435 = vsel %vm2371, %v2403, %v2339
  %v2436 = vsel %vm2372, %v2404, %v2340
  %v2437 = vsel %vm2373, %v2405, %v2341
  %v2438 = vsel %vm2374, %v2406, %v2342
  %v2439 = vsel %vm2375, %v2407, %v2343
  %v2440 = vsel %vm2376, %v2408, %v2344
  %v2441 = vmul.f32 %v1545, %v1577
  %v2442 = vmul.f32 %v1546, %v1578
  %v2443 = vmul.f32 %v1547, %v1579
  %v2444 = vmul.f32 %v1548, %v1580
  %v2445 = vmul.f32 %v1549, %v1581
  %v2446 = vmul.f32 %v1550, %v1582
  %v2447 = vmul.f32 %v1551, %v1583
  %v2448 = vmul.f32 %v1552, %v1584
  %v2449 = vmul.f32 %v1553, %v1585
  %v2450 = vmul.f32 %v1554, %v1586
  %v2451 = vmul.f32 %v1555, %v1587
  %v2452 = vmul.f32 %v1556, %v1588
  %v2453 = vmul.f32 %v1557, %v1589
  %v2454 = vmul.f32 %v1558, %v1590
  %v2455 = vmul.f32 %v1559, %v1591
  %v2456 = vmul.f32 %v1560, %v1592
  %v2457 = vmul.f32 %v1561, %v1593
  %v2458 = vmul.f32 %v1562, %v1594
  %v2459 = vmul.f32 %v1563, %v1595
  %v2460 = vmul.f32 %v1564, %v1596
  %v2461 = vmul.f32 %v1565, %v1597
  %v2462 = vmul.f32 %v1566, %v1598
  %v2463 = vmul.f32 %v1567, %v1599
  %v2464 = vmul.f32 %v1568, %v1600
  %v2465 = vmul.f32 %v1569, %v1601
  %v2466 = vmul.f32 %v1570, %v1602
  %v2467 = vmul.f32 %v1571, %v1603
  %v2468 = vmul.f32 %v1572, %v1604
  %v2469 = vmul.f32 %v1573, %v1605
  %v2470 = vmul.f32 %v1574, %v1606
  %v2471 = vmul.f32 %v1575, %v1607
  %v2472 = vmul.f32 %v1576, %v1608
  %vm2473 = vcmp.lt.f32.partialorder %v2441, 0.0
  %vm2474 = vcmp.lt.f32.partialorder %v2442, 0.0
  %vm2475 = vcmp.lt.f32.partialorder %v2443, 0.0
  %vm2476 = vcmp.lt.f32.partialorder %v2444, 0.0
  %vm2477 = vcmp.lt.f32.partialorder %v2445, 0.0
  %vm2478 = vcmp.lt.f32.partialorder %v2446, 0.0
  %vm2479 = vcmp.lt.f32.partialorder %v2447, 0.0
  %vm2480 = vcmp.lt.f32.partialorder %v2448, 0.0
  %vm2481 = vcmp.lt.f32.partialorder %v2449, 0.0
  %vm2482 = vcmp.lt.f32.partialorder %v2450, 0.0
  %vm2483 = vcmp.lt.f32.partialorder %v2451, 0.0
  %vm2484 = vcmp.lt.f32.partialorder %v2452, 0.0
  %vm2485 = vcmp.lt.f32.partialorder %v2453, 0.0
  %vm2486 = vcmp.lt.f32.partialorder %v2454, 0.0
  %vm2487 = vcmp.lt.f32.partialorder %v2455, 0.0
  %vm2488 = vcmp.lt.f32.partialorder %v2456, 0.0
  %vm2489 = vcmp.lt.f32.partialorder %v2457, 0.0
  %vm2490 = vcmp.lt.f32.partialorder %v2458, 0.0
  %vm2491 = vcmp.lt.f32.partialorder %v2459, 0.0
  %vm2492 = vcmp.lt.f32.partialorder %v2460, 0.0
  %vm2493 = vcmp.lt.f32.partialorder %v2461, 0.0
  %vm2494 = vcmp.lt.f32.partialorder %v2462, 0.0
  %vm2495 = vcmp.lt.f32.partialorder %v2463, 0.0
  %vm2496 = vcmp.lt.f32.partialorder %v2464, 0.0
  %vm2497 = vcmp.lt.f32.partialorder %v2465, 0.0
  %vm2498 = vcmp.lt.f32.partialorder %v2466, 0.0
  %vm2499 = vcmp.lt.f32.partialorder %v2467, 0.0
  %vm2500 = vcmp.lt.f32.partialorder %v2468, 0.0
  %vm2501 = vcmp.lt.f32.partialorder %v2469, 0.0
  %vm2502 = vcmp.lt.f32.partialorder %v2470, 0.0
  %vm2503 = vcmp.lt.f32.partialorder %v2471, 0.0
  %vm2504 = vcmp.lt.f32.partialorder %v2472, 0.0
  %v2505 = vsub.f32 3.1415927, %v2409
  %v2506 = vsub.f32 3.1415927, %v2410
  %v2507 = vsub.f32 3.1415927, %v2411
  %v2508 = vsub.f32 3.1415927, %v2412
  %v2509 = vsub.f32 3.1415927, %v2413
  %v2510 = vsub.f32 3.1415927, %v2414
  %v2511 = vsub.f32 3.1415927, %v2415
  %v2512 = vsub.f32 3.1415927, %v2416
  %v2513 = vsub.f32 3.1415927, %v2417
  %v2514 = vsub.f32 3.1415927, %v2418
  %v2515 = vsub.f32 3.1415927, %v2419
  %v2516 = vsub.f32 3.1415927, %v2420
  %v2517 = vsub.f32 3.1415927, %v2421
  %v2518 = vsub.f32 3.1415927, %v2422
  %v2519 = vsub.f32 3.1415927, %v2423
  %v2520 = vsub.f32 3.1415927, %v2424
  %v2521 = vsub.f32 3.1415927, %v2425
  %v2522 = vsub.f32 3.1415927, %v2426
  %v2523 = vsub.f32 3.1415927, %v2427
  %v2524 = vsub.f32 3.1415927, %v2428
  %v2525 = vsub.f32 3.1415927, %v2429
  %v2526 = vsub.f32 3.1415927, %v2430
  %v2527 = vsub.f32 3.1415927, %v2431
  %v2528 = vsub.f32 3.1415927, %v2432
  %v2529 = vsub.f32 3.1415927, %v2433
  %v2530 = vsub.f32 3.1415927, %v2434
  %v2531 = vsub.f32 3.1415927, %v2435
  %v2532 = vsub.f32 3.1415927, %v2436
  %v2533 = vsub.f32 3.1415927, %v2437
  %v2534 = vsub.f32 3.1415927, %v2438
  %v2535 = vsub.f32 3.1415927, %v2439
  %v2536 = vsub.f32 3.1415927, %v2440
  %v2537 = vsel %vm2473, %v2505, %v2409
  %v2538 = vsel %vm2474, %v2506, %v2410
  %v2539 = vsel %vm2475, %v2507, %v2411
  %v2540 = vsel %vm2476, %v2508, %v2412
  %v2541 = vsel %vm2477, %v2509, %v2413
  %v2542 = vsel %vm2478, %v2510, %v2414
  %v2543 = vsel %vm2479, %v2511, %v2415
  %v2544 = vsel %vm2480, %v2512, %v2416
  %v2545 = vsel %vm2481, %v2513, %v2417
  %v2546 = vsel %vm2482, %v2514, %v2418
  %v2547 = vsel %vm2483, %v2515, %v2419
  %v2548 = vsel %vm2484, %v2516, %v2420
  %v2549 = vsel %vm2485, %v2517, %v2421
  %v2550 = vsel %vm2486, %v2518, %v2422
  %v2551 = vsel %vm2487, %v2519, %v2423
  %v2552 = vsel %vm2488, %v2520, %v2424
  %v2553 = vsel %vm2489, %v2521, %v2425
  %v2554 = vsel %vm2490, %v2522, %v2426
  %v2555 = vsel %vm2491, %v2523, %v2427
  %v2556 = vsel %vm2492, %v2524, %v2428
  %v2557 = vsel %vm2493, %v2525, %v2429
  %v2558 = vsel %vm2494, %v2526, %v2430
  %v2559 = vsel %vm2495, %v2527, %v2431
  %v2560 = vsel %vm2496, %v2528, %v2432
  %v2561 = vsel %vm2497, %v2529, %v2433
  %v2562 = vsel %vm2498, %v2530, %v2434
  %v2563 = vsel %vm2499, %v2531, %v2435
  %v2564 = vsel %vm2500, %v2532, %v2436
  %v2565 = vsel %vm2501, %v2533, %v2437
  %v2566 = vsel %vm2502, %v2534, %v2438
  %v2567 = vsel %vm2503, %v2535, %v2439
  %v2568 = vsel %vm2504, %v2536, %v2440
  %vm2569 = vcmp.ge.f32.partialorder %v2537, 3.1415927
  %vm2570 = vcmp.ge.f32.partialorder %v2538, 3.1415927
  %vm2571 = vcmp.ge.f32.partialorder %v2539, 3.1415927
  %vm2572 = vcmp.ge.f32.partialorder %v2540, 3.1415927
  %vm2573 = vcmp.ge.f32.partialorder %v2541, 3.1415927
  %vm2574 = vcmp.ge.f32.partialorder %v2542, 3.1415927
  %vm2575 = vcmp.ge.f32.partialorder %v2543, 3.1415927
  %vm2576 = vcmp.ge.f32.partialorder %v2544, 3.1415927
  %vm2577 = vcmp.ge.f32.partialorder %v2545, 3.1415927
  %vm2578 = vcmp.ge.f32.partialorder %v2546, 3.1415927
  %vm2579 = vcmp.ge.f32.partialorder %v2547, 3.1415927
  %vm2580 = vcmp.ge.f32.partialorder %v2548, 3.1415927
  %vm2581 = vcmp.ge.f32.partialorder %v2549, 3.1415927
  %vm2582 = vcmp.ge.f32.partialorder %v2550, 3.1415927
  %vm2583 = vcmp.ge.f32.partialorder %v2551, 3.1415927
  %vm2584 = vcmp.ge.f32.partialorder %v2552, 3.1415927
  %vm2585 = vcmp.ge.f32.partialorder %v2553, 3.1415927
  %vm2586 = vcmp.ge.f32.partialorder %v2554, 3.1415927
  %vm2587 = vcmp.ge.f32.partialorder %v2555, 3.1415927
  %vm2588 = vcmp.ge.f32.partialorder %v2556, 3.1415927
  %vm2589 = vcmp.ge.f32.partialorder %v2557, 3.1415927
  %vm2590 = vcmp.ge.f32.partialorder %v2558, 3.1415927
  %vm2591 = vcmp.ge.f32.partialorder %v2559, 3.1415927
  %vm2592 = vcmp.ge.f32.partialorder %v2560, 3.1415927
  %vm2593 = vcmp.ge.f32.partialorder %v2561, 3.1415927
  %vm2594 = vcmp.ge.f32.partialorder %v2562, 3.1415927
  %vm2595 = vcmp.ge.f32.partialorder %v2563, 3.1415927
  %vm2596 = vcmp.ge.f32.partialorder %v2564, 3.1415927
  %vm2597 = vcmp.ge.f32.partialorder %v2565, 3.1415927
  %vm2598 = vcmp.ge.f32.partialorder %v2566, 3.1415927
  %vm2599 = vcmp.ge.f32.partialorder %v2567, 3.1415927
  %vm2600 = vcmp.ge.f32.partialorder %v2568, 3.1415927
  %v2601 = vsub.f32 %v2537, 3.1415927
  %v2602 = vsub.f32 %v2538, 3.1415927
  %v2603 = vsub.f32 %v2539, 3.1415927
  %v2604 = vsub.f32 %v2540, 3.1415927
  %v2605 = vsub.f32 %v2541, 3.1415927
  %v2606 = vsub.f32 %v2542, 3.1415927
  %v2607 = vsub.f32 %v2543, 3.1415927
  %v2608 = vsub.f32 %v2544, 3.1415927
  %v2609 = vsub.f32 %v2545, 3.1415927
  %v2610 = vsub.f32 %v2546, 3.1415927
  %v2611 = vsub.f32 %v2547, 3.1415927
  %v2612 = vsub.f32 %v2548, 3.1415927
  %v2613 = vsub.f32 %v2549, 3.1415927
  %v2614 = vsub.f32 %v2550, 3.1415927
  %v2615 = vsub.f32 %v2551, 3.1415927
  %v2616 = vsub.f32 %v2552, 3.1415927
  %v2617 = vsub.f32 %v2553, 3.1415927
  %v2618 = vsub.f32 %v2554, 3.1415927
  %v2619 = vsub.f32 %v2555, 3.1415927
  %v2620 = vsub.f32 %v2556, 3.1415927
  %v2621 = vsub.f32 %v2557, 3.1415927
  %v2622 = vsub.f32 %v2558, 3.1415927
  %v2623 = vsub.f32 %v2559, 3.1415927
  %v2624 = vsub.f32 %v2560, 3.1415927
  %v2625 = vsub.f32 %v2561, 3.1415927
  %v2626 = vsub.f32 %v2562, 3.1415927
  %v2627 = vsub.f32 %v2563, 3.1415927
  %v2628 = vsub.f32 %v2564, 3.1415927
  %v2629 = vsub.f32 %v2565, 3.1415927
  %v2630 = vsub.f32 %v2566, 3.1415927
  %v2631 = vsub.f32 %v2567, 3.1415927
  %v2632 = vsub.f32 %v2568, 3.1415927
  %v2633 = vsel %vm2569, %v2601, %v2537
  %v2634 = vsel %vm2570, %v2602, %v2538
  %v2635 = vsel %vm2571, %v2603, %v2539
  %v2636 = vsel %vm2572, %v2604, %v2540
  %v2637 = vsel %vm2573, %v2605, %v2541
  %v2638 = vsel %vm2574, %v2606, %v2542
  %v2639 = vsel %vm2575, %v2607, %v2543
  %v2640 = vsel %vm2576, %v2608, %v2544
  %v2641 = vsel %vm2577, %v2609, %v2545
  %v2642 = vsel %vm2578, %v2610, %v2546
  %v2643 = vsel %vm2579, %v2611, %v2547
  %v2644 = vsel %vm2580, %v2612, %v2548
  %v2645 = vsel %vm2581, %v2613, %v2549
  %v2646 = vsel %vm2582, %v2614, %v2550
  %v2647 = vsel %vm2583, %v2615, %v2551
  %v2648 = vsel %vm2584, %v2616, %v2552
  %v2649 = vsel %vm2585, %v2617, %v2553
  %v2650 = vsel %vm2586, %v2618, %v2554
  %v2651 = vsel %vm2587, %v2619, %v2555
  %v2652 = vsel %vm2588, %v2620, %v2556
  %v2653 = vsel %vm2589, %v2621, %v2557
  %v2654 = vsel %vm2590, %v2622, %v2558
  %v2655 = vsel %vm2591, %v2623, %v2559
  %v2656 = vsel %vm2592, %v2624, %v2560
  %v2657 = vsel %vm2593, %v2625, %v2561
  %v2658 = vsel %vm2594, %v2626, %v2562
  %v2659 = vsel %vm2595, %v2627, %v2563
  %v2660 = vsel %vm2596, %v2628, %v2564
  %v2661 = vsel %vm2597, %v2629, %v2565
  %v2662 = vsel %vm2598, %v2630, %v2566
  %v2663 = vsel %vm2599, %v2631, %v2567
  %v2664 = vsel %vm2600, %v2632, %v2568
  %v2665 = vmul.f32 %v2633, 2.864789
  %v2666 = vmul.f32 %v2634, 2.864789
  %v2667 = vmul.f32 %v2635, 2.864789
  %v2668 = vmul.f32 %v2636, 2.864789
  %v2669 = vmul.f32 %v2637, 2.864789
  %v2670 = vmul.f32 %v2638, 2.864789
  %v2671 = vmul.f32 %v2639, 2.864789
  %v2672 = vmul.f32 %v2640, 2.864789
  %v2673 = vmul.f32 %v2641, 2.864789
  %v2674 = vmul.f32 %v2642, 2.864789
  %v2675 = vmul.f32 %v2643, 2.864789
  %v2676 = vmul.f32 %v2644, 2.864789
  %v2677 = vmul.f32 %v2645, 2.864789
  %v2678 = vmul.f32 %v2646, 2.864789
  %v2679 = vmul.f32 %v2647, 2.864789
  %v2680 = vmul.f32 %v2648, 2.864789
  %v2681 = vmul.f32 %v2649, 2.864789
  %v2682 = vmul.f32 %v2650, 2.864789
  %v2683 = vmul.f32 %v2651, 2.864789
  %v2684 = vmul.f32 %v2652, 2.864789
  %v2685 = vmul.f32 %v2653, 2.864789
  %v2686 = vmul.f32 %v2654, 2.864789
  %v2687 = vmul.f32 %v2655, 2.864789
  %v2688 = vmul.f32 %v2656, 2.864789
  %v2689 = vmul.f32 %v2657, 2.864789
  %v2690 = vmul.f32 %v2658, 2.864789
  %v2691 = vmul.f32 %v2659, 2.864789
  %v2692 = vmul.f32 %v2660, 2.864789
  %v2693 = vmul.f32 %v2661, 2.864789
  %v2694 = vmul.f32 %v2662, 2.864789
  %v2695 = vmul.f32 %v2663, 2.864789
  %v2696 = vmul.f32 %v2664, 2.864789
  %v2697 = vsub.f32 %v2665, 0.5
  %v2698 = vsub.f32 %v2666, 0.5
  %v2699 = vsub.f32 %v2667, 0.5
  %v2700 = vsub.f32 %v2668, 0.5
  %v2701 = vsub.f32 %v2669, 0.5
  %v2702 = vsub.f32 %v2670, 0.5
  %v2703 = vsub.f32 %v2671, 0.5
  %v2704 = vsub.f32 %v2672, 0.5
  %v2705 = vsub.f32 %v2673, 0.5
  %v2706 = vsub.f32 %v2674, 0.5
  %v2707 = vsub.f32 %v2675, 0.5
  %v2708 = vsub.f32 %v2676, 0.5
  %v2709 = vsub.f32 %v2677, 0.5
  %v2710 = vsub.f32 %v2678, 0.5
  %v2711 = vsub.f32 %v2679, 0.5
  %v2712 = vsub.f32 %v2680, 0.5
  %v2713 = vsub.f32 %v2681, 0.5
  %v2714 = vsub.f32 %v2682, 0.5
  %v2715 = vsub.f32 %v2683, 0.5
  %v2716 = vsub.f32 %v2684, 0.5
  %v2717 = vsub.f32 %v2685, 0.5
  %v2718 = vsub.f32 %v2686, 0.5
  %v2719 = vsub.f32 %v2687, 0.5
  %v2720 = vsub.f32 %v2688, 0.5
  %v2721 = vsub.f32 %v2689, 0.5
  %v2722 = vsub.f32 %v2690, 0.5
  %v2723 = vsub.f32 %v2691, 0.5
  %v2724 = vsub.f32 %v2692, 0.5
  %v2725 = vsub.f32 %v2693, 0.5
  %v2726 = vsub.f32 %v2694, 0.5
  %v2727 = vsub.f32 %v2695, 0.5
  %v2728 = vsub.f32 %v2696, 0.5
  %v2729 = vfloor.f32 %v2697
  %v2730 = vfloor.f32 %v2698
  %v2731 = vfloor.f32 %v2699
  %v2732 = vfloor.f32 %v2700
  %v2733 = vfloor.f32 %v2701
  %v2734 = vfloor.f32 %v2702
  %v2735 = vfloor.f32 %v2703
  %v2736 = vfloor.f32 %v2704
  %v2737 = vfloor.f32 %v2705
  %v2738 = vfloor.f32 %v2706
  %v2739 = vfloor.f32 %v2707
  %v2740 = vfloor.f32 %v2708
  %v2741 = vfloor.f32 %v2709
  %v2742 = vfloor.f32 %v2710
  %v2743 = vfloor.f32 %v2711
  %v2744 = vfloor.f32 %v2712
  %v2745 = vfloor.f32 %v2713
  %v2746 = vfloor.f32 %v2714
  %v2747 = vfloor.f32 %v2715
  %v2748 = vfloor.f32 %v2716
  %v2749 = vfloor.f32 %v2717
  %v2750 = vfloor.f32 %v2718
  %v2751 = vfloor.f32 %v2719
  %v2752 = vfloor.f32 %v2720
  %v2753 = vfloor.f32 %v2721
  %v2754 = vfloor.f32 %v2722
  %v2755 = vfloor.f32 %v2723
  %v2756 = vfloor.f32 %v2724
  %v2757 = vfloor.f32 %v2725
  %v2758 = vfloor.f32 %v2726
  %v2759 = vfloor.f32 %v2727
  %v2760 = vfloor.f32 %v2728
  %v2761 = vsub.f32 %v2697, %v2729
  %v2762 = vsub.f32 %v2698, %v2730
  %v2763 = vsub.f32 %v2699, %v2731
  %v2764 = vsub.f32 %v2700, %v2732
  %v2765 = vsub.f32 %v2701, %v2733
  %v2766 = vsub.f32 %v2702, %v2734
  %v2767 = vsub.f32 %v2703, %v2735
  %v2768 = vsub.f32 %v2704, %v2736
  %v2769 = vsub.f32 %v2705, %v2737
  %v2770 = vsub.f32 %v2706, %v2738
  %v2771 = vsub.f32 %v2707, %v2739
  %v2772 = vsub.f32 %v2708, %v2740
  %v2773 = vsub.f32 %v2709, %v2741
  %v2774 = vsub.f32 %v2710, %v2742
  %v2775 = vsub.f32 %v2711, %v2743
  %v2776 = vsub.f32 %v2712, %v2744
  %v2777 = vsub.f32 %v2713, %v2745
  %v2778 = vsub.f32 %v2714, %v2746
  %v2779 = vsub.f32 %v2715, %v2747
  %v2780 = vsub.f32 %v2716, %v2748
  %v2781 = vsub.f32 %v2717, %v2749
  %v2782 = vsub.f32 %v2718, %v2750
  %v2783 = vsub.f32 %v2719, %v2751
  %v2784 = vsub.f32 %v2720, %v2752
  %v2785 = vsub.f32 %v2721, %v2753
  %v2786 = vsub.f32 %v2722, %v2754
  %v2787 = vsub.f32 %v2723, %v2755
  %v2788 = vsub.f32 %v2724, %v2756
  %v2789 = vsub.f32 %v2725, %v2757
  %v2790 = vsub.f32 %v2726, %v2758
  %v2791 = vsub.f32 %v2727, %v2759
  %v2792 = vsub.f32 %v2728, %v2760
  %v2793 = vmul.f32 %v1647, %v2761
  %v2794 = vmul.f32 %v1654, %v2762
  %v2795 = vmul.f32 %v1661, %v2763
  %v2796 = vmul.f32 %v1668, %v2764
  %v2797 = vmul.f32 %v1675, %v2765
  %v2798 = vmul.f32 %v1682, %v2766
  %v2799 = vmul.f32 %v1689, %v2767
  %v2800 = vmul.f32 %v1696, %v2768
  %v2801 = vmul.f32 %v1703, %v2769
  %v2802 = vmul.f32 %v1710, %v2770
  %v2803 = vmul.f32 %v1717, %v2771
  %v2804 = vmul.f32 %v1724, %v2772
  %v2805 = vmul.f32 %v1731, %v2773
  %v2806 = vmul.f32 %v1738, %v2774
  %v2807 = vmul.f32 %v1745, %v2775
  %v2808 = vmul.f32 %v1752, %v2776
  %v2809 = vmul.f32 %v1759, %v2777
  %v2810 = vmul.f32 %v1766, %v2778
  %v2811 = vmul.f32 %v1773, %v2779
  %v2812 = vmul.f32 %v1780, %v2780
  %v2813 = vmul.f32 %v1787, %v2781
  %v2814 = vmul.f32 %v1794, %v2782
  %v2815 = vmul.f32 %v1801, %v2783
  %v2816 = vmul.f32 %v1808, %v2784
  %v2817 = vmul.f32 %v1815, %v2785
  %v2818 = vmul.f32 %v1822, %v2786
  %v2819 = vmul.f32 %v1829, %v2787
  %v2820 = vmul.f32 %v1836, %v2788
  %v2821 = vmul.f32 %v1843, %v2789
  %v2822 = vmul.f32 %v1850, %v2790
  %v2823 = vmul.f32 %v1857, %v2791
  %v2824 = vmul.f32 %v1864, %v2792
  %v2825 = vsub.f32 %v1647, %v2793
  %v2826 = vsub.f32 %v1654, %v2794
  %v2827 = vsub.f32 %v1661, %v2795
  %v2828 = vsub.f32 %v1668, %v2796
  %v2829 = vsub.f32 %v1675, %v2797
  %v2830 = vsub.f32 %v1682, %v2798
  %v2831 = vsub.f32 %v1689, %v2799
  %v2832 = vsub.f32 %v1696, %v2800
  %v2833 = vsub.f32 %v1703, %v2801
  %v2834 = vsub.f32 %v1710, %v2802
  %v2835 = vsub.f32 %v1717, %v2803
  %v2836 = vsub.f32 %v1724, %v2804
  %v2837 = vsub.f32 %v1731, %v2805
  %v2838 = vsub.f32 %v1738, %v2806
  %v2839 = vsub.f32 %v1745, %v2807
  %v2840 = vsub.f32 %v1752, %v2808
  %v2841 = vsub.f32 %v1759, %v2809
  %v2842 = vsub.f32 %v1766, %v2810
  %v2843 = vsub.f32 %v1773, %v2811
  %v2844 = vsub.f32 %v1780, %v2812
  %v2845 = vsub.f32 %v1787, %v2813
  %v2846 = vsub.f32 %v1794, %v2814
  %v2847 = vsub.f32 %v1801, %v2815
  %v2848 = vsub.f32 %v1808, %v2816
  %v2849 = vsub.f32 %v1815, %v2817
  %v2850 = vsub.f32 %v1822, %v2818
  %v2851 = vsub.f32 %v1829, %v2819
  %v2852 = vsub.f32 %v1836, %v2820
  %v2853 = vsub.f32 %v1843, %v2821
  %v2854 = vsub.f32 %v1850, %v2822
  %v2855 = vsub.f32 %v1857, %v2823
  %v2856 = vsub.f32 %v1864, %v2824
  %v2857 = vcvt.f32.s32.to.zero.pseudo %v2729
  %v2858 = vcvt.f32.s32.to.zero.pseudo %v2730
  %v2859 = vcvt.f32.s32.to.zero.pseudo %v2731
  %v2860 = vcvt.f32.s32.to.zero.pseudo %v2732
  %v2861 = vcvt.f32.s32.to.zero.pseudo %v2733
  %v2862 = vcvt.f32.s32.to.zero.pseudo %v2734
  %v2863 = vcvt.f32.s32.to.zero.pseudo %v2735
  %v2864 = vcvt.f32.s32.to.zero.pseudo %v2736
  %v2865 = vcvt.f32.s32.to.zero.pseudo %v2737
  %v2866 = vcvt.f32.s32.to.zero.pseudo %v2738
  %v2867 = vcvt.f32.s32.to.zero.pseudo %v2739
  %v2868 = vcvt.f32.s32.to.zero.pseudo %v2740
  %v2869 = vcvt.f32.s32.to.zero.pseudo %v2741
  %v2870 = vcvt.f32.s32.to.zero.pseudo %v2742
  %v2871 = vcvt.f32.s32.to.zero.pseudo %v2743
  %v2872 = vcvt.f32.s32.to.zero.pseudo %v2744
  %v2873 = vcvt.f32.s32.to.zero.pseudo %v2745
  %v2874 = vcvt.f32.s32.to.zero.pseudo %v2746
  %v2875 = vcvt.f32.s32.to.zero.pseudo %v2747
  %v2876 = vcvt.f32.s32.to.zero.pseudo %v2748
  %v2877 = vcvt.f32.s32.to.zero.pseudo %v2749
  %v2878 = vcvt.f32.s32.to.zero.pseudo %v2750
  %v2879 = vcvt.f32.s32.to.zero.pseudo %v2751
  %v2880 = vcvt.f32.s32.to.zero.pseudo %v2752
  %v2881 = vcvt.f32.s32.to.zero.pseudo %v2753
  %v2882 = vcvt.f32.s32.to.zero.pseudo %v2754
  %v2883 = vcvt.f32.s32.to.zero.pseudo %v2755
  %v2884 = vcvt.f32.s32.to.zero.pseudo %v2756
  %v2885 = vcvt.f32.s32.to.zero.pseudo %v2757
  %v2886 = vcvt.f32.s32.to.zero.pseudo %v2758
  %v2887 = vcvt.f32.s32.to.zero.pseudo %v2759
  %v2888 = vcvt.f32.s32.to.zero.pseudo %v2760
  %vm2889 = vcmp.lt.s32.totalorder %v2857, 0
  %vm2890 = vcmp.lt.s32.totalorder %v2858, 0
  %vm2891 = vcmp.lt.s32.totalorder %v2859, 0
  %vm2892 = vcmp.lt.s32.totalorder %v2860, 0
  %vm2893 = vcmp.lt.s32.totalorder %v2861, 0
  %vm2894 = vcmp.lt.s32.totalorder %v2862, 0
  %vm2895 = vcmp.lt.s32.totalorder %v2863, 0
  %vm2896 = vcmp.lt.s32.totalorder %v2864, 0
  %vm2897 = vcmp.lt.s32.totalorder %v2865, 0
  %vm2898 = vcmp.lt.s32.totalorder %v2866, 0
  %vm2899 = vcmp.lt.s32.totalorder %v2867, 0
  %vm2900 = vcmp.lt.s32.totalorder %v2868, 0
  %vm2901 = vcmp.lt.s32.totalorder %v2869, 0
  %vm2902 = vcmp.lt.s32.totalorder %v2870, 0
  %vm2903 = vcmp.lt.s32.totalorder %v2871, 0
  %vm2904 = vcmp.lt.s32.totalorder %v2872, 0
  %vm2905 = vcmp.lt.s32.totalorder %v2873, 0
  %vm2906 = vcmp.lt.s32.totalorder %v2874, 0
  %vm2907 = vcmp.lt.s32.totalorder %v2875, 0
  %vm2908 = vcmp.lt.s32.totalorder %v2876, 0
  %vm2909 = vcmp.lt.s32.totalorder %v2877, 0
  %vm2910 = vcmp.lt.s32.totalorder %v2878, 0
  %vm2911 = vcmp.lt.s32.totalorder %v2879, 0
  %vm2912 = vcmp.lt.s32.totalorder %v2880, 0
  %vm2913 = vcmp.lt.s32.totalorder %v2881, 0
  %vm2914 = vcmp.lt.s32.totalorder %v2882, 0
  %vm2915 = vcmp.lt.s32.totalorder %v2883, 0
  %vm2916 = vcmp.lt.s32.totalorder %v2884, 0
  %vm2917 = vcmp.lt.s32.totalorder %v2885, 0
  %vm2918 = vcmp.lt.s32.totalorder %v2886, 0
  %vm2919 = vcmp.lt.s32.totalorder %v2887, 0
  %vm2920 = vcmp.lt.s32.totalorder %v2888, 0
  %v2921 = vadd.s32 %v2857, 9
  %v2922 = vadd.s32 %v2858, 9
  %v2923 = vadd.s32 %v2859, 9
  %v2924 = vadd.s32 %v2860, 9
  %v2925 = vadd.s32 %v2861, 9
  %v2926 = vadd.s32 %v2862, 9
  %v2927 = vadd.s32 %v2863, 9
  %v2928 = vadd.s32 %v2864, 9
  %v2929 = vadd.s32 %v2865, 9
  %v2930 = vadd.s32 %v2866, 9
  %v2931 = vadd.s32 %v2867, 9
  %v2932 = vadd.s32 %v2868, 9
  %v2933 = vadd.s32 %v2869, 9
  %v2934 = vadd.s32 %v2870, 9
  %v2935 = vadd.s32 %v2871, 9
  %v2936 = vadd.s32 %v2872, 9
  %v2937 = vadd.s32 %v2873, 9
  %v2938 = vadd.s32 %v2874, 9
  %v2939 = vadd.s32 %v2875, 9
  %v2940 = vadd.s32 %v2876, 9
  %v2941 = vadd.s32 %v2877, 9
  %v2942 = vadd.s32 %v2878, 9
  %v2943 = vadd.s32 %v2879, 9
  %v2944 = vadd.s32 %v2880, 9
  %v2945 = vadd.s32 %v2881, 9
  %v2946 = vadd.s32 %v2882, 9
  %v2947 = vadd.s32 %v2883, 9
  %v2948 = vadd.s32 %v2884, 9
  %v2949 = vadd.s32 %v2885, 9
  %v2950 = vadd.s32 %v2886, 9
  %v2951 = vadd.s32 %v2887, 9
  %v2952 = vadd.s32 %v2888, 9
  %v2953 = vsel %vm2889, %v2921, %v2857
  %v2954 = vsel %vm2890, %v2922, %v2858
  %v2955 = vsel %vm2891, %v2923, %v2859
  %v2956 = vsel %vm2892, %v2924, %v2860
  %v2957 = vsel %vm2893, %v2925, %v2861
  %v2958 = vsel %vm2894, %v2926, %v2862
  %v2959 = vsel %vm2895, %v2927, %v2863
  %v2960 = vsel %vm2896, %v2928, %v2864
  %v2961 = vsel %vm2897, %v2929, %v2865
  %v2962 = vsel %vm2898, %v2930, %v2866
  %v2963 = vsel %vm2899, %v2931, %v2867
  %v2964 = vsel %vm2900, %v2932, %v2868
  %v2965 = vsel %vm2901, %v2933, %v2869
  %v2966 = vsel %vm2902, %v2934, %v2870
  %v2967 = vsel %vm2903, %v2935, %v2871
  %v2968 = vsel %vm2904, %v2936, %v2872
  %v2969 = vsel %vm2905, %v2937, %v2873
  %v2970 = vsel %vm2906, %v2938, %v2874
  %v2971 = vsel %vm2907, %v2939, %v2875
  %v2972 = vsel %vm2908, %v2940, %v2876
  %v2973 = vsel %vm2909, %v2941, %v2877
  %v2974 = vsel %vm2910, %v2942, %v2878
  %v2975 = vsel %vm2911, %v2943, %v2879
  %v2976 = vsel %vm2912, %v2944, %v2880
  %v2977 = vsel %vm2913, %v2945, %v2881
  %v2978 = vsel %vm2914, %v2946, %v2882
  %v2979 = vsel %vm2915, %v2947, %v2883
  %v2980 = vsel %vm2916, %v2948, %v2884
  %v2981 = vsel %vm2917, %v2949, %v2885
  %v2982 = vsel %vm2918, %v2950, %v2886
  %v2983 = vsel %vm2919, %v2951, %v2887
  %v2984 = vsel %vm2920, %v2952, %v2888
  %vm2985 = vcmp.eq.s32.totalorder %v2953, 0
  %vm2986 = vcmp.eq.s32.totalorder %v2954, 0
  %vm2987 = vcmp.eq.s32.totalorder %v2955, 0
  %vm2988 = vcmp.eq.s32.totalorder %v2956, 0
  %vm2989 = vcmp.eq.s32.totalorder %v2957, 0
  %vm2990 = vcmp.eq.s32.totalorder %v2958, 0
  %vm2991 = vcmp.eq.s32.totalorder %v2959, 0
  %vm2992 = vcmp.eq.s32.totalorder %v2960, 0
  %vm2993 = vcmp.eq.s32.totalorder %v2961, 0
  %vm2994 = vcmp.eq.s32.totalorder %v2962, 0
  %vm2995 = vcmp.eq.s32.totalorder %v2963, 0
  %vm2996 = vcmp.eq.s32.totalorder %v2964, 0
  %vm2997 = vcmp.eq.s32.totalorder %v2965, 0
  %vm2998 = vcmp.eq.s32.totalorder %v2966, 0
  %vm2999 = vcmp.eq.s32.totalorder %v2967, 0
  %vm3000 = vcmp.eq.s32.totalorder %v2968, 0
  %vm3001 = vcmp.eq.s32.totalorder %v2969, 0
  %vm3002 = vcmp.eq.s32.totalorder %v2970, 0
  %vm3003 = vcmp.eq.s32.totalorder %v2971, 0
  %vm3004 = vcmp.eq.s32.totalorder %v2972, 0
  %vm3005 = vcmp.eq.s32.totalorder %v2973, 0
  %vm3006 = vcmp.eq.s32.totalorder %v2974, 0
  %vm3007 = vcmp.eq.s32.totalorder %v2975, 0
  %vm3008 = vcmp.eq.s32.totalorder %v2976, 0
  %vm3009 = vcmp.eq.s32.totalorder %v2977, 0
  %vm3010 = vcmp.eq.s32.totalorder %v2978, 0
  %vm3011 = vcmp.eq.s32.totalorder %v2979, 0
  %vm3012 = vcmp.eq.s32.totalorder %v2980, 0
  %vm3013 = vcmp.eq.s32.totalorder %v2981, 0
  %vm3014 = vcmp.eq.s32.totalorder %v2982, 0
  %vm3015 = vcmp.eq.s32.totalorder %v2983, 0
  %vm3016 = vcmp.eq.s32.totalorder %v2984, 0
  %v3017 = vsel %vm2985, %v2825, 0.0
  %v3018 = vsel %vm2986, %v2826, 0.0
  %v3019 = vsel %vm2987, %v2827, 0.0
  %v3020 = vsel %vm2988, %v2828, 0.0
  %v3021 = vsel %vm2989, %v2829, 0.0
  %v3022 = vsel %vm2990, %v2830, 0.0
  %v3023 = vsel %vm2991, %v2831, 0.0
  %v3024 = vsel %vm2992, %v2832, 0.0
  %v3025 = vsel %vm2993, %v2833, 0.0
  %v3026 = vsel %vm2994, %v2834, 0.0
  %v3027 = vsel %vm2995, %v2835, 0.0
  %v3028 = vsel %vm2996, %v2836, 0.0
  %v3029 = vsel %vm2997, %v2837, 0.0
  %v3030 = vsel %vm2998, %v2838, 0.0
  %v3031 = vsel %vm2999, %v2839, 0.0
  %v3032 = vsel %vm3000, %v2840, 0.0
  %v3033 = vsel %vm3001, %v2841, 0.0
  %v3034 = vsel %vm3002, %v2842, 0.0
  %v3035 = vsel %vm3003, %v2843, 0.0
  %v3036 = vsel %vm3004, %v2844, 0.0
  %v3037 = vsel %vm3005, %v2845, 0.0
  %v3038 = vsel %vm3006, %v2846, 0.0
  %v3039 = vsel %vm3007, %v2847, 0.0
  %v3040 = vsel %vm3008, %v2848, 0.0
  %v3041 = vsel %vm3009, %v2849, 0.0
  %v3042 = vsel %vm3010, %v2850, 0.0
  %v3043 = vsel %vm3011, %v2851, 0.0
  %v3044 = vsel %vm3012, %v2852, 0.0
  %v3045 = vsel %vm3013, %v2853, 0.0
  %v3046 = vsel %vm3014, %v2854, 0.0
  %v3047 = vsel %vm3015, %v2855, 0.0
  %v3048 = vsel %vm3016, %v2856, 0.0
  %vm3049 = vcmp.eq.s32.totalorder %v2953, 8
  %vm3050 = vcmp.eq.s32.totalorder %v2954, 8
  %vm3051 = vcmp.eq.s32.totalorder %v2955, 8
  %vm3052 = vcmp.eq.s32.totalorder %v2956, 8
  %vm3053 = vcmp.eq.s32.totalorder %v2957, 8
  %vm3054 = vcmp.eq.s32.totalorder %v2958, 8
  %vm3055 = vcmp.eq.s32.totalorder %v2959, 8
  %vm3056 = vcmp.eq.s32.totalorder %v2960, 8
  %vm3057 = vcmp.eq.s32.totalorder %v2961, 8
  %vm3058 = vcmp.eq.s32.totalorder %v2962, 8
  %vm3059 = vcmp.eq.s32.totalorder %v2963, 8
  %vm3060 = vcmp.eq.s32.totalorder %v2964, 8
  %vm3061 = vcmp.eq.s32.totalorder %v2965, 8
  %vm3062 = vcmp.eq.s32.totalorder %v2966, 8
  %vm3063 = vcmp.eq.s32.totalorder %v2967, 8
  %vm3064 = vcmp.eq.s32.totalorder %v2968, 8
  %vm3065 = vcmp.eq.s32.totalorder %v2969, 8
  %vm3066 = vcmp.eq.s32.totalorder %v2970, 8
  %vm3067 = vcmp.eq.s32.totalorder %v2971, 8
  %vm3068 = vcmp.eq.s32.totalorder %v2972, 8
  %vm3069 = vcmp.eq.s32.totalorder %v2973, 8
  %vm3070 = vcmp.eq.s32.totalorder %v2974, 8
  %vm3071 = vcmp.eq.s32.totalorder %v2975, 8
  %vm3072 = vcmp.eq.s32.totalorder %v2976, 8
  %vm3073 = vcmp.eq.s32.totalorder %v2977, 8
  %vm3074 = vcmp.eq.s32.totalorder %v2978, 8
  %vm3075 = vcmp.eq.s32.totalorder %v2979, 8
  %vm3076 = vcmp.eq.s32.totalorder %v2980, 8
  %vm3077 = vcmp.eq.s32.totalorder %v2981, 8
  %vm3078 = vcmp.eq.s32.totalorder %v2982, 8
  %vm3079 = vcmp.eq.s32.totalorder %v2983, 8
  %vm3080 = vcmp.eq.s32.totalorder %v2984, 8
  %v3081 = vsel %vm3049, %v2793, 0.0
  %v3082 = vsel %vm3050, %v2794, 0.0
  %v3083 = vsel %vm3051, %v2795, 0.0
  %v3084 = vsel %vm3052, %v2796, 0.0
  %v3085 = vsel %vm3053, %v2797, 0.0
  %v3086 = vsel %vm3054, %v2798, 0.0
  %v3087 = vsel %vm3055, %v2799, 0.0
  %v3088 = vsel %vm3056, %v2800, 0.0
  %v3089 = vsel %vm3057, %v2801, 0.0
  %v3090 = vsel %vm3058, %v2802, 0.0
  %v3091 = vsel %vm3059, %v2803, 0.0
  %v3092 = vsel %vm3060, %v2804, 0.0
  %v3093 = vsel %vm3061, %v2805, 0.0
  %v3094 = vsel %vm3062, %v2806, 0.0
  %v3095 = vsel %vm3063, %v2807, 0.0
  %v3096 = vsel %vm3064, %v2808, 0.0
  %v3097 = vsel %vm3065, %v2809, 0.0
  %v3098 = vsel %vm3066, %v2810, 0.0
  %v3099 = vsel %vm3067, %v2811, 0.0
  %v3100 = vsel %vm3068, %v2812, 0.0
  %v3101 = vsel %vm3069, %v2813, 0.0
  %v3102 = vsel %vm3070, %v2814, 0.0
  %v3103 = vsel %vm3071, %v2815, 0.0
  %v3104 = vsel %vm3072, %v2816, 0.0
  %v3105 = vsel %vm3073, %v2817, 0.0
  %v3106 = vsel %vm3074, %v2818, 0.0
  %v3107 = vsel %vm3075, %v2819, 0.0
  %v3108 = vsel %vm3076, %v2820, 0.0
  %v3109 = vsel %vm3077, %v2821, 0.0
  %v3110 = vsel %vm3078, %v2822, 0.0
  %v3111 = vsel %vm3079, %v2823, 0.0
  %v3112 = vsel %vm3080, %v2824, 0.0
  %v3113 = vadd.f32 %v3017, %v3081
  %v3114 = vadd.f32 %v3018, %v3082
  %v3115 = vadd.f32 %v3019, %v3083
  %v3116 = vadd.f32 %v3020, %v3084
  %v3117 = vadd.f32 %v3021, %v3085
  %v3118 = vadd.f32 %v3022, %v3086
  %v3119 = vadd.f32 %v3023, %v3087
  %v3120 = vadd.f32 %v3024, %v3088
  %v3121 = vadd.f32 %v3025, %v3089
  %v3122 = vadd.f32 %v3026, %v3090
  %v3123 = vadd.f32 %v3027, %v3091
  %v3124 = vadd.f32 %v3028, %v3092
  %v3125 = vadd.f32 %v3029, %v3093
  %v3126 = vadd.f32 %v3030, %v3094
  %v3127 = vadd.f32 %v3031, %v3095
  %v3128 = vadd.f32 %v3032, %v3096
  %v3129 = vadd.f32 %v3033, %v3097
  %v3130 = vadd.f32 %v3034, %v3098
  %v3131 = vadd.f32 %v3035, %v3099
  %v3132 = vadd.f32 %v3036, %v3100
  %v3133 = vadd.f32 %v3037, %v3101
  %v3134 = vadd.f32 %v3038, %v3102
  %v3135 = vadd.f32 %v3039, %v3103
  %v3136 = vadd.f32 %v3040, %v3104
  %v3137 = vadd.f32 %v3041, %v3105
  %v3138 = vadd.f32 %v3042, %v3106
  %v3139 = vadd.f32 %v3043, %v3107
  %v3140 = vadd.f32 %v3044, %v3108
  %v3141 = vadd.f32 %v3045, %v3109
  %v3142 = vadd.f32 %v3046, %v3110
  %v3143 = vadd.f32 %v3047, %v3111
  %v3144 = vadd.f32 %v3048, %v3112
  %v3145 = vpack.c.bf16 %v3114, %v3113
  %v3146 = vpack.c.bf16 %v3116, %v3115
  %v3147 = vpack.c.bf16 %v3118, %v3117
  %v3148 = vpack.c.bf16 %v3120, %v3119
  %v3149 = vpack.c.bf16 %v3122, %v3121
  %v3150 = vpack.c.bf16 %v3124, %v3123
  %v3151 = vpack.c.bf16 %v3126, %v3125
  %v3152 = vpack.c.bf16 %v3128, %v3127
  %v3153 = vpack.c.bf16 %v3130, %v3129
  %v3154 = vpack.c.bf16 %v3132, %v3131
  %v3155 = vpack.c.bf16 %v3134, %v3133
  %v3156 = vpack.c.bf16 %v3136, %v3135
  %v3157 = vpack.c.bf16 %v3138, %v3137
  %v3158 = vpack.c.bf16 %v3140, %v3139
  %v3159 = vpack.c.bf16 %v3142, %v3141
  %v3160 = vpack.c.bf16 %v3144, %v3143
  %v3165 = vunpack.c.l.b16 %v15
  %v3166 = vunpack.c.h.b16 %v15
  %v3167 = vunpack.c.l.b16 %v16
  %v3168 = vunpack.c.h.b16 %v16
  %v3169 = vunpack.c.l.b16 %v17
  %v3170 = vunpack.c.h.b16 %v17
  %v3171 = vunpack.c.l.b16 %v18
  %v3172 = vunpack.c.h.b16 %v18
  %v3173 = vpack.c.b16 %v3167, %v3165
  %v3174 = vpack.c.b16 %v3168, %v3166
  %v3175 = vpack.c.b16 %v3171, %v3169
  %v3176 = vpack.c.b16 %v3172, %v3170
  %3181 = vmatprep.subr.bf16.mxu0 0
  %3182 = vmatpush1.bf16.msra.mxu0 %v3145
  %3183 = vmatprep.subr.bf16.mxu0 0
  %3184 = vmatpush1.bf16.msra.mxu0 %v3146
  %3185 = vmatprep.subr.bf16.mxu0 0
  %3186 = vmatpush1.bf16.msra.mxu0 %v3147
  %3187 = vmatprep.subr.bf16.mxu0 0
  %3188 = vmatpush1.bf16.msra.mxu0 %v3148
  %3189 = vmatprep.subr.bf16.mxu0 0
  %3190 = vmatpush1.bf16.msra.mxu0 %v3149
  %3191 = vmatprep.subr.bf16.mxu0 0
  %3192 = vmatpush1.bf16.msra.mxu0 %v3150
  %3193 = vmatprep.subr.bf16.mxu0 0
  %3194 = vmatpush1.bf16.msra.mxu0 %v3151
  %3195 = vmatprep.subr.bf16.mxu0 0
  %3196 = vmatpush1.bf16.msra.mxu0 %v3152
  %3197 = vmatprep.subr.bf16.mxu0 0
  %3198 = vmatpush1.bf16.msra.mxu0 %v3153
  %3199 = vmatprep.subr.bf16.mxu0 0
  %3200 = vmatpush1.bf16.msra.mxu0 %v3154
  %3201 = vmatprep.subr.bf16.mxu0 0
  %3202 = vmatpush1.bf16.msra.mxu0 %v3155
  %3203 = vmatprep.subr.bf16.mxu0 0
  %3204 = vmatpush1.bf16.msra.mxu0 %v3156
  %3205 = vmatprep.subr.bf16.mxu0 0
  %3206 = vmatpush1.bf16.msra.mxu0 %v3157
  %3207 = vmatprep.subr.bf16.mxu0 0
  %3208 = vmatpush1.bf16.msra.mxu0 %v3158
  %3209 = vmatprep.subr.bf16.mxu0 0
  %3210 = vmatpush1.bf16.msra.mxu0 %v3159
  %3211 = vmatprep.subr.bf16.mxu0 0
  %3212 = vmatpush1.bf16.msra.mxu0 %v3160
  %3213 = vmatprep.mubr.bf16.mxu0 %v3174
  %3214 = vmatmul.mubr.bf16.gmra.mrb[0].mxu0 %v3173
  %v3215 = vpop.f32.mrb[0].mxu0
  %v3216 = vadd.f32 0.0, %v3215
  %v3217 = vpop.f32.mrb[0].mxu0
  %v3218 = vpop.f32.mrb[0].mxu0
  %v3219 = vadd.f32 0.0, %v3218
  %v3220 = vpop.f32.mrb[0].mxu0
  %3221 = vmatprep.mubr.bf16.mxu0 %v3176
  %3222 = vmatmul.mubr.bf16.gmra.mrb[0].mxu0 %v3175
  %v3223 = vpop.f32.mrb[0].mxu0
  %v3224 = vadd.f32 0.0, %v3223
  %v3225 = vpop.f32.mrb[0].mxu0
  %v3226 = vpop.f32.mrb[0].mxu0
  %v3227 = vadd.f32 0.0, %v3226
  %v3228 = vpop.f32.mrb[0].mxu0
  %3229 = vdwg.mxu0
  %v3230 = vpack.c.bf16 %v3219, %v3216
  %v3231 = vpack.c.bf16 %v3227, %v3224
  %vm3232 = vcmp.eq.s32.totalorder %v2953, 1
  %vm3233 = vcmp.eq.s32.totalorder %v2954, 1
  %vm3234 = vcmp.eq.s32.totalorder %v2955, 1
  %vm3235 = vcmp.eq.s32.totalorder %v2956, 1
  %vm3236 = vcmp.eq.s32.totalorder %v2957, 1
  %vm3237 = vcmp.eq.s32.totalorder %v2958, 1
  %vm3238 = vcmp.eq.s32.totalorder %v2959, 1
  %vm3239 = vcmp.eq.s32.totalorder %v2960, 1
  %vm3240 = vcmp.eq.s32.totalorder %v2961, 1
  %vm3241 = vcmp.eq.s32.totalorder %v2962, 1
  %vm3242 = vcmp.eq.s32.totalorder %v2963, 1
  %vm3243 = vcmp.eq.s32.totalorder %v2964, 1
  %vm3244 = vcmp.eq.s32.totalorder %v2965, 1
  %vm3245 = vcmp.eq.s32.totalorder %v2966, 1
  %vm3246 = vcmp.eq.s32.totalorder %v2967, 1
  %vm3247 = vcmp.eq.s32.totalorder %v2968, 1
  %vm3248 = vcmp.eq.s32.totalorder %v2969, 1
  %vm3249 = vcmp.eq.s32.totalorder %v2970, 1
  %vm3250 = vcmp.eq.s32.totalorder %v2971, 1
  %vm3251 = vcmp.eq.s32.totalorder %v2972, 1
  %vm3252 = vcmp.eq.s32.totalorder %v2973, 1
  %vm3253 = vcmp.eq.s32.totalorder %v2974, 1
  %vm3254 = vcmp.eq.s32.totalorder %v2975, 1
  %vm3255 = vcmp.eq.s32.totalorder %v2976, 1
  %vm3256 = vcmp.eq.s32.totalorder %v2977, 1
  %vm3257 = vcmp.eq.s32.totalorder %v2978, 1
  %vm3258 = vcmp.eq.s32.totalorder %v2979, 1
  %vm3259 = vcmp.eq.s32.totalorder %v2980, 1
  %vm3260 = vcmp.eq.s32.totalorder %v2981, 1
  %vm3261 = vcmp.eq.s32.totalorder %v2982, 1
  %vm3262 = vcmp.eq.s32.totalorder %v2983, 1
  %vm3263 = vcmp.eq.s32.totalorder %v2984, 1
  %v3264 = vsel %vm3232, %v2825, 0.0
  %v3265 = vsel %vm3233, %v2826, 0.0
  %v3266 = vsel %vm3234, %v2827, 0.0
  %v3267 = vsel %vm3235, %v2828, 0.0
  %v3268 = vsel %vm3236, %v2829, 0.0
  %v3269 = vsel %vm3237, %v2830, 0.0
  %v3270 = vsel %vm3238, %v2831, 0.0
  %v3271 = vsel %vm3239, %v2832, 0.0
  %v3272 = vsel %vm3240, %v2833, 0.0
  %v3273 = vsel %vm3241, %v2834, 0.0
  %v3274 = vsel %vm3242, %v2835, 0.0
  %v3275 = vsel %vm3243, %v2836, 0.0
  %v3276 = vsel %vm3244, %v2837, 0.0
  %v3277 = vsel %vm3245, %v2838, 0.0
  %v3278 = vsel %vm3246, %v2839, 0.0
  %v3279 = vsel %vm3247, %v2840, 0.0
  %v3280 = vsel %vm3248, %v2841, 0.0
  %v3281 = vsel %vm3249, %v2842, 0.0
  %v3282 = vsel %vm3250, %v2843, 0.0
  %v3283 = vsel %vm3251, %v2844, 0.0
  %v3284 = vsel %vm3252, %v2845, 0.0
  %v3285 = vsel %vm3253, %v2846, 0.0
  %v3286 = vsel %vm3254, %v2847, 0.0
  %v3287 = vsel %vm3255, %v2848, 0.0
  %v3288 = vsel %vm3256, %v2849, 0.0
  %v3289 = vsel %vm3257, %v2850, 0.0
  %v3290 = vsel %vm3258, %v2851, 0.0
  %v3291 = vsel %vm3259, %v2852, 0.0
  %v3292 = vsel %vm3260, %v2853, 0.0
  %v3293 = vsel %vm3261, %v2854, 0.0
  %v3294 = vsel %vm3262, %v2855, 0.0
  %v3295 = vsel %vm3263, %v2856, 0.0
  %v3296 = vsel %vm2985, %v2793, 0.0
  %v3297 = vsel %vm2986, %v2794, 0.0
  %v3298 = vsel %vm2987, %v2795, 0.0
  %v3299 = vsel %vm2988, %v2796, 0.0
  %v3300 = vsel %vm2989, %v2797, 0.0
  %v3301 = vsel %vm2990, %v2798, 0.0
  %v3302 = vsel %vm2991, %v2799, 0.0
  %v3303 = vsel %vm2992, %v2800, 0.0
  %v3304 = vsel %vm2993, %v2801, 0.0
  %v3305 = vsel %vm2994, %v2802, 0.0
  %v3306 = vsel %vm2995, %v2803, 0.0
  %v3307 = vsel %vm2996, %v2804, 0.0
  %v3308 = vsel %vm2997, %v2805, 0.0
  %v3309 = vsel %vm2998, %v2806, 0.0
  %v3310 = vsel %vm2999, %v2807, 0.0
  %v3311 = vsel %vm3000, %v2808, 0.0
  %v3312 = vsel %vm3001, %v2809, 0.0
  %v3313 = vsel %vm3002, %v2810, 0.0
  %v3314 = vsel %vm3003, %v2811, 0.0
  %v3315 = vsel %vm3004, %v2812, 0.0
  %v3316 = vsel %vm3005, %v2813, 0.0
  %v3317 = vsel %vm3006, %v2814, 0.0
  %v3318 = vsel %vm3007, %v2815, 0.0
  %v3319 = vsel %vm3008, %v2816, 0.0
  %v3320 = vsel %vm3009, %v2817, 0.0
  %v3321 = vsel %vm3010, %v2818, 0.0
  %v3322 = vsel %vm3011, %v2819, 0.0
  %v3323 = vsel %vm3012, %v2820, 0.0
  %v3324 = vsel %vm3013, %v2821, 0.0
  %v3325 = vsel %vm3014, %v2822, 0.0
  %v3326 = vsel %vm3015, %v2823, 0.0
  %v3327 = vsel %vm3016, %v2824, 0.0
  %v3328 = vadd.f32 %v3264, %v3296
  %v3329 = vadd.f32 %v3265, %v3297
  %v3330 = vadd.f32 %v3266, %v3298
  %v3331 = vadd.f32 %v3267, %v3299
  %v3332 = vadd.f32 %v3268, %v3300
  %v3333 = vadd.f32 %v3269, %v3301
  %v3334 = vadd.f32 %v3270, %v3302
  %v3335 = vadd.f32 %v3271, %v3303
  %v3336 = vadd.f32 %v3272, %v3304
  %v3337 = vadd.f32 %v3273, %v3305
  %v3338 = vadd.f32 %v3274, %v3306
  %v3339 = vadd.f32 %v3275, %v3307
  %v3340 = vadd.f32 %v3276, %v3308
  %v3341 = vadd.f32 %v3277, %v3309
  %v3342 = vadd.f32 %v3278, %v3310
  %v3343 = vadd.f32 %v3279, %v3311
  %v3344 = vadd.f32 %v3280, %v3312
  %v3345 = vadd.f32 %v3281, %v3313
  %v3346 = vadd.f32 %v3282, %v3314
  %v3347 = vadd.f32 %v3283, %v3315
  %v3348 = vadd.f32 %v3284, %v3316
  %v3349 = vadd.f32 %v3285, %v3317
  %v3350 = vadd.f32 %v3286, %v3318
  %v3351 = vadd.f32 %v3287, %v3319
  %v3352 = vadd.f32 %v3288, %v3320
  %v3353 = vadd.f32 %v3289, %v3321
  %v3354 = vadd.f32 %v3290, %v3322
  %v3355 = vadd.f32 %v3291, %v3323
  %v3356 = vadd.f32 %v3292, %v3324
  %v3357 = vadd.f32 %v3293, %v3325
  %v3358 = vadd.f32 %v3294, %v3326
  %v3359 = vadd.f32 %v3295, %v3327
  %v3360 = vpack.c.bf16 %v3329, %v3328
  %v3361 = vpack.c.bf16 %v3331, %v3330
  %v3362 = vpack.c.bf16 %v3333, %v3332
  %v3363 = vpack.c.bf16 %v3335, %v3334
  %v3364 = vpack.c.bf16 %v3337, %v3336
  %v3365 = vpack.c.bf16 %v3339, %v3338
  %v3366 = vpack.c.bf16 %v3341, %v3340
  %v3367 = vpack.c.bf16 %v3343, %v3342
  %v3368 = vpack.c.bf16 %v3345, %v3344
  %v3369 = vpack.c.bf16 %v3347, %v3346
  %v3370 = vpack.c.bf16 %v3349, %v3348
  %v3371 = vpack.c.bf16 %v3351, %v3350
  %v3372 = vpack.c.bf16 %v3353, %v3352
  %v3373 = vpack.c.bf16 %v3355, %v3354
  %v3374 = vpack.c.bf16 %v3357, %v3356
  %v3375 = vpack.c.bf16 %v3359, %v3358
  %3376 = vmatprep.subr.bf16.mxu0 0
  %3377 = vmatpush1.bf16.msra.mxu0 %v3360
  %3378 = vmatprep.subr.bf16.mxu0 0
  %3379 = vmatpush1.bf16.msra.mxu0 %v3361
  %3380 = vmatprep.subr.bf16.mxu0 0
  %3381 = vmatpush1.bf16.msra.mxu0 %v3362
  %3382 = vmatprep.subr.bf16.mxu0 0
  %3383 = vmatpush1.bf16.msra.mxu0 %v3363
  %3384 = vmatprep.subr.bf16.mxu0 0
  %3385 = vmatpush1.bf16.msra.mxu0 %v3364
  %3386 = vmatprep.subr.bf16.mxu0 0
  %3387 = vmatpush1.bf16.msra.mxu0 %v3365
  %3388 = vmatprep.subr.bf16.mxu0 0
  %3389 = vmatpush1.bf16.msra.mxu0 %v3366
  %3390 = vmatprep.subr.bf16.mxu0 0
  %3391 = vmatpush1.bf16.msra.mxu0 %v3367
  %3392 = vmatprep.subr.bf16.mxu0 0
  %3393 = vmatpush1.bf16.msra.mxu0 %v3368
  %3394 = vmatprep.subr.bf16.mxu0 0
  %3395 = vmatpush1.bf16.msra.mxu0 %v3369
  %3396 = vmatprep.subr.bf16.mxu0 0
  %3397 = vmatpush1.bf16.msra.mxu0 %v3370
  %3398 = vmatprep.subr.bf16.mxu0 0
  %3399 = vmatpush1.bf16.msra.mxu0 %v3371
  %3400 = vmatprep.subr.bf16.mxu0 0
  %3401 = vmatpush1.bf16.msra.mxu0 %v3372
  %3402 = vmatprep.subr.bf16.mxu0 0
  %3403 = vmatpush1.bf16.msra.mxu0 %v3373
  %3404 = vmatprep.subr.bf16.mxu0 0
  %3405 = vmatpush1.bf16.msra.mxu0 %v3374
  %3406 = vmatprep.subr.bf16.mxu0 0
  %3407 = vmatpush1.bf16.msra.mxu0 %v3375
  %3408 = vmatprep.mubr.bf16.mxu0 %v3174
  %3409 = vmatmul.mubr.bf16.gmra.mrb[0].mxu0 %v3173
  %v3410 = vpop.f32.mrb[0].mxu0
  %v3411 = vadd.f32 0.0, %v3410
  %v3412 = vpop.f32.mrb[0].mxu0
  %v3413 = vpop.f32.mrb[0].mxu0
  %v3414 = vadd.f32 0.0, %v3413
  %v3415 = vpop.f32.mrb[0].mxu0
  %3416 = vmatprep.mubr.bf16.mxu0 %v3176
  %3417 = vmatmul.mubr.bf16.gmra.mrb[0].mxu0 %v3175
  %v3418 = vpop.f32.mrb[0].mxu0
  %v3419 = vadd.f32 0.0, %v3418
  %v3420 = vpop.f32.mrb[0].mxu0
  %v3421 = vpop.f32.mrb[0].mxu0
  %v3422 = vadd.f32 0.0, %v3421
  %v3423 = vpop.f32.mrb[0].mxu0
  %3424 = vdwg.mxu0
  %v3425 = vpack.c.bf16 %v3414, %v3411
  %v3426 = vpack.c.bf16 %v3422, %v3419
  %vm3427 = vcmp.eq.s32.totalorder %v2953, 2
  %vm3428 = vcmp.eq.s32.totalorder %v2954, 2
  %vm3429 = vcmp.eq.s32.totalorder %v2955, 2
  %vm3430 = vcmp.eq.s32.totalorder %v2956, 2
  %vm3431 = vcmp.eq.s32.totalorder %v2957, 2
  %vm3432 = vcmp.eq.s32.totalorder %v2958, 2
  %vm3433 = vcmp.eq.s32.totalorder %v2959, 2
  %vm3434 = vcmp.eq.s32.totalorder %v2960, 2
  %vm3435 = vcmp.eq.s32.totalorder %v2961, 2
  %vm3436 = vcmp.eq.s32.totalorder %v2962, 2
  %vm3437 = vcmp.eq.s32.totalorder %v2963, 2
  %vm3438 = vcmp.eq.s32.totalorder %v2964, 2
  %vm3439 = vcmp.eq.s32.totalorder %v2965, 2
  %vm3440 = vcmp.eq.s32.totalorder %v2966, 2
  %vm3441 = vcmp.eq.s32.totalorder %v2967, 2
  %vm3442 = vcmp.eq.s32.totalorder %v2968, 2
  %vm3443 = vcmp.eq.s32.totalorder %v2969, 2
  %vm3444 = vcmp.eq.s32.totalorder %v2970, 2
  %vm3445 = vcmp.eq.s32.totalorder %v2971, 2
  %vm3446 = vcmp.eq.s32.totalorder %v2972, 2
  %vm3447 = vcmp.eq.s32.totalorder %v2973, 2
  %vm3448 = vcmp.eq.s32.totalorder %v2974, 2
  %vm3449 = vcmp.eq.s32.totalorder %v2975, 2
  %vm3450 = vcmp.eq.s32.totalorder %v2976, 2
  %vm3451 = vcmp.eq.s32.totalorder %v2977, 2
  %vm3452 = vcmp.eq.s32.totalorder %v2978, 2
  %vm3453 = vcmp.eq.s32.totalorder %v2979, 2
  %vm3454 = vcmp.eq.s32.totalorder %v2980, 2
  %vm3455 = vcmp.eq.s32.totalorder %v2981, 2
  %vm3456 = vcmp.eq.s32.totalorder %v2982, 2
  %vm3457 = vcmp.eq.s32.totalorder %v2983, 2
  %vm3458 = vcmp.eq.s32.totalorder %v2984, 2
  %v3459 = vsel %vm3427, %v2825, 0.0
  %v3460 = vsel %vm3428, %v2826, 0.0
  %v3461 = vsel %vm3429, %v2827, 0.0
  %v3462 = vsel %vm3430, %v2828, 0.0
  %v3463 = vsel %vm3431, %v2829, 0.0
  %v3464 = vsel %vm3432, %v2830, 0.0
  %v3465 = vsel %vm3433, %v2831, 0.0
  %v3466 = vsel %vm3434, %v2832, 0.0
  %v3467 = vsel %vm3435, %v2833, 0.0
  %v3468 = vsel %vm3436, %v2834, 0.0
  %v3469 = vsel %vm3437, %v2835, 0.0
  %v3470 = vsel %vm3438, %v2836, 0.0
  %v3471 = vsel %vm3439, %v2837, 0.0
  %v3472 = vsel %vm3440, %v2838, 0.0
  %v3473 = vsel %vm3441, %v2839, 0.0
  %v3474 = vsel %vm3442, %v2840, 0.0
  %v3475 = vsel %vm3443, %v2841, 0.0
  %v3476 = vsel %vm3444, %v2842, 0.0
  %v3477 = vsel %vm3445, %v2843, 0.0
  %v3478 = vsel %vm3446, %v2844, 0.0
  %v3479 = vsel %vm3447, %v2845, 0.0
  %v3480 = vsel %vm3448, %v2846, 0.0
  %v3481 = vsel %vm3449, %v2847, 0.0
  %v3482 = vsel %vm3450, %v2848, 0.0
  %v3483 = vsel %vm3451, %v2849, 0.0
  %v3484 = vsel %vm3452, %v2850, 0.0
  %v3485 = vsel %vm3453, %v2851, 0.0
  %v3486 = vsel %vm3454, %v2852, 0.0
  %v3487 = vsel %vm3455, %v2853, 0.0
  %v3488 = vsel %vm3456, %v2854, 0.0
  %v3489 = vsel %vm3457, %v2855, 0.0
  %v3490 = vsel %vm3458, %v2856, 0.0
  %v3491 = vsel %vm3232, %v2793, 0.0
  %v3492 = vsel %vm3233, %v2794, 0.0
  %v3493 = vsel %vm3234, %v2795, 0.0
  %v3494 = vsel %vm3235, %v2796, 0.0
  %v3495 = vsel %vm3236, %v2797, 0.0
  %v3496 = vsel %vm3237, %v2798, 0.0
  %v3497 = vsel %vm3238, %v2799, 0.0
  %v3498 = vsel %vm3239, %v2800, 0.0
  %v3499 = vsel %vm3240, %v2801, 0.0
  %v3500 = vsel %vm3241, %v2802, 0.0
  %v3501 = vsel %vm3242, %v2803, 0.0
  %v3502 = vsel %vm3243, %v2804, 0.0
  %v3503 = vsel %vm3244, %v2805, 0.0
  %v3504 = vsel %vm3245, %v2806, 0.0
  %v3505 = vsel %vm3246, %v2807, 0.0
  %v3506 = vsel %vm3247, %v2808, 0.0
  %v3507 = vsel %vm3248, %v2809, 0.0
  %v3508 = vsel %vm3249, %v2810, 0.0
  %v3509 = vsel %vm3250, %v2811, 0.0
  %v3510 = vsel %vm3251, %v2812, 0.0
  %v3511 = vsel %vm3252, %v2813, 0.0
  %v3512 = vsel %vm3253, %v2814, 0.0
  %v3513 = vsel %vm3254, %v2815, 0.0
  %v3514 = vsel %vm3255, %v2816, 0.0
  %v3515 = vsel %vm3256, %v2817, 0.0
  %v3516 = vsel %vm3257, %v2818, 0.0
  %v3517 = vsel %vm3258, %v2819, 0.0
  %v3518 = vsel %vm3259, %v2820, 0.0
  %v3519 = vsel %vm3260, %v2821, 0.0
  %v3520 = vsel %vm3261, %v2822, 0.0
  %v3521 = vsel %vm3262, %v2823, 0.0
  %v3522 = vsel %vm3263, %v2824, 0.0
  %v3523 = vadd.f32 %v3459, %v3491
  %v3524 = vadd.f32 %v3460, %v3492
  %v3525 = vadd.f32 %v3461, %v3493
  %v3526 = vadd.f32 %v3462, %v3494
  %v3527 = vadd.f32 %v3463, %v3495
  %v3528 = vadd.f32 %v3464, %v3496
  %v3529 = vadd.f32 %v3465, %v3497
  %v3530 = vadd.f32 %v3466, %v3498
  %v3531 = vadd.f32 %v3467, %v3499
  %v3532 = vadd.f32 %v3468, %v3500
  %v3533 = vadd.f32 %v3469, %v3501
  %v3534 = vadd.f32 %v3470, %v3502
  %v3535 = vadd.f32 %v3471, %v3503
  %v3536 = vadd.f32 %v3472, %v3504
  %v3537 = vadd.f32 %v3473, %v3505
  %v3538 = vadd.f32 %v3474, %v3506
  %v3539 = vadd.f32 %v3475, %v3507
  %v3540 = vadd.f32 %v3476, %v3508
  %v3541 = vadd.f32 %v3477, %v3509
  %v3542 = vadd.f32 %v3478, %v3510
  %v3543 = vadd.f32 %v3479, %v3511
  %v3544 = vadd.f32 %v3480, %v3512
  %v3545 = vadd.f32 %v3481, %v3513
  %v3546 = vadd.f32 %v3482, %v3514
  %v3547 = vadd.f32 %v3483, %v3515
  %v3548 = vadd.f32 %v3484, %v3516
  %v3549 = vadd.f32 %v3485, %v3517
  %v3550 = vadd.f32 %v3486, %v3518
  %v3551 = vadd.f32 %v3487, %v3519
  %v3552 = vadd.f32 %v3488, %v3520
  %v3553 = vadd.f32 %v3489, %v3521
  %v3554 = vadd.f32 %v3490, %v3522
  %v3555 = vpack.c.bf16 %v3524, %v3523
  %v3556 = vpack.c.bf16 %v3526, %v3525
  %v3557 = vpack.c.bf16 %v3528, %v3527
  %v3558 = vpack.c.bf16 %v3530, %v3529
  %v3559 = vpack.c.bf16 %v3532, %v3531
  %v3560 = vpack.c.bf16 %v3534, %v3533
  %v3561 = vpack.c.bf16 %v3536, %v3535
  %v3562 = vpack.c.bf16 %v3538, %v3537
  %v3563 = vpack.c.bf16 %v3540, %v3539
  %v3564 = vpack.c.bf16 %v3542, %v3541
  %v3565 = vpack.c.bf16 %v3544, %v3543
  %v3566 = vpack.c.bf16 %v3546, %v3545
  %v3567 = vpack.c.bf16 %v3548, %v3547
  %v3568 = vpack.c.bf16 %v3550, %v3549
  %v3569 = vpack.c.bf16 %v3552, %v3551
  %v3570 = vpack.c.bf16 %v3554, %v3553
  %3571 = vmatprep.subr.bf16.mxu0 0
  %3572 = vmatpush1.bf16.msra.mxu0 %v3555
  %3573 = vmatprep.subr.bf16.mxu0 0
  %3574 = vmatpush1.bf16.msra.mxu0 %v3556
  %3575 = vmatprep.subr.bf16.mxu0 0
  %3576 = vmatpush1.bf16.msra.mxu0 %v3557
  %3577 = vmatprep.subr.bf16.mxu0 0
  %3578 = vmatpush1.bf16.msra.mxu0 %v3558
  %3579 = vmatprep.subr.bf16.mxu0 0
  %3580 = vmatpush1.bf16.msra.mxu0 %v3559
  %3581 = vmatprep.subr.bf16.mxu0 0
  %3582 = vmatpush1.bf16.msra.mxu0 %v3560
  %3583 = vmatprep.subr.bf16.mxu0 0
  %3584 = vmatpush1.bf16.msra.mxu0 %v3561
  %3585 = vmatprep.subr.bf16.mxu0 0
  %3586 = vmatpush1.bf16.msra.mxu0 %v3562
  %3587 = vmatprep.subr.bf16.mxu0 0
  %3588 = vmatpush1.bf16.msra.mxu0 %v3563
  %3589 = vmatprep.subr.bf16.mxu0 0
  %3590 = vmatpush1.bf16.msra.mxu0 %v3564
  %3591 = vmatprep.subr.bf16.mxu0 0
  %3592 = vmatpush1.bf16.msra.mxu0 %v3565
  %3593 = vmatprep.subr.bf16.mxu0 0
  %3594 = vmatpush1.bf16.msra.mxu0 %v3566
  %3595 = vmatprep.subr.bf16.mxu0 0
  %3596 = vmatpush1.bf16.msra.mxu0 %v3567
  %3597 = vmatprep.subr.bf16.mxu0 0
  %3598 = vmatpush1.bf16.msra.mxu0 %v3568
  %3599 = vmatprep.subr.bf16.mxu0 0
  %3600 = vmatpush1.bf16.msra.mxu0 %v3569
  %3601 = vmatprep.subr.bf16.mxu0 0
  %3602 = vmatpush1.bf16.msra.mxu0 %v3570
  %3603 = vmatprep.mubr.bf16.mxu0 %v3174
  %3604 = vmatmul.mubr.bf16.gmra.mrb[0].mxu0 %v3173
  %v3605 = vpop.f32.mrb[0].mxu0
  %v3606 = vadd.f32 0.0, %v3605
  %v3607 = vpop.f32.mrb[0].mxu0
  %v3608 = vpop.f32.mrb[0].mxu0
  %v3609 = vadd.f32 0.0, %v3608
  %v3610 = vpop.f32.mrb[0].mxu0
  %3611 = vmatprep.mubr.bf16.mxu0 %v3176
  %3612 = vmatmul.mubr.bf16.gmra.mrb[0].mxu0 %v3175
  %v3613 = vpop.f32.mrb[0].mxu0
  %v3614 = vadd.f32 0.0, %v3613
  %v3615 = vpop.f32.mrb[0].mxu0
  %v3616 = vpop.f32.mrb[0].mxu0
  %v3617 = vadd.f32 0.0, %v3616
  %v3618 = vpop.f32.mrb[0].mxu0
  %3619 = vdwg.mxu0
  %v3620 = vpack.c.bf16 %v3609, %v3606
  %v3621 = vpack.c.bf16 %v3617, %v3614
  %vm3622 = vcmp.eq.s32.totalorder %v2953, 3
  %vm3623 = vcmp.eq.s32.totalorder %v2954, 3
  %vm3624 = vcmp.eq.s32.totalorder %v2955, 3
  %vm3625 = vcmp.eq.s32.totalorder %v2956, 3
  %vm3626 = vcmp.eq.s32.totalorder %v2957, 3
  %vm3627 = vcmp.eq.s32.totalorder %v2958, 3
  %vm3628 = vcmp.eq.s32.totalorder %v2959, 3
  %vm3629 = vcmp.eq.s32.totalorder %v2960, 3
  %vm3630 = vcmp.eq.s32.totalorder %v2961, 3
  %vm3631 = vcmp.eq.s32.totalorder %v2962, 3
  %vm3632 = vcmp.eq.s32.totalorder %v2963, 3
  %vm3633 = vcmp.eq.s32.totalorder %v2964, 3
  %vm3634 = vcmp.eq.s32.totalorder %v2965, 3
  %vm3635 = vcmp.eq.s32.totalorder %v2966, 3
  %vm3636 = vcmp.eq.s32.totalorder %v2967, 3
  %vm3637 = vcmp.eq.s32.totalorder %v2968, 3
  %vm3638 = vcmp.eq.s32.totalorder %v2969, 3
  %vm3639 = vcmp.eq.s32.totalorder %v2970, 3
  %vm3640 = vcmp.eq.s32.totalorder %v2971, 3
  %vm3641 = vcmp.eq.s32.totalorder %v2972, 3
  %vm3642 = vcmp.eq.s32.totalorder %v2973, 3
  %vm3643 = vcmp.eq.s32.totalorder %v2974, 3
  %vm3644 = vcmp.eq.s32.totalorder %v2975, 3
  %vm3645 = vcmp.eq.s32.totalorder %v2976, 3
  %vm3646 = vcmp.eq.s32.totalorder %v2977, 3
  %vm3647 = vcmp.eq.s32.totalorder %v2978, 3
  %vm3648 = vcmp.eq.s32.totalorder %v2979, 3
  %vm3649 = vcmp.eq.s32.totalorder %v2980, 3
  %vm3650 = vcmp.eq.s32.totalorder %v2981, 3
  %vm3651 = vcmp.eq.s32.totalorder %v2982, 3
  %vm3652 = vcmp.eq.s32.totalorder %v2983, 3
  %vm3653 = vcmp.eq.s32.totalorder %v2984, 3
  %v3654 = vsel %vm3622, %v2825, 0.0
  %v3655 = vsel %vm3623, %v2826, 0.0
  %v3656 = vsel %vm3624, %v2827, 0.0
  %v3657 = vsel %vm3625, %v2828, 0.0
  %v3658 = vsel %vm3626, %v2829, 0.0
  %v3659 = vsel %vm3627, %v2830, 0.0
  %v3660 = vsel %vm3628, %v2831, 0.0
  %v3661 = vsel %vm3629, %v2832, 0.0
  %v3662 = vsel %vm3630, %v2833, 0.0
  %v3663 = vsel %vm3631, %v2834, 0.0
  %v3664 = vsel %vm3632, %v2835, 0.0
  %v3665 = vsel %vm3633, %v2836, 0.0
  %v3666 = vsel %vm3634, %v2837, 0.0
  %v3667 = vsel %vm3635, %v2838, 0.0
  %v3668 = vsel %vm3636, %v2839, 0.0
  %v3669 = vsel %vm3637, %v2840, 0.0
  %v3670 = vsel %vm3638, %v2841, 0.0
  %v3671 = vsel %vm3639, %v2842, 0.0
  %v3672 = vsel %vm3640, %v2843, 0.0
  %v3673 = vsel %vm3641, %v2844, 0.0
  %v3674 = vsel %vm3642, %v2845, 0.0
  %v3675 = vsel %vm3643, %v2846, 0.0
  %v3676 = vsel %vm3644, %v2847, 0.0
  %v3677 = vsel %vm3645, %v2848, 0.0
  %v3678 = vsel %vm3646, %v2849, 0.0
  %v3679 = vsel %vm3647, %v2850, 0.0
  %v3680 = vsel %vm3648, %v2851, 0.0
  %v3681 = vsel %vm3649, %v2852, 0.0
  %v3682 = vsel %vm3650, %v2853, 0.0
  %v3683 = vsel %vm3651, %v2854, 0.0
  %v3684 = vsel %vm3652, %v2855, 0.0
  %v3685 = vsel %vm3653, %v2856, 0.0
  %v3686 = vsel %vm3427, %v2793, 0.0
  %v3687 = vsel %vm3428, %v2794, 0.0
  %v3688 = vsel %vm3429, %v2795, 0.0
  %v3689 = vsel %vm3430, %v2796, 0.0
  %v3690 = vsel %vm3431, %v2797, 0.0
  %v3691 = vsel %vm3432, %v2798, 0.0
  %v3692 = vsel %vm3433, %v2799, 0.0
  %v3693 = vsel %vm3434, %v2800, 0.0
  %v3694 = vsel %vm3435, %v2801, 0.0
  %v3695 = vsel %vm3436, %v2802, 0.0
  %v3696 = vsel %vm3437, %v2803, 0.0
  %v3697 = vsel %vm3438, %v2804, 0.0
  %v3698 = vsel %vm3439, %v2805, 0.0
  %v3699 = vsel %vm3440, %v2806, 0.0
  %v3700 = vsel %vm3441, %v2807, 0.0
  %v3701 = vsel %vm3442, %v2808, 0.0
  %v3702 = vsel %vm3443, %v2809, 0.0
  %v3703 = vsel %vm3444, %v2810, 0.0
  %v3704 = vsel %vm3445, %v2811, 0.0
  %v3705 = vsel %vm3446, %v2812, 0.0
  %v3706 = vsel %vm3447, %v2813, 0.0
  %v3707 = vsel %vm3448, %v2814, 0.0
  %v3708 = vsel %vm3449, %v2815, 0.0
  %v3709 = vsel %vm3450, %v2816, 0.0
  %v3710 = vsel %vm3451, %v2817, 0.0
  %v3711 = vsel %vm3452, %v2818, 0.0
  %v3712 = vsel %vm3453, %v2819, 0.0
  %v3713 = vsel %vm3454, %v2820, 0.0
  %v3714 = vsel %vm3455, %v2821, 0.0
  %v3715 = vsel %vm3456, %v2822, 0.0
  %v3716 = vsel %vm3457, %v2823, 0.0
  %v3717 = vsel %vm3458, %v2824, 0.0
  %v3718 = vadd.f32 %v3654, %v3686
  %v3719 = vadd.f32 %v3655, %v3687
  %v3720 = vadd.f32 %v3656, %v3688
  %v3721 = vadd.f32 %v3657, %v3689
  %v3722 = vadd.f32 %v3658, %v3690
  %v3723 = vadd.f32 %v3659, %v3691
  %v3724 = vadd.f32 %v3660, %v3692
  %v3725 = vadd.f32 %v3661, %v3693
  %v3726 = vadd.f32 %v3662, %v3694
  %v3727 = vadd.f32 %v3663, %v3695
  %v3728 = vadd.f32 %v3664, %v3696
  %v3729 = vadd.f32 %v3665, %v3697
  %v3730 = vadd.f32 %v3666, %v3698
  %v3731 = vadd.f32 %v3667, %v3699
  %v3732 = vadd.f32 %v3668, %v3700
  %v3733 = vadd.f32 %v3669, %v3701
  %v3734 = vadd.f32 %v3670, %v3702
  %v3735 = vadd.f32 %v3671, %v3703
  %v3736 = vadd.f32 %v3672, %v3704
  %v3737 = vadd.f32 %v3673, %v3705
  %v3738 = vadd.f32 %v3674, %v3706
  %v3739 = vadd.f32 %v3675, %v3707
  %v3740 = vadd.f32 %v3676, %v3708
  %v3741 = vadd.f32 %v3677, %v3709
  %v3742 = vadd.f32 %v3678, %v3710
  %v3743 = vadd.f32 %v3679, %v3711
  %v3744 = vadd.f32 %v3680, %v3712
  %v3745 = vadd.f32 %v3681, %v3713
  %v3746 = vadd.f32 %v3682, %v3714
  %v3747 = vadd.f32 %v3683, %v3715
  %v3748 = vadd.f32 %v3684, %v3716
  %v3749 = vadd.f32 %v3685, %v3717
  %v3750 = vpack.c.bf16 %v3719, %v3718
  %v3751 = vpack.c.bf16 %v3721, %v3720
  %v3752 = vpack.c.bf16 %v3723, %v3722
  %v3753 = vpack.c.bf16 %v3725, %v3724
  %v3754 = vpack.c.bf16 %v3727, %v3726
  %v3755 = vpack.c.bf16 %v3729, %v3728
  %v3756 = vpack.c.bf16 %v3731, %v3730
  %v3757 = vpack.c.bf16 %v3733, %v3732
  %v3758 = vpack.c.bf16 %v3735, %v3734
  %v3759 = vpack.c.bf16 %v3737, %v3736
  %v3760 = vpack.c.bf16 %v3739, %v3738
  %v3761 = vpack.c.bf16 %v3741, %v3740
  %v3762 = vpack.c.bf16 %v3743, %v3742
  %v3763 = vpack.c.bf16 %v3745, %v3744
  %v3764 = vpack.c.bf16 %v3747, %v3746
  %v3765 = vpack.c.bf16 %v3749, %v3748
  %3766 = vmatprep.subr.bf16.mxu0 0
  %3767 = vmatpush1.bf16.msra.mxu0 %v3750
  %3768 = vmatprep.subr.bf16.mxu0 0
  %3769 = vmatpush1.bf16.msra.mxu0 %v3751
  %3770 = vmatprep.subr.bf16.mxu0 0
  %3771 = vmatpush1.bf16.msra.mxu0 %v3752
  %3772 = vmatprep.subr.bf16.mxu0 0
  %3773 = vmatpush1.bf16.msra.mxu0 %v3753
  %3774 = vmatprep.subr.bf16.mxu0 0
  %3775 = vmatpush1.bf16.msra.mxu0 %v3754
  %3776 = vmatprep.subr.bf16.mxu0 0
  %3777 = vmatpush1.bf16.msra.mxu0 %v3755
  %3778 = vmatprep.subr.bf16.mxu0 0
  %3779 = vmatpush1.bf16.msra.mxu0 %v3756
  %3780 = vmatprep.subr.bf16.mxu0 0
  %3781 = vmatpush1.bf16.msra.mxu0 %v3757
  %3782 = vmatprep.subr.bf16.mxu0 0
  %3783 = vmatpush1.bf16.msra.mxu0 %v3758
  %3784 = vmatprep.subr.bf16.mxu0 0
  %3785 = vmatpush1.bf16.msra.mxu0 %v3759
  %3786 = vmatprep.subr.bf16.mxu0 0
  %3787 = vmatpush1.bf16.msra.mxu0 %v3760
  %3788 = vmatprep.subr.bf16.mxu0 0
  %3789 = vmatpush1.bf16.msra.mxu0 %v3761
  %3790 = vmatprep.subr.bf16.mxu0 0
  %3791 = vmatpush1.bf16.msra.mxu0 %v3762
  %3792 = vmatprep.subr.bf16.mxu0 0
  %3793 = vmatpush1.bf16.msra.mxu0 %v3763
  %3794 = vmatprep.subr.bf16.mxu0 0
  %3795 = vmatpush1.bf16.msra.mxu0 %v3764
  %3796 = vmatprep.subr.bf16.mxu0 0
  %3797 = vmatpush1.bf16.msra.mxu0 %v3765
  %3798 = vmatprep.mubr.bf16.mxu0 %v3174
  %3799 = vmatmul.mubr.bf16.gmra.mrb[0].mxu0 %v3173
  %v3800 = vpop.f32.mrb[0].mxu0
  %v3801 = vadd.f32 0.0, %v3800
  %v3802 = vpop.f32.mrb[0].mxu0
  %v3803 = vpop.f32.mrb[0].mxu0
  %v3804 = vadd.f32 0.0, %v3803
  %v3805 = vpop.f32.mrb[0].mxu0
  %3806 = vmatprep.mubr.bf16.mxu0 %v3176
  %3807 = vmatmul.mubr.bf16.gmra.mrb[0].mxu0 %v3175
  %v3808 = vpop.f32.mrb[0].mxu0
  %v3809 = vadd.f32 0.0, %v3808
  %v3810 = vpop.f32.mrb[0].mxu0
  %v3811 = vpop.f32.mrb[0].mxu0
  %v3812 = vadd.f32 0.0, %v3811
  %v3813 = vpop.f32.mrb[0].mxu0
  %3814 = vdwg.mxu0
  %v3815 = vpack.c.bf16 %v3804, %v3801
  %v3816 = vpack.c.bf16 %v3812, %v3809
  %vm3817 = vcmp.eq.s32.totalorder %v2953, 4
  %vm3818 = vcmp.eq.s32.totalorder %v2954, 4
  %vm3819 = vcmp.eq.s32.totalorder %v2955, 4
  %vm3820 = vcmp.eq.s32.totalorder %v2956, 4
  %vm3821 = vcmp.eq.s32.totalorder %v2957, 4
  %vm3822 = vcmp.eq.s32.totalorder %v2958, 4
  %vm3823 = vcmp.eq.s32.totalorder %v2959, 4
  %vm3824 = vcmp.eq.s32.totalorder %v2960, 4
  %vm3825 = vcmp.eq.s32.totalorder %v2961, 4
  %vm3826 = vcmp.eq.s32.totalorder %v2962, 4
  %vm3827 = vcmp.eq.s32.totalorder %v2963, 4
  %vm3828 = vcmp.eq.s32.totalorder %v2964, 4
  %vm3829 = vcmp.eq.s32.totalorder %v2965, 4
  %vm3830 = vcmp.eq.s32.totalorder %v2966, 4
  %vm3831 = vcmp.eq.s32.totalorder %v2967, 4
  %vm3832 = vcmp.eq.s32.totalorder %v2968, 4
  %vm3833 = vcmp.eq.s32.totalorder %v2969, 4
  %vm3834 = vcmp.eq.s32.totalorder %v2970, 4
  %vm3835 = vcmp.eq.s32.totalorder %v2971, 4
  %vm3836 = vcmp.eq.s32.totalorder %v2972, 4
  %vm3837 = vcmp.eq.s32.totalorder %v2973, 4
  %vm3838 = vcmp.eq.s32.totalorder %v2974, 4
  %vm3839 = vcmp.eq.s32.totalorder %v2975, 4
  %vm3840 = vcmp.eq.s32.totalorder %v2976, 4
  %vm3841 = vcmp.eq.s32.totalorder %v2977, 4
  %vm3842 = vcmp.eq.s32.totalorder %v2978, 4
  %vm3843 = vcmp.eq.s32.totalorder %v2979, 4
  %vm3844 = vcmp.eq.s32.totalorder %v2980, 4
  %vm3845 = vcmp.eq.s32.totalorder %v2981, 4
  %vm3846 = vcmp.eq.s32.totalorder %v2982, 4
  %vm3847 = vcmp.eq.s32.totalorder %v2983, 4
  %vm3848 = vcmp.eq.s32.totalorder %v2984, 4
  %v3849 = vsel %vm3817, %v2825, 0.0
  %v3850 = vsel %vm3818, %v2826, 0.0
  %v3851 = vsel %vm3819, %v2827, 0.0
  %v3852 = vsel %vm3820, %v2828, 0.0
  %v3853 = vsel %vm3821, %v2829, 0.0
  %v3854 = vsel %vm3822, %v2830, 0.0
  %v3855 = vsel %vm3823, %v2831, 0.0
  %v3856 = vsel %vm3824, %v2832, 0.0
  %v3857 = vsel %vm3825, %v2833, 0.0
  %v3858 = vsel %vm3826, %v2834, 0.0
  %v3859 = vsel %vm3827, %v2835, 0.0
  %v3860 = vsel %vm3828, %v2836, 0.0
  %v3861 = vsel %vm3829, %v2837, 0.0
  %v3862 = vsel %vm3830, %v2838, 0.0
  %v3863 = vsel %vm3831, %v2839, 0.0
  %v3864 = vsel %vm3832, %v2840, 0.0
  %v3865 = vsel %vm3833, %v2841, 0.0
  %v3866 = vsel %vm3834, %v2842, 0.0
  %v3867 = vsel %vm3835, %v2843, 0.0
  %v3868 = vsel %vm3836, %v2844, 0.0
  %v3869 = vsel %vm3837, %v2845, 0.0
  %v3870 = vsel %vm3838, %v2846, 0.0
  %v3871 = vsel %vm3839, %v2847, 0.0
  %v3872 = vsel %vm3840, %v2848, 0.0
  %v3873 = vsel %vm3841, %v2849, 0.0
  %v3874 = vsel %vm3842, %v2850, 0.0
  %v3875 = vsel %vm3843, %v2851, 0.0
  %v3876 = vsel %vm3844, %v2852, 0.0
  %v3877 = vsel %vm3845, %v2853, 0.0
  %v3878 = vsel %vm3846, %v2854, 0.0
  %v3879 = vsel %vm3847, %v2855, 0.0
  %v3880 = vsel %vm3848, %v2856, 0.0
  %v3881 = vsel %vm3622, %v2793, 0.0
  %v3882 = vsel %vm3623, %v2794, 0.0
  %v3883 = vsel %vm3624, %v2795, 0.0
  %v3884 = vsel %vm3625, %v2796, 0.0
  %v3885 = vsel %vm3626, %v2797, 0.0
  %v3886 = vsel %vm3627, %v2798, 0.0
  %v3887 = vsel %vm3628, %v2799, 0.0
  %v3888 = vsel %vm3629, %v2800, 0.0
  %v3889 = vsel %vm3630, %v2801, 0.0
  %v3890 = vsel %vm3631, %v2802, 0.0
  %v3891 = vsel %vm3632, %v2803, 0.0
  %v3892 = vsel %vm3633, %v2804, 0.0
  %v3893 = vsel %vm3634, %v2805, 0.0
  %v3894 = vsel %vm3635, %v2806, 0.0
  %v3895 = vsel %vm3636, %v2807, 0.0
  %v3896 = vsel %vm3637, %v2808, 0.0
  %v3897 = vsel %vm3638, %v2809, 0.0
  %v3898 = vsel %vm3639, %v2810, 0.0
  %v3899 = vsel %vm3640, %v2811, 0.0
  %v3900 = vsel %vm3641, %v2812, 0.0
  %v3901 = vsel %vm3642, %v2813, 0.0
  %v3902 = vsel %vm3643, %v2814, 0.0
  %v3903 = vsel %vm3644, %v2815, 0.0
  %v3904 = vsel %vm3645, %v2816, 0.0
  %v3905 = vsel %vm3646, %v2817, 0.0
  %v3906 = vsel %vm3647, %v2818, 0.0
  %v3907 = vsel %vm3648, %v2819, 0.0
  %v3908 = vsel %vm3649, %v2820, 0.0
  %v3909 = vsel %vm3650, %v2821, 0.0
  %v3910 = vsel %vm3651, %v2822, 0.0
  %v3911 = vsel %vm3652, %v2823, 0.0
  %v3912 = vsel %vm3653, %v2824, 0.0
  %v3913 = vadd.f32 %v3849, %v3881
  %v3914 = vadd.f32 %v3850, %v3882
  %v3915 = vadd.f32 %v3851, %v3883
  %v3916 = vadd.f32 %v3852, %v3884
  %v3917 = vadd.f32 %v3853, %v3885
  %v3918 = vadd.f32 %v3854, %v3886
  %v3919 = vadd.f32 %v3855, %v3887
  %v3920 = vadd.f32 %v3856, %v3888
  %v3921 = vadd.f32 %v3857, %v3889
  %v3922 = vadd.f32 %v3858, %v3890
  %v3923 = vadd.f32 %v3859, %v3891
  %v3924 = vadd.f32 %v3860, %v3892
  %v3925 = vadd.f32 %v3861, %v3893
  %v3926 = vadd.f32 %v3862, %v3894
  %v3927 = vadd.f32 %v3863, %v3895
  %v3928 = vadd.f32 %v3864, %v3896
  %v3929 = vadd.f32 %v3865, %v3897
  %v3930 = vadd.f32 %v3866, %v3898
  %v3931 = vadd.f32 %v3867, %v3899
  %v3932 = vadd.f32 %v3868, %v3900
  %v3933 = vadd.f32 %v3869, %v3901
  %v3934 = vadd.f32 %v3870, %v3902
  %v3935 = vadd.f32 %v3871, %v3903
  %v3936 = vadd.f32 %v3872, %v3904
  %v3937 = vadd.f32 %v3873, %v3905
  %v3938 = vadd.f32 %v3874, %v3906
  %v3939 = vadd.f32 %v3875, %v3907
  %v3940 = vadd.f32 %v3876, %v3908
  %v3941 = vadd.f32 %v3877, %v3909
  %v3942 = vadd.f32 %v3878, %v3910
  %v3943 = vadd.f32 %v3879, %v3911
  %v3944 = vadd.f32 %v3880, %v3912
  %v3945 = vpack.c.bf16 %v3914, %v3913
  %v3946 = vpack.c.bf16 %v3916, %v3915
  %v3947 = vpack.c.bf16 %v3918, %v3917
  %v3948 = vpack.c.bf16 %v3920, %v3919
  %v3949 = vpack.c.bf16 %v3922, %v3921
  %v3950 = vpack.c.bf16 %v3924, %v3923
  %v3951 = vpack.c.bf16 %v3926, %v3925
  %v3952 = vpack.c.bf16 %v3928, %v3927
  %v3953 = vpack.c.bf16 %v3930, %v3929
  %v3954 = vpack.c.bf16 %v3932, %v3931
  %v3955 = vpack.c.bf16 %v3934, %v3933
  %v3956 = vpack.c.bf16 %v3936, %v3935
  %v3957 = vpack.c.bf16 %v3938, %v3937
  %v3958 = vpack.c.bf16 %v3940, %v3939
  %v3959 = vpack.c.bf16 %v3942, %v3941
  %v3960 = vpack.c.bf16 %v3944, %v3943
  %3961 = vmatprep.subr.bf16.mxu0 0
  %3962 = vmatpush1.bf16.msra.mxu0 %v3945
  %3963 = vmatprep.subr.bf16.mxu0 0
  %3964 = vmatpush1.bf16.msra.mxu0 %v3946
  %3965 = vmatprep.subr.bf16.mxu0 0
  %3966 = vmatpush1.bf16.msra.mxu0 %v3947
  %3967 = vmatprep.subr.bf16.mxu0 0
  %3968 = vmatpush1.bf16.msra.mxu0 %v3948
  %3969 = vmatprep.subr.bf16.mxu0 0
  %3970 = vmatpush1.bf16.msra.mxu0 %v3949
  %3971 = vmatprep.subr.bf16.mxu0 0
  %3972 = vmatpush1.bf16.msra.mxu0 %v3950
  %3973 = vmatprep.subr.bf16.mxu0 0
  %3974 = vmatpush1.bf16.msra.mxu0 %v3951
  %3975 = vmatprep.subr.bf16.mxu0 0
  %3976 = vmatpush1.bf16.msra.mxu0 %v3952
  %3977 = vmatprep.subr.bf16.mxu0 0
  %3978 = vmatpush1.bf16.msra.mxu0 %v3953
  %3979 = vmatprep.subr.bf16.mxu0 0
  %3980 = vmatpush1.bf16.msra.mxu0 %v3954
  %3981 = vmatprep.subr.bf16.mxu0 0
  %3982 = vmatpush1.bf16.msra.mxu0 %v3955
  %3983 = vmatprep.subr.bf16.mxu0 0
  %3984 = vmatpush1.bf16.msra.mxu0 %v3956
  %3985 = vmatprep.subr.bf16.mxu0 0
  %3986 = vmatpush1.bf16.msra.mxu0 %v3957
  %3987 = vmatprep.subr.bf16.mxu0 0
  %3988 = vmatpush1.bf16.msra.mxu0 %v3958
  %3989 = vmatprep.subr.bf16.mxu0 0
  %3990 = vmatpush1.bf16.msra.mxu0 %v3959
  %3991 = vmatprep.subr.bf16.mxu0 0
  %3992 = vmatpush1.bf16.msra.mxu0 %v3960
  %3993 = vmatprep.mubr.bf16.mxu0 %v3174
  %3994 = vmatmul.mubr.bf16.gmra.mrb[0].mxu0 %v3173
  %v3995 = vpop.f32.mrb[0].mxu0
  %v3996 = vadd.f32 0.0, %v3995
  %v3997 = vpop.f32.mrb[0].mxu0
  %v3998 = vpop.f32.mrb[0].mxu0
  %v3999 = vadd.f32 0.0, %v3998
  %v4000 = vpop.f32.mrb[0].mxu0
  %4001 = vmatprep.mubr.bf16.mxu0 %v3176
  %4002 = vmatmul.mubr.bf16.gmra.mrb[0].mxu0 %v3175
  %v4003 = vpop.f32.mrb[0].mxu0
  %v4004 = vadd.f32 0.0, %v4003
  %v4005 = vpop.f32.mrb[0].mxu0
  %v4006 = vpop.f32.mrb[0].mxu0
  %v4007 = vadd.f32 0.0, %v4006
  %v4008 = vpop.f32.mrb[0].mxu0
  %4009 = vdwg.mxu0
  %v4010 = vpack.c.bf16 %v3999, %v3996
  %v4011 = vpack.c.bf16 %v4007, %v4004
  %vm4012 = vcmp.eq.s32.totalorder %v2953, 5
  %vm4013 = vcmp.eq.s32.totalorder %v2954, 5
  %vm4014 = vcmp.eq.s32.totalorder %v2955, 5
  %vm4015 = vcmp.eq.s32.totalorder %v2956, 5
  %vm4016 = vcmp.eq.s32.totalorder %v2957, 5
  %vm4017 = vcmp.eq.s32.totalorder %v2958, 5
  %vm4018 = vcmp.eq.s32.totalorder %v2959, 5
  %vm4019 = vcmp.eq.s32.totalorder %v2960, 5
  %vm4020 = vcmp.eq.s32.totalorder %v2961, 5
  %vm4021 = vcmp.eq.s32.totalorder %v2962, 5
  %vm4022 = vcmp.eq.s32.totalorder %v2963, 5
  %vm4023 = vcmp.eq.s32.totalorder %v2964, 5
  %vm4024 = vcmp.eq.s32.totalorder %v2965, 5
  %vm4025 = vcmp.eq.s32.totalorder %v2966, 5
  %vm4026 = vcmp.eq.s32.totalorder %v2967, 5
  %vm4027 = vcmp.eq.s32.totalorder %v2968, 5
  %vm4028 = vcmp.eq.s32.totalorder %v2969, 5
  %vm4029 = vcmp.eq.s32.totalorder %v2970, 5
  %vm4030 = vcmp.eq.s32.totalorder %v2971, 5
  %vm4031 = vcmp.eq.s32.totalorder %v2972, 5
  %vm4032 = vcmp.eq.s32.totalorder %v2973, 5
  %vm4033 = vcmp.eq.s32.totalorder %v2974, 5
  %vm4034 = vcmp.eq.s32.totalorder %v2975, 5
  %vm4035 = vcmp.eq.s32.totalorder %v2976, 5
  %vm4036 = vcmp.eq.s32.totalorder %v2977, 5
  %vm4037 = vcmp.eq.s32.totalorder %v2978, 5
  %vm4038 = vcmp.eq.s32.totalorder %v2979, 5
  %vm4039 = vcmp.eq.s32.totalorder %v2980, 5
  %vm4040 = vcmp.eq.s32.totalorder %v2981, 5
  %vm4041 = vcmp.eq.s32.totalorder %v2982, 5
  %vm4042 = vcmp.eq.s32.totalorder %v2983, 5
  %vm4043 = vcmp.eq.s32.totalorder %v2984, 5
  %v4044 = vsel %vm4012, %v2825, 0.0
  %v4045 = vsel %vm4013, %v2826, 0.0
  %v4046 = vsel %vm4014, %v2827, 0.0
  %v4047 = vsel %vm4015, %v2828, 0.0
  %v4048 = vsel %vm4016, %v2829, 0.0
  %v4049 = vsel %vm4017, %v2830, 0.0
  %v4050 = vsel %vm4018, %v2831, 0.0
  %v4051 = vsel %vm4019, %v2832, 0.0
  %v4052 = vsel %vm4020, %v2833, 0.0
  %v4053 = vsel %vm4021, %v2834, 0.0
  %v4054 = vsel %vm4022, %v2835, 0.0
  %v4055 = vsel %vm4023, %v2836, 0.0
  %v4056 = vsel %vm4024, %v2837, 0.0
  %v4057 = vsel %vm4025, %v2838, 0.0
  %v4058 = vsel %vm4026, %v2839, 0.0
  %v4059 = vsel %vm4027, %v2840, 0.0
  %v4060 = vsel %vm4028, %v2841, 0.0
  %v4061 = vsel %vm4029, %v2842, 0.0
  %v4062 = vsel %vm4030, %v2843, 0.0
  %v4063 = vsel %vm4031, %v2844, 0.0
  %v4064 = vsel %vm4032, %v2845, 0.0
  %v4065 = vsel %vm4033, %v2846, 0.0
  %v4066 = vsel %vm4034, %v2847, 0.0
  %v4067 = vsel %vm4035, %v2848, 0.0
  %v4068 = vsel %vm4036, %v2849, 0.0
  %v4069 = vsel %vm4037, %v2850, 0.0
  %v4070 = vsel %vm4038, %v2851, 0.0
  %v4071 = vsel %vm4039, %v2852, 0.0
  %v4072 = vsel %vm4040, %v2853, 0.0
  %v4073 = vsel %vm4041, %v2854, 0.0
  %v4074 = vsel %vm4042, %v2855, 0.0
  %v4075 = vsel %vm4043, %v2856, 0.0
  %v4076 = vsel %vm3817, %v2793, 0.0
  %v4077 = vsel %vm3818, %v2794, 0.0
  %v4078 = vsel %vm3819, %v2795, 0.0
  %v4079 = vsel %vm3820, %v2796, 0.0
  %v4080 = vsel %vm3821, %v2797, 0.0
  %v4081 = vsel %vm3822, %v2798, 0.0
  %v4082 = vsel %vm3823, %v2799, 0.0
  %v4083 = vsel %vm3824, %v2800, 0.0
  %v4084 = vsel %vm3825, %v2801, 0.0
  %v4085 = vsel %vm3826, %v2802, 0.0
  %v4086 = vsel %vm3827, %v2803, 0.0
  %v4087 = vsel %vm3828, %v2804, 0.0
  %v4088 = vsel %vm3829, %v2805, 0.0
  %v4089 = vsel %vm3830, %v2806, 0.0
  %v4090 = vsel %vm3831, %v2807, 0.0
  %v4091 = vsel %vm3832, %v2808, 0.0
  %v4092 = vsel %vm3833, %v2809, 0.0
  %v4093 = vsel %vm3834, %v2810, 0.0
  %v4094 = vsel %vm3835, %v2811, 0.0
  %v4095 = vsel %vm3836, %v2812, 0.0
  %v4096 = vsel %vm3837, %v2813, 0.0
  %v4097 = vsel %vm3838, %v2814, 0.0
  %v4098 = vsel %vm3839, %v2815, 0.0
  %v4099 = vsel %vm3840, %v2816, 0.0
  %v4100 = vsel %vm3841, %v2817, 0.0
  %v4101 = vsel %vm3842, %v2818, 0.0
  %v4102 = vsel %vm3843, %v2819, 0.0
  %v4103 = vsel %vm3844, %v2820, 0.0
  %v4104 = vsel %vm3845, %v2821, 0.0
  %v4105 = vsel %vm3846, %v2822, 0.0
  %v4106 = vsel %vm3847, %v2823, 0.0
  %v4107 = vsel %vm3848, %v2824, 0.0
  %v4108 = vadd.f32 %v4044, %v4076
  %v4109 = vadd.f32 %v4045, %v4077
  %v4110 = vadd.f32 %v4046, %v4078
  %v4111 = vadd.f32 %v4047, %v4079
  %v4112 = vadd.f32 %v4048, %v4080
  %v4113 = vadd.f32 %v4049, %v4081
  %v4114 = vadd.f32 %v4050, %v4082
  %v4115 = vadd.f32 %v4051, %v4083
  %v4116 = vadd.f32 %v4052, %v4084
  %v4117 = vadd.f32 %v4053, %v4085
  %v4118 = vadd.f32 %v4054, %v4086
  %v4119 = vadd.f32 %v4055, %v4087
  %v4120 = vadd.f32 %v4056, %v4088
  %v4121 = vadd.f32 %v4057, %v4089
  %v4122 = vadd.f32 %v4058, %v4090
  %v4123 = vadd.f32 %v4059, %v4091
  %v4124 = vadd.f32 %v4060, %v4092
  %v4125 = vadd.f32 %v4061, %v4093
  %v4126 = vadd.f32 %v4062, %v4094
  %v4127 = vadd.f32 %v4063, %v4095
  %v4128 = vadd.f32 %v4064, %v4096
  %v4129 = vadd.f32 %v4065, %v4097
  %v4130 = vadd.f32 %v4066, %v4098
  %v4131 = vadd.f32 %v4067, %v4099
  %v4132 = vadd.f32 %v4068, %v4100
  %v4133 = vadd.f32 %v4069, %v4101
  %v4134 = vadd.f32 %v4070, %v4102
  %v4135 = vadd.f32 %v4071, %v4103
  %v4136 = vadd.f32 %v4072, %v4104
  %v4137 = vadd.f32 %v4073, %v4105
  %v4138 = vadd.f32 %v4074, %v4106
  %v4139 = vadd.f32 %v4075, %v4107
  %v4140 = vpack.c.bf16 %v4109, %v4108
  %v4141 = vpack.c.bf16 %v4111, %v4110
  %v4142 = vpack.c.bf16 %v4113, %v4112
  %v4143 = vpack.c.bf16 %v4115, %v4114
  %v4144 = vpack.c.bf16 %v4117, %v4116
  %v4145 = vpack.c.bf16 %v4119, %v4118
  %v4146 = vpack.c.bf16 %v4121, %v4120
  %v4147 = vpack.c.bf16 %v4123, %v4122
  %v4148 = vpack.c.bf16 %v4125, %v4124
  %v4149 = vpack.c.bf16 %v4127, %v4126
  %v4150 = vpack.c.bf16 %v4129, %v4128
  %v4151 = vpack.c.bf16 %v4131, %v4130
  %v4152 = vpack.c.bf16 %v4133, %v4132
  %v4153 = vpack.c.bf16 %v4135, %v4134
  %v4154 = vpack.c.bf16 %v4137, %v4136
  %v4155 = vpack.c.bf16 %v4139, %v4138
  %4156 = vmatprep.subr.bf16.mxu0 0
  %4157 = vmatpush1.bf16.msra.mxu0 %v4140
  %4158 = vmatprep.subr.bf16.mxu0 0
  %4159 = vmatpush1.bf16.msra.mxu0 %v4141
  %4160 = vmatprep.subr.bf16.mxu0 0
  %4161 = vmatpush1.bf16.msra.mxu0 %v4142
  %4162 = vmatprep.subr.bf16.mxu0 0
  %4163 = vmatpush1.bf16.msra.mxu0 %v4143
  %4164 = vmatprep.subr.bf16.mxu0 0
  %4165 = vmatpush1.bf16.msra.mxu0 %v4144
  %4166 = vmatprep.subr.bf16.mxu0 0
  %4167 = vmatpush1.bf16.msra.mxu0 %v4145
  %4168 = vmatprep.subr.bf16.mxu0 0
  %4169 = vmatpush1.bf16.msra.mxu0 %v4146
  %4170 = vmatprep.subr.bf16.mxu0 0
  %4171 = vmatpush1.bf16.msra.mxu0 %v4147
  %4172 = vmatprep.subr.bf16.mxu0 0
  %4173 = vmatpush1.bf16.msra.mxu0 %v4148
  %4174 = vmatprep.subr.bf16.mxu0 0
  %4175 = vmatpush1.bf16.msra.mxu0 %v4149
  %4176 = vmatprep.subr.bf16.mxu0 0
  %4177 = vmatpush1.bf16.msra.mxu0 %v4150
  %4178 = vmatprep.subr.bf16.mxu0 0
  %4179 = vmatpush1.bf16.msra.mxu0 %v4151
  %4180 = vmatprep.subr.bf16.mxu0 0
  %4181 = vmatpush1.bf16.msra.mxu0 %v4152
  %4182 = vmatprep.subr.bf16.mxu0 0
  %4183 = vmatpush1.bf16.msra.mxu0 %v4153
  %4184 = vmatprep.subr.bf16.mxu0 0
  %4185 = vmatpush1.bf16.msra.mxu0 %v4154
  %4186 = vmatprep.subr.bf16.mxu0 0
  %4187 = vmatpush1.bf16.msra.mxu0 %v4155
  %4188 = vmatprep.mubr.bf16.mxu0 %v3174
  %4189 = vmatmul.mubr.bf16.gmra.mrb[0].mxu0 %v3173
  %v4190 = vpop.f32.mrb[0].mxu0
  %v4191 = vadd.f32 0.0, %v4190
  %v4192 = vpop.f32.mrb[0].mxu0
  %v4193 = vpop.f32.mrb[0].mxu0
  %v4194 = vadd.f32 0.0, %v4193
  %v4195 = vpop.f32.mrb[0].mxu0
  %4196 = vmatprep.mubr.bf16.mxu0 %v3176
  %4197 = vmatmul.mubr.bf16.gmra.mrb[0].mxu0 %v3175
  %v4198 = vpop.f32.mrb[0].mxu0
  %v4199 = vadd.f32 0.0, %v4198
  %v4200 = vpop.f32.mrb[0].mxu0
  %v4201 = vpop.f32.mrb[0].mxu0
  %v4202 = vadd.f32 0.0, %v4201
  %v4203 = vpop.f32.mrb[0].mxu0
  %4204 = vdwg.mxu0
  %v4205 = vpack.c.bf16 %v4194, %v4191
  %v4206 = vpack.c.bf16 %v4202, %v4199
  %vm4207 = vcmp.eq.s32.totalorder %v2953, 6
  %vm4208 = vcmp.eq.s32.totalorder %v2954, 6
  %vm4209 = vcmp.eq.s32.totalorder %v2955, 6
  %vm4210 = vcmp.eq.s32.totalorder %v2956, 6
  %vm4211 = vcmp.eq.s32.totalorder %v2957, 6
  %vm4212 = vcmp.eq.s32.totalorder %v2958, 6
  %vm4213 = vcmp.eq.s32.totalorder %v2959, 6
  %vm4214 = vcmp.eq.s32.totalorder %v2960, 6
  %vm4215 = vcmp.eq.s32.totalorder %v2961, 6
  %vm4216 = vcmp.eq.s32.totalorder %v2962, 6
  %vm4217 = vcmp.eq.s32.totalorder %v2963, 6
  %vm4218 = vcmp.eq.s32.totalorder %v2964, 6
  %vm4219 = vcmp.eq.s32.totalorder %v2965, 6
  %vm4220 = vcmp.eq.s32.totalorder %v2966, 6
  %vm4221 = vcmp.eq.s32.totalorder %v2967, 6
  %vm4222 = vcmp.eq.s32.totalorder %v2968, 6
  %vm4223 = vcmp.eq.s32.totalorder %v2969, 6
  %vm4224 = vcmp.eq.s32.totalorder %v2970, 6
  %vm4225 = vcmp.eq.s32.totalorder %v2971, 6
  %vm4226 = vcmp.eq.s32.totalorder %v2972, 6
  %vm4227 = vcmp.eq.s32.totalorder %v2973, 6
  %vm4228 = vcmp.eq.s32.totalorder %v2974, 6
  %vm4229 = vcmp.eq.s32.totalorder %v2975, 6
  %vm4230 = vcmp.eq.s32.totalorder %v2976, 6
  %vm4231 = vcmp.eq.s32.totalorder %v2977, 6
  %vm4232 = vcmp.eq.s32.totalorder %v2978, 6
  %vm4233 = vcmp.eq.s32.totalorder %v2979, 6
  %vm4234 = vcmp.eq.s32.totalorder %v2980, 6
  %vm4235 = vcmp.eq.s32.totalorder %v2981, 6
  %vm4236 = vcmp.eq.s32.totalorder %v2982, 6
  %vm4237 = vcmp.eq.s32.totalorder %v2983, 6
  %vm4238 = vcmp.eq.s32.totalorder %v2984, 6
  %v4239 = vsel %vm4207, %v2825, 0.0
  %v4240 = vsel %vm4208, %v2826, 0.0
  %v4241 = vsel %vm4209, %v2827, 0.0
  %v4242 = vsel %vm4210, %v2828, 0.0
  %v4243 = vsel %vm4211, %v2829, 0.0
  %v4244 = vsel %vm4212, %v2830, 0.0
  %v4245 = vsel %vm4213, %v2831, 0.0
  %v4246 = vsel %vm4214, %v2832, 0.0
  %v4247 = vsel %vm4215, %v2833, 0.0
  %v4248 = vsel %vm4216, %v2834, 0.0
  %v4249 = vsel %vm4217, %v2835, 0.0
  %v4250 = vsel %vm4218, %v2836, 0.0
  %v4251 = vsel %vm4219, %v2837, 0.0
  %v4252 = vsel %vm4220, %v2838, 0.0
  %v4253 = vsel %vm4221, %v2839, 0.0
  %v4254 = vsel %vm4222, %v2840, 0.0
  %v4255 = vsel %vm4223, %v2841, 0.0
  %v4256 = vsel %vm4224, %v2842, 0.0
  %v4257 = vsel %vm4225, %v2843, 0.0
  %v4258 = vsel %vm4226, %v2844, 0.0
  %v4259 = vsel %vm4227, %v2845, 0.0
  %v4260 = vsel %vm4228, %v2846, 0.0
  %v4261 = vsel %vm4229, %v2847, 0.0
  %v4262 = vsel %vm4230, %v2848, 0.0
  %v4263 = vsel %vm4231, %v2849, 0.0
  %v4264 = vsel %vm4232, %v2850, 0.0
  %v4265 = vsel %vm4233, %v2851, 0.0
  %v4266 = vsel %vm4234, %v2852, 0.0
  %v4267 = vsel %vm4235, %v2853, 0.0
  %v4268 = vsel %vm4236, %v2854, 0.0
  %v4269 = vsel %vm4237, %v2855, 0.0
  %v4270 = vsel %vm4238, %v2856, 0.0
  %v4271 = vsel %vm4012, %v2793, 0.0
  %v4272 = vsel %vm4013, %v2794, 0.0
  %v4273 = vsel %vm4014, %v2795, 0.0
  %v4274 = vsel %vm4015, %v2796, 0.0
  %v4275 = vsel %vm4016, %v2797, 0.0
  %v4276 = vsel %vm4017, %v2798, 0.0
  %v4277 = vsel %vm4018, %v2799, 0.0
  %v4278 = vsel %vm4019, %v2800, 0.0
  %v4279 = vsel %vm4020, %v2801, 0.0
  %v4280 = vsel %vm4021, %v2802, 0.0
  %v4281 = vsel %vm4022, %v2803, 0.0
  %v4282 = vsel %vm4023, %v2804, 0.0
  %v4283 = vsel %vm4024, %v2805, 0.0
  %v4284 = vsel %vm4025, %v2806, 0.0
  %v4285 = vsel %vm4026, %v2807, 0.0
  %v4286 = vsel %vm4027, %v2808, 0.0
  %v4287 = vsel %vm4028, %v2809, 0.0
  %v4288 = vsel %vm4029, %v2810, 0.0
  %v4289 = vsel %vm4030, %v2811, 0.0
  %v4290 = vsel %vm4031, %v2812, 0.0
  %v4291 = vsel %vm4032, %v2813, 0.0
  %v4292 = vsel %vm4033, %v2814, 0.0
  %v4293 = vsel %vm4034, %v2815, 0.0
  %v4294 = vsel %vm4035, %v2816, 0.0
  %v4295 = vsel %vm4036, %v2817, 0.0
  %v4296 = vsel %vm4037, %v2818, 0.0
  %v4297 = vsel %vm4038, %v2819, 0.0
  %v4298 = vsel %vm4039, %v2820, 0.0
  %v4299 = vsel %vm4040, %v2821, 0.0
  %v4300 = vsel %vm4041, %v2822, 0.0
  %v4301 = vsel %vm4042, %v2823, 0.0
  %v4302 = vsel %vm4043, %v2824, 0.0
  %v4303 = vadd.f32 %v4239, %v4271
  %v4304 = vadd.f32 %v4240, %v4272
  %v4305 = vadd.f32 %v4241, %v4273
  %v4306 = vadd.f32 %v4242, %v4274
  %v4307 = vadd.f32 %v4243, %v4275
  %v4308 = vadd.f32 %v4244, %v4276
  %v4309 = vadd.f32 %v4245, %v4277
  %v4310 = vadd.f32 %v4246, %v4278
  %v4311 = vadd.f32 %v4247, %v4279
  %v4312 = vadd.f32 %v4248, %v4280
  %v4313 = vadd.f32 %v4249, %v4281
  %v4314 = vadd.f32 %v4250, %v4282
  %v4315 = vadd.f32 %v4251, %v4283
  %v4316 = vadd.f32 %v4252, %v4284
  %v4317 = vadd.f32 %v4253, %v4285
  %v4318 = vadd.f32 %v4254, %v4286
  %v4319 = vadd.f32 %v4255, %v4287
  %v4320 = vadd.f32 %v4256, %v4288
  %v4321 = vadd.f32 %v4257, %v4289
  %v4322 = vadd.f32 %v4258, %v4290
  %v4323 = vadd.f32 %v4259, %v4291
  %v4324 = vadd.f32 %v4260, %v4292
  %v4325 = vadd.f32 %v4261, %v4293
  %v4326 = vadd.f32 %v4262, %v4294
  %v4327 = vadd.f32 %v4263, %v4295
  %v4328 = vadd.f32 %v4264, %v4296
  %v4329 = vadd.f32 %v4265, %v4297
  %v4330 = vadd.f32 %v4266, %v4298
  %v4331 = vadd.f32 %v4267, %v4299
  %v4332 = vadd.f32 %v4268, %v4300
  %v4333 = vadd.f32 %v4269, %v4301
  %v4334 = vadd.f32 %v4270, %v4302
  %v4335 = vpack.c.bf16 %v4304, %v4303
  %v4336 = vpack.c.bf16 %v4306, %v4305
  %v4337 = vpack.c.bf16 %v4308, %v4307
  %v4338 = vpack.c.bf16 %v4310, %v4309
  %v4339 = vpack.c.bf16 %v4312, %v4311
  %v4340 = vpack.c.bf16 %v4314, %v4313
  %v4341 = vpack.c.bf16 %v4316, %v4315
  %v4342 = vpack.c.bf16 %v4318, %v4317
  %v4343 = vpack.c.bf16 %v4320, %v4319
  %v4344 = vpack.c.bf16 %v4322, %v4321
  %v4345 = vpack.c.bf16 %v4324, %v4323
  %v4346 = vpack.c.bf16 %v4326, %v4325
  %v4347 = vpack.c.bf16 %v4328, %v4327
  %v4348 = vpack.c.bf16 %v4330, %v4329
  %v4349 = vpack.c.bf16 %v4332, %v4331
  %v4350 = vpack.c.bf16 %v4334, %v4333
  %4351 = vmatprep.subr.bf16.mxu0 0
  %4352 = vmatpush1.bf16.msra.mxu0 %v4335
  %4353 = vmatprep.subr.bf16.mxu0 0
  %4354 = vmatpush1.bf16.msra.mxu0 %v4336
  %4355 = vmatprep.subr.bf16.mxu0 0
  %4356 = vmatpush1.bf16.msra.mxu0 %v4337
  %4357 = vmatprep.subr.bf16.mxu0 0
  %4358 = vmatpush1.bf16.msra.mxu0 %v4338
  %4359 = vmatprep.subr.bf16.mxu0 0
  %4360 = vmatpush1.bf16.msra.mxu0 %v4339
  %4361 = vmatprep.subr.bf16.mxu0 0
  %4362 = vmatpush1.bf16.msra.mxu0 %v4340
  %4363 = vmatprep.subr.bf16.mxu0 0
  %4364 = vmatpush1.bf16.msra.mxu0 %v4341
  %4365 = vmatprep.subr.bf16.mxu0 0
  %4366 = vmatpush1.bf16.msra.mxu0 %v4342
  %4367 = vmatprep.subr.bf16.mxu0 0
  %4368 = vmatpush1.bf16.msra.mxu0 %v4343
  %4369 = vmatprep.subr.bf16.mxu0 0
  %4370 = vmatpush1.bf16.msra.mxu0 %v4344
  %4371 = vmatprep.subr.bf16.mxu0 0
  %4372 = vmatpush1.bf16.msra.mxu0 %v4345
  %4373 = vmatprep.subr.bf16.mxu0 0
  %4374 = vmatpush1.bf16.msra.mxu0 %v4346
  %4375 = vmatprep.subr.bf16.mxu0 0
  %4376 = vmatpush1.bf16.msra.mxu0 %v4347
  %4377 = vmatprep.subr.bf16.mxu0 0
  %4378 = vmatpush1.bf16.msra.mxu0 %v4348
  %4379 = vmatprep.subr.bf16.mxu0 0
  %4380 = vmatpush1.bf16.msra.mxu0 %v4349
  %4381 = vmatprep.subr.bf16.mxu0 0
  %4382 = vmatpush1.bf16.msra.mxu0 %v4350
  %4383 = vmatprep.mubr.bf16.mxu0 %v3174
  %4384 = vmatmul.mubr.bf16.gmra.mrb[0].mxu0 %v3173
  %v4385 = vpop.f32.mrb[0].mxu0
  %v4386 = vadd.f32 0.0, %v4385
  %v4387 = vpop.f32.mrb[0].mxu0
  %v4388 = vpop.f32.mrb[0].mxu0
  %v4389 = vadd.f32 0.0, %v4388
  %v4390 = vpop.f32.mrb[0].mxu0
  %4391 = vmatprep.mubr.bf16.mxu0 %v3176
  %4392 = vmatmul.mubr.bf16.gmra.mrb[0].mxu0 %v3175
  %v4393 = vpop.f32.mrb[0].mxu0
  %v4394 = vadd.f32 0.0, %v4393
  %v4395 = vpop.f32.mrb[0].mxu0
  %v4396 = vpop.f32.mrb[0].mxu0
  %v4397 = vadd.f32 0.0, %v4396
  %v4398 = vpop.f32.mrb[0].mxu0
  %4399 = vdwg.mxu0
  %v4400 = vpack.c.bf16 %v4389, %v4386
  %v4401 = vpack.c.bf16 %v4397, %v4394
  %vm4402 = vcmp.eq.s32.totalorder %v2953, 7
  %vm4403 = vcmp.eq.s32.totalorder %v2954, 7
  %vm4404 = vcmp.eq.s32.totalorder %v2955, 7
  %vm4405 = vcmp.eq.s32.totalorder %v2956, 7
  %vm4406 = vcmp.eq.s32.totalorder %v2957, 7
  %vm4407 = vcmp.eq.s32.totalorder %v2958, 7
  %vm4408 = vcmp.eq.s32.totalorder %v2959, 7
  %vm4409 = vcmp.eq.s32.totalorder %v2960, 7
  %vm4410 = vcmp.eq.s32.totalorder %v2961, 7
  %vm4411 = vcmp.eq.s32.totalorder %v2962, 7
  %vm4412 = vcmp.eq.s32.totalorder %v2963, 7
  %vm4413 = vcmp.eq.s32.totalorder %v2964, 7
  %vm4414 = vcmp.eq.s32.totalorder %v2965, 7
  %vm4415 = vcmp.eq.s32.totalorder %v2966, 7
  %vm4416 = vcmp.eq.s32.totalorder %v2967, 7
  %vm4417 = vcmp.eq.s32.totalorder %v2968, 7
  %vm4418 = vcmp.eq.s32.totalorder %v2969, 7
  %vm4419 = vcmp.eq.s32.totalorder %v2970, 7
  %vm4420 = vcmp.eq.s32.totalorder %v2971, 7
  %vm4421 = vcmp.eq.s32.totalorder %v2972, 7
  %vm4422 = vcmp.eq.s32.totalorder %v2973, 7
  %vm4423 = vcmp.eq.s32.totalorder %v2974, 7
  %vm4424 = vcmp.eq.s32.totalorder %v2975, 7
  %vm4425 = vcmp.eq.s32.totalorder %v2976, 7
  %vm4426 = vcmp.eq.s32.totalorder %v2977, 7
  %vm4427 = vcmp.eq.s32.totalorder %v2978, 7
  %vm4428 = vcmp.eq.s32.totalorder %v2979, 7
  %vm4429 = vcmp.eq.s32.totalorder %v2980, 7
  %vm4430 = vcmp.eq.s32.totalorder %v2981, 7
  %vm4431 = vcmp.eq.s32.totalorder %v2982, 7
  %vm4432 = vcmp.eq.s32.totalorder %v2983, 7
  %vm4433 = vcmp.eq.s32.totalorder %v2984, 7
  %v4434 = vsel %vm4402, %v2825, 0.0
  %v4435 = vsel %vm4403, %v2826, 0.0
  %v4436 = vsel %vm4404, %v2827, 0.0
  %v4437 = vsel %vm4405, %v2828, 0.0
  %v4438 = vsel %vm4406, %v2829, 0.0
  %v4439 = vsel %vm4407, %v2830, 0.0
  %v4440 = vsel %vm4408, %v2831, 0.0
  %v4441 = vsel %vm4409, %v2832, 0.0
  %v4442 = vsel %vm4410, %v2833, 0.0
  %v4443 = vsel %vm4411, %v2834, 0.0
  %v4444 = vsel %vm4412, %v2835, 0.0
  %v4445 = vsel %vm4413, %v2836, 0.0
  %v4446 = vsel %vm4414, %v2837, 0.0
  %v4447 = vsel %vm4415, %v2838, 0.0
  %v4448 = vsel %vm4416, %v2839, 0.0
  %v4449 = vsel %vm4417, %v2840, 0.0
  %v4450 = vsel %vm4418, %v2841, 0.0
  %v4451 = vsel %vm4419, %v2842, 0.0
  %v4452 = vsel %vm4420, %v2843, 0.0
  %v4453 = vsel %vm4421, %v2844, 0.0
  %v4454 = vsel %vm4422, %v2845, 0.0
  %v4455 = vsel %vm4423, %v2846, 0.0
  %v4456 = vsel %vm4424, %v2847, 0.0
  %v4457 = vsel %vm4425, %v2848, 0.0
  %v4458 = vsel %vm4426, %v2849, 0.0
  %v4459 = vsel %vm4427, %v2850, 0.0
  %v4460 = vsel %vm4428, %v2851, 0.0
  %v4461 = vsel %vm4429, %v2852, 0.0
  %v4462 = vsel %vm4430, %v2853, 0.0
  %v4463 = vsel %vm4431, %v2854, 0.0
  %v4464 = vsel %vm4432, %v2855, 0.0
  %v4465 = vsel %vm4433, %v2856, 0.0
  %v4466 = vsel %vm4207, %v2793, 0.0
  %v4467 = vsel %vm4208, %v2794, 0.0
  %v4468 = vsel %vm4209, %v2795, 0.0
  %v4469 = vsel %vm4210, %v2796, 0.0
  %v4470 = vsel %vm4211, %v2797, 0.0
  %v4471 = vsel %vm4212, %v2798, 0.0
  %v4472 = vsel %vm4213, %v2799, 0.0
  %v4473 = vsel %vm4214, %v2800, 0.0
  %v4474 = vsel %vm4215, %v2801, 0.0
  %v4475 = vsel %vm4216, %v2802, 0.0
  %v4476 = vsel %vm4217, %v2803, 0.0
  %v4477 = vsel %vm4218, %v2804, 0.0
  %v4478 = vsel %vm4219, %v2805, 0.0
  %v4479 = vsel %vm4220, %v2806, 0.0
  %v4480 = vsel %vm4221, %v2807, 0.0
  %v4481 = vsel %vm4222, %v2808, 0.0
  %v4482 = vsel %vm4223, %v2809, 0.0
  %v4483 = vsel %vm4224, %v2810, 0.0
  %v4484 = vsel %vm4225, %v2811, 0.0
  %v4485 = vsel %vm4226, %v2812, 0.0
  %v4486 = vsel %vm4227, %v2813, 0.0
  %v4487 = vsel %vm4228, %v2814, 0.0
  %v4488 = vsel %vm4229, %v2815, 0.0
  %v4489 = vsel %vm4230, %v2816, 0.0
  %v4490 = vsel %vm4231, %v2817, 0.0
  %v4491 = vsel %vm4232, %v2818, 0.0
  %v4492 = vsel %vm4233, %v2819, 0.0
  %v4493 = vsel %vm4234, %v2820, 0.0
  %v4494 = vsel %vm4235, %v2821, 0.0
  %v4495 = vsel %vm4236, %v2822, 0.0
  %v4496 = vsel %vm4237, %v2823, 0.0
  %v4497 = vsel %vm4238, %v2824, 0.0
  %v4498 = vadd.f32 %v4434, %v4466
  %v4499 = vadd.f32 %v4435, %v4467
  %v4500 = vadd.f32 %v4436, %v4468
  %v4501 = vadd.f32 %v4437, %v4469
  %v4502 = vadd.f32 %v4438, %v4470
  %v4503 = vadd.f32 %v4439, %v4471
  %v4504 = vadd.f32 %v4440, %v4472
  %v4505 = vadd.f32 %v4441, %v4473
  %v4506 = vadd.f32 %v4442, %v4474
  %v4507 = vadd.f32 %v4443, %v4475
  %v4508 = vadd.f32 %v4444, %v4476
  %v4509 = vadd.f32 %v4445, %v4477
  %v4510 = vadd.f32 %v4446, %v4478
  %v4511 = vadd.f32 %v4447, %v4479
  %v4512 = vadd.f32 %v4448, %v4480
  %v4513 = vadd.f32 %v4449, %v4481
  %v4514 = vadd.f32 %v4450, %v4482
  %v4515 = vadd.f32 %v4451, %v4483
  %v4516 = vadd.f32 %v4452, %v4484
  %v4517 = vadd.f32 %v4453, %v4485
  %v4518 = vadd.f32 %v4454, %v4486
  %v4519 = vadd.f32 %v4455, %v4487
  %v4520 = vadd.f32 %v4456, %v4488
  %v4521 = vadd.f32 %v4457, %v4489
  %v4522 = vadd.f32 %v4458, %v4490
  %v4523 = vadd.f32 %v4459, %v4491
  %v4524 = vadd.f32 %v4460, %v4492
  %v4525 = vadd.f32 %v4461, %v4493
  %v4526 = vadd.f32 %v4462, %v4494
  %v4527 = vadd.f32 %v4463, %v4495
  %v4528 = vadd.f32 %v4464, %v4496
  %v4529 = vadd.f32 %v4465, %v4497
  %v4530 = vpack.c.bf16 %v4499, %v4498
  %v4531 = vpack.c.bf16 %v4501, %v4500
  %v4532 = vpack.c.bf16 %v4503, %v4502
  %v4533 = vpack.c.bf16 %v4505, %v4504
  %v4534 = vpack.c.bf16 %v4507, %v4506
  %v4535 = vpack.c.bf16 %v4509, %v4508
  %v4536 = vpack.c.bf16 %v4511, %v4510
  %v4537 = vpack.c.bf16 %v4513, %v4512
  %v4538 = vpack.c.bf16 %v4515, %v4514
  %v4539 = vpack.c.bf16 %v4517, %v4516
  %v4540 = vpack.c.bf16 %v4519, %v4518
  %v4541 = vpack.c.bf16 %v4521, %v4520
  %v4542 = vpack.c.bf16 %v4523, %v4522
  %v4543 = vpack.c.bf16 %v4525, %v4524
  %v4544 = vpack.c.bf16 %v4527, %v4526
  %v4545 = vpack.c.bf16 %v4529, %v4528
  %4546 = vmatprep.subr.bf16.mxu0 0
  %4547 = vmatpush1.bf16.msra.mxu0 %v4530
  %4548 = vmatprep.subr.bf16.mxu0 0
  %4549 = vmatpush1.bf16.msra.mxu0 %v4531
  %4550 = vmatprep.subr.bf16.mxu0 0
  %4551 = vmatpush1.bf16.msra.mxu0 %v4532
  %4552 = vmatprep.subr.bf16.mxu0 0
  %4553 = vmatpush1.bf16.msra.mxu0 %v4533
  %4554 = vmatprep.subr.bf16.mxu0 0
  %4555 = vmatpush1.bf16.msra.mxu0 %v4534
  %4556 = vmatprep.subr.bf16.mxu0 0
  %4557 = vmatpush1.bf16.msra.mxu0 %v4535
  %4558 = vmatprep.subr.bf16.mxu0 0
  %4559 = vmatpush1.bf16.msra.mxu0 %v4536
  %4560 = vmatprep.subr.bf16.mxu0 0
  %4561 = vmatpush1.bf16.msra.mxu0 %v4537
  %4562 = vmatprep.subr.bf16.mxu0 0
  %4563 = vmatpush1.bf16.msra.mxu0 %v4538
  %4564 = vmatprep.subr.bf16.mxu0 0
  %4565 = vmatpush1.bf16.msra.mxu0 %v4539
  %4566 = vmatprep.subr.bf16.mxu0 0
  %4567 = vmatpush1.bf16.msra.mxu0 %v4540
  %4568 = vmatprep.subr.bf16.mxu0 0
  %4569 = vmatpush1.bf16.msra.mxu0 %v4541
  %4570 = vmatprep.subr.bf16.mxu0 0
  %4571 = vmatpush1.bf16.msra.mxu0 %v4542
  %4572 = vmatprep.subr.bf16.mxu0 0
  %4573 = vmatpush1.bf16.msra.mxu0 %v4543
  %4574 = vmatprep.subr.bf16.mxu0 0
  %4575 = vmatpush1.bf16.msra.mxu0 %v4544
  %4576 = vmatprep.subr.bf16.mxu0 0
  %4577 = vmatpush1.bf16.msra.mxu0 %v4545
  %4578 = vmatprep.mubr.bf16.mxu0 %v3174
  %4579 = vmatmul.mubr.bf16.gmra.mrb[0].mxu0 %v3173
  %v4580 = vpop.f32.mrb[0].mxu0
  %v4581 = vadd.f32 0.0, %v4580
  %v4582 = vpop.f32.mrb[0].mxu0
  %v4583 = vpop.f32.mrb[0].mxu0
  %v4584 = vadd.f32 0.0, %v4583
  %v4585 = vpop.f32.mrb[0].mxu0
  %4586 = vmatprep.mubr.bf16.mxu0 %v3176
  %4587 = vmatmul.mubr.bf16.gmra.mrb[0].mxu0 %v3175
  %v4588 = vpop.f32.mrb[0].mxu0
  %v4589 = vadd.f32 0.0, %v4588
  %v4590 = vpop.f32.mrb[0].mxu0
  %v4591 = vpop.f32.mrb[0].mxu0
  %v4592 = vadd.f32 0.0, %v4591
  %v4593 = vpop.f32.mrb[0].mxu0
  %4594 = vdwg.mxu0
  %v4595 = vpack.c.bf16 %v4584, %v4581
  %v4596 = vpack.c.bf16 %v4592, %v4589
  %v4597 = vsel %vm3049, %v2825, 0.0
  %v4598 = vsel %vm3050, %v2826, 0.0
  %v4599 = vsel %vm3051, %v2827, 0.0
  %v4600 = vsel %vm3052, %v2828, 0.0
  %v4601 = vsel %vm3053, %v2829, 0.0
  %v4602 = vsel %vm3054, %v2830, 0.0
  %v4603 = vsel %vm3055, %v2831, 0.0
  %v4604 = vsel %vm3056, %v2832, 0.0
  %v4605 = vsel %vm3057, %v2833, 0.0
  %v4606 = vsel %vm3058, %v2834, 0.0
  %v4607 = vsel %vm3059, %v2835, 0.0
  %v4608 = vsel %vm3060, %v2836, 0.0
  %v4609 = vsel %vm3061, %v2837, 0.0
  %v4610 = vsel %vm3062, %v2838, 0.0
  %v4611 = vsel %vm3063, %v2839, 0.0
  %v4612 = vsel %vm3064, %v2840, 0.0
  %v4613 = vsel %vm3065, %v2841, 0.0
  %v4614 = vsel %vm3066, %v2842, 0.0
  %v4615 = vsel %vm3067, %v2843, 0.0
  %v4616 = vsel %vm3068, %v2844, 0.0
  %v4617 = vsel %vm3069, %v2845, 0.0
  %v4618 = vsel %vm3070, %v2846, 0.0
  %v4619 = vsel %vm3071, %v2847, 0.0
  %v4620 = vsel %vm3072, %v2848, 0.0
  %v4621 = vsel %vm3073, %v2849, 0.0
  %v4622 = vsel %vm3074, %v2850, 0.0
  %v4623 = vsel %vm3075, %v2851, 0.0
  %v4624 = vsel %vm3076, %v2852, 0.0
  %v4625 = vsel %vm3077, %v2853, 0.0
  %v4626 = vsel %vm3078, %v2854, 0.0
  %v4627 = vsel %vm3079, %v2855, 0.0
  %v4628 = vsel %vm3080, %v2856, 0.0
  %v4629 = vsel %vm4402, %v2793, 0.0
  %v4630 = vsel %vm4403, %v2794, 0.0
  %v4631 = vsel %vm4404, %v2795, 0.0
  %v4632 = vsel %vm4405, %v2796, 0.0
  %v4633 = vsel %vm4406, %v2797, 0.0
  %v4634 = vsel %vm4407, %v2798, 0.0
  %v4635 = vsel %vm4408, %v2799, 0.0
  %v4636 = vsel %vm4409, %v2800, 0.0
  %v4637 = vsel %vm4410, %v2801, 0.0
  %v4638 = vsel %vm4411, %v2802, 0.0
  %v4639 = vsel %vm4412, %v2803, 0.0
  %v4640 = vsel %vm4413, %v2804, 0.0
  %v4641 = vsel %vm4414, %v2805, 0.0
  %v4642 = vsel %vm4415, %v2806, 0.0
  %v4643 = vsel %vm4416, %v2807, 0.0
  %v4644 = vsel %vm4417, %v2808, 0.0
  %v4645 = vsel %vm4418, %v2809, 0.0
  %v4646 = vsel %vm4419, %v2810, 0.0
  %v4647 = vsel %vm4420, %v2811, 0.0
  %v4648 = vsel %vm4421, %v2812, 0.0
  %v4649 = vsel %vm4422, %v2813, 0.0
  %v4650 = vsel %vm4423, %v2814, 0.0
  %v4651 = vsel %vm4424, %v2815, 0.0
  %v4652 = vsel %vm4425, %v2816, 0.0
  %v4653 = vsel %vm4426, %v2817, 0.0
  %v4654 = vsel %vm4427, %v2818, 0.0
  %v4655 = vsel %vm4428, %v2819, 0.0
  %v4656 = vsel %vm4429, %v2820, 0.0
  %v4657 = vsel %vm4430, %v2821, 0.0
  %v4658 = vsel %vm4431, %v2822, 0.0
  %v4659 = vsel %vm4432, %v2823, 0.0
  %v4660 = vsel %vm4433, %v2824, 0.0
  %v4661 = vadd.f32 %v4597, %v4629
  %v4662 = vadd.f32 %v4598, %v4630
  %v4663 = vadd.f32 %v4599, %v4631
  %v4664 = vadd.f32 %v4600, %v4632
  %v4665 = vadd.f32 %v4601, %v4633
  %v4666 = vadd.f32 %v4602, %v4634
  %v4667 = vadd.f32 %v4603, %v4635
  %v4668 = vadd.f32 %v4604, %v4636
  %v4669 = vadd.f32 %v4605, %v4637
  %v4670 = vadd.f32 %v4606, %v4638
  %v4671 = vadd.f32 %v4607, %v4639
  %v4672 = vadd.f32 %v4608, %v4640
  %v4673 = vadd.f32 %v4609, %v4641
  %v4674 = vadd.f32 %v4610, %v4642
  %v4675 = vadd.f32 %v4611, %v4643
  %v4676 = vadd.f32 %v4612, %v4644
  %v4677 = vadd.f32 %v4613, %v4645
  %v4678 = vadd.f32 %v4614, %v4646
  %v4679 = vadd.f32 %v4615, %v4647
  %v4680 = vadd.f32 %v4616, %v4648
  %v4681 = vadd.f32 %v4617, %v4649
  %v4682 = vadd.f32 %v4618, %v4650
  %v4683 = vadd.f32 %v4619, %v4651
  %v4684 = vadd.f32 %v4620, %v4652
  %v4685 = vadd.f32 %v4621, %v4653
  %v4686 = vadd.f32 %v4622, %v4654
  %v4687 = vadd.f32 %v4623, %v4655
  %v4688 = vadd.f32 %v4624, %v4656
  %v4689 = vadd.f32 %v4625, %v4657
  %v4690 = vadd.f32 %v4626, %v4658
  %v4691 = vadd.f32 %v4627, %v4659
  %v4692 = vadd.f32 %v4628, %v4660
  %v4693 = vpack.c.bf16 %v4662, %v4661
  %v4694 = vpack.c.bf16 %v4664, %v4663
  %v4695 = vpack.c.bf16 %v4666, %v4665
  %v4696 = vpack.c.bf16 %v4668, %v4667
  %v4697 = vpack.c.bf16 %v4670, %v4669
  %v4698 = vpack.c.bf16 %v4672, %v4671
  %v4699 = vpack.c.bf16 %v4674, %v4673
  %v4700 = vpack.c.bf16 %v4676, %v4675
  %v4701 = vpack.c.bf16 %v4678, %v4677
  %v4702 = vpack.c.bf16 %v4680, %v4679
  %v4703 = vpack.c.bf16 %v4682, %v4681
  %v4704 = vpack.c.bf16 %v4684, %v4683
  %v4705 = vpack.c.bf16 %v4686, %v4685
  %v4706 = vpack.c.bf16 %v4688, %v4687
  %v4707 = vpack.c.bf16 %v4690, %v4689
  %v4708 = vpack.c.bf16 %v4692, %v4691
  %4709 = vmatprep.subr.bf16.mxu0 0
  %4710 = vmatpush1.bf16.msra.mxu0 %v4693
  %4711 = vmatprep.subr.bf16.mxu0 0
  %4712 = vmatpush1.bf16.msra.mxu0 %v4694
  %4713 = vmatprep.subr.bf16.mxu0 0
  %4714 = vmatpush1.bf16.msra.mxu0 %v4695
  %4715 = vmatprep.subr.bf16.mxu0 0
  %4716 = vmatpush1.bf16.msra.mxu0 %v4696
  %4717 = vmatprep.subr.bf16.mxu0 0
  %4718 = vmatpush1.bf16.msra.mxu0 %v4697
  %4719 = vmatprep.subr.bf16.mxu0 0
  %4720 = vmatpush1.bf16.msra.mxu0 %v4698
  %4721 = vmatprep.subr.bf16.mxu0 0
  %4722 = vmatpush1.bf16.msra.mxu0 %v4699
  %4723 = vmatprep.subr.bf16.mxu0 0
  %4724 = vmatpush1.bf16.msra.mxu0 %v4700
  %4725 = vmatprep.subr.bf16.mxu0 0
  %4726 = vmatpush1.bf16.msra.mxu0 %v4701
  %4727 = vmatprep.subr.bf16.mxu0 0
  %4728 = vmatpush1.bf16.msra.mxu0 %v4702
  %4729 = vmatprep.subr.bf16.mxu0 0
  %4730 = vmatpush1.bf16.msra.mxu0 %v4703
  %4731 = vmatprep.subr.bf16.mxu0 0
  %4732 = vmatpush1.bf16.msra.mxu0 %v4704
  %4733 = vmatprep.subr.bf16.mxu0 0
  %4734 = vmatpush1.bf16.msra.mxu0 %v4705
  %4735 = vmatprep.subr.bf16.mxu0 0
  %4736 = vmatpush1.bf16.msra.mxu0 %v4706
  %4737 = vmatprep.subr.bf16.mxu0 0
  %4738 = vmatpush1.bf16.msra.mxu0 %v4707
  %4739 = vmatprep.subr.bf16.mxu0 0
  %4740 = vmatpush1.bf16.msra.mxu0 %v4708
  %4741 = vmatprep.mubr.bf16.mxu0 %v3174
  %4742 = vmatmul.mubr.bf16.gmra.mrb[0].mxu0 %v3173
  %v4743 = vpop.f32.mrb[0].mxu0
  %v4744 = vadd.f32 0.0, %v4743
  %v4745 = vpop.f32.mrb[0].mxu0
  %v4746 = vpop.f32.mrb[0].mxu0
  %v4747 = vadd.f32 0.0, %v4746
  %v4748 = vpop.f32.mrb[0].mxu0
  %4749 = vmatprep.mubr.bf16.mxu0 %v3176
  %4750 = vmatmul.mubr.bf16.gmra.mrb[0].mxu0 %v3175
  %v4751 = vpop.f32.mrb[0].mxu0
  %v4752 = vadd.f32 0.0, %v4751
  %v4753 = vpop.f32.mrb[0].mxu0
  %v4754 = vpop.f32.mrb[0].mxu0
  %v4755 = vadd.f32 0.0, %v4754
  %v4756 = vpop.f32.mrb[0].mxu0
  %4757 = vdwg.mxu0
  %v4758 = vpack.c.bf16 %v4747, %v4744
  %v4759 = vpack.c.bf16 %v4755, %v4752
  %v4776 = vunpack.c.l.b16 %v19
  %v4777 = vunpack.c.l.b16 %v20
  %v4778 = vunpack.c.l.b16 %v21
  %v4779 = vunpack.c.l.b16 %v22
  %v4780 = vunpack.c.l.b16 %v23
  %v4781 = vunpack.c.l.b16 %v24
  %v4782 = vunpack.c.l.b16 %v25
  %v4783 = vunpack.c.l.b16 %v26
  %v4784 = vunpack.c.l.b16 %v27
  %v4785 = vunpack.c.l.b16 %v28
  %v4786 = vunpack.c.l.b16 %v29
  %v4787 = vunpack.c.l.b16 %v30
  %v4788 = vunpack.c.l.b16 %v31
  %v4789 = vunpack.c.l.b16 %v32
  %v4790 = vunpack.c.l.b16 %v33
  %v4791 = vunpack.c.l.b16 %v34
  %v4792 = vpack.c.b16 %v4777, %v4776
  %v4793 = vpack.c.b16 %v4779, %v4778
  %v4794 = vpack.c.b16 %v4781, %v4780
  %v4795 = vpack.c.b16 %v4783, %v4782
  %v4796 = vpack.c.b16 %v4785, %v4784
  %v4797 = vpack.c.b16 %v4787, %v4786
  %v4798 = vpack.c.b16 %v4789, %v4788
  %v4799 = vpack.c.b16 %v4791, %v4790
  %4808 = vmatprep.subr.bf16.mxu0 0
  %4809 = vmatpush1.bf16.msra.mxu0 %v4792
  %4810 = vmatprep.subr.bf16.mxu0 0
  %4811 = vmatpush1.bf16.msra.mxu0 %v4793
  %4812 = vmatprep.subr.bf16.mxu0 0
  %4813 = vmatpush1.bf16.msra.mxu0 %v4794
  %4814 = vmatprep.subr.bf16.mxu0 0
  %4815 = vmatpush1.bf16.msra.mxu0 %v4795
  %4816 = vmatprep.subr.bf16.mxu0 0
  %4817 = vmatpush1.bf16.msra.mxu0 %v4796
  %4818 = vmatprep.subr.bf16.mxu0 0
  %4819 = vmatpush1.bf16.msra.mxu0 %v4797
  %4820 = vmatprep.subr.bf16.mxu0 0
  %4821 = vmatpush1.bf16.msra.mxu0 %v4798
  %4822 = vmatprep.subr.bf16.mxu0 0
  %4823 = vmatpush1.bf16.msra.mxu0 %v4799
  %4824 = vmatprep.subr.bf16.mxu0 0
  %4825 = vmatpush1.bf16.msra.mxu0 0
  %4826 = vmatprep.subr.bf16.mxu0 0
  %4827 = vmatpush1.bf16.msra.mxu0 0
  %4828 = vmatprep.subr.bf16.mxu0 0
  %4829 = vmatpush1.bf16.msra.mxu0 0
  %4830 = vmatprep.subr.bf16.mxu0 0
  %4831 = vmatpush1.bf16.msra.mxu0 0
  %4832 = vmatprep.subr.bf16.mxu0 0
  %4833 = vmatpush1.bf16.msra.mxu0 0
  %4834 = vmatprep.subr.bf16.mxu0 0
  %4835 = vmatpush1.bf16.msra.mxu0 0
  %4836 = vmatprep.subr.bf16.mxu0 0
  %4837 = vmatpush1.bf16.msra.mxu0 0
  %4838 = vmatprep.subr.bf16.mxu0 0
  %4839 = vmatpush1.bf16.msra.mxu0 0
  %4840 = vmatprep.mubr.bf16.mxu0 0
  %4841 = vmatmul.mubr.bf16.gmra.mrb[0].mxu0 %v3230
  %v4842 = vpop.f32.mrb[0].mxu0
  %v4843 = vadd.f32 0.0, %v4842
  %v4844 = vpop.f32.mrb[0].mxu0
  %v4845 = vpop.f32.mrb[0].mxu0
  %v4846 = vadd.f32 0.0, %v4845
  %v4847 = vpop.f32.mrb[0].mxu0
  %4848 = vmatprep.mubr.bf16.mxu0 0
  %4849 = vmatmul.mubr.bf16.gmra.mrb[0].mxu0 %v3231
  %v4850 = vpop.f32.mrb[0].mxu0
  %v4851 = vadd.f32 0.0, %v4850
  %v4852 = vpop.f32.mrb[0].mxu0
  %v4853 = vpop.f32.mrb[0].mxu0
  %v4854 = vadd.f32 0.0, %v4853
  %v4855 = vpop.f32.mrb[0].mxu0
  %4856 = vmatprep.mubr.bf16.mxu0 0
  %4857 = vmatmul.mubr.bf16.gmra.mrb[0].mxu0 %v3425
  %v4858 = vpop.f32.mrb[0].mxu0
  %v4859 = vadd.f32 0.0, %v4858
  %v4860 = vpop.f32.mrb[0].mxu0
  %v4861 = vpop.f32.mrb[0].mxu0
  %v4862 = vadd.f32 0.0, %v4861
  %v4863 = vpop.f32.mrb[0].mxu0
  %4864 = vmatprep.mubr.bf16.mxu0 0
  %4865 = vmatmul.mubr.bf16.gmra.mrb[0].mxu0 %v3426
  %v4866 = vpop.f32.mrb[0].mxu0
  %v4867 = vadd.f32 0.0, %v4866
  %v4868 = vpop.f32.mrb[0].mxu0
  %v4869 = vpop.f32.mrb[0].mxu0
  %v4870 = vadd.f32 0.0, %v4869
  %v4871 = vpop.f32.mrb[0].mxu0
  %4872 = vmatprep.mubr.bf16.mxu0 0
  %4873 = vmatmul.mubr.bf16.gmra.mrb[0].mxu0 %v3620
  %v4874 = vpop.f32.mrb[0].mxu0
  %v4875 = vadd.f32 0.0, %v4874
  %v4876 = vpop.f32.mrb[0].mxu0
  %v4877 = vpop.f32.mrb[0].mxu0
  %v4878 = vadd.f32 0.0, %v4877
  %v4879 = vpop.f32.mrb[0].mxu0
  %4880 = vmatprep.mubr.bf16.mxu0 0
  %4881 = vmatmul.mubr.bf16.gmra.mrb[0].mxu0 %v3621
  %v4882 = vpop.f32.mrb[0].mxu0
  %v4883 = vadd.f32 0.0, %v4882
  %v4884 = vpop.f32.mrb[0].mxu0
  %v4885 = vpop.f32.mrb[0].mxu0
  %v4886 = vadd.f32 0.0, %v4885
  %v4887 = vpop.f32.mrb[0].mxu0
  %4888 = vmatprep.mubr.bf16.mxu0 0
  %4889 = vmatmul.mubr.bf16.gmra.mrb[0].mxu0 %v3815
  %v4890 = vpop.f32.mrb[0].mxu0
  %v4891 = vadd.f32 0.0, %v4890
  %v4892 = vpop.f32.mrb[0].mxu0
  %v4893 = vpop.f32.mrb[0].mxu0
  %v4894 = vadd.f32 0.0, %v4893
  %v4895 = vpop.f32.mrb[0].mxu0
  %4896 = vmatprep.mubr.bf16.mxu0 0
  %4897 = vmatmul.mubr.bf16.gmra.mrb[0].mxu0 %v3816
  %v4898 = vpop.f32.mrb[0].mxu0
  %v4899 = vadd.f32 0.0, %v4898
  %v4900 = vpop.f32.mrb[0].mxu0
  %v4901 = vpop.f32.mrb[0].mxu0
  %v4902 = vadd.f32 0.0, %v4901
  %v4903 = vpop.f32.mrb[0].mxu0
  %4904 = vmatprep.mubr.bf16.mxu0 0
  %4905 = vmatmul.mubr.bf16.gmra.mrb[0].mxu0 %v4010
  %v4906 = vpop.f32.mrb[0].mxu0
  %v4907 = vadd.f32 0.0, %v4906
  %v4908 = vpop.f32.mrb[0].mxu0
  %v4909 = vpop.f32.mrb[0].mxu0
  %v4910 = vadd.f32 0.0, %v4909
  %v4911 = vpop.f32.mrb[0].mxu0
  %4912 = vmatprep.mubr.bf16.mxu0 0
  %4913 = vmatmul.mubr.bf16.gmra.mrb[0].mxu0 %v4011
  %v4914 = vpop.f32.mrb[0].mxu0
  %v4915 = vadd.f32 0.0, %v4914
  %v4916 = vpop.f32.mrb[0].mxu0
  %v4917 = vpop.f32.mrb[0].mxu0
  %v4918 = vadd.f32 0.0, %v4917
  %v4919 = vpop.f32.mrb[0].mxu0
  %4920 = vmatprep.mubr.bf16.mxu0 0
  %4921 = vmatmul.mubr.bf16.gmra.mrb[0].mxu0 %v4205
  %v4922 = vpop.f32.mrb[0].mxu0
  %v4923 = vadd.f32 0.0, %v4922
  %v4924 = vpop.f32.mrb[0].mxu0
  %v4925 = vpop.f32.mrb[0].mxu0
  %v4926 = vadd.f32 0.0, %v4925
  %v4927 = vpop.f32.mrb[0].mxu0
  %4928 = vmatprep.mubr.bf16.mxu0 0
  %4929 = vmatmul.mubr.bf16.gmra.mrb[0].mxu0 %v4206
  %v4930 = vpop.f32.mrb[0].mxu0
  %v4931 = vadd.f32 0.0, %v4930
  %v4932 = vpop.f32.mrb[0].mxu0
  %v4933 = vpop.f32.mrb[0].mxu0
  %v4934 = vadd.f32 0.0, %v4933
  %v4935 = vpop.f32.mrb[0].mxu0
  %4936 = vmatprep.mubr.bf16.mxu0 0
  %4937 = vmatmul.mubr.bf16.gmra.mrb[0].mxu0 %v4400
  %v4938 = vpop.f32.mrb[0].mxu0
  %v4939 = vadd.f32 0.0, %v4938
  %v4940 = vpop.f32.mrb[0].mxu0
  %v4941 = vpop.f32.mrb[0].mxu0
  %v4942 = vadd.f32 0.0, %v4941
  %v4943 = vpop.f32.mrb[0].mxu0
  %4944 = vmatprep.mubr.bf16.mxu0 0
  %4945 = vmatmul.mubr.bf16.gmra.mrb[0].mxu0 %v4401
  %v4946 = vpop.f32.mrb[0].mxu0
  %v4947 = vadd.f32 0.0, %v4946
  %v4948 = vpop.f32.mrb[0].mxu0
  %v4949 = vpop.f32.mrb[0].mxu0
  %v4950 = vadd.f32 0.0, %v4949
  %v4951 = vpop.f32.mrb[0].mxu0
  %4952 = vmatprep.mubr.bf16.mxu0 0
  %4953 = vmatmul.mubr.bf16.gmra.mrb[0].mxu0 %v4595
  %v4954 = vpop.f32.mrb[0].mxu0
  %v4955 = vadd.f32 0.0, %v4954
  %v4956 = vpop.f32.mrb[0].mxu0
  %v4957 = vpop.f32.mrb[0].mxu0
  %v4958 = vadd.f32 0.0, %v4957
  %v4959 = vpop.f32.mrb[0].mxu0
  %4960 = vmatprep.mubr.bf16.mxu0 0
  %4961 = vmatmul.mubr.bf16.gmra.mrb[0].mxu0 %v4596
  %v4962 = vpop.f32.mrb[0].mxu0
  %v4963 = vadd.f32 0.0, %v4962
  %v4964 = vpop.f32.mrb[0].mxu0
  %v4965 = vpop.f32.mrb[0].mxu0
  %v4966 = vadd.f32 0.0, %v4965
  %v4967 = vpop.f32.mrb[0].mxu0
  %4968 = vmatprep.mubr.bf16.mxu0 0
  %4969 = vmatmul.mubr.bf16.gmra.mrb[0].mxu0 %v4758
  %v4970 = vpop.f32.mrb[0].mxu0
  %v4971 = vadd.f32 0.0, %v4970
  %v4972 = vpop.f32.mrb[0].mxu0
  %v4973 = vpop.f32.mrb[0].mxu0
  %v4974 = vadd.f32 0.0, %v4973
  %v4975 = vpop.f32.mrb[0].mxu0
  %4976 = vmatprep.mubr.bf16.mxu0 0
  %4977 = vmatmul.mubr.bf16.gmra.mrb[0].mxu0 %v4759
  %v4978 = vpop.f32.mrb[0].mxu0
  %v4979 = vadd.f32 0.0, %v4978
  %v4980 = vpop.f32.mrb[0].mxu0
  %v4981 = vpop.f32.mrb[0].mxu0
  %v4982 = vadd.f32 0.0, %v4981
  %v4983 = vpop.f32.mrb[0].mxu0
  %4984 = vdwg.mxu0
  %4985 = vrot.lane.b32.xlu0 %v4859, 8
  %v4986 = vpop.permute.xlu0 %4985
  %4987 = vrot.lane.b32.xlu0 %v4862, 8
  %v4988 = vpop.permute.xlu0 %4987
  %v4989 = vadd.f32 %v4843, %v4986
  %v4990 = vadd.f32 %v4846, %v4988
  %4991 = vrot.lane.b32.xlu0 %v4867, 8
  %v4992 = vpop.permute.xlu0 %4991
  %4993 = vrot.lane.b32.xlu0 %v4870, 8
  %v4994 = vpop.permute.xlu0 %4993
  %v4995 = vadd.f32 %v4851, %v4992
  %v4996 = vadd.f32 %v4854, %v4994
  %4997 = vrot.lane.b32.xlu0 %v4875, 16
  %v4998 = vpop.permute.xlu0 %4997
  %4999 = vrot.lane.b32.xlu0 %v4878, 16
  %v5000 = vpop.permute.xlu0 %4999
  %v5001 = vadd.f32 %v4989, %v4998
  %v5002 = vadd.f32 %v4990, %v5000
  %5003 = vrot.lane.b32.xlu0 %v4883, 16
  %v5004 = vpop.permute.xlu0 %5003
  %5005 = vrot.lane.b32.xlu0 %v4886, 16
  %v5006 = vpop.permute.xlu0 %5005
  %v5007 = vadd.f32 %v4995, %v5004
  %v5008 = vadd.f32 %v4996, %v5006
  %5009 = vrot.lane.b32.xlu0 %v4891, 24
  %v5010 = vpop.permute.xlu0 %5009
  %5011 = vrot.lane.b32.xlu0 %v4894, 24
  %v5012 = vpop.permute.xlu0 %5011
  %v5013 = vadd.f32 %v5001, %v5010
  %v5014 = vadd.f32 %v5002, %v5012
  %5015 = vrot.lane.b32.xlu0 %v4899, 24
  %v5016 = vpop.permute.xlu0 %5015
  %5017 = vrot.lane.b32.xlu0 %v4902, 24
  %v5018 = vpop.permute.xlu0 %5017
  %v5019 = vadd.f32 %v5007, %v5016
  %v5020 = vadd.f32 %v5008, %v5018
  %5021 = vrot.lane.b32.xlu0 %v4907, 32
  %v5022 = vpop.permute.xlu0 %5021
  %5023 = vrot.lane.b32.xlu0 %v4910, 32
  %v5024 = vpop.permute.xlu0 %5023
  %v5025 = vadd.f32 %v5013, %v5022
  %v5026 = vadd.f32 %v5014, %v5024
  %5027 = vrot.lane.b32.xlu0 %v4915, 32
  %v5028 = vpop.permute.xlu0 %5027
  %5029 = vrot.lane.b32.xlu0 %v4918, 32
  %v5030 = vpop.permute.xlu0 %5029
  %v5031 = vadd.f32 %v5019, %v5028
  %v5032 = vadd.f32 %v5020, %v5030
  %5033 = vrot.lane.b32.xlu0 %v4923, 40
  %v5034 = vpop.permute.xlu0 %5033
  %5035 = vrot.lane.b32.xlu0 %v4926, 40
  %v5036 = vpop.permute.xlu0 %5035
  %v5037 = vadd.f32 %v5025, %v5034
  %v5038 = vadd.f32 %v5026, %v5036
  %5039 = vrot.lane.b32.xlu0 %v4931, 40
  %v5040 = vpop.permute.xlu0 %5039
  %5041 = vrot.lane.b32.xlu0 %v4934, 40
  %v5042 = vpop.permute.xlu0 %5041
  %v5043 = vadd.f32 %v5031, %v5040
  %v5044 = vadd.f32 %v5032, %v5042
  %5045 = vrot.lane.b32.xlu0 %v4939, 48
  %v5046 = vpop.permute.xlu0 %5045
  %5047 = vrot.lane.b32.xlu0 %v4942, 48
  %v5048 = vpop.permute.xlu0 %5047
  %v5049 = vadd.f32 %v5037, %v5046
  %v5050 = vadd.f32 %v5038, %v5048
  %5051 = vrot.lane.b32.xlu0 %v4947, 48
  %v5052 = vpop.permute.xlu0 %5051
  %5053 = vrot.lane.b32.xlu0 %v4950, 48
  %v5054 = vpop.permute.xlu0 %5053
  %v5055 = vadd.f32 %v5043, %v5052
  %v5056 = vadd.f32 %v5044, %v5054
  %5057 = vrot.lane.b32.xlu0 %v4955, 56
  %v5058 = vpop.permute.xlu0 %5057
  %5059 = vrot.lane.b32.xlu0 %v4958, 56
  %v5060 = vpop.permute.xlu0 %5059
  %v5061 = vadd.f32 %v5049, %v5058
  %v5062 = vadd.f32 %v5050, %v5060
  %5063 = vrot.lane.b32.xlu0 %v4963, 56
  %v5064 = vpop.permute.xlu0 %5063
  %5065 = vrot.lane.b32.xlu0 %v4966, 56
  %v5066 = vpop.permute.xlu0 %5065
  %v5067 = vadd.f32 %v5055, %v5064
  %v5068 = vadd.f32 %v5056, %v5066
  %5069 = vrot.lane.b32.xlu0 %v4971, 64
  %v5070 = vpop.permute.xlu0 %5069
  %5071 = vrot.lane.b32.xlu0 %v4974, 64
  %v5072 = vpop.permute.xlu0 %5071
  %v5073 = vadd.f32 %v5061, %v5070
  %v5074 = vadd.f32 %v5062, %v5072
  %5075 = vrot.lane.b32.xlu0 %v4979, 64
  %v5076 = vpop.permute.xlu0 %5075
  %5077 = vrot.lane.b32.xlu0 %v4982, 64
  %v5078 = vpop.permute.xlu0 %5077
  %v5079 = vadd.f32 %v5067, %v5076
  %v5080 = vadd.f32 %v5068, %v5078
  %5081 = vrot.lane.b32.xlu0 %v5073, 127
  %v5082 = vpop.permute.xlu0 %5081
  %5083 = vrot.lane.b32.xlu0 %v5074, 127
  %v5084 = vpop.permute.xlu0 %5083
  %5085 = vrot.lane.b32.xlu0 %v5079, 127
  %v5086 = vpop.permute.xlu0 %5085
  %5087 = vrot.lane.b32.xlu0 %v5080, 127
  %v5088 = vpop.permute.xlu0 %5087
  %v5089 = vmul.f32 %v5073, %v5073
  %v5090 = vmul.f32 %v5074, %v5074
  %v5091 = vmul.f32 %v5082, %v5082
  %v5092 = vmul.f32 %v5084, %v5084
  %v5093 = vadd.f32 %v5089, %v5091
  %v5094 = vadd.f32 %v5090, %v5092
  %v5095 = vmul.f32 %v5079, %v5079
  %v5096 = vmul.f32 %v5080, %v5080
  %v5097 = vadd.f32 %v5093, %v5095
  %v5098 = vadd.f32 %v5094, %v5096
  %v5099 = vmul.f32 %v5086, %v5086
  %v5100 = vmul.f32 %v5088, %v5088
  %v5101 = vadd.f32 %v5097, %v5099
  %v5102 = vadd.f32 %v5098, %v5100
  %5103 = vrot.lane.b32.xlu0 %v5101, 120
  %v5104 = vpop.permute.xlu0 %5103
  %5105 = vrot.lane.b32.xlu0 %v5102, 120
  %v5106 = vpop.permute.xlu0 %5105
  %v5107 = vadd.f32 %v5101, %v5104
  %v5108 = vadd.f32 %v5102, %v5106
  %5109 = vrot.lane.b32.xlu0 %v5107, 112
  %v5110 = vpop.permute.xlu0 %5109
  %5111 = vrot.lane.b32.xlu0 %v5108, 112
  %v5112 = vpop.permute.xlu0 %5111
  %v5113 = vadd.f32 %v5107, %v5110
  %v5114 = vadd.f32 %v5108, %v5112
  %5115 = vrot.lane.b32.xlu0 %v5113, 96
  %v5116 = vpop.permute.xlu0 %5115
  %5117 = vrot.lane.b32.xlu0 %v5114, 96
  %v5118 = vpop.permute.xlu0 %5117
  %v5119 = vadd.f32 %v5113, %v5116
  %v5120 = vadd.f32 %v5114, %v5118
  %5121 = vrot.lane.b32.xlu0 %v5119, 64
  %v5122 = vpop.permute.xlu0 %5121
  %5123 = vrot.lane.b32.xlu0 %v5120, 64
  %v5124 = vpop.permute.xlu0 %5123
  %v5125 = vadd.f32 %v5119, %v5122
  %v5126 = vadd.f32 %v5120, %v5124
  %v5127 = vrsqrt.pop %v5125
  %v5128 = vmul.f32 %v5125, %v5127
  %vm5129 = vcmp.eq.f32.partialorder %v5125, inf
  %v5130 = vsel %vm5129, %v5125, %v5128
  %vm5131 = vcmp.eq.f32.partialorder %v5125, 0.0
  %v5132 = vand.u32 %v5125, 2147483648
  %v5133 = vsel %vm5131, %v5132, %v5130
  %v5134 = vrsqrt.pop %v5126
  %v5135 = vmul.f32 %v5126, %v5134
  %vm5136 = vcmp.eq.f32.partialorder %v5126, inf
  %v5137 = vsel %vm5136, %v5126, %v5135
  %vm5138 = vcmp.eq.f32.partialorder %v5126, 0.0
  %v5139 = vand.u32 %v5126, 2147483648
  %v5140 = vsel %vm5138, %v5139, %v5137
  %v5141 = vadd.f32 %v5133, 3.6
  %v5142 = vadd.f32 %v5140, 3.6
  %v5143 = vrcp.pop %v5141
  %v5144 = vrcp.pop %v5142
  %v5145 = vmul.f32 %v5073, %v5143
  %v5146 = vmul.f32 %v5074, %v5144
  %v5147 = vmin.f32 %v5145, 0.2
  %v5148 = vmin.f32 %v5146, 0.2
  %v5149 = vmul.f32 %v5082, %v5143
  %v5150 = vmul.f32 %v5084, %v5144
  %v5151 = vmin.f32 %v5149, 0.2
  %v5152 = vmin.f32 %v5150, 0.2
  %v5153 = vmul.f32 %v5079, %v5143
  %v5154 = vmul.f32 %v5080, %v5144
  %v5155 = vmin.f32 %v5153, 0.2
  %v5156 = vmin.f32 %v5154, 0.2
  %v5157 = vmul.f32 %v5086, %v5143
  %v5158 = vmul.f32 %v5088, %v5144
  %v5159 = vmin.f32 %v5157, 0.2
  %v5160 = vmin.f32 %v5158, 0.2
  %v5161 = vmul.f32 %v5147, %v5147
  %v5162 = vmul.f32 %v5148, %v5148
  %v5163 = vmul.f32 %v5151, %v5151
  %v5164 = vmul.f32 %v5152, %v5152
  %v5165 = vadd.f32 %v5161, %v5163
  %v5166 = vadd.f32 %v5162, %v5164
  %v5167 = vmul.f32 %v5155, %v5155
  %v5168 = vmul.f32 %v5156, %v5156
  %v5169 = vadd.f32 %v5165, %v5167
  %v5170 = vadd.f32 %v5166, %v5168
  %v5171 = vmul.f32 %v5159, %v5159
  %v5172 = vmul.f32 %v5160, %v5160
  %v5173 = vadd.f32 %v5169, %v5171
  %v5174 = vadd.f32 %v5170, %v5172
  %5175 = vrot.lane.b32.xlu0 %v5173, 120
  %v5176 = vpop.permute.xlu0 %5175
  %5177 = vrot.lane.b32.xlu0 %v5174, 120
  %v5178 = vpop.permute.xlu0 %5177
  %v5179 = vadd.f32 %v5173, %v5176
  %v5180 = vadd.f32 %v5174, %v5178
  %5181 = vrot.lane.b32.xlu0 %v5179, 112
  %v5182 = vpop.permute.xlu0 %5181
  %5183 = vrot.lane.b32.xlu0 %v5180, 112
  %v5184 = vpop.permute.xlu0 %5183
  %v5185 = vadd.f32 %v5179, %v5182
  %v5186 = vadd.f32 %v5180, %v5184
  %5187 = vrot.lane.b32.xlu0 %v5185, 96
  %v5188 = vpop.permute.xlu0 %5187
  %5189 = vrot.lane.b32.xlu0 %v5186, 96
  %v5190 = vpop.permute.xlu0 %5189
  %v5191 = vadd.f32 %v5185, %v5188
  %v5192 = vadd.f32 %v5186, %v5190
  %5193 = vrot.lane.b32.xlu0 %v5191, 64
  %v5194 = vpop.permute.xlu0 %5193
  %5195 = vrot.lane.b32.xlu0 %v5192, 64
  %v5196 = vpop.permute.xlu0 %5195
  %v5197 = vadd.f32 %v5191, %v5194
  %v5198 = vadd.f32 %v5192, %v5196
  %v5199 = vrsqrt.pop %v5197
  %v5200 = vmul.f32 %v5197, %v5199
  %vm5201 = vcmp.eq.f32.partialorder %v5197, inf
  %v5202 = vsel %vm5201, %v5197, %v5200
  %vm5203 = vcmp.eq.f32.partialorder %v5197, 0.0
  %v5204 = vand.u32 %v5197, 2147483648
  %v5205 = vsel %vm5203, %v5204, %v5202
  %v5206 = vrsqrt.pop %v5198
  %v5207 = vmul.f32 %v5198, %v5206
  %vm5208 = vcmp.eq.f32.partialorder %v5198, inf
  %v5209 = vsel %vm5208, %v5198, %v5207
  %vm5210 = vcmp.eq.f32.partialorder %v5198, 0.0
  %v5211 = vand.u32 %v5198, 2147483648
  %v5212 = vsel %vm5210, %v5211, %v5209
  %v5213 = vadd.f32 %v5205, 0.001
  %v5214 = vadd.f32 %v5212, 0.001
  %v5215 = vrcp.pop %v5213
  %v5216 = vrcp.pop %v5214
  %v5217 = vmul.f32 %v5147, %v5215
  %v5218 = vmul.f32 %v5148, %v5216
  %5219 = vst [vmem:[%s3] sm:$0xff] %v5217
  %5220 = vst [vmem:[%s3 + $0x8] sm:$0xff] %v5218
  %v5221 = vmul.f32 %v5151, %v5215
  %v5222 = vmul.f32 %v5152, %v5216
  %s5223 = scalar_lea.vmem %s3, 16
  %5224 = vst [vmem:[%s5223] sm:$0xff] %v5221
  %5225 = vst [vmem:[%s5223 + $0x8] sm:$0xff] %v5222
  %v5226 = vmul.f32 %v5155, %v5215
  %v5227 = vmul.f32 %v5156, %v5216
  %s5228 = scalar_lea.vmem %s3, 32
  %5229 = vst [vmem:[%s5228] sm:$0xff] %v5226
  %5230 = vst [vmem:[%s5228 + $0x8] sm:$0xff] %v5227
  %v5231 = vmul.f32 %v5159, %v5215
  %v5232 = vmul.f32 %v5160, %v5216
  %s5233 = scalar_lea.vmem %s3, 48
  %5234 = vst [vmem:[%s5233] sm:$0xff] %v5231
  %5235 = vst [vmem:[%s5233 + $0x8] sm:$0xff] %v5232
  %s5236 = scalar_lea.vmem %s0, 792
  %v5237 = vld [vmem:[%s5236 + $0x1] sm:$0xff]
  %v5238 = vld [vmem:[%s5236 + $0x9] sm:$0xff]
  %v5239 = vld [vmem:[%s5236 + $0x11] sm:$0xff]
  %v5240 = vld [vmem:[%s5236 + $0x19] sm:$0xff]
  %v5241 = vld [vmem:[%s5236 + $0x21] sm:$0xff]
  %v5242 = vld [vmem:[%s5236 + $0x29] sm:$0xff]
  %v5243 = vld [vmem:[%s5236 + $0x31] sm:$0xff]
  %v5244 = vld [vmem:[%s5236 + $0x39] sm:$0xff]
  %v5245 = vld [vmem:[%s5236 + $0x41] sm:$0xff]
  %v5246 = vld [vmem:[%s5236 + $0x49] sm:$0xff]
  %v5247 = vld [vmem:[%s5236 + $0x51] sm:$0xff]
  %v5248 = vld [vmem:[%s5236 + $0x59] sm:$0xff]
  %v5249 = vld [vmem:[%s5236 + $0x61] sm:$0xff]
  %v5250 = vld [vmem:[%s5236 + $0x69] sm:$0xff]
  %v5251 = vld [vmem:[%s5236 + $0x71] sm:$0xff]
  %v5252 = vld [vmem:[%s5236 + $0x79] sm:$0xff]
  %v5253 = vld [vmem:[%s5236 + $0x81] sm:$0xff]
  %v5254 = vld [vmem:[%s5236 + $0x89] sm:$0xff]
  %v5255 = vld [vmem:[%s5236 + $0x91] sm:$0xff]
  %v5256 = vld [vmem:[%s5236 + $0x99] sm:$0xff]
  %v5257 = vld [vmem:[%s5236 + $0xa1] sm:$0xff]
  %v5258 = vld [vmem:[%s5236 + $0xa9] sm:$0xff]
  %v5259 = vld [vmem:[%s5236 + $0xb1] sm:$0xff]
  %v5260 = vld [vmem:[%s5236 + $0xb9] sm:$0xff]
  %v5261 = vld [vmem:[%s5236 + $0xc1] sm:$0xff]
  %v5262 = vld [vmem:[%s5236 + $0xc9] sm:$0xff]
  %v5263 = vld [vmem:[%s5236 + $0xd1] sm:$0xff]
  %v5264 = vld [vmem:[%s5236 + $0xd9] sm:$0xff]
  %v5265 = vld [vmem:[%s5236 + $0xe1] sm:$0xff]
  %v5266 = vld [vmem:[%s5236 + $0xe9] sm:$0xff]
  %v5267 = vld [vmem:[%s5236 + $0xf1] sm:$0xff]
  %v5268 = vld [vmem:[%s5236 + $0xf9] sm:$0xff]
  %v5269 = vld [vmem:[%s5236 + $0x2] sm:$0xff]
  %v5270 = vld [vmem:[%s5236 + $0xa] sm:$0xff]
  %v5271 = vld [vmem:[%s5236 + $0x12] sm:$0xff]
  %v5272 = vld [vmem:[%s5236 + $0x1a] sm:$0xff]
  %v5273 = vld [vmem:[%s5236 + $0x22] sm:$0xff]
  %v5274 = vld [vmem:[%s5236 + $0x2a] sm:$0xff]
  %v5275 = vld [vmem:[%s5236 + $0x32] sm:$0xff]
  %v5276 = vld [vmem:[%s5236 + $0x3a] sm:$0xff]
  %v5277 = vld [vmem:[%s5236 + $0x42] sm:$0xff]
  %v5278 = vld [vmem:[%s5236 + $0x4a] sm:$0xff]
  %v5279 = vld [vmem:[%s5236 + $0x52] sm:$0xff]
  %v5280 = vld [vmem:[%s5236 + $0x5a] sm:$0xff]
  %v5281 = vld [vmem:[%s5236 + $0x62] sm:$0xff]
  %v5282 = vld [vmem:[%s5236 + $0x6a] sm:$0xff]
  %v5283 = vld [vmem:[%s5236 + $0x72] sm:$0xff]
  %v5284 = vld [vmem:[%s5236 + $0x7a] sm:$0xff]
  %v5285 = vld [vmem:[%s5236 + $0x82] sm:$0xff]
  %v5286 = vld [vmem:[%s5236 + $0x8a] sm:$0xff]
  %v5287 = vld [vmem:[%s5236 + $0x92] sm:$0xff]
  %v5288 = vld [vmem:[%s5236 + $0x9a] sm:$0xff]
  %v5289 = vld [vmem:[%s5236 + $0xa2] sm:$0xff]
  %v5290 = vld [vmem:[%s5236 + $0xaa] sm:$0xff]
  %v5291 = vld [vmem:[%s5236 + $0xb2] sm:$0xff]
  %v5292 = vld [vmem:[%s5236 + $0xba] sm:$0xff]
  %v5293 = vld [vmem:[%s5236 + $0xc2] sm:$0xff]
  %v5294 = vld [vmem:[%s5236 + $0xca] sm:$0xff]
  %v5295 = vld [vmem:[%s5236 + $0xd2] sm:$0xff]
  %v5296 = vld [vmem:[%s5236 + $0xda] sm:$0xff]
  %v5297 = vld [vmem:[%s5236 + $0xe2] sm:$0xff]
  %v5298 = vld [vmem:[%s5236 + $0xea] sm:$0xff]
  %v5299 = vld [vmem:[%s5236 + $0xf2] sm:$0xff]
  %v5300 = vld [vmem:[%s5236 + $0xfa] sm:$0xff]
  %v5301 = vld [vmem:[%s5236] sm:$0xff]
  %v5302 = vld [vmem:[%s5236 + $0x8] sm:$0xff]
  %v5303 = vld [vmem:[%s5236 + $0x10] sm:$0xff]
  %v5304 = vld [vmem:[%s5236 + $0x18] sm:$0xff]
  %v5305 = vld [vmem:[%s5236 + $0x20] sm:$0xff]
  %v5306 = vld [vmem:[%s5236 + $0x28] sm:$0xff]
  %v5307 = vld [vmem:[%s5236 + $0x30] sm:$0xff]
  %v5308 = vld [vmem:[%s5236 + $0x38] sm:$0xff]
  %v5309 = vld [vmem:[%s5236 + $0x40] sm:$0xff]
  %v5310 = vld [vmem:[%s5236 + $0x48] sm:$0xff]
  %v5311 = vld [vmem:[%s5236 + $0x50] sm:$0xff]
  %v5312 = vld [vmem:[%s5236 + $0x58] sm:$0xff]
  %v5313 = vld [vmem:[%s5236 + $0x60] sm:$0xff]
  %v5314 = vld [vmem:[%s5236 + $0x68] sm:$0xff]
  %v5315 = vld [vmem:[%s5236 + $0x70] sm:$0xff]
  %v5316 = vld [vmem:[%s5236 + $0x78] sm:$0xff]
  %v5317 = vld [vmem:[%s5236 + $0x80] sm:$0xff]
  %v5318 = vld [vmem:[%s5236 + $0x88] sm:$0xff]
  %v5319 = vld [vmem:[%s5236 + $0x90] sm:$0xff]
  %v5320 = vld [vmem:[%s5236 + $0x98] sm:$0xff]
  %v5321 = vld [vmem:[%s5236 + $0xa0] sm:$0xff]
  %v5322 = vld [vmem:[%s5236 + $0xa8] sm:$0xff]
  %v5323 = vld [vmem:[%s5236 + $0xb0] sm:$0xff]
  %v5324 = vld [vmem:[%s5236 + $0xb8] sm:$0xff]
  %v5325 = vld [vmem:[%s5236 + $0xc0] sm:$0xff]
  %v5326 = vld [vmem:[%s5236 + $0xc8] sm:$0xff]
  %v5327 = vld [vmem:[%s5236 + $0xd0] sm:$0xff]
  %v5328 = vld [vmem:[%s5236 + $0xd8] sm:$0xff]
  %v5329 = vld [vmem:[%s5236 + $0xe0] sm:$0xff]
  %v5330 = vld [vmem:[%s5236 + $0xe8] sm:$0xff]
  %v5331 = vld [vmem:[%s5236 + $0xf0] sm:$0xff]
  %v5332 = vld [vmem:[%s5236 + $0xf8] sm:$0xff]
  %5333 = vrot.lane.b32.xlu0 %v5237, 127
  %v5334 = vpop.permute.xlu0 %5333
  %5335 = vrot.lane.b32.xlu0 %v5238, 127
  %v5336 = vpop.permute.xlu0 %5335
  %5337 = vrot.lane.b32.xlu0 %v5239, 127
  %v5338 = vpop.permute.xlu0 %5337
  %5339 = vrot.lane.b32.xlu0 %v5240, 127
  %v5340 = vpop.permute.xlu0 %5339
  %5341 = vrot.lane.b32.xlu0 %v5241, 127
  %v5342 = vpop.permute.xlu0 %5341
  %5343 = vrot.lane.b32.xlu0 %v5242, 127
  %v5344 = vpop.permute.xlu0 %5343
  %5345 = vrot.lane.b32.xlu0 %v5243, 127
  %v5346 = vpop.permute.xlu0 %5345
  %5347 = vrot.lane.b32.xlu0 %v5244, 127
  %v5348 = vpop.permute.xlu0 %5347
  %5349 = vrot.lane.b32.xlu0 %v5245, 127
  %v5350 = vpop.permute.xlu0 %5349
  %5351 = vrot.lane.b32.xlu0 %v5246, 127
  %v5352 = vpop.permute.xlu0 %5351
  %5353 = vrot.lane.b32.xlu0 %v5247, 127
  %v5354 = vpop.permute.xlu0 %5353
  %5355 = vrot.lane.b32.xlu0 %v5248, 127
  %v5356 = vpop.permute.xlu0 %5355
  %5357 = vrot.lane.b32.xlu0 %v5249, 127
  %v5358 = vpop.permute.xlu0 %5357
  %5359 = vrot.lane.b32.xlu0 %v5250, 127
  %v5360 = vpop.permute.xlu0 %5359
  %5361 = vrot.lane.b32.xlu0 %v5251, 127
  %v5362 = vpop.permute.xlu0 %5361
  %5363 = vrot.lane.b32.xlu0 %v5252, 127
  %v5364 = vpop.permute.xlu0 %5363
  %5365 = vrot.lane.b32.xlu0 %v5253, 127
  %v5366 = vpop.permute.xlu0 %5365
  %5367 = vrot.lane.b32.xlu0 %v5254, 127
  %v5368 = vpop.permute.xlu0 %5367
  %5369 = vrot.lane.b32.xlu0 %v5255, 127
  %v5370 = vpop.permute.xlu0 %5369
  %5371 = vrot.lane.b32.xlu0 %v5256, 127
  %v5372 = vpop.permute.xlu0 %5371
  %5373 = vrot.lane.b32.xlu0 %v5257, 127
  %v5374 = vpop.permute.xlu0 %5373
  %5375 = vrot.lane.b32.xlu0 %v5258, 127
  %v5376 = vpop.permute.xlu0 %5375
  %5377 = vrot.lane.b32.xlu0 %v5259, 127
  %v5378 = vpop.permute.xlu0 %5377
  %5379 = vrot.lane.b32.xlu0 %v5260, 127
  %v5380 = vpop.permute.xlu0 %5379
  %5381 = vrot.lane.b32.xlu0 %v5261, 127
  %v5382 = vpop.permute.xlu0 %5381
  %5383 = vrot.lane.b32.xlu0 %v5262, 127
  %v5384 = vpop.permute.xlu0 %5383
  %5385 = vrot.lane.b32.xlu0 %v5263, 127
  %v5386 = vpop.permute.xlu0 %5385
  %5387 = vrot.lane.b32.xlu0 %v5264, 127
  %v5388 = vpop.permute.xlu0 %5387
  %5389 = vrot.lane.b32.xlu0 %v5265, 127
  %v5390 = vpop.permute.xlu0 %5389
  %5391 = vrot.lane.b32.xlu0 %v5266, 127
  %v5392 = vpop.permute.xlu0 %5391
  %5393 = vrot.lane.b32.xlu0 %v5267, 127
  %v5394 = vpop.permute.xlu0 %5393
  %5395 = vrot.lane.b32.xlu0 %v5268, 127
  %v5396 = vpop.permute.xlu0 %5395
  %v5397 = vsel %vm38, %v5237, %v5334
  %v5398 = vsel %vm38, %v5238, %v5336
  %v5399 = vsel %vm38, %v5239, %v5338
  %v5400 = vsel %vm38, %v5240, %v5340
  %v5401 = vsel %vm38, %v5241, %v5342
  %v5402 = vsel %vm38, %v5242, %v5344
  %v5403 = vsel %vm38, %v5243, %v5346
  %v5404 = vsel %vm38, %v5244, %v5348
  %v5405 = vsel %vm38, %v5245, %v5350
  %v5406 = vsel %vm38, %v5246, %v5352
  %v5407 = vsel %vm38, %v5247, %v5354
  %v5408 = vsel %vm38, %v5248, %v5356
  %v5409 = vsel %vm38, %v5249, %v5358
  %v5410 = vsel %vm38, %v5250, %v5360
  %v5411 = vsel %vm38, %v5251, %v5362
  %v5412 = vsel %vm38, %v5252, %v5364
  %v5413 = vsel %vm38, %v5253, %v5366
  %v5414 = vsel %vm38, %v5254, %v5368
  %v5415 = vsel %vm38, %v5255, %v5370
  %v5416 = vsel %vm38, %v5256, %v5372
  %v5417 = vsel %vm38, %v5257, %v5374
  %v5418 = vsel %vm38, %v5258, %v5376
  %v5419 = vsel %vm38, %v5259, %v5378
  %v5420 = vsel %vm38, %v5260, %v5380
  %v5421 = vsel %vm38, %v5261, %v5382
  %v5422 = vsel %vm38, %v5262, %v5384
  %v5423 = vsel %vm38, %v5263, %v5386
  %v5424 = vsel %vm38, %v5264, %v5388
  %v5425 = vsel %vm38, %v5265, %v5390
  %v5426 = vsel %vm38, %v5266, %v5392
  %v5427 = vsel %vm38, %v5267, %v5394
  %v5428 = vsel %vm38, %v5268, %v5396
  %5429 = vrot.lane.b32.xlu0 %v5237, 1
  %v5430 = vpop.permute.xlu0 %5429
  %5431 = vrot.lane.b32.xlu0 %v5238, 1
  %v5432 = vpop.permute.xlu0 %5431
  %5433 = vrot.lane.b32.xlu0 %v5239, 1
  %v5434 = vpop.permute.xlu0 %5433
  %5435 = vrot.lane.b32.xlu0 %v5240, 1
  %v5436 = vpop.permute.xlu0 %5435
  %5437 = vrot.lane.b32.xlu0 %v5241, 1
  %v5438 = vpop.permute.xlu0 %5437
  %5439 = vrot.lane.b32.xlu0 %v5242, 1
  %v5440 = vpop.permute.xlu0 %5439
  %5441 = vrot.lane.b32.xlu0 %v5243, 1
  %v5442 = vpop.permute.xlu0 %5441
  %5443 = vrot.lane.b32.xlu0 %v5244, 1
  %v5444 = vpop.permute.xlu0 %5443
  %5445 = vrot.lane.b32.xlu0 %v5245, 1
  %v5446 = vpop.permute.xlu0 %5445
  %5447 = vrot.lane.b32.xlu0 %v5246, 1
  %v5448 = vpop.permute.xlu0 %5447
  %5449 = vrot.lane.b32.xlu0 %v5247, 1
  %v5450 = vpop.permute.xlu0 %5449
  %5451 = vrot.lane.b32.xlu0 %v5248, 1
  %v5452 = vpop.permute.xlu0 %5451
  %5453 = vrot.lane.b32.xlu0 %v5249, 1
  %v5454 = vpop.permute.xlu0 %5453
  %5455 = vrot.lane.b32.xlu0 %v5250, 1
  %v5456 = vpop.permute.xlu0 %5455
  %5457 = vrot.lane.b32.xlu0 %v5251, 1
  %v5458 = vpop.permute.xlu0 %5457
  %5459 = vrot.lane.b32.xlu0 %v5252, 1
  %v5460 = vpop.permute.xlu0 %5459
  %5461 = vrot.lane.b32.xlu0 %v5253, 1
  %v5462 = vpop.permute.xlu0 %5461
  %5463 = vrot.lane.b32.xlu0 %v5254, 1
  %v5464 = vpop.permute.xlu0 %5463
  %5465 = vrot.lane.b32.xlu0 %v5255, 1
  %v5466 = vpop.permute.xlu0 %5465
  %5467 = vrot.lane.b32.xlu0 %v5256, 1
  %v5468 = vpop.permute.xlu0 %5467
  %5469 = vrot.lane.b32.xlu0 %v5257, 1
  %v5470 = vpop.permute.xlu0 %5469
  %5471 = vrot.lane.b32.xlu0 %v5258, 1
  %v5472 = vpop.permute.xlu0 %5471
  %5473 = vrot.lane.b32.xlu0 %v5259, 1
  %v5474 = vpop.permute.xlu0 %5473
  %5475 = vrot.lane.b32.xlu0 %v5260, 1
  %v5476 = vpop.permute.xlu0 %5475
  %5477 = vrot.lane.b32.xlu0 %v5261, 1
  %v5478 = vpop.permute.xlu0 %5477
  %5479 = vrot.lane.b32.xlu0 %v5262, 1
  %v5480 = vpop.permute.xlu0 %5479
  %5481 = vrot.lane.b32.xlu0 %v5263, 1
  %v5482 = vpop.permute.xlu0 %5481
  %5483 = vrot.lane.b32.xlu0 %v5264, 1
  %v5484 = vpop.permute.xlu0 %5483
  %5485 = vrot.lane.b32.xlu0 %v5265, 1
  %v5486 = vpop.permute.xlu0 %5485
  %5487 = vrot.lane.b32.xlu0 %v5266, 1
  %v5488 = vpop.permute.xlu0 %5487
  %5489 = vrot.lane.b32.xlu0 %v5267, 1
  %v5490 = vpop.permute.xlu0 %5489
  %5491 = vrot.lane.b32.xlu0 %v5268, 1
  %v5492 = vpop.permute.xlu0 %5491
  %v5493 = vsel %vm37, %v5237, %v5430
  %v5494 = vsel %vm37, %v5238, %v5432
  %v5495 = vsel %vm37, %v5239, %v5434
  %v5496 = vsel %vm37, %v5240, %v5436
  %v5497 = vsel %vm37, %v5241, %v5438
  %v5498 = vsel %vm37, %v5242, %v5440
  %v5499 = vsel %vm37, %v5243, %v5442
  %v5500 = vsel %vm37, %v5244, %v5444
  %v5501 = vsel %vm37, %v5245, %v5446
  %v5502 = vsel %vm37, %v5246, %v5448
  %v5503 = vsel %vm37, %v5247, %v5450
  %v5504 = vsel %vm37, %v5248, %v5452
  %v5505 = vsel %vm37, %v5249, %v5454
  %v5506 = vsel %vm37, %v5250, %v5456
  %v5507 = vsel %vm37, %v5251, %v5458
  %v5508 = vsel %vm37, %v5252, %v5460
  %v5509 = vsel %vm37, %v5253, %v5462
  %v5510 = vsel %vm37, %v5254, %v5464
  %v5511 = vsel %vm37, %v5255, %v5466
  %v5512 = vsel %vm37, %v5256, %v5468
  %v5513 = vsel %vm37, %v5257, %v5470
  %v5514 = vsel %vm37, %v5258, %v5472
  %v5515 = vsel %vm37, %v5259, %v5474
  %v5516 = vsel %vm37, %v5260, %v5476
  %v5517 = vsel %vm37, %v5261, %v5478
  %v5518 = vsel %vm37, %v5262, %v5480
  %v5519 = vsel %vm37, %v5263, %v5482
  %v5520 = vsel %vm37, %v5264, %v5484
  %v5521 = vsel %vm37, %v5265, %v5486
  %v5522 = vsel %vm37, %v5266, %v5488
  %v5523 = vsel %vm37, %v5267, %v5490
  %v5524 = vsel %vm37, %v5268, %v5492
  %v5525 = vsub.f32 %v5397, %v5493
  %v5526 = vsub.f32 %v5398, %v5494
  %v5527 = vsub.f32 %v5399, %v5495
  %v5528 = vsub.f32 %v5400, %v5496
  %v5529 = vsub.f32 %v5401, %v5497
  %v5530 = vsub.f32 %v5402, %v5498
  %v5531 = vsub.f32 %v5403, %v5499
  %v5532 = vsub.f32 %v5404, %v5500
  %v5533 = vsub.f32 %v5405, %v5501
  %v5534 = vsub.f32 %v5406, %v5502
  %v5535 = vsub.f32 %v5407, %v5503
  %v5536 = vsub.f32 %v5408, %v5504
  %v5537 = vsub.f32 %v5409, %v5505
  %v5538 = vsub.f32 %v5410, %v5506
  %v5539 = vsub.f32 %v5411, %v5507
  %v5540 = vsub.f32 %v5412, %v5508
  %v5541 = vsub.f32 %v5413, %v5509
  %v5542 = vsub.f32 %v5414, %v5510
  %v5543 = vsub.f32 %v5415, %v5511
  %v5544 = vsub.f32 %v5416, %v5512
  %v5545 = vsub.f32 %v5417, %v5513
  %v5546 = vsub.f32 %v5418, %v5514
  %v5547 = vsub.f32 %v5419, %v5515
  %v5548 = vsub.f32 %v5420, %v5516
  %v5549 = vsub.f32 %v5421, %v5517
  %v5550 = vsub.f32 %v5422, %v5518
  %v5551 = vsub.f32 %v5423, %v5519
  %v5552 = vsub.f32 %v5424, %v5520
  %v5553 = vsub.f32 %v5425, %v5521
  %v5554 = vsub.f32 %v5426, %v5522
  %v5555 = vsub.f32 %v5427, %v5523
  %v5556 = vsub.f32 %v5428, %v5524
  %v5557 = vsub.f32 %v5269, %v5301
  %v5558 = vsub.f32 %v5270, %v5302
  %v5559 = vsub.f32 %v5271, %v5303
  %v5560 = vsub.f32 %v5272, %v5304
  %v5561 = vsub.f32 %v5273, %v5305
  %v5562 = vsub.f32 %v5274, %v5306
  %v5563 = vsub.f32 %v5275, %v5307
  %v5564 = vsub.f32 %v5276, %v5308
  %v5565 = vsub.f32 %v5277, %v5309
  %v5566 = vsub.f32 %v5278, %v5310
  %v5567 = vsub.f32 %v5279, %v5311
  %v5568 = vsub.f32 %v5280, %v5312
  %v5569 = vsub.f32 %v5281, %v5313
  %v5570 = vsub.f32 %v5282, %v5314
  %v5571 = vsub.f32 %v5283, %v5315
  %v5572 = vsub.f32 %v5284, %v5316
  %v5573 = vsub.f32 %v5285, %v5317
  %v5574 = vsub.f32 %v5286, %v5318
  %v5575 = vsub.f32 %v5287, %v5319
  %v5576 = vsub.f32 %v5288, %v5320
  %v5577 = vsub.f32 %v5289, %v5321
  %v5578 = vsub.f32 %v5290, %v5322
  %v5579 = vsub.f32 %v5291, %v5323
  %v5580 = vsub.f32 %v5292, %v5324
  %v5581 = vsub.f32 %v5293, %v5325
  %v5582 = vsub.f32 %v5294, %v5326
  %v5583 = vsub.f32 %v5295, %v5327
  %v5584 = vsub.f32 %v5296, %v5328
  %v5585 = vsub.f32 %v5297, %v5329
  %v5586 = vsub.f32 %v5298, %v5330
  %v5587 = vsub.f32 %v5299, %v5331
  %v5588 = vsub.f32 %v5300, %v5332
  %v5589 = vmul.f32 %v5525, %v5525
  %v5590 = vmul.f32 %v5526, %v5526
  %v5591 = vmul.f32 %v5527, %v5527
  %v5592 = vmul.f32 %v5528, %v5528
  %v5593 = vmul.f32 %v5529, %v5529
  %v5594 = vmul.f32 %v5530, %v5530
  %v5595 = vmul.f32 %v5531, %v5531
  %v5596 = vmul.f32 %v5532, %v5532
  %v5597 = vmul.f32 %v5533, %v5533
  %v5598 = vmul.f32 %v5534, %v5534
  %v5599 = vmul.f32 %v5535, %v5535
  %v5600 = vmul.f32 %v5536, %v5536
  %v5601 = vmul.f32 %v5537, %v5537
  %v5602 = vmul.f32 %v5538, %v5538
  %v5603 = vmul.f32 %v5539, %v5539
  %v5604 = vmul.f32 %v5540, %v5540
  %v5605 = vmul.f32 %v5541, %v5541
  %v5606 = vmul.f32 %v5542, %v5542
  %v5607 = vmul.f32 %v5543, %v5543
  %v5608 = vmul.f32 %v5544, %v5544
  %v5609 = vmul.f32 %v5545, %v5545
  %v5610 = vmul.f32 %v5546, %v5546
  %v5611 = vmul.f32 %v5547, %v5547
  %v5612 = vmul.f32 %v5548, %v5548
  %v5613 = vmul.f32 %v5549, %v5549
  %v5614 = vmul.f32 %v5550, %v5550
  %v5615 = vmul.f32 %v5551, %v5551
  %v5616 = vmul.f32 %v5552, %v5552
  %v5617 = vmul.f32 %v5553, %v5553
  %v5618 = vmul.f32 %v5554, %v5554
  %v5619 = vmul.f32 %v5555, %v5555
  %v5620 = vmul.f32 %v5556, %v5556
  %v5621 = vmul.f32 %v5557, %v5557
  %v5622 = vmul.f32 %v5558, %v5558
  %v5623 = vmul.f32 %v5559, %v5559
  %v5624 = vmul.f32 %v5560, %v5560
  %v5625 = vmul.f32 %v5561, %v5561
  %v5626 = vmul.f32 %v5562, %v5562
  %v5627 = vmul.f32 %v5563, %v5563
  %v5628 = vmul.f32 %v5564, %v5564
  %v5629 = vmul.f32 %v5565, %v5565
  %v5630 = vmul.f32 %v5566, %v5566
  %v5631 = vmul.f32 %v5567, %v5567
  %v5632 = vmul.f32 %v5568, %v5568
  %v5633 = vmul.f32 %v5569, %v5569
  %v5634 = vmul.f32 %v5570, %v5570
  %v5635 = vmul.f32 %v5571, %v5571
  %v5636 = vmul.f32 %v5572, %v5572
  %v5637 = vmul.f32 %v5573, %v5573
  %v5638 = vmul.f32 %v5574, %v5574
  %v5639 = vmul.f32 %v5575, %v5575
  %v5640 = vmul.f32 %v5576, %v5576
  %v5641 = vmul.f32 %v5577, %v5577
  %v5642 = vmul.f32 %v5578, %v5578
  %v5643 = vmul.f32 %v5579, %v5579
  %v5644 = vmul.f32 %v5580, %v5580
  %v5645 = vmul.f32 %v5581, %v5581
  %v5646 = vmul.f32 %v5582, %v5582
  %v5647 = vmul.f32 %v5583, %v5583
  %v5648 = vmul.f32 %v5584, %v5584
  %v5649 = vmul.f32 %v5585, %v5585
  %v5650 = vmul.f32 %v5586, %v5586
  %v5651 = vmul.f32 %v5587, %v5587
  %v5652 = vmul.f32 %v5588, %v5588
  %v5653 = vadd.f32 %v5589, %v5621
  %v5654 = vadd.f32 %v5590, %v5622
  %v5655 = vadd.f32 %v5591, %v5623
  %v5656 = vadd.f32 %v5592, %v5624
  %v5657 = vadd.f32 %v5593, %v5625
  %v5658 = vadd.f32 %v5594, %v5626
  %v5659 = vadd.f32 %v5595, %v5627
  %v5660 = vadd.f32 %v5596, %v5628
  %v5661 = vadd.f32 %v5597, %v5629
  %v5662 = vadd.f32 %v5598, %v5630
  %v5663 = vadd.f32 %v5599, %v5631
  %v5664 = vadd.f32 %v5600, %v5632
  %v5665 = vadd.f32 %v5601, %v5633
  %v5666 = vadd.f32 %v5602, %v5634
  %v5667 = vadd.f32 %v5603, %v5635
  %v5668 = vadd.f32 %v5604, %v5636
  %v5669 = vadd.f32 %v5605, %v5637
  %v5670 = vadd.f32 %v5606, %v5638
  %v5671 = vadd.f32 %v5607, %v5639
  %v5672 = vadd.f32 %v5608, %v5640
  %v5673 = vadd.f32 %v5609, %v5641
  %v5674 = vadd.f32 %v5610, %v5642
  %v5675 = vadd.f32 %v5611, %v5643
  %v5676 = vadd.f32 %v5612, %v5644
  %v5677 = vadd.f32 %v5613, %v5645
  %v5678 = vadd.f32 %v5614, %v5646
  %v5679 = vadd.f32 %v5615, %v5647
  %v5680 = vadd.f32 %v5616, %v5648
  %v5681 = vadd.f32 %v5617, %v5649
  %v5682 = vadd.f32 %v5618, %v5650
  %v5683 = vadd.f32 %v5619, %v5651
  %v5684 = vadd.f32 %v5620, %v5652
  %s5685 = scalar_lea.vmem %s0, 1056
  %v5686 = vld [vmem:[%s5685 + $0x1] sm:$0xff]
  %v5687 = vld [vmem:[%s5685 + $0x9] sm:$0xff]
  %v5688 = vld [vmem:[%s5685 + $0x11] sm:$0xff]
  %v5689 = vld [vmem:[%s5685 + $0x19] sm:$0xff]
  %v5690 = vld [vmem:[%s5685 + $0x21] sm:$0xff]
  %v5691 = vld [vmem:[%s5685 + $0x29] sm:$0xff]
  %v5692 = vld [vmem:[%s5685 + $0x31] sm:$0xff]
  %v5693 = vld [vmem:[%s5685 + $0x39] sm:$0xff]
  %v5694 = vld [vmem:[%s5685 + $0x41] sm:$0xff]
  %v5695 = vld [vmem:[%s5685 + $0x49] sm:$0xff]
  %v5696 = vld [vmem:[%s5685 + $0x51] sm:$0xff]
  %v5697 = vld [vmem:[%s5685 + $0x59] sm:$0xff]
  %v5698 = vld [vmem:[%s5685 + $0x61] sm:$0xff]
  %v5699 = vld [vmem:[%s5685 + $0x69] sm:$0xff]
  %v5700 = vld [vmem:[%s5685 + $0x71] sm:$0xff]
  %v5701 = vld [vmem:[%s5685 + $0x79] sm:$0xff]
  %v5702 = vld [vmem:[%s5685 + $0x81] sm:$0xff]
  %v5703 = vld [vmem:[%s5685 + $0x89] sm:$0xff]
  %v5704 = vld [vmem:[%s5685 + $0x91] sm:$0xff]
  %v5705 = vld [vmem:[%s5685 + $0x99] sm:$0xff]
  %v5706 = vld [vmem:[%s5685 + $0xa1] sm:$0xff]
  %v5707 = vld [vmem:[%s5685 + $0xa9] sm:$0xff]
  %v5708 = vld [vmem:[%s5685 + $0xb1] sm:$0xff]
  %v5709 = vld [vmem:[%s5685 + $0xb9] sm:$0xff]
  %v5710 = vld [vmem:[%s5685 + $0xc1] sm:$0xff]
  %v5711 = vld [vmem:[%s5685 + $0xc9] sm:$0xff]
  %v5712 = vld [vmem:[%s5685 + $0xd1] sm:$0xff]
  %v5713 = vld [vmem:[%s5685 + $0xd9] sm:$0xff]
  %v5714 = vld [vmem:[%s5685 + $0xe1] sm:$0xff]
  %v5715 = vld [vmem:[%s5685 + $0xe9] sm:$0xff]
  %v5716 = vld [vmem:[%s5685 + $0xf1] sm:$0xff]
  %v5717 = vld [vmem:[%s5685 + $0xf9] sm:$0xff]
  %v5718 = vld [vmem:[%s5685 + $0x2] sm:$0xff]
  %v5719 = vld [vmem:[%s5685 + $0xa] sm:$0xff]
  %v5720 = vld [vmem:[%s5685 + $0x12] sm:$0xff]
  %v5721 = vld [vmem:[%s5685 + $0x1a] sm:$0xff]
  %v5722 = vld [vmem:[%s5685 + $0x22] sm:$0xff]
  %v5723 = vld [vmem:[%s5685 + $0x2a] sm:$0xff]
  %v5724 = vld [vmem:[%s5685 + $0x32] sm:$0xff]
  %v5725 = vld [vmem:[%s5685 + $0x3a] sm:$0xff]
  %v5726 = vld [vmem:[%s5685 + $0x42] sm:$0xff]
  %v5727 = vld [vmem:[%s5685 + $0x4a] sm:$0xff]
  %v5728 = vld [vmem:[%s5685 + $0x52] sm:$0xff]
  %v5729 = vld [vmem:[%s5685 + $0x5a] sm:$0xff]
  %v5730 = vld [vmem:[%s5685 + $0x62] sm:$0xff]
  %v5731 = vld [vmem:[%s5685 + $0x6a] sm:$0xff]
  %v5732 = vld [vmem:[%s5685 + $0x72] sm:$0xff]
  %v5733 = vld [vmem:[%s5685 + $0x7a] sm:$0xff]
  %v5734 = vld [vmem:[%s5685 + $0x82] sm:$0xff]
  %v5735 = vld [vmem:[%s5685 + $0x8a] sm:$0xff]
  %v5736 = vld [vmem:[%s5685 + $0x92] sm:$0xff]
  %v5737 = vld [vmem:[%s5685 + $0x9a] sm:$0xff]
  %v5738 = vld [vmem:[%s5685 + $0xa2] sm:$0xff]
  %v5739 = vld [vmem:[%s5685 + $0xaa] sm:$0xff]
  %v5740 = vld [vmem:[%s5685 + $0xb2] sm:$0xff]
  %v5741 = vld [vmem:[%s5685 + $0xba] sm:$0xff]
  %v5742 = vld [vmem:[%s5685 + $0xc2] sm:$0xff]
  %v5743 = vld [vmem:[%s5685 + $0xca] sm:$0xff]
  %v5744 = vld [vmem:[%s5685 + $0xd2] sm:$0xff]
  %v5745 = vld [vmem:[%s5685 + $0xda] sm:$0xff]
  %v5746 = vld [vmem:[%s5685 + $0xe2] sm:$0xff]
  %v5747 = vld [vmem:[%s5685 + $0xea] sm:$0xff]
  %v5748 = vld [vmem:[%s5685 + $0xf2] sm:$0xff]
  %v5749 = vld [vmem:[%s5685 + $0xfa] sm:$0xff]
  %v5750 = vld [vmem:[%s5685] sm:$0xff]
  %v5751 = vld [vmem:[%s5685 + $0x8] sm:$0xff]
  %v5752 = vld [vmem:[%s5685 + $0x10] sm:$0xff]
  %v5753 = vld [vmem:[%s5685 + $0x18] sm:$0xff]
  %v5754 = vld [vmem:[%s5685 + $0x20] sm:$0xff]
  %v5755 = vld [vmem:[%s5685 + $0x28] sm:$0xff]
  %v5756 = vld [vmem:[%s5685 + $0x30] sm:$0xff]
  %v5757 = vld [vmem:[%s5685 + $0x38] sm:$0xff]
  %v5758 = vld [vmem:[%s5685 + $0x40] sm:$0xff]
  %v5759 = vld [vmem:[%s5685 + $0x48] sm:$0xff]
  %v5760 = vld [vmem:[%s5685 + $0x50] sm:$0xff]
  %v5761 = vld [vmem:[%s5685 + $0x58] sm:$0xff]
  %v5762 = vld [vmem:[%s5685 + $0x60] sm:$0xff]
  %v5763 = vld [vmem:[%s5685 + $0x68] sm:$0xff]
  %v5764 = vld [vmem:[%s5685 + $0x70] sm:$0xff]
  %v5765 = vld [vmem:[%s5685 + $0x78] sm:$0xff]
  %v5766 = vld [vmem:[%s5685 + $0x80] sm:$0xff]
  %v5767 = vld [vmem:[%s5685 + $0x88] sm:$0xff]
  %v5768 = vld [vmem:[%s5685 + $0x90] sm:$0xff]
  %v5769 = vld [vmem:[%s5685 + $0x98] sm:$0xff]
  %v5770 = vld [vmem:[%s5685 + $0xa0] sm:$0xff]
  %v5771 = vld [vmem:[%s5685 + $0xa8] sm:$0xff]
  %v5772 = vld [vmem:[%s5685 + $0xb0] sm:$0xff]
  %v5773 = vld [vmem:[%s5685 + $0xb8] sm:$0xff]
  %v5774 = vld [vmem:[%s5685 + $0xc0] sm:$0xff]
  %v5775 = vld [vmem:[%s5685 + $0xc8] sm:$0xff]
  %v5776 = vld [vmem:[%s5685 + $0xd0] sm:$0xff]
  %v5777 = vld [vmem:[%s5685 + $0xd8] sm:$0xff]
  %v5778 = vld [vmem:[%s5685 + $0xe0] sm:$0xff]
  %v5779 = vld [vmem:[%s5685 + $0xe8] sm:$0xff]
  %v5780 = vld [vmem:[%s5685 + $0xf0] sm:$0xff]
  %v5781 = vld [vmem:[%s5685 + $0xf8] sm:$0xff]
  %5782 = vrot.lane.b32.xlu0 %v5686, 127
  %v5783 = vpop.permute.xlu0 %5782
  %5784 = vrot.lane.b32.xlu0 %v5687, 127
  %v5785 = vpop.permute.xlu0 %5784
  %5786 = vrot.lane.b32.xlu0 %v5688, 127
  %v5787 = vpop.permute.xlu0 %5786
  %5788 = vrot.lane.b32.xlu0 %v5689, 127
  %v5789 = vpop.permute.xlu0 %5788
  %5790 = vrot.lane.b32.xlu0 %v5690, 127
  %v5791 = vpop.permute.xlu0 %5790
  %5792 = vrot.lane.b32.xlu0 %v5691, 127
  %v5793 = vpop.permute.xlu0 %5792
  %5794 = vrot.lane.b32.xlu0 %v5692, 127
  %v5795 = vpop.permute.xlu0 %5794
  %5796 = vrot.lane.b32.xlu0 %v5693, 127
  %v5797 = vpop.permute.xlu0 %5796
  %5798 = vrot.lane.b32.xlu0 %v5694, 127
  %v5799 = vpop.permute.xlu0 %5798
  %5800 = vrot.lane.b32.xlu0 %v5695, 127
  %v5801 = vpop.permute.xlu0 %5800
  %5802 = vrot.lane.b32.xlu0 %v5696, 127
  %v5803 = vpop.permute.xlu0 %5802
  %5804 = vrot.lane.b32.xlu0 %v5697, 127
  %v5805 = vpop.permute.xlu0 %5804
  %5806 = vrot.lane.b32.xlu0 %v5698, 127
  %v5807 = vpop.permute.xlu0 %5806
  %5808 = vrot.lane.b32.xlu0 %v5699, 127
  %v5809 = vpop.permute.xlu0 %5808
  %5810 = vrot.lane.b32.xlu0 %v5700, 127
  %v5811 = vpop.permute.xlu0 %5810
  %5812 = vrot.lane.b32.xlu0 %v5701, 127
  %v5813 = vpop.permute.xlu0 %5812
  %5814 = vrot.lane.b32.xlu0 %v5702, 127
  %v5815 = vpop.permute.xlu0 %5814
  %5816 = vrot.lane.b32.xlu0 %v5703, 127
  %v5817 = vpop.permute.xlu0 %5816
  %5818 = vrot.lane.b32.xlu0 %v5704, 127
  %v5819 = vpop.permute.xlu0 %5818
  %5820 = vrot.lane.b32.xlu0 %v5705, 127
  %v5821 = vpop.permute.xlu0 %5820
  %5822 = vrot.lane.b32.xlu0 %v5706, 127
  %v5823 = vpop.permute.xlu0 %5822
  %5824 = vrot.lane.b32.xlu0 %v5707, 127
  %v5825 = vpop.permute.xlu0 %5824
  %5826 = vrot.lane.b32.xlu0 %v5708, 127
  %v5827 = vpop.permute.xlu0 %5826
  %5828 = vrot.lane.b32.xlu0 %v5709, 127
  %v5829 = vpop.permute.xlu0 %5828
  %5830 = vrot.lane.b32.xlu0 %v5710, 127
  %v5831 = vpop.permute.xlu0 %5830
  %5832 = vrot.lane.b32.xlu0 %v5711, 127
  %v5833 = vpop.permute.xlu0 %5832
  %5834 = vrot.lane.b32.xlu0 %v5712, 127
  %v5835 = vpop.permute.xlu0 %5834
  %5836 = vrot.lane.b32.xlu0 %v5713, 127
  %v5837 = vpop.permute.xlu0 %5836
  %5838 = vrot.lane.b32.xlu0 %v5714, 127
  %v5839 = vpop.permute.xlu0 %5838
  %5840 = vrot.lane.b32.xlu0 %v5715, 127
  %v5841 = vpop.permute.xlu0 %5840
  %5842 = vrot.lane.b32.xlu0 %v5716, 127
  %v5843 = vpop.permute.xlu0 %5842
  %5844 = vrot.lane.b32.xlu0 %v5717, 127
  %v5845 = vpop.permute.xlu0 %5844
  %v5846 = vsel %vm38, %v5686, %v5783
  %v5847 = vsel %vm38, %v5687, %v5785
  %v5848 = vsel %vm38, %v5688, %v5787
  %v5849 = vsel %vm38, %v5689, %v5789
  %v5850 = vsel %vm38, %v5690, %v5791
  %v5851 = vsel %vm38, %v5691, %v5793
  %v5852 = vsel %vm38, %v5692, %v5795
  %v5853 = vsel %vm38, %v5693, %v5797
  %v5854 = vsel %vm38, %v5694, %v5799
  %v5855 = vsel %vm38, %v5695, %v5801
  %v5856 = vsel %vm38, %v5696, %v5803
  %v5857 = vsel %vm38, %v5697, %v5805
  %v5858 = vsel %vm38, %v5698, %v5807
  %v5859 = vsel %vm38, %v5699, %v5809
  %v5860 = vsel %vm38, %v5700, %v5811
  %v5861 = vsel %vm38, %v5701, %v5813
  %v5862 = vsel %vm38, %v5702, %v5815
  %v5863 = vsel %vm38, %v5703, %v5817
  %v5864 = vsel %vm38, %v5704, %v5819
  %v5865 = vsel %vm38, %v5705, %v5821
  %v5866 = vsel %vm38, %v5706, %v5823
  %v5867 = vsel %vm38, %v5707, %v5825
  %v5868 = vsel %vm38, %v5708, %v5827
  %v5869 = vsel %vm38, %v5709, %v5829
  %v5870 = vsel %vm38, %v5710, %v5831
  %v5871 = vsel %vm38, %v5711, %v5833
  %v5872 = vsel %vm38, %v5712, %v5835
  %v5873 = vsel %vm38, %v5713, %v5837
  %v5874 = vsel %vm38, %v5714, %v5839
  %v5875 = vsel %vm38, %v5715, %v5841
  %v5876 = vsel %vm38, %v5716, %v5843
  %v5877 = vsel %vm38, %v5717, %v5845
  %5878 = vrot.lane.b32.xlu0 %v5686, 1
  %v5879 = vpop.permute.xlu0 %5878
  %5880 = vrot.lane.b32.xlu0 %v5687, 1
  %v5881 = vpop.permute.xlu0 %5880
  %5882 = vrot.lane.b32.xlu0 %v5688, 1
  %v5883 = vpop.permute.xlu0 %5882
  %5884 = vrot.lane.b32.xlu0 %v5689, 1
  %v5885 = vpop.permute.xlu0 %5884
  %5886 = vrot.lane.b32.xlu0 %v5690, 1
  %v5887 = vpop.permute.xlu0 %5886
  %5888 = vrot.lane.b32.xlu0 %v5691, 1
  %v5889 = vpop.permute.xlu0 %5888
  %5890 = vrot.lane.b32.xlu0 %v5692, 1
  %v5891 = vpop.permute.xlu0 %5890
  %5892 = vrot.lane.b32.xlu0 %v5693, 1
  %v5893 = vpop.permute.xlu0 %5892
  %5894 = vrot.lane.b32.xlu0 %v5694, 1
  %v5895 = vpop.permute.xlu0 %5894
  %5896 = vrot.lane.b32.xlu0 %v5695, 1
  %v5897 = vpop.permute.xlu0 %5896
  %5898 = vrot.lane.b32.xlu0 %v5696, 1
  %v5899 = vpop.permute.xlu0 %5898
  %5900 = vrot.lane.b32.xlu0 %v5697, 1
  %v5901 = vpop.permute.xlu0 %5900
  %5902 = vrot.lane.b32.xlu0 %v5698, 1
  %v5903 = vpop.permute.xlu0 %5902
  %5904 = vrot.lane.b32.xlu0 %v5699, 1
  %v5905 = vpop.permute.xlu0 %5904
  %5906 = vrot.lane.b32.xlu0 %v5700, 1
  %v5907 = vpop.permute.xlu0 %5906
  %5908 = vrot.lane.b32.xlu0 %v5701, 1
  %v5909 = vpop.permute.xlu0 %5908
  %5910 = vrot.lane.b32.xlu0 %v5702, 1
  %v5911 = vpop.permute.xlu0 %5910
  %5912 = vrot.lane.b32.xlu0 %v5703, 1
  %v5913 = vpop.permute.xlu0 %5912
  %5914 = vrot.lane.b32.xlu0 %v5704, 1
  %v5915 = vpop.permute.xlu0 %5914
  %5916 = vrot.lane.b32.xlu0 %v5705, 1
  %v5917 = vpop.permute.xlu0 %5916
  %5918 = vrot.lane.b32.xlu0 %v5706, 1
  %v5919 = vpop.permute.xlu0 %5918
  %5920 = vrot.lane.b32.xlu0 %v5707, 1
  %v5921 = vpop.permute.xlu0 %5920
  %5922 = vrot.lane.b32.xlu0 %v5708, 1
  %v5923 = vpop.permute.xlu0 %5922
  %5924 = vrot.lane.b32.xlu0 %v5709, 1
  %v5925 = vpop.permute.xlu0 %5924
  %5926 = vrot.lane.b32.xlu0 %v5710, 1
  %v5927 = vpop.permute.xlu0 %5926
  %5928 = vrot.lane.b32.xlu0 %v5711, 1
  %v5929 = vpop.permute.xlu0 %5928
  %5930 = vrot.lane.b32.xlu0 %v5712, 1
  %v5931 = vpop.permute.xlu0 %5930
  %5932 = vrot.lane.b32.xlu0 %v5713, 1
  %v5933 = vpop.permute.xlu0 %5932
  %5934 = vrot.lane.b32.xlu0 %v5714, 1
  %v5935 = vpop.permute.xlu0 %5934
  %5936 = vrot.lane.b32.xlu0 %v5715, 1
  %v5937 = vpop.permute.xlu0 %5936
  %5938 = vrot.lane.b32.xlu0 %v5716, 1
  %v5939 = vpop.permute.xlu0 %5938
  %5940 = vrot.lane.b32.xlu0 %v5717, 1
  %v5941 = vpop.permute.xlu0 %5940
  %v5942 = vsel %vm37, %v5686, %v5879
  %v5943 = vsel %vm37, %v5687, %v5881
  %v5944 = vsel %vm37, %v5688, %v5883
  %v5945 = vsel %vm37, %v5689, %v5885
  %v5946 = vsel %vm37, %v5690, %v5887
  %v5947 = vsel %vm37, %v5691, %v5889
  %v5948 = vsel %vm37, %v5692, %v5891
  %v5949 = vsel %vm37, %v5693, %v5893
  %v5950 = vsel %vm37, %v5694, %v5895
  %v5951 = vsel %vm37, %v5695, %v5897
  %v5952 = vsel %vm37, %v5696, %v5899
  %v5953 = vsel %vm37, %v5697, %v5901
  %v5954 = vsel %vm37, %v5698, %v5903
  %v5955 = vsel %vm37, %v5699, %v5905
  %v5956 = vsel %vm37, %v5700, %v5907
  %v5957 = vsel %vm37, %v5701, %v5909
  %v5958 = vsel %vm37, %v5702, %v5911
  %v5959 = vsel %vm37, %v5703, %v5913
  %v5960 = vsel %vm37, %v5704, %v5915
  %v5961 = vsel %vm37, %v5705, %v5917
  %v5962 = vsel %vm37, %v5706, %v5919
  %v5963 = vsel %vm37, %v5707, %v5921
  %v5964 = vsel %vm37, %v5708, %v5923
  %v5965 = vsel %vm37, %v5709, %v5925
  %v5966 = vsel %vm37, %v5710, %v5927
  %v5967 = vsel %vm37, %v5711, %v5929
  %v5968 = vsel %vm37, %v5712, %v5931
  %v5969 = vsel %vm37, %v5713, %v5933
  %v5970 = vsel %vm37, %v5714, %v5935
  %v5971 = vsel %vm37, %v5715, %v5937
  %v5972 = vsel %vm37, %v5716, %v5939
  %v5973 = vsel %vm37, %v5717, %v5941
  %v5974 = vsub.f32 %v5846, %v5942
  %v5975 = vsub.f32 %v5847, %v5943
  %v5976 = vsub.f32 %v5848, %v5944
  %v5977 = vsub.f32 %v5849, %v5945
  %v5978 = vsub.f32 %v5850, %v5946
  %v5979 = vsub.f32 %v5851, %v5947
  %v5980 = vsub.f32 %v5852, %v5948
  %v5981 = vsub.f32 %v5853, %v5949
  %v5982 = vsub.f32 %v5854, %v5950
  %v5983 = vsub.f32 %v5855, %v5951
  %v5984 = vsub.f32 %v5856, %v5952
  %v5985 = vsub.f32 %v5857, %v5953
  %v5986 = vsub.f32 %v5858, %v5954
  %v5987 = vsub.f32 %v5859, %v5955
  %v5988 = vsub.f32 %v5860, %v5956
  %v5989 = vsub.f32 %v5861, %v5957
  %v5990 = vsub.f32 %v5862, %v5958
  %v5991 = vsub.f32 %v5863, %v5959
  %v5992 = vsub.f32 %v5864, %v5960
  %v5993 = vsub.f32 %v5865, %v5961
  %v5994 = vsub.f32 %v5866, %v5962
  %v5995 = vsub.f32 %v5867, %v5963
  %v5996 = vsub.f32 %v5868, %v5964
  %v5997 = vsub.f32 %v5869, %v5965
  %v5998 = vsub.f32 %v5870, %v5966
  %v5999 = vsub.f32 %v5871, %v5967
  %v6000 = vsub.f32 %v5872, %v5968
  %v6001 = vsub.f32 %v5873, %v5969
  %v6002 = vsub.f32 %v5874, %v5970
  %v6003 = vsub.f32 %v5875, %v5971
  %v6004 = vsub.f32 %v5876, %v5972
  %v6005 = vsub.f32 %v5877, %v5973
  %v6006 = vsub.f32 %v5718, %v5750
  %v6007 = vsub.f32 %v5719, %v5751
  %v6008 = vsub.f32 %v5720, %v5752
  %v6009 = vsub.f32 %v5721, %v5753
  %v6010 = vsub.f32 %v5722, %v5754
  %v6011 = vsub.f32 %v5723, %v5755
  %v6012 = vsub.f32 %v5724, %v5756
  %v6013 = vsub.f32 %v5725, %v5757
  %v6014 = vsub.f32 %v5726, %v5758
  %v6015 = vsub.f32 %v5727, %v5759
  %v6016 = vsub.f32 %v5728, %v5760
  %v6017 = vsub.f32 %v5729, %v5761
  %v6018 = vsub.f32 %v5730, %v5762
  %v6019 = vsub.f32 %v5731, %v5763
  %v6020 = vsub.f32 %v5732, %v5764
  %v6021 = vsub.f32 %v5733, %v5765
  %v6022 = vsub.f32 %v5734, %v5766
  %v6023 = vsub.f32 %v5735, %v5767
  %v6024 = vsub.f32 %v5736, %v5768
  %v6025 = vsub.f32 %v5737, %v5769
  %v6026 = vsub.f32 %v5738, %v5770
  %v6027 = vsub.f32 %v5739, %v5771
  %v6028 = vsub.f32 %v5740, %v5772
  %v6029 = vsub.f32 %v5741, %v5773
  %v6030 = vsub.f32 %v5742, %v5774
  %v6031 = vsub.f32 %v5743, %v5775
  %v6032 = vsub.f32 %v5744, %v5776
  %v6033 = vsub.f32 %v5745, %v5777
  %v6034 = vsub.f32 %v5746, %v5778
  %v6035 = vsub.f32 %v5747, %v5779
  %v6036 = vsub.f32 %v5748, %v5780
  %v6037 = vsub.f32 %v5749, %v5781
  %v6038 = vmul.f32 %v5974, %v5974
  %v6039 = vmul.f32 %v5975, %v5975
  %v6040 = vmul.f32 %v5976, %v5976
  %v6041 = vmul.f32 %v5977, %v5977
  %v6042 = vmul.f32 %v5978, %v5978
  %v6043 = vmul.f32 %v5979, %v5979
  %v6044 = vmul.f32 %v5980, %v5980
  %v6045 = vmul.f32 %v5981, %v5981
  %v6046 = vmul.f32 %v5982, %v5982
  %v6047 = vmul.f32 %v5983, %v5983
  %v6048 = vmul.f32 %v5984, %v5984
  %v6049 = vmul.f32 %v5985, %v5985
  %v6050 = vmul.f32 %v5986, %v5986
  %v6051 = vmul.f32 %v5987, %v5987
  %v6052 = vmul.f32 %v5988, %v5988
  %v6053 = vmul.f32 %v5989, %v5989
  %v6054 = vmul.f32 %v5990, %v5990
  %v6055 = vmul.f32 %v5991, %v5991
  %v6056 = vmul.f32 %v5992, %v5992
  %v6057 = vmul.f32 %v5993, %v5993
  %v6058 = vmul.f32 %v5994, %v5994
  %v6059 = vmul.f32 %v5995, %v5995
  %v6060 = vmul.f32 %v5996, %v5996
  %v6061 = vmul.f32 %v5997, %v5997
  %v6062 = vmul.f32 %v5998, %v5998
  %v6063 = vmul.f32 %v5999, %v5999
  %v6064 = vmul.f32 %v6000, %v6000
  %v6065 = vmul.f32 %v6001, %v6001
  %v6066 = vmul.f32 %v6002, %v6002
  %v6067 = vmul.f32 %v6003, %v6003
  %v6068 = vmul.f32 %v6004, %v6004
  %v6069 = vmul.f32 %v6005, %v6005
  %v6070 = vmul.f32 %v6006, %v6006
  %v6071 = vmul.f32 %v6007, %v6007
  %v6072 = vmul.f32 %v6008, %v6008
  %v6073 = vmul.f32 %v6009, %v6009
  %v6074 = vmul.f32 %v6010, %v6010
  %v6075 = vmul.f32 %v6011, %v6011
  %v6076 = vmul.f32 %v6012, %v6012
  %v6077 = vmul.f32 %v6013, %v6013
  %v6078 = vmul.f32 %v6014, %v6014
  %v6079 = vmul.f32 %v6015, %v6015
  %v6080 = vmul.f32 %v6016, %v6016
  %v6081 = vmul.f32 %v6017, %v6017
  %v6082 = vmul.f32 %v6018, %v6018
  %v6083 = vmul.f32 %v6019, %v6019
  %v6084 = vmul.f32 %v6020, %v6020
  %v6085 = vmul.f32 %v6021, %v6021
  %v6086 = vmul.f32 %v6022, %v6022
  %v6087 = vmul.f32 %v6023, %v6023
  %v6088 = vmul.f32 %v6024, %v6024
  %v6089 = vmul.f32 %v6025, %v6025
  %v6090 = vmul.f32 %v6026, %v6026
  %v6091 = vmul.f32 %v6027, %v6027
  %v6092 = vmul.f32 %v6028, %v6028
  %v6093 = vmul.f32 %v6029, %v6029
  %v6094 = vmul.f32 %v6030, %v6030
  %v6095 = vmul.f32 %v6031, %v6031
  %v6096 = vmul.f32 %v6032, %v6032
  %v6097 = vmul.f32 %v6033, %v6033
  %v6098 = vmul.f32 %v6034, %v6034
  %v6099 = vmul.f32 %v6035, %v6035
  %v6100 = vmul.f32 %v6036, %v6036
  %v6101 = vmul.f32 %v6037, %v6037
  %v6102 = vadd.f32 %v6038, %v6070
  %v6103 = vadd.f32 %v6039, %v6071
  %v6104 = vadd.f32 %v6040, %v6072
  %v6105 = vadd.f32 %v6041, %v6073
  %v6106 = vadd.f32 %v6042, %v6074
  %v6107 = vadd.f32 %v6043, %v6075
  %v6108 = vadd.f32 %v6044, %v6076
  %v6109 = vadd.f32 %v6045, %v6077
  %v6110 = vadd.f32 %v6046, %v6078
  %v6111 = vadd.f32 %v6047, %v6079
  %v6112 = vadd.f32 %v6048, %v6080
  %v6113 = vadd.f32 %v6049, %v6081
  %v6114 = vadd.f32 %v6050, %v6082
  %v6115 = vadd.f32 %v6051, %v6083
  %v6116 = vadd.f32 %v6052, %v6084
  %v6117 = vadd.f32 %v6053, %v6085
  %v6118 = vadd.f32 %v6054, %v6086
  %v6119 = vadd.f32 %v6055, %v6087
  %v6120 = vadd.f32 %v6056, %v6088
  %v6121 = vadd.f32 %v6057, %v6089
  %v6122 = vadd.f32 %v6058, %v6090
  %v6123 = vadd.f32 %v6059, %v6091
  %v6124 = vadd.f32 %v6060, %v6092
  %v6125 = vadd.f32 %v6061, %v6093
  %v6126 = vadd.f32 %v6062, %v6094
  %v6127 = vadd.f32 %v6063, %v6095
  %v6128 = vadd.f32 %v6064, %v6096
  %v6129 = vadd.f32 %v6065, %v6097
  %v6130 = vadd.f32 %v6066, %v6098
  %v6131 = vadd.f32 %v6067, %v6099
  %v6132 = vadd.f32 %v6068, %v6100
  %v6133 = vadd.f32 %v6069, %v6101
  %vm6134 = vcmp.gt.f32.partialorder %v6102, %v5653
  %vm6135 = vcmp.gt.f32.partialorder %v6103, %v5654
  %vm6136 = vcmp.gt.f32.partialorder %v6104, %v5655
  %vm6137 = vcmp.gt.f32.partialorder %v6105, %v5656
  %vm6138 = vcmp.gt.f32.partialorder %v6106, %v5657
  %vm6139 = vcmp.gt.f32.partialorder %v6107, %v5658
  %vm6140 = vcmp.gt.f32.partialorder %v6108, %v5659
  %vm6141 = vcmp.gt.f32.partialorder %v6109, %v5660
  %vm6142 = vcmp.gt.f32.partialorder %v6110, %v5661
  %vm6143 = vcmp.gt.f32.partialorder %v6111, %v5662
  %vm6144 = vcmp.gt.f32.partialorder %v6112, %v5663
  %vm6145 = vcmp.gt.f32.partialorder %v6113, %v5664
  %vm6146 = vcmp.gt.f32.partialorder %v6114, %v5665
  %vm6147 = vcmp.gt.f32.partialorder %v6115, %v5666
  %vm6148 = vcmp.gt.f32.partialorder %v6116, %v5667
  %vm6149 = vcmp.gt.f32.partialorder %v6117, %v5668
  %vm6150 = vcmp.gt.f32.partialorder %v6118, %v5669
  %vm6151 = vcmp.gt.f32.partialorder %v6119, %v5670
  %vm6152 = vcmp.gt.f32.partialorder %v6120, %v5671
  %vm6153 = vcmp.gt.f32.partialorder %v6121, %v5672
  %vm6154 = vcmp.gt.f32.partialorder %v6122, %v5673
  %vm6155 = vcmp.gt.f32.partialorder %v6123, %v5674
  %vm6156 = vcmp.gt.f32.partialorder %v6124, %v5675
  %vm6157 = vcmp.gt.f32.partialorder %v6125, %v5676
  %vm6158 = vcmp.gt.f32.partialorder %v6126, %v5677
  %vm6159 = vcmp.gt.f32.partialorder %v6127, %v5678
  %vm6160 = vcmp.gt.f32.partialorder %v6128, %v5679
  %vm6161 = vcmp.gt.f32.partialorder %v6129, %v5680
  %vm6162 = vcmp.gt.f32.partialorder %v6130, %v5681
  %vm6163 = vcmp.gt.f32.partialorder %v6131, %v5682
  %vm6164 = vcmp.gt.f32.partialorder %v6132, %v5683
  %vm6165 = vcmp.gt.f32.partialorder %v6133, %v5684
  %v6166 = vsel %vm6134, %v5974, %v5525
  %v6167 = vsel %vm6135, %v5975, %v5526
  %v6168 = vsel %vm6136, %v5976, %v5527
  %v6169 = vsel %vm6137, %v5977, %v5528
  %v6170 = vsel %vm6138, %v5978, %v5529
  %v6171 = vsel %vm6139, %v5979, %v5530
  %v6172 = vsel %vm6140, %v5980, %v5531
  %v6173 = vsel %vm6141, %v5981, %v5532
  %v6174 = vsel %vm6142, %v5982, %v5533
  %v6175 = vsel %vm6143, %v5983, %v5534
  %v6176 = vsel %vm6144, %v5984, %v5535
  %v6177 = vsel %vm6145, %v5985, %v5536
  %v6178 = vsel %vm6146, %v5986, %v5537
  %v6179 = vsel %vm6147, %v5987, %v5538
  %v6180 = vsel %vm6148, %v5988, %v5539
  %v6181 = vsel %vm6149, %v5989, %v5540
  %v6182 = vsel %vm6150, %v5990, %v5541
  %v6183 = vsel %vm6151, %v5991, %v5542
  %v6184 = vsel %vm6152, %v5992, %v5543
  %v6185 = vsel %vm6153, %v5993, %v5544
  %v6186 = vsel %vm6154, %v5994, %v5545
  %v6187 = vsel %vm6155, %v5995, %v5546
  %v6188 = vsel %vm6156, %v5996, %v5547
  %v6189 = vsel %vm6157, %v5997, %v5548
  %v6190 = vsel %vm6158, %v5998, %v5549
  %v6191 = vsel %vm6159, %v5999, %v5550
  %v6192 = vsel %vm6160, %v6000, %v5551
  %v6193 = vsel %vm6161, %v6001, %v5552
  %v6194 = vsel %vm6162, %v6002, %v5553
  %v6195 = vsel %vm6163, %v6003, %v5554
  %v6196 = vsel %vm6164, %v6004, %v5555
  %v6197 = vsel %vm6165, %v6005, %v5556
  %v6198 = vsel %vm6134, %v6006, %v5557
  %v6199 = vsel %vm6135, %v6007, %v5558
  %v6200 = vsel %vm6136, %v6008, %v5559
  %v6201 = vsel %vm6137, %v6009, %v5560
  %v6202 = vsel %vm6138, %v6010, %v5561
  %v6203 = vsel %vm6139, %v6011, %v5562
  %v6204 = vsel %vm6140, %v6012, %v5563
  %v6205 = vsel %vm6141, %v6013, %v5564
  %v6206 = vsel %vm6142, %v6014, %v5565
  %v6207 = vsel %vm6143, %v6015, %v5566
  %v6208 = vsel %vm6144, %v6016, %v5567
  %v6209 = vsel %vm6145, %v6017, %v5568
  %v6210 = vsel %vm6146, %v6018, %v5569
  %v6211 = vsel %vm6147, %v6019, %v5570
  %v6212 = vsel %vm6148, %v6020, %v5571
  %v6213 = vsel %vm6149, %v6021, %v5572
  %v6214 = vsel %vm6150, %v6022, %v5573
  %v6215 = vsel %vm6151, %v6023, %v5574
  %v6216 = vsel %vm6152, %v6024, %v5575
  %v6217 = vsel %vm6153, %v6025, %v5576
  %v6218 = vsel %vm6154, %v6026, %v5577
  %v6219 = vsel %vm6155, %v6027, %v5578
  %v6220 = vsel %vm6156, %v6028, %v5579
  %v6221 = vsel %vm6157, %v6029, %v5580
  %v6222 = vsel %vm6158, %v6030, %v5581
  %v6223 = vsel %vm6159, %v6031, %v5582
  %v6224 = vsel %vm6160, %v6032, %v5583
  %v6225 = vsel %vm6161, %v6033, %v5584
  %v6226 = vsel %vm6162, %v6034, %v5585
  %v6227 = vsel %vm6163, %v6035, %v5586
  %v6228 = vsel %vm6164, %v6036, %v5587
  %v6229 = vsel %vm6165, %v6037, %v5588
  %v6230 = vsel %vm6134, %v6102, %v5653
  %v6231 = vsel %vm6135, %v6103, %v5654
  %v6232 = vsel %vm6136, %v6104, %v5655
  %v6233 = vsel %vm6137, %v6105, %v5656
  %v6234 = vsel %vm6138, %v6106, %v5657
  %v6235 = vsel %vm6139, %v6107, %v5658
  %v6236 = vsel %vm6140, %v6108, %v5659
  %v6237 = vsel %vm6141, %v6109, %v5660
  %v6238 = vsel %vm6142, %v6110, %v5661
  %v6239 = vsel %vm6143, %v6111, %v5662
  %v6240 = vsel %vm6144, %v6112, %v5663
  %v6241 = vsel %vm6145, %v6113, %v5664
  %v6242 = vsel %vm6146, %v6114, %v5665
  %v6243 = vsel %vm6147, %v6115, %v5666
  %v6244 = vsel %vm6148, %v6116, %v5667
  %v6245 = vsel %vm6149, %v6117, %v5668
  %v6246 = vsel %vm6150, %v6118, %v5669
  %v6247 = vsel %vm6151, %v6119, %v5670
  %v6248 = vsel %vm6152, %v6120, %v5671
  %v6249 = vsel %vm6153, %v6121, %v5672
  %v6250 = vsel %vm6154, %v6122, %v5673
  %v6251 = vsel %vm6155, %v6123, %v5674
  %v6252 = vsel %vm6156, %v6124, %v5675
  %v6253 = vsel %vm6157, %v6125, %v5676
  %v6254 = vsel %vm6158, %v6126, %v5677
  %v6255 = vsel %vm6159, %v6127, %v5678
  %v6256 = vsel %vm6160, %v6128, %v5679
  %v6257 = vsel %vm6161, %v6129, %v5680
  %v6258 = vsel %vm6162, %v6130, %v5681
  %v6259 = vsel %vm6163, %v6131, %v5682
  %v6260 = vsel %vm6164, %v6132, %v5683
  %v6261 = vsel %vm6165, %v6133, %v5684
  %s6262 = scalar_lea.vmem %s0, 1320
  %v6263 = vld [vmem:[%s6262 + $0x1] sm:$0xff]
  %v6264 = vld [vmem:[%s6262 + $0x9] sm:$0xff]
  %v6265 = vld [vmem:[%s6262 + $0x11] sm:$0xff]
  %v6266 = vld [vmem:[%s6262 + $0x19] sm:$0xff]
  %v6267 = vld [vmem:[%s6262 + $0x21] sm:$0xff]
  %v6268 = vld [vmem:[%s6262 + $0x29] sm:$0xff]
  %v6269 = vld [vmem:[%s6262 + $0x31] sm:$0xff]
  %v6270 = vld [vmem:[%s6262 + $0x39] sm:$0xff]
  %v6271 = vld [vmem:[%s6262 + $0x41] sm:$0xff]
  %v6272 = vld [vmem:[%s6262 + $0x49] sm:$0xff]
  %v6273 = vld [vmem:[%s6262 + $0x51] sm:$0xff]
  %v6274 = vld [vmem:[%s6262 + $0x59] sm:$0xff]
  %v6275 = vld [vmem:[%s6262 + $0x61] sm:$0xff]
  %v6276 = vld [vmem:[%s6262 + $0x69] sm:$0xff]
  %v6277 = vld [vmem:[%s6262 + $0x71] sm:$0xff]
  %v6278 = vld [vmem:[%s6262 + $0x79] sm:$0xff]
  %v6279 = vld [vmem:[%s6262 + $0x81] sm:$0xff]
  %v6280 = vld [vmem:[%s6262 + $0x89] sm:$0xff]
  %v6281 = vld [vmem:[%s6262 + $0x91] sm:$0xff]
  %v6282 = vld [vmem:[%s6262 + $0x99] sm:$0xff]
  %v6283 = vld [vmem:[%s6262 + $0xa1] sm:$0xff]
  %v6284 = vld [vmem:[%s6262 + $0xa9] sm:$0xff]
  %v6285 = vld [vmem:[%s6262 + $0xb1] sm:$0xff]
  %v6286 = vld [vmem:[%s6262 + $0xb9] sm:$0xff]
  %v6287 = vld [vmem:[%s6262 + $0xc1] sm:$0xff]
  %v6288 = vld [vmem:[%s6262 + $0xc9] sm:$0xff]
  %v6289 = vld [vmem:[%s6262 + $0xd1] sm:$0xff]
  %v6290 = vld [vmem:[%s6262 + $0xd9] sm:$0xff]
  %v6291 = vld [vmem:[%s6262 + $0xe1] sm:$0xff]
  %v6292 = vld [vmem:[%s6262 + $0xe9] sm:$0xff]
  %v6293 = vld [vmem:[%s6262 + $0xf1] sm:$0xff]
  %v6294 = vld [vmem:[%s6262 + $0xf9] sm:$0xff]
  %v6295 = vld [vmem:[%s6262 + $0x2] sm:$0xff]
  %v6296 = vld [vmem:[%s6262 + $0xa] sm:$0xff]
  %v6297 = vld [vmem:[%s6262 + $0x12] sm:$0xff]
  %v6298 = vld [vmem:[%s6262 + $0x1a] sm:$0xff]
  %v6299 = vld [vmem:[%s6262 + $0x22] sm:$0xff]
  %v6300 = vld [vmem:[%s6262 + $0x2a] sm:$0xff]
  %v6301 = vld [vmem:[%s6262 + $0x32] sm:$0xff]
  %v6302 = vld [vmem:[%s6262 + $0x3a] sm:$0xff]
  %v6303 = vld [vmem:[%s6262 + $0x42] sm:$0xff]
  %v6304 = vld [vmem:[%s6262 + $0x4a] sm:$0xff]
  %v6305 = vld [vmem:[%s6262 + $0x52] sm:$0xff]
  %v6306 = vld [vmem:[%s6262 + $0x5a] sm:$0xff]
  %v6307 = vld [vmem:[%s6262 + $0x62] sm:$0xff]
  %v6308 = vld [vmem:[%s6262 + $0x6a] sm:$0xff]
  %v6309 = vld [vmem:[%s6262 + $0x72] sm:$0xff]
  %v6310 = vld [vmem:[%s6262 + $0x7a] sm:$0xff]
  %v6311 = vld [vmem:[%s6262 + $0x82] sm:$0xff]
  %v6312 = vld [vmem:[%s6262 + $0x8a] sm:$0xff]
  %v6313 = vld [vmem:[%s6262 + $0x92] sm:$0xff]
  %v6314 = vld [vmem:[%s6262 + $0x9a] sm:$0xff]
  %v6315 = vld [vmem:[%s6262 + $0xa2] sm:$0xff]
  %v6316 = vld [vmem:[%s6262 + $0xaa] sm:$0xff]
  %v6317 = vld [vmem:[%s6262 + $0xb2] sm:$0xff]
  %v6318 = vld [vmem:[%s6262 + $0xba] sm:$0xff]
  %v6319 = vld [vmem:[%s6262 + $0xc2] sm:$0xff]
  %v6320 = vld [vmem:[%s6262 + $0xca] sm:$0xff]
  %v6321 = vld [vmem:[%s6262 + $0xd2] sm:$0xff]
  %v6322 = vld [vmem:[%s6262 + $0xda] sm:$0xff]
  %v6323 = vld [vmem:[%s6262 + $0xe2] sm:$0xff]
  %v6324 = vld [vmem:[%s6262 + $0xea] sm:$0xff]
  %v6325 = vld [vmem:[%s6262 + $0xf2] sm:$0xff]
  %v6326 = vld [vmem:[%s6262 + $0xfa] sm:$0xff]
  %v6327 = vld [vmem:[%s6262] sm:$0xff]
  %v6328 = vld [vmem:[%s6262 + $0x8] sm:$0xff]
  %v6329 = vld [vmem:[%s6262 + $0x10] sm:$0xff]
  %v6330 = vld [vmem:[%s6262 + $0x18] sm:$0xff]
  %v6331 = vld [vmem:[%s6262 + $0x20] sm:$0xff]
  %v6332 = vld [vmem:[%s6262 + $0x28] sm:$0xff]
  %v6333 = vld [vmem:[%s6262 + $0x30] sm:$0xff]
  %v6334 = vld [vmem:[%s6262 + $0x38] sm:$0xff]
  %v6335 = vld [vmem:[%s6262 + $0x40] sm:$0xff]
  %v6336 = vld [vmem:[%s6262 + $0x48] sm:$0xff]
  %v6337 = vld [vmem:[%s6262 + $0x50] sm:$0xff]
  %v6338 = vld [vmem:[%s6262 + $0x58] sm:$0xff]
  %v6339 = vld [vmem:[%s6262 + $0x60] sm:$0xff]
  %v6340 = vld [vmem:[%s6262 + $0x68] sm:$0xff]
  %v6341 = vld [vmem:[%s6262 + $0x70] sm:$0xff]
  %v6342 = vld [vmem:[%s6262 + $0x78] sm:$0xff]
  %v6343 = vld [vmem:[%s6262 + $0x80] sm:$0xff]
  %v6344 = vld [vmem:[%s6262 + $0x88] sm:$0xff]
  %v6345 = vld [vmem:[%s6262 + $0x90] sm:$0xff]
  %v6346 = vld [vmem:[%s6262 + $0x98] sm:$0xff]
  %v6347 = vld [vmem:[%s6262 + $0xa0] sm:$0xff]
  %v6348 = vld [vmem:[%s6262 + $0xa8] sm:$0xff]
  %v6349 = vld [vmem:[%s6262 + $0xb0] sm:$0xff]
  %v6350 = vld [vmem:[%s6262 + $0xb8] sm:$0xff]
  %v6351 = vld [vmem:[%s6262 + $0xc0] sm:$0xff]
  %v6352 = vld [vmem:[%s6262 + $0xc8] sm:$0xff]
  %v6353 = vld [vmem:[%s6262 + $0xd0] sm:$0xff]
  %v6354 = vld [vmem:[%s6262 + $0xd8] sm:$0xff]
  %v6355 = vld [vmem:[%s6262 + $0xe0] sm:$0xff]
  %v6356 = vld [vmem:[%s6262 + $0xe8] sm:$0xff]
  %v6357 = vld [vmem:[%s6262 + $0xf0] sm:$0xff]
  %v6358 = vld [vmem:[%s6262 + $0xf8] sm:$0xff]
  %6359 = vrot.lane.b32.xlu0 %v6263, 127
  %v6360 = vpop.permute.xlu0 %6359
  %6361 = vrot.lane.b32.xlu0 %v6264, 127
  %v6362 = vpop.permute.xlu0 %6361
  %6363 = vrot.lane.b32.xlu0 %v6265, 127
  %v6364 = vpop.permute.xlu0 %6363
  %6365 = vrot.lane.b32.xlu0 %v6266, 127
  %v6366 = vpop.permute.xlu0 %6365
  %6367 = vrot.lane.b32.xlu0 %v6267, 127
  %v6368 = vpop.permute.xlu0 %6367
  %6369 = vrot.lane.b32.xlu0 %v6268, 127
  %v6370 = vpop.permute.xlu0 %6369
  %6371 = vrot.lane.b32.xlu0 %v6269, 127
  %v6372 = vpop.permute.xlu0 %6371
  %6373 = vrot.lane.b32.xlu0 %v6270, 127
  %v6374 = vpop.permute.xlu0 %6373
  %6375 = vrot.lane.b32.xlu0 %v6271, 127
  %v6376 = vpop.permute.xlu0 %6375
  %6377 = vrot.lane.b32.xlu0 %v6272, 127
  %v6378 = vpop.permute.xlu0 %6377
  %6379 = vrot.lane.b32.xlu0 %v6273, 127
  %v6380 = vpop.permute.xlu0 %6379
  %6381 = vrot.lane.b32.xlu0 %v6274, 127
  %v6382 = vpop.permute.xlu0 %6381
  %6383 = vrot.lane.b32.xlu0 %v6275, 127
  %v6384 = vpop.permute.xlu0 %6383
  %6385 = vrot.lane.b32.xlu0 %v6276, 127
  %v6386 = vpop.permute.xlu0 %6385
  %6387 = vrot.lane.b32.xlu0 %v6277, 127
  %v6388 = vpop.permute.xlu0 %6387
  %6389 = vrot.lane.b32.xlu0 %v6278, 127
  %v6390 = vpop.permute.xlu0 %6389
  %6391 = vrot.lane.b32.xlu0 %v6279, 127
  %v6392 = vpop.permute.xlu0 %6391
  %6393 = vrot.lane.b32.xlu0 %v6280, 127
  %v6394 = vpop.permute.xlu0 %6393
  %6395 = vrot.lane.b32.xlu0 %v6281, 127
  %v6396 = vpop.permute.xlu0 %6395
  %6397 = vrot.lane.b32.xlu0 %v6282, 127
  %v6398 = vpop.permute.xlu0 %6397
  %6399 = vrot.lane.b32.xlu0 %v6283, 127
  %v6400 = vpop.permute.xlu0 %6399
  %6401 = vrot.lane.b32.xlu0 %v6284, 127
  %v6402 = vpop.permute.xlu0 %6401
  %6403 = vrot.lane.b32.xlu0 %v6285, 127
  %v6404 = vpop.permute.xlu0 %6403
  %6405 = vrot.lane.b32.xlu0 %v6286, 127
  %v6406 = vpop.permute.xlu0 %6405
  %6407 = vrot.lane.b32.xlu0 %v6287, 127
  %v6408 = vpop.permute.xlu0 %6407
  %6409 = vrot.lane.b32.xlu0 %v6288, 127
  %v6410 = vpop.permute.xlu0 %6409
  %6411 = vrot.lane.b32.xlu0 %v6289, 127
  %v6412 = vpop.permute.xlu0 %6411
  %6413 = vrot.lane.b32.xlu0 %v6290, 127
  %v6414 = vpop.permute.xlu0 %6413
  %6415 = vrot.lane.b32.xlu0 %v6291, 127
  %v6416 = vpop.permute.xlu0 %6415
  %6417 = vrot.lane.b32.xlu0 %v6292, 127
  %v6418 = vpop.permute.xlu0 %6417
  %6419 = vrot.lane.b32.xlu0 %v6293, 127
  %v6420 = vpop.permute.xlu0 %6419
  %6421 = vrot.lane.b32.xlu0 %v6294, 127
  %v6422 = vpop.permute.xlu0 %6421
  %v6423 = vsel %vm38, %v6263, %v6360
  %v6424 = vsel %vm38, %v6264, %v6362
  %v6425 = vsel %vm38, %v6265, %v6364
  %v6426 = vsel %vm38, %v6266, %v6366
  %v6427 = vsel %vm38, %v6267, %v6368
  %v6428 = vsel %vm38, %v6268, %v6370
  %v6429 = vsel %vm38, %v6269, %v6372
  %v6430 = vsel %vm38, %v6270, %v6374
  %v6431 = vsel %vm38, %v6271, %v6376
  %v6432 = vsel %vm38, %v6272, %v6378
  %v6433 = vsel %vm38, %v6273, %v6380
  %v6434 = vsel %vm38, %v6274, %v6382
  %v6435 = vsel %vm38, %v6275, %v6384
  %v6436 = vsel %vm38, %v6276, %v6386
  %v6437 = vsel %vm38, %v6277, %v6388
  %v6438 = vsel %vm38, %v6278, %v6390
  %v6439 = vsel %vm38, %v6279, %v6392
  %v6440 = vsel %vm38, %v6280, %v6394
  %v6441 = vsel %vm38, %v6281, %v6396
  %v6442 = vsel %vm38, %v6282, %v6398
  %v6443 = vsel %vm38, %v6283, %v6400
  %v6444 = vsel %vm38, %v6284, %v6402
  %v6445 = vsel %vm38, %v6285, %v6404
  %v6446 = vsel %vm38, %v6286, %v6406
  %v6447 = vsel %vm38, %v6287, %v6408
  %v6448 = vsel %vm38, %v6288, %v6410
  %v6449 = vsel %vm38, %v6289, %v6412
  %v6450 = vsel %vm38, %v6290, %v6414
  %v6451 = vsel %vm38, %v6291, %v6416
  %v6452 = vsel %vm38, %v6292, %v6418
  %v6453 = vsel %vm38, %v6293, %v6420
  %v6454 = vsel %vm38, %v6294, %v6422
  %6455 = vrot.lane.b32.xlu0 %v6263, 1
  %v6456 = vpop.permute.xlu0 %6455
  %6457 = vrot.lane.b32.xlu0 %v6264, 1
  %v6458 = vpop.permute.xlu0 %6457
  %6459 = vrot.lane.b32.xlu0 %v6265, 1
  %v6460 = vpop.permute.xlu0 %6459
  %6461 = vrot.lane.b32.xlu0 %v6266, 1
  %v6462 = vpop.permute.xlu0 %6461
  %6463 = vrot.lane.b32.xlu0 %v6267, 1
  %v6464 = vpop.permute.xlu0 %6463
  %6465 = vrot.lane.b32.xlu0 %v6268, 1
  %v6466 = vpop.permute.xlu0 %6465
  %6467 = vrot.lane.b32.xlu0 %v6269, 1
  %v6468 = vpop.permute.xlu0 %6467
  %6469 = vrot.lane.b32.xlu0 %v6270, 1
  %v6470 = vpop.permute.xlu0 %6469
  %6471 = vrot.lane.b32.xlu0 %v6271, 1
  %v6472 = vpop.permute.xlu0 %6471
  %6473 = vrot.lane.b32.xlu0 %v6272, 1
  %v6474 = vpop.permute.xlu0 %6473
  %6475 = vrot.lane.b32.xlu0 %v6273, 1
  %v6476 = vpop.permute.xlu0 %6475
  %6477 = vrot.lane.b32.xlu0 %v6274, 1
  %v6478 = vpop.permute.xlu0 %6477
  %6479 = vrot.lane.b32.xlu0 %v6275, 1
  %v6480 = vpop.permute.xlu0 %6479
  %6481 = vrot.lane.b32.xlu0 %v6276, 1
  %v6482 = vpop.permute.xlu0 %6481
  %6483 = vrot.lane.b32.xlu0 %v6277, 1
  %v6484 = vpop.permute.xlu0 %6483
  %6485 = vrot.lane.b32.xlu0 %v6278, 1
  %v6486 = vpop.permute.xlu0 %6485
  %6487 = vrot.lane.b32.xlu0 %v6279, 1
  %v6488 = vpop.permute.xlu0 %6487
  %6489 = vrot.lane.b32.xlu0 %v6280, 1
  %v6490 = vpop.permute.xlu0 %6489
  %6491 = vrot.lane.b32.xlu0 %v6281, 1
  %v6492 = vpop.permute.xlu0 %6491
  %6493 = vrot.lane.b32.xlu0 %v6282, 1
  %v6494 = vpop.permute.xlu0 %6493
  %6495 = vrot.lane.b32.xlu0 %v6283, 1
  %v6496 = vpop.permute.xlu0 %6495
  %6497 = vrot.lane.b32.xlu0 %v6284, 1
  %v6498 = vpop.permute.xlu0 %6497
  %6499 = vrot.lane.b32.xlu0 %v6285, 1
  %v6500 = vpop.permute.xlu0 %6499
  %6501 = vrot.lane.b32.xlu0 %v6286, 1
  %v6502 = vpop.permute.xlu0 %6501
  %6503 = vrot.lane.b32.xlu0 %v6287, 1
  %v6504 = vpop.permute.xlu0 %6503
  %6505 = vrot.lane.b32.xlu0 %v6288, 1
  %v6506 = vpop.permute.xlu0 %6505
  %6507 = vrot.lane.b32.xlu0 %v6289, 1
  %v6508 = vpop.permute.xlu0 %6507
  %6509 = vrot.lane.b32.xlu0 %v6290, 1
  %v6510 = vpop.permute.xlu0 %6509
  %6511 = vrot.lane.b32.xlu0 %v6291, 1
  %v6512 = vpop.permute.xlu0 %6511
  %6513 = vrot.lane.b32.xlu0 %v6292, 1
  %v6514 = vpop.permute.xlu0 %6513
  %6515 = vrot.lane.b32.xlu0 %v6293, 1
  %v6516 = vpop.permute.xlu0 %6515
  %6517 = vrot.lane.b32.xlu0 %v6294, 1
  %v6518 = vpop.permute.xlu0 %6517
  %v6519 = vsel %vm37, %v6263, %v6456
  %v6520 = vsel %vm37, %v6264, %v6458
  %v6521 = vsel %vm37, %v6265, %v6460
  %v6522 = vsel %vm37, %v6266, %v6462
  %v6523 = vsel %vm37, %v6267, %v6464
  %v6524 = vsel %vm37, %v6268, %v6466
  %v6525 = vsel %vm37, %v6269, %v6468
  %v6526 = vsel %vm37, %v6270, %v6470
  %v6527 = vsel %vm37, %v6271, %v6472
  %v6528 = vsel %vm37, %v6272, %v6474
  %v6529 = vsel %vm37, %v6273, %v6476
  %v6530 = vsel %vm37, %v6274, %v6478
  %v6531 = vsel %vm37, %v6275, %v6480
  %v6532 = vsel %vm37, %v6276, %v6482
  %v6533 = vsel %vm37, %v6277, %v6484
  %v6534 = vsel %vm37, %v6278, %v6486
  %v6535 = vsel %vm37, %v6279, %v6488
  %v6536 = vsel %vm37, %v6280, %v6490
  %v6537 = vsel %vm37, %v6281, %v6492
  %v6538 = vsel %vm37, %v6282, %v6494
  %v6539 = vsel %vm37, %v6283, %v6496
  %v6540 = vsel %vm37, %v6284, %v6498
  %v6541 = vsel %vm37, %v6285, %v6500
  %v6542 = vsel %vm37, %v6286, %v6502
  %v6543 = vsel %vm37, %v6287, %v6504
  %v6544 = vsel %vm37, %v6288, %v6506
  %v6545 = vsel %vm37, %v6289, %v6508
  %v6546 = vsel %vm37, %v6290, %v6510
  %v6547 = vsel %vm37, %v6291, %v6512
  %v6548 = vsel %vm37, %v6292, %v6514
  %v6549 = vsel %vm37, %v6293, %v6516
  %v6550 = vsel %vm37, %v6294, %v6518
  %v6551 = vsub.f32 %v6423, %v6519
  %v6552 = vsub.f32 %v6424, %v6520
  %v6553 = vsub.f32 %v6425, %v6521
  %v6554 = vsub.f32 %v6426, %v6522
  %v6555 = vsub.f32 %v6427, %v6523
  %v6556 = vsub.f32 %v6428, %v6524
  %v6557 = vsub.f32 %v6429, %v6525
  %v6558 = vsub.f32 %v6430, %v6526
  %v6559 = vsub.f32 %v6431, %v6527
  %v6560 = vsub.f32 %v6432, %v6528
  %v6561 = vsub.f32 %v6433, %v6529
  %v6562 = vsub.f32 %v6434, %v6530
  %v6563 = vsub.f32 %v6435, %v6531
  %v6564 = vsub.f32 %v6436, %v6532
  %v6565 = vsub.f32 %v6437, %v6533
  %v6566 = vsub.f32 %v6438, %v6534
  %v6567 = vsub.f32 %v6439, %v6535
  %v6568 = vsub.f32 %v6440, %v6536
  %v6569 = vsub.f32 %v6441, %v6537
  %v6570 = vsub.f32 %v6442, %v6538
  %v6571 = vsub.f32 %v6443, %v6539
  %v6572 = vsub.f32 %v6444, %v6540
  %v6573 = vsub.f32 %v6445, %v6541
  %v6574 = vsub.f32 %v6446, %v6542
  %v6575 = vsub.f32 %v6447, %v6543
  %v6576 = vsub.f32 %v6448, %v6544
  %v6577 = vsub.f32 %v6449, %v6545
  %v6578 = vsub.f32 %v6450, %v6546
  %v6579 = vsub.f32 %v6451, %v6547
  %v6580 = vsub.f32 %v6452, %v6548
  %v6581 = vsub.f32 %v6453, %v6549
  %v6582 = vsub.f32 %v6454, %v6550
  %v6583 = vsub.f32 %v6295, %v6327
  %v6584 = vsub.f32 %v6296, %v6328
  %v6585 = vsub.f32 %v6297, %v6329
  %v6586 = vsub.f32 %v6298, %v6330
  %v6587 = vsub.f32 %v6299, %v6331
  %v6588 = vsub.f32 %v6300, %v6332
  %v6589 = vsub.f32 %v6301, %v6333
  %v6590 = vsub.f32 %v6302, %v6334
  %v6591 = vsub.f32 %v6303, %v6335
  %v6592 = vsub.f32 %v6304, %v6336
  %v6593 = vsub.f32 %v6305, %v6337
  %v6594 = vsub.f32 %v6306, %v6338
  %v6595 = vsub.f32 %v6307, %v6339
  %v6596 = vsub.f32 %v6308, %v6340
  %v6597 = vsub.f32 %v6309, %v6341
  %v6598 = vsub.f32 %v6310, %v6342
  %v6599 = vsub.f32 %v6311, %v6343
  %v6600 = vsub.f32 %v6312, %v6344
  %v6601 = vsub.f32 %v6313, %v6345
  %v6602 = vsub.f32 %v6314, %v6346
  %v6603 = vsub.f32 %v6315, %v6347
  %v6604 = vsub.f32 %v6316, %v6348
  %v6605 = vsub.f32 %v6317, %v6349
  %v6606 = vsub.f32 %v6318, %v6350
  %v6607 = vsub.f32 %v6319, %v6351
  %v6608 = vsub.f32 %v6320, %v6352
  %v6609 = vsub.f32 %v6321, %v6353
  %v6610 = vsub.f32 %v6322, %v6354
  %v6611 = vsub.f32 %v6323, %v6355
  %v6612 = vsub.f32 %v6324, %v6356
  %v6613 = vsub.f32 %v6325, %v6357
  %v6614 = vsub.f32 %v6326, %v6358
  %v6615 = vmul.f32 %v6551, %v6551
  %v6616 = vmul.f32 %v6552, %v6552
  %v6617 = vmul.f32 %v6553, %v6553
  %v6618 = vmul.f32 %v6554, %v6554
  %v6619 = vmul.f32 %v6555, %v6555
  %v6620 = vmul.f32 %v6556, %v6556
  %v6621 = vmul.f32 %v6557, %v6557
  %v6622 = vmul.f32 %v6558, %v6558
  %v6623 = vmul.f32 %v6559, %v6559
  %v6624 = vmul.f32 %v6560, %v6560
  %v6625 = vmul.f32 %v6561, %v6561
  %v6626 = vmul.f32 %v6562, %v6562
  %v6627 = vmul.f32 %v6563, %v6563
  %v6628 = vmul.f32 %v6564, %v6564
  %v6629 = vmul.f32 %v6565, %v6565
  %v6630 = vmul.f32 %v6566, %v6566
  %v6631 = vmul.f32 %v6567, %v6567
  %v6632 = vmul.f32 %v6568, %v6568
  %v6633 = vmul.f32 %v6569, %v6569
  %v6634 = vmul.f32 %v6570, %v6570
  %v6635 = vmul.f32 %v6571, %v6571
  %v6636 = vmul.f32 %v6572, %v6572
  %v6637 = vmul.f32 %v6573, %v6573
  %v6638 = vmul.f32 %v6574, %v6574
  %v6639 = vmul.f32 %v6575, %v6575
  %v6640 = vmul.f32 %v6576, %v6576
  %v6641 = vmul.f32 %v6577, %v6577
  %v6642 = vmul.f32 %v6578, %v6578
  %v6643 = vmul.f32 %v6579, %v6579
  %v6644 = vmul.f32 %v6580, %v6580
  %v6645 = vmul.f32 %v6581, %v6581
  %v6646 = vmul.f32 %v6582, %v6582
  %v6647 = vmul.f32 %v6583, %v6583
  %v6648 = vmul.f32 %v6584, %v6584
  %v6649 = vmul.f32 %v6585, %v6585
  %v6650 = vmul.f32 %v6586, %v6586
  %v6651 = vmul.f32 %v6587, %v6587
  %v6652 = vmul.f32 %v6588, %v6588
  %v6653 = vmul.f32 %v6589, %v6589
  %v6654 = vmul.f32 %v6590, %v6590
  %v6655 = vmul.f32 %v6591, %v6591
  %v6656 = vmul.f32 %v6592, %v6592
  %v6657 = vmul.f32 %v6593, %v6593
  %v6658 = vmul.f32 %v6594, %v6594
  %v6659 = vmul.f32 %v6595, %v6595
  %v6660 = vmul.f32 %v6596, %v6596
  %v6661 = vmul.f32 %v6597, %v6597
  %v6662 = vmul.f32 %v6598, %v6598
  %v6663 = vmul.f32 %v6599, %v6599
  %v6664 = vmul.f32 %v6600, %v6600
  %v6665 = vmul.f32 %v6601, %v6601
  %v6666 = vmul.f32 %v6602, %v6602
  %v6667 = vmul.f32 %v6603, %v6603
  %v6668 = vmul.f32 %v6604, %v6604
  %v6669 = vmul.f32 %v6605, %v6605
  %v6670 = vmul.f32 %v6606, %v6606
  %v6671 = vmul.f32 %v6607, %v6607
  %v6672 = vmul.f32 %v6608, %v6608
  %v6673 = vmul.f32 %v6609, %v6609
  %v6674 = vmul.f32 %v6610, %v6610
  %v6675 = vmul.f32 %v6611, %v6611
  %v6676 = vmul.f32 %v6612, %v6612
  %v6677 = vmul.f32 %v6613, %v6613
  %v6678 = vmul.f32 %v6614, %v6614
  %v6679 = vadd.f32 %v6615, %v6647
  %v6680 = vadd.f32 %v6616, %v6648
  %v6681 = vadd.f32 %v6617, %v6649
  %v6682 = vadd.f32 %v6618, %v6650
  %v6683 = vadd.f32 %v6619, %v6651
  %v6684 = vadd.f32 %v6620, %v6652
  %v6685 = vadd.f32 %v6621, %v6653
  %v6686 = vadd.f32 %v6622, %v6654
  %v6687 = vadd.f32 %v6623, %v6655
  %v6688 = vadd.f32 %v6624, %v6656
  %v6689 = vadd.f32 %v6625, %v6657
  %v6690 = vadd.f32 %v6626, %v6658
  %v6691 = vadd.f32 %v6627, %v6659
  %v6692 = vadd.f32 %v6628, %v6660
  %v6693 = vadd.f32 %v6629, %v6661
  %v6694 = vadd.f32 %v6630, %v6662
  %v6695 = vadd.f32 %v6631, %v6663
  %v6696 = vadd.f32 %v6632, %v6664
  %v6697 = vadd.f32 %v6633, %v6665
  %v6698 = vadd.f32 %v6634, %v6666
  %v6699 = vadd.f32 %v6635, %v6667
  %v6700 = vadd.f32 %v6636, %v6668
  %v6701 = vadd.f32 %v6637, %v6669
  %v6702 = vadd.f32 %v6638, %v6670
  %v6703 = vadd.f32 %v6639, %v6671
  %v6704 = vadd.f32 %v6640, %v6672
  %v6705 = vadd.f32 %v6641, %v6673
  %v6706 = vadd.f32 %v6642, %v6674
  %v6707 = vadd.f32 %v6643, %v6675
  %v6708 = vadd.f32 %v6644, %v6676
  %v6709 = vadd.f32 %v6645, %v6677
  %v6710 = vadd.f32 %v6646, %v6678
  %vm6711 = vcmp.gt.f32.partialorder %v6679, %v6230
  %vm6712 = vcmp.gt.f32.partialorder %v6680, %v6231
  %vm6713 = vcmp.gt.f32.partialorder %v6681, %v6232
  %vm6714 = vcmp.gt.f32.partialorder %v6682, %v6233
  %vm6715 = vcmp.gt.f32.partialorder %v6683, %v6234
  %vm6716 = vcmp.gt.f32.partialorder %v6684, %v6235
  %vm6717 = vcmp.gt.f32.partialorder %v6685, %v6236
  %vm6718 = vcmp.gt.f32.partialorder %v6686, %v6237
  %vm6719 = vcmp.gt.f32.partialorder %v6687, %v6238
  %vm6720 = vcmp.gt.f32.partialorder %v6688, %v6239
  %vm6721 = vcmp.gt.f32.partialorder %v6689, %v6240
  %vm6722 = vcmp.gt.f32.partialorder %v6690, %v6241
  %vm6723 = vcmp.gt.f32.partialorder %v6691, %v6242
  %vm6724 = vcmp.gt.f32.partialorder %v6692, %v6243
  %vm6725 = vcmp.gt.f32.partialorder %v6693, %v6244
  %vm6726 = vcmp.gt.f32.partialorder %v6694, %v6245
  %vm6727 = vcmp.gt.f32.partialorder %v6695, %v6246
  %vm6728 = vcmp.gt.f32.partialorder %v6696, %v6247
  %vm6729 = vcmp.gt.f32.partialorder %v6697, %v6248
  %vm6730 = vcmp.gt.f32.partialorder %v6698, %v6249
  %vm6731 = vcmp.gt.f32.partialorder %v6699, %v6250
  %vm6732 = vcmp.gt.f32.partialorder %v6700, %v6251
  %vm6733 = vcmp.gt.f32.partialorder %v6701, %v6252
  %vm6734 = vcmp.gt.f32.partialorder %v6702, %v6253
  %vm6735 = vcmp.gt.f32.partialorder %v6703, %v6254
  %vm6736 = vcmp.gt.f32.partialorder %v6704, %v6255
  %vm6737 = vcmp.gt.f32.partialorder %v6705, %v6256
  %vm6738 = vcmp.gt.f32.partialorder %v6706, %v6257
  %vm6739 = vcmp.gt.f32.partialorder %v6707, %v6258
  %vm6740 = vcmp.gt.f32.partialorder %v6708, %v6259
  %vm6741 = vcmp.gt.f32.partialorder %v6709, %v6260
  %vm6742 = vcmp.gt.f32.partialorder %v6710, %v6261
  %v6743 = vsel %vm6711, %v6551, %v6166
  %v6744 = vsel %vm6712, %v6552, %v6167
  %v6745 = vsel %vm6713, %v6553, %v6168
  %v6746 = vsel %vm6714, %v6554, %v6169
  %v6747 = vsel %vm6715, %v6555, %v6170
  %v6748 = vsel %vm6716, %v6556, %v6171
  %v6749 = vsel %vm6717, %v6557, %v6172
  %v6750 = vsel %vm6718, %v6558, %v6173
  %v6751 = vsel %vm6719, %v6559, %v6174
  %v6752 = vsel %vm6720, %v6560, %v6175
  %v6753 = vsel %vm6721, %v6561, %v6176
  %v6754 = vsel %vm6722, %v6562, %v6177
  %v6755 = vsel %vm6723, %v6563, %v6178
  %v6756 = vsel %vm6724, %v6564, %v6179
  %v6757 = vsel %vm6725, %v6565, %v6180
  %v6758 = vsel %vm6726, %v6566, %v6181
  %v6759 = vsel %vm6727, %v6567, %v6182
  %v6760 = vsel %vm6728, %v6568, %v6183
  %v6761 = vsel %vm6729, %v6569, %v6184
  %v6762 = vsel %vm6730, %v6570, %v6185
  %v6763 = vsel %vm6731, %v6571, %v6186
  %v6764 = vsel %vm6732, %v6572, %v6187
  %v6765 = vsel %vm6733, %v6573, %v6188
  %v6766 = vsel %vm6734, %v6574, %v6189
  %v6767 = vsel %vm6735, %v6575, %v6190
  %v6768 = vsel %vm6736, %v6576, %v6191
  %v6769 = vsel %vm6737, %v6577, %v6192
  %v6770 = vsel %vm6738, %v6578, %v6193
  %v6771 = vsel %vm6739, %v6579, %v6194
  %v6772 = vsel %vm6740, %v6580, %v6195
  %v6773 = vsel %vm6741, %v6581, %v6196
  %v6774 = vsel %vm6742, %v6582, %v6197
  %v6775 = vsel %vm6711, %v6583, %v6198
  %v6776 = vsel %vm6712, %v6584, %v6199
  %v6777 = vsel %vm6713, %v6585, %v6200
  %v6778 = vsel %vm6714, %v6586, %v6201
  %v6779 = vsel %vm6715, %v6587, %v6202
  %v6780 = vsel %vm6716, %v6588, %v6203
  %v6781 = vsel %vm6717, %v6589, %v6204
  %v6782 = vsel %vm6718, %v6590, %v6205
  %v6783 = vsel %vm6719, %v6591, %v6206
  %v6784 = vsel %vm6720, %v6592, %v6207
  %v6785 = vsel %vm6721, %v6593, %v6208
  %v6786 = vsel %vm6722, %v6594, %v6209
  %v6787 = vsel %vm6723, %v6595, %v6210
  %v6788 = vsel %vm6724, %v6596, %v6211
  %v6789 = vsel %vm6725, %v6597, %v6212
  %v6790 = vsel %vm6726, %v6598, %v6213
  %v6791 = vsel %vm6727, %v6599, %v6214
  %v6792 = vsel %vm6728, %v6600, %v6215
  %v6793 = vsel %vm6729, %v6601, %v6216
  %v6794 = vsel %vm6730, %v6602, %v6217
  %v6795 = vsel %vm6731, %v6603, %v6218
  %v6796 = vsel %vm6732, %v6604, %v6219
  %v6797 = vsel %vm6733, %v6605, %v6220
  %v6798 = vsel %vm6734, %v6606, %v6221
  %v6799 = vsel %vm6735, %v6607, %v6222
  %v6800 = vsel %vm6736, %v6608, %v6223
  %v6801 = vsel %vm6737, %v6609, %v6224
  %v6802 = vsel %vm6738, %v6610, %v6225
  %v6803 = vsel %vm6739, %v6611, %v6226
  %v6804 = vsel %vm6740, %v6612, %v6227
  %v6805 = vsel %vm6741, %v6613, %v6228
  %v6806 = vsel %vm6742, %v6614, %v6229
  %v6807 = vsel %vm6711, %v6679, %v6230
  %v6808 = vsel %vm6712, %v6680, %v6231
  %v6809 = vsel %vm6713, %v6681, %v6232
  %v6810 = vsel %vm6714, %v6682, %v6233
  %v6811 = vsel %vm6715, %v6683, %v6234
  %v6812 = vsel %vm6716, %v6684, %v6235
  %v6813 = vsel %vm6717, %v6685, %v6236
  %v6814 = vsel %vm6718, %v6686, %v6237
  %v6815 = vsel %vm6719, %v6687, %v6238
  %v6816 = vsel %vm6720, %v6688, %v6239
  %v6817 = vsel %vm6721, %v6689, %v6240
  %v6818 = vsel %vm6722, %v6690, %v6241
  %v6819 = vsel %vm6723, %v6691, %v6242
  %v6820 = vsel %vm6724, %v6692, %v6243
  %v6821 = vsel %vm6725, %v6693, %v6244
  %v6822 = vsel %vm6726, %v6694, %v6245
  %v6823 = vsel %vm6727, %v6695, %v6246
  %v6824 = vsel %vm6728, %v6696, %v6247
  %v6825 = vsel %vm6729, %v6697, %v6248
  %v6826 = vsel %vm6730, %v6698, %v6249
  %v6827 = vsel %vm6731, %v6699, %v6250
  %v6828 = vsel %vm6732, %v6700, %v6251
  %v6829 = vsel %vm6733, %v6701, %v6252
  %v6830 = vsel %vm6734, %v6702, %v6253
  %v6831 = vsel %vm6735, %v6703, %v6254
  %v6832 = vsel %vm6736, %v6704, %v6255
  %v6833 = vsel %vm6737, %v6705, %v6256
  %v6834 = vsel %vm6738, %v6706, %v6257
  %v6835 = vsel %vm6739, %v6707, %v6258
  %v6836 = vsel %vm6740, %v6708, %v6259
  %v6837 = vsel %vm6741, %v6709, %v6260
  %v6838 = vsel %vm6742, %v6710, %v6261
  %v6839 = vrsqrt.pop %v6807
  %v6840 = vmul.f32 %v6807, %v6839
  %vm6841 = vcmp.eq.f32.partialorder %v6807, inf
  %v6842 = vsel %vm6841, %v6807, %v6840
  %vm6843 = vcmp.eq.f32.partialorder %v6807, 0.0
  %v6844 = vand.u32 %v6807, 2147483648
  %v6845 = vsel %vm6843, %v6844, %v6842
  %v6846 = vrsqrt.pop %v6808
  %v6847 = vmul.f32 %v6808, %v6846
  %vm6848 = vcmp.eq.f32.partialorder %v6808, inf
  %v6849 = vsel %vm6848, %v6808, %v6847
  %vm6850 = vcmp.eq.f32.partialorder %v6808, 0.0
  %v6851 = vand.u32 %v6808, 2147483648
  %v6852 = vsel %vm6850, %v6851, %v6849
  %v6853 = vrsqrt.pop %v6809
  %v6854 = vmul.f32 %v6809, %v6853
  %vm6855 = vcmp.eq.f32.partialorder %v6809, inf
  %v6856 = vsel %vm6855, %v6809, %v6854
  %vm6857 = vcmp.eq.f32.partialorder %v6809, 0.0
  %v6858 = vand.u32 %v6809, 2147483648
  %v6859 = vsel %vm6857, %v6858, %v6856
  %v6860 = vrsqrt.pop %v6810
  %v6861 = vmul.f32 %v6810, %v6860
  %vm6862 = vcmp.eq.f32.partialorder %v6810, inf
  %v6863 = vsel %vm6862, %v6810, %v6861
  %vm6864 = vcmp.eq.f32.partialorder %v6810, 0.0
  %v6865 = vand.u32 %v6810, 2147483648
  %v6866 = vsel %vm6864, %v6865, %v6863
  %v6867 = vrsqrt.pop %v6811
  %v6868 = vmul.f32 %v6811, %v6867
  %vm6869 = vcmp.eq.f32.partialorder %v6811, inf
  %v6870 = vsel %vm6869, %v6811, %v6868
  %vm6871 = vcmp.eq.f32.partialorder %v6811, 0.0
  %v6872 = vand.u32 %v6811, 2147483648
  %v6873 = vsel %vm6871, %v6872, %v6870
  %v6874 = vrsqrt.pop %v6812
  %v6875 = vmul.f32 %v6812, %v6874
  %vm6876 = vcmp.eq.f32.partialorder %v6812, inf
  %v6877 = vsel %vm6876, %v6812, %v6875
  %vm6878 = vcmp.eq.f32.partialorder %v6812, 0.0
  %v6879 = vand.u32 %v6812, 2147483648
  %v6880 = vsel %vm6878, %v6879, %v6877
  %v6881 = vrsqrt.pop %v6813
  %v6882 = vmul.f32 %v6813, %v6881
  %vm6883 = vcmp.eq.f32.partialorder %v6813, inf
  %v6884 = vsel %vm6883, %v6813, %v6882
  %vm6885 = vcmp.eq.f32.partialorder %v6813, 0.0
  %v6886 = vand.u32 %v6813, 2147483648
  %v6887 = vsel %vm6885, %v6886, %v6884
  %v6888 = vrsqrt.pop %v6814
  %v6889 = vmul.f32 %v6814, %v6888
  %vm6890 = vcmp.eq.f32.partialorder %v6814, inf
  %v6891 = vsel %vm6890, %v6814, %v6889
  %vm6892 = vcmp.eq.f32.partialorder %v6814, 0.0
  %v6893 = vand.u32 %v6814, 2147483648
  %v6894 = vsel %vm6892, %v6893, %v6891
  %v6895 = vrsqrt.pop %v6815
  %v6896 = vmul.f32 %v6815, %v6895
  %vm6897 = vcmp.eq.f32.partialorder %v6815, inf
  %v6898 = vsel %vm6897, %v6815, %v6896
  %vm6899 = vcmp.eq.f32.partialorder %v6815, 0.0
  %v6900 = vand.u32 %v6815, 2147483648
  %v6901 = vsel %vm6899, %v6900, %v6898
  %v6902 = vrsqrt.pop %v6816
  %v6903 = vmul.f32 %v6816, %v6902
  %vm6904 = vcmp.eq.f32.partialorder %v6816, inf
  %v6905 = vsel %vm6904, %v6816, %v6903
  %vm6906 = vcmp.eq.f32.partialorder %v6816, 0.0
  %v6907 = vand.u32 %v6816, 2147483648
  %v6908 = vsel %vm6906, %v6907, %v6905
  %v6909 = vrsqrt.pop %v6817
  %v6910 = vmul.f32 %v6817, %v6909
  %vm6911 = vcmp.eq.f32.partialorder %v6817, inf
  %v6912 = vsel %vm6911, %v6817, %v6910
  %vm6913 = vcmp.eq.f32.partialorder %v6817, 0.0
  %v6914 = vand.u32 %v6817, 2147483648
  %v6915 = vsel %vm6913, %v6914, %v6912
  %v6916 = vrsqrt.pop %v6818
  %v6917 = vmul.f32 %v6818, %v6916
  %vm6918 = vcmp.eq.f32.partialorder %v6818, inf
  %v6919 = vsel %vm6918, %v6818, %v6917
  %vm6920 = vcmp.eq.f32.partialorder %v6818, 0.0
  %v6921 = vand.u32 %v6818, 2147483648
  %v6922 = vsel %vm6920, %v6921, %v6919
  %v6923 = vrsqrt.pop %v6819
  %v6924 = vmul.f32 %v6819, %v6923
  %vm6925 = vcmp.eq.f32.partialorder %v6819, inf
  %v6926 = vsel %vm6925, %v6819, %v6924
  %vm6927 = vcmp.eq.f32.partialorder %v6819, 0.0
  %v6928 = vand.u32 %v6819, 2147483648
  %v6929 = vsel %vm6927, %v6928, %v6926
  %v6930 = vrsqrt.pop %v6820
  %v6931 = vmul.f32 %v6820, %v6930
  %vm6932 = vcmp.eq.f32.partialorder %v6820, inf
  %v6933 = vsel %vm6932, %v6820, %v6931
  %vm6934 = vcmp.eq.f32.partialorder %v6820, 0.0
  %v6935 = vand.u32 %v6820, 2147483648
  %v6936 = vsel %vm6934, %v6935, %v6933
  %v6937 = vrsqrt.pop %v6821
  %v6938 = vmul.f32 %v6821, %v6937
  %vm6939 = vcmp.eq.f32.partialorder %v6821, inf
  %v6940 = vsel %vm6939, %v6821, %v6938
  %vm6941 = vcmp.eq.f32.partialorder %v6821, 0.0
  %v6942 = vand.u32 %v6821, 2147483648
  %v6943 = vsel %vm6941, %v6942, %v6940
  %v6944 = vrsqrt.pop %v6822
  %v6945 = vmul.f32 %v6822, %v6944
  %vm6946 = vcmp.eq.f32.partialorder %v6822, inf
  %v6947 = vsel %vm6946, %v6822, %v6945
  %vm6948 = vcmp.eq.f32.partialorder %v6822, 0.0
  %v6949 = vand.u32 %v6822, 2147483648
  %v6950 = vsel %vm6948, %v6949, %v6947
  %v6951 = vrsqrt.pop %v6823
  %v6952 = vmul.f32 %v6823, %v6951
  %vm6953 = vcmp.eq.f32.partialorder %v6823, inf
  %v6954 = vsel %vm6953, %v6823, %v6952
  %vm6955 = vcmp.eq.f32.partialorder %v6823, 0.0
  %v6956 = vand.u32 %v6823, 2147483648
  %v6957 = vsel %vm6955, %v6956, %v6954
  %v6958 = vrsqrt.pop %v6824
  %v6959 = vmul.f32 %v6824, %v6958
  %vm6960 = vcmp.eq.f32.partialorder %v6824, inf
  %v6961 = vsel %vm6960, %v6824, %v6959
  %vm6962 = vcmp.eq.f32.partialorder %v6824, 0.0
  %v6963 = vand.u32 %v6824, 2147483648
  %v6964 = vsel %vm6962, %v6963, %v6961
  %v6965 = vrsqrt.pop %v6825
  %v6966 = vmul.f32 %v6825, %v6965
  %vm6967 = vcmp.eq.f32.partialorder %v6825, inf
  %v6968 = vsel %vm6967, %v6825, %v6966
  %vm6969 = vcmp.eq.f32.partialorder %v6825, 0.0
  %v6970 = vand.u32 %v6825, 2147483648
  %v6971 = vsel %vm6969, %v6970, %v6968
  %v6972 = vrsqrt.pop %v6826
  %v6973 = vmul.f32 %v6826, %v6972
  %vm6974 = vcmp.eq.f32.partialorder %v6826, inf
  %v6975 = vsel %vm6974, %v6826, %v6973
  %vm6976 = vcmp.eq.f32.partialorder %v6826, 0.0
  %v6977 = vand.u32 %v6826, 2147483648
  %v6978 = vsel %vm6976, %v6977, %v6975
  %v6979 = vrsqrt.pop %v6827
  %v6980 = vmul.f32 %v6827, %v6979
  %vm6981 = vcmp.eq.f32.partialorder %v6827, inf
  %v6982 = vsel %vm6981, %v6827, %v6980
  %vm6983 = vcmp.eq.f32.partialorder %v6827, 0.0
  %v6984 = vand.u32 %v6827, 2147483648
  %v6985 = vsel %vm6983, %v6984, %v6982
  %v6986 = vrsqrt.pop %v6828
  %v6987 = vmul.f32 %v6828, %v6986
  %vm6988 = vcmp.eq.f32.partialorder %v6828, inf
  %v6989 = vsel %vm6988, %v6828, %v6987
  %vm6990 = vcmp.eq.f32.partialorder %v6828, 0.0
  %v6991 = vand.u32 %v6828, 2147483648
  %v6992 = vsel %vm6990, %v6991, %v6989
  %v6993 = vrsqrt.pop %v6829
  %v6994 = vmul.f32 %v6829, %v6993
  %vm6995 = vcmp.eq.f32.partialorder %v6829, inf
  %v6996 = vsel %vm6995, %v6829, %v6994
  %vm6997 = vcmp.eq.f32.partialorder %v6829, 0.0
  %v6998 = vand.u32 %v6829, 2147483648
  %v6999 = vsel %vm6997, %v6998, %v6996
  %v7000 = vrsqrt.pop %v6830
  %v7001 = vmul.f32 %v6830, %v7000
  %vm7002 = vcmp.eq.f32.partialorder %v6830, inf
  %v7003 = vsel %vm7002, %v6830, %v7001
  %vm7004 = vcmp.eq.f32.partialorder %v6830, 0.0
  %v7005 = vand.u32 %v6830, 2147483648
  %v7006 = vsel %vm7004, %v7005, %v7003
  %v7007 = vrsqrt.pop %v6831
  %v7008 = vmul.f32 %v6831, %v7007
  %vm7009 = vcmp.eq.f32.partialorder %v6831, inf
  %v7010 = vsel %vm7009, %v6831, %v7008
  %vm7011 = vcmp.eq.f32.partialorder %v6831, 0.0
  %v7012 = vand.u32 %v6831, 2147483648
  %v7013 = vsel %vm7011, %v7012, %v7010
  %v7014 = vrsqrt.pop %v6832
  %v7015 = vmul.f32 %v6832, %v7014
  %vm7016 = vcmp.eq.f32.partialorder %v6832, inf
  %v7017 = vsel %vm7016, %v6832, %v7015
  %vm7018 = vcmp.eq.f32.partialorder %v6832, 0.0
  %v7019 = vand.u32 %v6832, 2147483648
  %v7020 = vsel %vm7018, %v7019, %v7017
  %v7021 = vrsqrt.pop %v6833
  %v7022 = vmul.f32 %v6833, %v7021
  %vm7023 = vcmp.eq.f32.partialorder %v6833, inf
  %v7024 = vsel %vm7023, %v6833, %v7022
  %vm7025 = vcmp.eq.f32.partialorder %v6833, 0.0
  %v7026 = vand.u32 %v6833, 2147483648
  %v7027 = vsel %vm7025, %v7026, %v7024
  %v7028 = vrsqrt.pop %v6834
  %v7029 = vmul.f32 %v6834, %v7028
  %vm7030 = vcmp.eq.f32.partialorder %v6834, inf
  %v7031 = vsel %vm7030, %v6834, %v7029
  %vm7032 = vcmp.eq.f32.partialorder %v6834, 0.0
  %v7033 = vand.u32 %v6834, 2147483648
  %v7034 = vsel %vm7032, %v7033, %v7031
  %v7035 = vrsqrt.pop %v6835
  %v7036 = vmul.f32 %v6835, %v7035
  %vm7037 = vcmp.eq.f32.partialorder %v6835, inf
  %v7038 = vsel %vm7037, %v6835, %v7036
  %vm7039 = vcmp.eq.f32.partialorder %v6835, 0.0
  %v7040 = vand.u32 %v6835, 2147483648
  %v7041 = vsel %vm7039, %v7040, %v7038
  %v7042 = vrsqrt.pop %v6836
  %v7043 = vmul.f32 %v6836, %v7042
  %vm7044 = vcmp.eq.f32.partialorder %v6836, inf
  %v7045 = vsel %vm7044, %v6836, %v7043
  %vm7046 = vcmp.eq.f32.partialorder %v6836, 0.0
  %v7047 = vand.u32 %v6836, 2147483648
  %v7048 = vsel %vm7046, %v7047, %v7045
  %v7049 = vrsqrt.pop %v6837
  %v7050 = vmul.f32 %v6837, %v7049
  %vm7051 = vcmp.eq.f32.partialorder %v6837, inf
  %v7052 = vsel %vm7051, %v6837, %v7050
  %vm7053 = vcmp.eq.f32.partialorder %v6837, 0.0
  %v7054 = vand.u32 %v6837, 2147483648
  %v7055 = vsel %vm7053, %v7054, %v7052
  %v7056 = vrsqrt.pop %v6838
  %v7057 = vmul.f32 %v6838, %v7056
  %vm7058 = vcmp.eq.f32.partialorder %v6838, inf
  %v7059 = vsel %vm7058, %v6838, %v7057
  %vm7060 = vcmp.eq.f32.partialorder %v6838, 0.0
  %v7061 = vand.u32 %v6838, 2147483648
  %v7062 = vsel %vm7060, %v7061, %v7059
  %v7063 = vand.u32 2147483647, %v6743
  %v7064 = vand.u32 2147483647, %v6744
  %v7065 = vand.u32 2147483647, %v6745
  %v7066 = vand.u32 2147483647, %v6746
  %v7067 = vand.u32 2147483647, %v6747
  %v7068 = vand.u32 2147483647, %v6748
  %v7069 = vand.u32 2147483647, %v6749
  %v7070 = vand.u32 2147483647, %v6750
  %v7071 = vand.u32 2147483647, %v6751
  %v7072 = vand.u32 2147483647, %v6752
  %v7073 = vand.u32 2147483647, %v6753
  %v7074 = vand.u32 2147483647, %v6754
  %v7075 = vand.u32 2147483647, %v6755
  %v7076 = vand.u32 2147483647, %v6756
  %v7077 = vand.u32 2147483647, %v6757
  %v7078 = vand.u32 2147483647, %v6758
  %v7079 = vand.u32 2147483647, %v6759
  %v7080 = vand.u32 2147483647, %v6760
  %v7081 = vand.u32 2147483647, %v6761
  %v7082 = vand.u32 2147483647, %v6762
  %v7083 = vand.u32 2147483647, %v6763
  %v7084 = vand.u32 2147483647, %v6764
  %v7085 = vand.u32 2147483647, %v6765
  %v7086 = vand.u32 2147483647, %v6766
  %v7087 = vand.u32 2147483647, %v6767
  %v7088 = vand.u32 2147483647, %v6768
  %v7089 = vand.u32 2147483647, %v6769
  %v7090 = vand.u32 2147483647, %v6770
  %v7091 = vand.u32 2147483647, %v6771
  %v7092 = vand.u32 2147483647, %v6772
  %v7093 = vand.u32 2147483647, %v6773
  %v7094 = vand.u32 2147483647, %v6774
  %v7095 = vand.u32 2147483647, %v6775
  %v7096 = vand.u32 2147483647, %v6776
  %v7097 = vand.u32 2147483647, %v6777
  %v7098 = vand.u32 2147483647, %v6778
  %v7099 = vand.u32 2147483647, %v6779
  %v7100 = vand.u32 2147483647, %v6780
  %v7101 = vand.u32 2147483647, %v6781
  %v7102 = vand.u32 2147483647, %v6782
  %v7103 = vand.u32 2147483647, %v6783
  %v7104 = vand.u32 2147483647, %v6784
  %v7105 = vand.u32 2147483647, %v6785
  %v7106 = vand.u32 2147483647, %v6786
  %v7107 = vand.u32 2147483647, %v6787
  %v7108 = vand.u32 2147483647, %v6788
  %v7109 = vand.u32 2147483647, %v6789
  %v7110 = vand.u32 2147483647, %v6790
  %v7111 = vand.u32 2147483647, %v6791
  %v7112 = vand.u32 2147483647, %v6792
  %v7113 = vand.u32 2147483647, %v6793
  %v7114 = vand.u32 2147483647, %v6794
  %v7115 = vand.u32 2147483647, %v6795
  %v7116 = vand.u32 2147483647, %v6796
  %v7117 = vand.u32 2147483647, %v6797
  %v7118 = vand.u32 2147483647, %v6798
  %v7119 = vand.u32 2147483647, %v6799
  %v7120 = vand.u32 2147483647, %v6800
  %v7121 = vand.u32 2147483647, %v6801
  %v7122 = vand.u32 2147483647, %v6802
  %v7123 = vand.u32 2147483647, %v6803
  %v7124 = vand.u32 2147483647, %v6804
  %v7125 = vand.u32 2147483647, %v6805
  %v7126 = vand.u32 2147483647, %v6806
  %v7127 = vmax.f32 %v7063, %v7095
  %v7128 = vmax.f32 %v7064, %v7096
  %v7129 = vmax.f32 %v7065, %v7097
  %v7130 = vmax.f32 %v7066, %v7098
  %v7131 = vmax.f32 %v7067, %v7099
  %v7132 = vmax.f32 %v7068, %v7100
  %v7133 = vmax.f32 %v7069, %v7101
  %v7134 = vmax.f32 %v7070, %v7102
  %v7135 = vmax.f32 %v7071, %v7103
  %v7136 = vmax.f32 %v7072, %v7104
  %v7137 = vmax.f32 %v7073, %v7105
  %v7138 = vmax.f32 %v7074, %v7106
  %v7139 = vmax.f32 %v7075, %v7107
  %v7140 = vmax.f32 %v7076, %v7108
  %v7141 = vmax.f32 %v7077, %v7109
  %v7142 = vmax.f32 %v7078, %v7110
  %v7143 = vmax.f32 %v7079, %v7111
  %v7144 = vmax.f32 %v7080, %v7112
  %v7145 = vmax.f32 %v7081, %v7113
  %v7146 = vmax.f32 %v7082, %v7114
  %v7147 = vmax.f32 %v7083, %v7115
  %v7148 = vmax.f32 %v7084, %v7116
  %v7149 = vmax.f32 %v7085, %v7117
  %v7150 = vmax.f32 %v7086, %v7118
  %v7151 = vmax.f32 %v7087, %v7119
  %v7152 = vmax.f32 %v7088, %v7120
  %v7153 = vmax.f32 %v7089, %v7121
  %v7154 = vmax.f32 %v7090, %v7122
  %v7155 = vmax.f32 %v7091, %v7123
  %v7156 = vmax.f32 %v7092, %v7124
  %v7157 = vmax.f32 %v7093, %v7125
  %v7158 = vmax.f32 %v7094, %v7126
  %v7159 = vmin.f32 %v7063, %v7095
  %v7160 = vmin.f32 %v7064, %v7096
  %v7161 = vmin.f32 %v7065, %v7097
  %v7162 = vmin.f32 %v7066, %v7098
  %v7163 = vmin.f32 %v7067, %v7099
  %v7164 = vmin.f32 %v7068, %v7100
  %v7165 = vmin.f32 %v7069, %v7101
  %v7166 = vmin.f32 %v7070, %v7102
  %v7167 = vmin.f32 %v7071, %v7103
  %v7168 = vmin.f32 %v7072, %v7104
  %v7169 = vmin.f32 %v7073, %v7105
  %v7170 = vmin.f32 %v7074, %v7106
  %v7171 = vmin.f32 %v7075, %v7107
  %v7172 = vmin.f32 %v7076, %v7108
  %v7173 = vmin.f32 %v7077, %v7109
  %v7174 = vmin.f32 %v7078, %v7110
  %v7175 = vmin.f32 %v7079, %v7111
  %v7176 = vmin.f32 %v7080, %v7112
  %v7177 = vmin.f32 %v7081, %v7113
  %v7178 = vmin.f32 %v7082, %v7114
  %v7179 = vmin.f32 %v7083, %v7115
  %v7180 = vmin.f32 %v7084, %v7116
  %v7181 = vmin.f32 %v7085, %v7117
  %v7182 = vmin.f32 %v7086, %v7118
  %v7183 = vmin.f32 %v7087, %v7119
  %v7184 = vmin.f32 %v7088, %v7120
  %v7185 = vmin.f32 %v7089, %v7121
  %v7186 = vmin.f32 %v7090, %v7122
  %v7187 = vmin.f32 %v7091, %v7123
  %v7188 = vmin.f32 %v7092, %v7124
  %v7189 = vmin.f32 %v7093, %v7125
  %v7190 = vmin.f32 %v7094, %v7126
  %v7191 = vadd.f32 %v7127, 1e-12
  %v7192 = vadd.f32 %v7128, 1e-12
  %v7193 = vadd.f32 %v7129, 1e-12
  %v7194 = vadd.f32 %v7130, 1e-12
  %v7195 = vadd.f32 %v7131, 1e-12
  %v7196 = vadd.f32 %v7132, 1e-12
  %v7197 = vadd.f32 %v7133, 1e-12
  %v7198 = vadd.f32 %v7134, 1e-12
  %v7199 = vadd.f32 %v7135, 1e-12
  %v7200 = vadd.f32 %v7136, 1e-12
  %v7201 = vadd.f32 %v7137, 1e-12
  %v7202 = vadd.f32 %v7138, 1e-12
  %v7203 = vadd.f32 %v7139, 1e-12
  %v7204 = vadd.f32 %v7140, 1e-12
  %v7205 = vadd.f32 %v7141, 1e-12
  %v7206 = vadd.f32 %v7142, 1e-12
  %v7207 = vadd.f32 %v7143, 1e-12
  %v7208 = vadd.f32 %v7144, 1e-12
  %v7209 = vadd.f32 %v7145, 1e-12
  %v7210 = vadd.f32 %v7146, 1e-12
  %v7211 = vadd.f32 %v7147, 1e-12
  %v7212 = vadd.f32 %v7148, 1e-12
  %v7213 = vadd.f32 %v7149, 1e-12
  %v7214 = vadd.f32 %v7150, 1e-12
  %v7215 = vadd.f32 %v7151, 1e-12
  %v7216 = vadd.f32 %v7152, 1e-12
  %v7217 = vadd.f32 %v7153, 1e-12
  %v7218 = vadd.f32 %v7154, 1e-12
  %v7219 = vadd.f32 %v7155, 1e-12
  %v7220 = vadd.f32 %v7156, 1e-12
  %v7221 = vadd.f32 %v7157, 1e-12
  %v7222 = vadd.f32 %v7158, 1e-12
  %v7223 = vrcp.pop %v7191
  %v7224 = vrcp.pop %v7192
  %v7225 = vrcp.pop %v7193
  %v7226 = vrcp.pop %v7194
  %v7227 = vrcp.pop %v7195
  %v7228 = vrcp.pop %v7196
  %v7229 = vrcp.pop %v7197
  %v7230 = vrcp.pop %v7198
  %v7231 = vrcp.pop %v7199
  %v7232 = vrcp.pop %v7200
  %v7233 = vrcp.pop %v7201
  %v7234 = vrcp.pop %v7202
  %v7235 = vrcp.pop %v7203
  %v7236 = vrcp.pop %v7204
  %v7237 = vrcp.pop %v7205
  %v7238 = vrcp.pop %v7206
  %v7239 = vrcp.pop %v7207
  %v7240 = vrcp.pop %v7208
  %v7241 = vrcp.pop %v7209
  %v7242 = vrcp.pop %v7210
  %v7243 = vrcp.pop %v7211
  %v7244 = vrcp.pop %v7212
  %v7245 = vrcp.pop %v7213
  %v7246 = vrcp.pop %v7214
  %v7247 = vrcp.pop %v7215
  %v7248 = vrcp.pop %v7216
  %v7249 = vrcp.pop %v7217
  %v7250 = vrcp.pop %v7218
  %v7251 = vrcp.pop %v7219
  %v7252 = vrcp.pop %v7220
  %v7253 = vrcp.pop %v7221
  %v7254 = vrcp.pop %v7222
  %v7255 = vmul.f32 %v7159, %v7223
  %v7256 = vmul.f32 %v7160, %v7224
  %v7257 = vmul.f32 %v7161, %v7225
  %v7258 = vmul.f32 %v7162, %v7226
  %v7259 = vmul.f32 %v7163, %v7227
  %v7260 = vmul.f32 %v7164, %v7228
  %v7261 = vmul.f32 %v7165, %v7229
  %v7262 = vmul.f32 %v7166, %v7230
  %v7263 = vmul.f32 %v7167, %v7231
  %v7264 = vmul.f32 %v7168, %v7232
  %v7265 = vmul.f32 %v7169, %v7233
  %v7266 = vmul.f32 %v7170, %v7234
  %v7267 = vmul.f32 %v7171, %v7235
  %v7268 = vmul.f32 %v7172, %v7236
  %v7269 = vmul.f32 %v7173, %v7237
  %v7270 = vmul.f32 %v7174, %v7238
  %v7271 = vmul.f32 %v7175, %v7239
  %v7272 = vmul.f32 %v7176, %v7240
  %v7273 = vmul.f32 %v7177, %v7241
  %v7274 = vmul.f32 %v7178, %v7242
  %v7275 = vmul.f32 %v7179, %v7243
  %v7276 = vmul.f32 %v7180, %v7244
  %v7277 = vmul.f32 %v7181, %v7245
  %v7278 = vmul.f32 %v7182, %v7246
  %v7279 = vmul.f32 %v7183, %v7247
  %v7280 = vmul.f32 %v7184, %v7248
  %v7281 = vmul.f32 %v7185, %v7249
  %v7282 = vmul.f32 %v7186, %v7250
  %v7283 = vmul.f32 %v7187, %v7251
  %v7284 = vmul.f32 %v7188, %v7252
  %v7285 = vmul.f32 %v7189, %v7253
  %v7286 = vmul.f32 %v7190, %v7254
  %v7287 = vmul.f32 %v7255, %v7255
  %v7288 = vmul.f32 %v7256, %v7256
  %v7289 = vmul.f32 %v7257, %v7257
  %v7290 = vmul.f32 %v7258, %v7258
  %v7291 = vmul.f32 %v7259, %v7259
  %v7292 = vmul.f32 %v7260, %v7260
  %v7293 = vmul.f32 %v7261, %v7261
  %v7294 = vmul.f32 %v7262, %v7262
  %v7295 = vmul.f32 %v7263, %v7263
  %v7296 = vmul.f32 %v7264, %v7264
  %v7297 = vmul.f32 %v7265, %v7265
  %v7298 = vmul.f32 %v7266, %v7266
  %v7299 = vmul.f32 %v7267, %v7267
  %v7300 = vmul.f32 %v7268, %v7268
  %v7301 = vmul.f32 %v7269, %v7269
  %v7302 = vmul.f32 %v7270, %v7270
  %v7303 = vmul.f32 %v7271, %v7271
  %v7304 = vmul.f32 %v7272, %v7272
  %v7305 = vmul.f32 %v7273, %v7273
  %v7306 = vmul.f32 %v7274, %v7274
  %v7307 = vmul.f32 %v7275, %v7275
  %v7308 = vmul.f32 %v7276, %v7276
  %v7309 = vmul.f32 %v7277, %v7277
  %v7310 = vmul.f32 %v7278, %v7278
  %v7311 = vmul.f32 %v7279, %v7279
  %v7312 = vmul.f32 %v7280, %v7280
  %v7313 = vmul.f32 %v7281, %v7281
  %v7314 = vmul.f32 %v7282, %v7282
  %v7315 = vmul.f32 %v7283, %v7283
  %v7316 = vmul.f32 %v7284, %v7284
  %v7317 = vmul.f32 %v7285, %v7285
  %v7318 = vmul.f32 %v7286, %v7286
  %v7319 = vmul.f32 %v7287, -0.046496473
  %v7320 = vmul.f32 %v7288, -0.046496473
  %v7321 = vmul.f32 %v7289, -0.046496473
  %v7322 = vmul.f32 %v7290, -0.046496473
  %v7323 = vmul.f32 %v7291, -0.046496473
  %v7324 = vmul.f32 %v7292, -0.046496473
  %v7325 = vmul.f32 %v7293, -0.046496473
  %v7326 = vmul.f32 %v7294, -0.046496473
  %v7327 = vmul.f32 %v7295, -0.046496473
  %v7328 = vmul.f32 %v7296, -0.046496473
  %v7329 = vmul.f32 %v7297, -0.046496473
  %v7330 = vmul.f32 %v7298, -0.046496473
  %v7331 = vmul.f32 %v7299, -0.046496473
  %v7332 = vmul.f32 %v7300, -0.046496473
  %v7333 = vmul.f32 %v7301, -0.046496473
  %v7334 = vmul.f32 %v7302, -0.046496473
  %v7335 = vmul.f32 %v7303, -0.046496473
  %v7336 = vmul.f32 %v7304, -0.046496473
  %v7337 = vmul.f32 %v7305, -0.046496473
  %v7338 = vmul.f32 %v7306, -0.046496473
  %v7339 = vmul.f32 %v7307, -0.046496473
  %v7340 = vmul.f32 %v7308, -0.046496473
  %v7341 = vmul.f32 %v7309, -0.046496473
  %v7342 = vmul.f32 %v7310, -0.046496473
  %v7343 = vmul.f32 %v7311, -0.046496473
  %v7344 = vmul.f32 %v7312, -0.046496473
  %v7345 = vmul.f32 %v7313, -0.046496473
  %v7346 = vmul.f32 %v7314, -0.046496473
  %v7347 = vmul.f32 %v7315, -0.046496473
  %v7348 = vmul.f32 %v7316, -0.046496473
  %v7349 = vmul.f32 %v7317, -0.046496473
  %v7350 = vmul.f32 %v7318, -0.046496473
  %v7351 = vadd.f32 %v7319, 0.15931422
  %v7352 = vadd.f32 %v7320, 0.15931422
  %v7353 = vadd.f32 %v7321, 0.15931422
  %v7354 = vadd.f32 %v7322, 0.15931422
  %v7355 = vadd.f32 %v7323, 0.15931422
  %v7356 = vadd.f32 %v7324, 0.15931422
  %v7357 = vadd.f32 %v7325, 0.15931422
  %v7358 = vadd.f32 %v7326, 0.15931422
  %v7359 = vadd.f32 %v7327, 0.15931422
  %v7360 = vadd.f32 %v7328, 0.15931422
  %v7361 = vadd.f32 %v7329, 0.15931422
  %v7362 = vadd.f32 %v7330, 0.15931422
  %v7363 = vadd.f32 %v7331, 0.15931422
  %v7364 = vadd.f32 %v7332, 0.15931422
  %v7365 = vadd.f32 %v7333, 0.15931422
  %v7366 = vadd.f32 %v7334, 0.15931422
  %v7367 = vadd.f32 %v7335, 0.15931422
  %v7368 = vadd.f32 %v7336, 0.15931422
  %v7369 = vadd.f32 %v7337, 0.15931422
  %v7370 = vadd.f32 %v7338, 0.15931422
  %v7371 = vadd.f32 %v7339, 0.15931422
  %v7372 = vadd.f32 %v7340, 0.15931422
  %v7373 = vadd.f32 %v7341, 0.15931422
  %v7374 = vadd.f32 %v7342, 0.15931422
  %v7375 = vadd.f32 %v7343, 0.15931422
  %v7376 = vadd.f32 %v7344, 0.15931422
  %v7377 = vadd.f32 %v7345, 0.15931422
  %v7378 = vadd.f32 %v7346, 0.15931422
  %v7379 = vadd.f32 %v7347, 0.15931422
  %v7380 = vadd.f32 %v7348, 0.15931422
  %v7381 = vadd.f32 %v7349, 0.15931422
  %v7382 = vadd.f32 %v7350, 0.15931422
  %v7383 = vmul.f32 %v7351, %v7287
  %v7384 = vmul.f32 %v7352, %v7288
  %v7385 = vmul.f32 %v7353, %v7289
  %v7386 = vmul.f32 %v7354, %v7290
  %v7387 = vmul.f32 %v7355, %v7291
  %v7388 = vmul.f32 %v7356, %v7292
  %v7389 = vmul.f32 %v7357, %v7293
  %v7390 = vmul.f32 %v7358, %v7294
  %v7391 = vmul.f32 %v7359, %v7295
  %v7392 = vmul.f32 %v7360, %v7296
  %v7393 = vmul.f32 %v7361, %v7297
  %v7394 = vmul.f32 %v7362, %v7298
  %v7395 = vmul.f32 %v7363, %v7299
  %v7396 = vmul.f32 %v7364, %v7300
  %v7397 = vmul.f32 %v7365, %v7301
  %v7398 = vmul.f32 %v7366, %v7302
  %v7399 = vmul.f32 %v7367, %v7303
  %v7400 = vmul.f32 %v7368, %v7304
  %v7401 = vmul.f32 %v7369, %v7305
  %v7402 = vmul.f32 %v7370, %v7306
  %v7403 = vmul.f32 %v7371, %v7307
  %v7404 = vmul.f32 %v7372, %v7308
  %v7405 = vmul.f32 %v7373, %v7309
  %v7406 = vmul.f32 %v7374, %v7310
  %v7407 = vmul.f32 %v7375, %v7311
  %v7408 = vmul.f32 %v7376, %v7312
  %v7409 = vmul.f32 %v7377, %v7313
  %v7410 = vmul.f32 %v7378, %v7314
  %v7411 = vmul.f32 %v7379, %v7315
  %v7412 = vmul.f32 %v7380, %v7316
  %v7413 = vmul.f32 %v7381, %v7317
  %v7414 = vmul.f32 %v7382, %v7318
  %v7415 = vsub.f32 %v7383, 0.32762277
  %v7416 = vsub.f32 %v7384, 0.32762277
  %v7417 = vsub.f32 %v7385, 0.32762277
  %v7418 = vsub.f32 %v7386, 0.32762277
  %v7419 = vsub.f32 %v7387, 0.32762277
  %v7420 = vsub.f32 %v7388, 0.32762277
  %v7421 = vsub.f32 %v7389, 0.32762277
  %v7422 = vsub.f32 %v7390, 0.32762277
  %v7423 = vsub.f32 %v7391, 0.32762277
  %v7424 = vsub.f32 %v7392, 0.32762277
  %v7425 = vsub.f32 %v7393, 0.32762277
  %v7426 = vsub.f32 %v7394, 0.32762277
  %v7427 = vsub.f32 %v7395, 0.32762277
  %v7428 = vsub.f32 %v7396, 0.32762277
  %v7429 = vsub.f32 %v7397, 0.32762277
  %v7430 = vsub.f32 %v7398, 0.32762277
  %v7431 = vsub.f32 %v7399, 0.32762277
  %v7432 = vsub.f32 %v7400, 0.32762277
  %v7433 = vsub.f32 %v7401, 0.32762277
  %v7434 = vsub.f32 %v7402, 0.32762277
  %v7435 = vsub.f32 %v7403, 0.32762277
  %v7436 = vsub.f32 %v7404, 0.32762277
  %v7437 = vsub.f32 %v7405, 0.32762277
  %v7438 = vsub.f32 %v7406, 0.32762277
  %v7439 = vsub.f32 %v7407, 0.32762277
  %v7440 = vsub.f32 %v7408, 0.32762277
  %v7441 = vsub.f32 %v7409, 0.32762277
  %v7442 = vsub.f32 %v7410, 0.32762277
  %v7443 = vsub.f32 %v7411, 0.32762277
  %v7444 = vsub.f32 %v7412, 0.32762277
  %v7445 = vsub.f32 %v7413, 0.32762277
  %v7446 = vsub.f32 %v7414, 0.32762277
  %v7447 = vmul.f32 %v7415, %v7287
  %v7448 = vmul.f32 %v7416, %v7288
  %v7449 = vmul.f32 %v7417, %v7289
  %v7450 = vmul.f32 %v7418, %v7290
  %v7451 = vmul.f32 %v7419, %v7291
  %v7452 = vmul.f32 %v7420, %v7292
  %v7453 = vmul.f32 %v7421, %v7293
  %v7454 = vmul.f32 %v7422, %v7294
  %v7455 = vmul.f32 %v7423, %v7295
  %v7456 = vmul.f32 %v7424, %v7296
  %v7457 = vmul.f32 %v7425, %v7297
  %v7458 = vmul.f32 %v7426, %v7298
  %v7459 = vmul.f32 %v7427, %v7299
  %v7460 = vmul.f32 %v7428, %v7300
  %v7461 = vmul.f32 %v7429, %v7301
  %v7462 = vmul.f32 %v7430, %v7302
  %v7463 = vmul.f32 %v7431, %v7303
  %v7464 = vmul.f32 %v7432, %v7304
  %v7465 = vmul.f32 %v7433, %v7305
  %v7466 = vmul.f32 %v7434, %v7306
  %v7467 = vmul.f32 %v7435, %v7307
  %v7468 = vmul.f32 %v7436, %v7308
  %v7469 = vmul.f32 %v7437, %v7309
  %v7470 = vmul.f32 %v7438, %v7310
  %v7471 = vmul.f32 %v7439, %v7311
  %v7472 = vmul.f32 %v7440, %v7312
  %v7473 = vmul.f32 %v7441, %v7313
  %v7474 = vmul.f32 %v7442, %v7314
  %v7475 = vmul.f32 %v7443, %v7315
  %v7476 = vmul.f32 %v7444, %v7316
  %v7477 = vmul.f32 %v7445, %v7317
  %v7478 = vmul.f32 %v7446, %v7318
  %v7479 = vmul.f32 %v7447, %v7255
  %v7480 = vmul.f32 %v7448, %v7256
  %v7481 = vmul.f32 %v7449, %v7257
  %v7482 = vmul.f32 %v7450, %v7258
  %v7483 = vmul.f32 %v7451, %v7259
  %v7484 = vmul.f32 %v7452, %v7260
  %v7485 = vmul.f32 %v7453, %v7261
  %v7486 = vmul.f32 %v7454, %v7262
  %v7487 = vmul.f32 %v7455, %v7263
  %v7488 = vmul.f32 %v7456, %v7264
  %v7489 = vmul.f32 %v7457, %v7265
  %v7490 = vmul.f32 %v7458, %v7266
  %v7491 = vmul.f32 %v7459, %v7267
  %v7492 = vmul.f32 %v7460, %v7268
  %v7493 = vmul.f32 %v7461, %v7269
  %v7494 = vmul.f32 %v7462, %v7270
  %v7495 = vmul.f32 %v7463, %v7271
  %v7496 = vmul.f32 %v7464, %v7272
  %v7497 = vmul.f32 %v7465, %v7273
  %v7498 = vmul.f32 %v7466, %v7274
  %v7499 = vmul.f32 %v7467, %v7275
  %v7500 = vmul.f32 %v7468, %v7276
  %v7501 = vmul.f32 %v7469, %v7277
  %v7502 = vmul.f32 %v7470, %v7278
  %v7503 = vmul.f32 %v7471, %v7279
  %v7504 = vmul.f32 %v7472, %v7280
  %v7505 = vmul.f32 %v7473, %v7281
  %v7506 = vmul.f32 %v7474, %v7282
  %v7507 = vmul.f32 %v7475, %v7283
  %v7508 = vmul.f32 %v7476, %v7284
  %v7509 = vmul.f32 %v7477, %v7285
  %v7510 = vmul.f32 %v7478, %v7286
  %v7511 = vadd.f32 %v7479, %v7255
  %v7512 = vadd.f32 %v7480, %v7256
  %v7513 = vadd.f32 %v7481, %v7257
  %v7514 = vadd.f32 %v7482, %v7258
  %v7515 = vadd.f32 %v7483, %v7259
  %v7516 = vadd.f32 %v7484, %v7260
  %v7517 = vadd.f32 %v7485, %v7261
  %v7518 = vadd.f32 %v7486, %v7262
  %v7519 = vadd.f32 %v7487, %v7263
  %v7520 = vadd.f32 %v7488, %v7264
  %v7521 = vadd.f32 %v7489, %v7265
  %v7522 = vadd.f32 %v7490, %v7266
  %v7523 = vadd.f32 %v7491, %v7267
  %v7524 = vadd.f32 %v7492, %v7268
  %v7525 = vadd.f32 %v7493, %v7269
  %v7526 = vadd.f32 %v7494, %v7270
  %v7527 = vadd.f32 %v7495, %v7271
  %v7528 = vadd.f32 %v7496, %v7272
  %v7529 = vadd.f32 %v7497, %v7273
  %v7530 = vadd.f32 %v7498, %v7274
  %v7531 = vadd.f32 %v7499, %v7275
  %v7532 = vadd.f32 %v7500, %v7276
  %v7533 = vadd.f32 %v7501, %v7277
  %v7534 = vadd.f32 %v7502, %v7278
  %v7535 = vadd.f32 %v7503, %v7279
  %v7536 = vadd.f32 %v7504, %v7280
  %v7537 = vadd.f32 %v7505, %v7281
  %v7538 = vadd.f32 %v7506, %v7282
  %v7539 = vadd.f32 %v7507, %v7283
  %v7540 = vadd.f32 %v7508, %v7284
  %v7541 = vadd.f32 %v7509, %v7285
  %v7542 = vadd.f32 %v7510, %v7286
  %vm7543 = vcmp.gt.f32.partialorder %v7095, %v7063
  %vm7544 = vcmp.gt.f32.partialorder %v7096, %v7064
  %vm7545 = vcmp.gt.f32.partialorder %v7097, %v7065
  %vm7546 = vcmp.gt.f32.partialorder %v7098, %v7066
  %vm7547 = vcmp.gt.f32.partialorder %v7099, %v7067
  %vm7548 = vcmp.gt.f32.partialorder %v7100, %v7068
  %vm7549 = vcmp.gt.f32.partialorder %v7101, %v7069
  %vm7550 = vcmp.gt.f32.partialorder %v7102, %v7070
  %vm7551 = vcmp.gt.f32.partialorder %v7103, %v7071
  %vm7552 = vcmp.gt.f32.partialorder %v7104, %v7072
  %vm7553 = vcmp.gt.f32.partialorder %v7105, %v7073
  %vm7554 = vcmp.gt.f32.partialorder %v7106, %v7074
  %vm7555 = vcmp.gt.f32.partialorder %v7107, %v7075
  %vm7556 = vcmp.gt.f32.partialorder %v7108, %v7076
  %vm7557 = vcmp.gt.f32.partialorder %v7109, %v7077
  %vm7558 = vcmp.gt.f32.partialorder %v7110, %v7078
  %vm7559 = vcmp.gt.f32.partialorder %v7111, %v7079
  %vm7560 = vcmp.gt.f32.partialorder %v7112, %v7080
  %vm7561 = vcmp.gt.f32.partialorder %v7113, %v7081
  %vm7562 = vcmp.gt.f32.partialorder %v7114, %v7082
  %vm7563 = vcmp.gt.f32.partialorder %v7115, %v7083
  %vm7564 = vcmp.gt.f32.partialorder %v7116, %v7084
  %vm7565 = vcmp.gt.f32.partialorder %v7117, %v7085
  %vm7566 = vcmp.gt.f32.partialorder %v7118, %v7086
  %vm7567 = vcmp.gt.f32.partialorder %v7119, %v7087
  %vm7568 = vcmp.gt.f32.partialorder %v7120, %v7088
  %vm7569 = vcmp.gt.f32.partialorder %v7121, %v7089
  %vm7570 = vcmp.gt.f32.partialorder %v7122, %v7090
  %vm7571 = vcmp.gt.f32.partialorder %v7123, %v7091
  %vm7572 = vcmp.gt.f32.partialorder %v7124, %v7092
  %vm7573 = vcmp.gt.f32.partialorder %v7125, %v7093
  %vm7574 = vcmp.gt.f32.partialorder %v7126, %v7094
  %v7575 = vsub.f32 1.5707964, %v7511
  %v7576 = vsub.f32 1.5707964, %v7512
  %v7577 = vsub.f32 1.5707964, %v7513
  %v7578 = vsub.f32 1.5707964, %v7514
  %v7579 = vsub.f32 1.5707964, %v7515
  %v7580 = vsub.f32 1.5707964, %v7516
  %v7581 = vsub.f32 1.5707964, %v7517
  %v7582 = vsub.f32 1.5707964, %v7518
  %v7583 = vsub.f32 1.5707964, %v7519
  %v7584 = vsub.f32 1.5707964, %v7520
  %v7585 = vsub.f32 1.5707964, %v7521
  %v7586 = vsub.f32 1.5707964, %v7522
  %v7587 = vsub.f32 1.5707964, %v7523
  %v7588 = vsub.f32 1.5707964, %v7524
  %v7589 = vsub.f32 1.5707964, %v7525
  %v7590 = vsub.f32 1.5707964, %v7526
  %v7591 = vsub.f32 1.5707964, %v7527
  %v7592 = vsub.f32 1.5707964, %v7528
  %v7593 = vsub.f32 1.5707964, %v7529
  %v7594 = vsub.f32 1.5707964, %v7530
  %v7595 = vsub.f32 1.5707964, %v7531
  %v7596 = vsub.f32 1.5707964, %v7532
  %v7597 = vsub.f32 1.5707964, %v7533
  %v7598 = vsub.f32 1.5707964, %v7534
  %v7599 = vsub.f32 1.5707964, %v7535
  %v7600 = vsub.f32 1.5707964, %v7536
  %v7601 = vsub.f32 1.5707964, %v7537
  %v7602 = vsub.f32 1.5707964, %v7538
  %v7603 = vsub.f32 1.5707964, %v7539
  %v7604 = vsub.f32 1.5707964, %v7540
  %v7605 = vsub.f32 1.5707964, %v7541
  %v7606 = vsub.f32 1.5707964, %v7542
  %v7607 = vsel %vm7543, %v7575, %v7511
  %v7608 = vsel %vm7544, %v7576, %v7512
  %v7609 = vsel %vm7545, %v7577, %v7513
  %v7610 = vsel %vm7546, %v7578, %v7514
  %v7611 = vsel %vm7547, %v7579, %v7515
  %v7612 = vsel %vm7548, %v7580, %v7516
  %v7613 = vsel %vm7549, %v7581, %v7517
  %v7614 = vsel %vm7550, %v7582, %v7518
  %v7615 = vsel %vm7551, %v7583, %v7519
  %v7616 = vsel %vm7552, %v7584, %v7520
  %v7617 = vsel %vm7553, %v7585, %v7521
  %v7618 = vsel %vm7554, %v7586, %v7522
  %v7619 = vsel %vm7555, %v7587, %v7523
  %v7620 = vsel %vm7556, %v7588, %v7524
  %v7621 = vsel %vm7557, %v7589, %v7525
  %v7622 = vsel %vm7558, %v7590, %v7526
  %v7623 = vsel %vm7559, %v7591, %v7527
  %v7624 = vsel %vm7560, %v7592, %v7528
  %v7625 = vsel %vm7561, %v7593, %v7529
  %v7626 = vsel %vm7562, %v7594, %v7530
  %v7627 = vsel %vm7563, %v7595, %v7531
  %v7628 = vsel %vm7564, %v7596, %v7532
  %v7629 = vsel %vm7565, %v7597, %v7533
  %v7630 = vsel %vm7566, %v7598, %v7534
  %v7631 = vsel %vm7567, %v7599, %v7535
  %v7632 = vsel %vm7568, %v7600, %v7536
  %v7633 = vsel %vm7569, %v7601, %v7537
  %v7634 = vsel %vm7570, %v7602, %v7538
  %v7635 = vsel %vm7571, %v7603, %v7539
  %v7636 = vsel %vm7572, %v7604, %v7540
  %v7637 = vsel %vm7573, %v7605, %v7541
  %v7638 = vsel %vm7574, %v7606, %v7542
  %v7639 = vmul.f32 %v6743, %v6775
  %v7640 = vmul.f32 %v6744, %v6776
  %v7641 = vmul.f32 %v6745, %v6777
  %v7642 = vmul.f32 %v6746, %v6778
  %v7643 = vmul.f32 %v6747, %v6779
  %v7644 = vmul.f32 %v6748, %v6780
  %v7645 = vmul.f32 %v6749, %v6781
  %v7646 = vmul.f32 %v6750, %v6782
  %v7647 = vmul.f32 %v6751, %v6783
  %v7648 = vmul.f32 %v6752, %v6784
  %v7649 = vmul.f32 %v6753, %v6785
  %v7650 = vmul.f32 %v6754, %v6786
  %v7651 = vmul.f32 %v6755, %v6787
  %v7652 = vmul.f32 %v6756, %v6788
  %v7653 = vmul.f32 %v6757, %v6789
  %v7654 = vmul.f32 %v6758, %v6790
  %v7655 = vmul.f32 %v6759, %v6791
  %v7656 = vmul.f32 %v6760, %v6792
  %v7657 = vmul.f32 %v6761, %v6793
  %v7658 = vmul.f32 %v6762, %v6794
  %v7659 = vmul.f32 %v6763, %v6795
  %v7660 = vmul.f32 %v6764, %v6796
  %v7661 = vmul.f32 %v6765, %v6797
  %v7662 = vmul.f32 %v6766, %v6798
  %v7663 = vmul.f32 %v6767, %v6799
  %v7664 = vmul.f32 %v6768, %v6800
  %v7665 = vmul.f32 %v6769, %v6801
  %v7666 = vmul.f32 %v6770, %v6802
  %v7667 = vmul.f32 %v6771, %v6803
  %v7668 = vmul.f32 %v6772, %v6804
  %v7669 = vmul.f32 %v6773, %v6805
  %v7670 = vmul.f32 %v6774, %v6806
  %vm7671 = vcmp.lt.f32.partialorder %v7639, 0.0
  %vm7672 = vcmp.lt.f32.partialorder %v7640, 0.0
  %vm7673 = vcmp.lt.f32.partialorder %v7641, 0.0
  %vm7674 = vcmp.lt.f32.partialorder %v7642, 0.0
  %vm7675 = vcmp.lt.f32.partialorder %v7643, 0.0
  %vm7676 = vcmp.lt.f32.partialorder %v7644, 0.0
  %vm7677 = vcmp.lt.f32.partialorder %v7645, 0.0
  %vm7678 = vcmp.lt.f32.partialorder %v7646, 0.0
  %vm7679 = vcmp.lt.f32.partialorder %v7647, 0.0
  %vm7680 = vcmp.lt.f32.partialorder %v7648, 0.0
  %vm7681 = vcmp.lt.f32.partialorder %v7649, 0.0
  %vm7682 = vcmp.lt.f32.partialorder %v7650, 0.0
  %vm7683 = vcmp.lt.f32.partialorder %v7651, 0.0
  %vm7684 = vcmp.lt.f32.partialorder %v7652, 0.0
  %vm7685 = vcmp.lt.f32.partialorder %v7653, 0.0
  %vm7686 = vcmp.lt.f32.partialorder %v7654, 0.0
  %vm7687 = vcmp.lt.f32.partialorder %v7655, 0.0
  %vm7688 = vcmp.lt.f32.partialorder %v7656, 0.0
  %vm7689 = vcmp.lt.f32.partialorder %v7657, 0.0
  %vm7690 = vcmp.lt.f32.partialorder %v7658, 0.0
  %vm7691 = vcmp.lt.f32.partialorder %v7659, 0.0
  %vm7692 = vcmp.lt.f32.partialorder %v7660, 0.0
  %vm7693 = vcmp.lt.f32.partialorder %v7661, 0.0
  %vm7694 = vcmp.lt.f32.partialorder %v7662, 0.0
  %vm7695 = vcmp.lt.f32.partialorder %v7663, 0.0
  %vm7696 = vcmp.lt.f32.partialorder %v7664, 0.0
  %vm7697 = vcmp.lt.f32.partialorder %v7665, 0.0
  %vm7698 = vcmp.lt.f32.partialorder %v7666, 0.0
  %vm7699 = vcmp.lt.f32.partialorder %v7667, 0.0
  %vm7700 = vcmp.lt.f32.partialorder %v7668, 0.0
  %vm7701 = vcmp.lt.f32.partialorder %v7669, 0.0
  %vm7702 = vcmp.lt.f32.partialorder %v7670, 0.0
  %v7703 = vsub.f32 3.1415927, %v7607
  %v7704 = vsub.f32 3.1415927, %v7608
  %v7705 = vsub.f32 3.1415927, %v7609
  %v7706 = vsub.f32 3.1415927, %v7610
  %v7707 = vsub.f32 3.1415927, %v7611
  %v7708 = vsub.f32 3.1415927, %v7612
  %v7709 = vsub.f32 3.1415927, %v7613
  %v7710 = vsub.f32 3.1415927, %v7614
  %v7711 = vsub.f32 3.1415927, %v7615
  %v7712 = vsub.f32 3.1415927, %v7616
  %v7713 = vsub.f32 3.1415927, %v7617
  %v7714 = vsub.f32 3.1415927, %v7618
  %v7715 = vsub.f32 3.1415927, %v7619
  %v7716 = vsub.f32 3.1415927, %v7620
  %v7717 = vsub.f32 3.1415927, %v7621
  %v7718 = vsub.f32 3.1415927, %v7622
  %v7719 = vsub.f32 3.1415927, %v7623
  %v7720 = vsub.f32 3.1415927, %v7624
  %v7721 = vsub.f32 3.1415927, %v7625
  %v7722 = vsub.f32 3.1415927, %v7626
  %v7723 = vsub.f32 3.1415927, %v7627
  %v7724 = vsub.f32 3.1415927, %v7628
  %v7725 = vsub.f32 3.1415927, %v7629
  %v7726 = vsub.f32 3.1415927, %v7630
  %v7727 = vsub.f32 3.1415927, %v7631
  %v7728 = vsub.f32 3.1415927, %v7632
  %v7729 = vsub.f32 3.1415927, %v7633
  %v7730 = vsub.f32 3.1415927, %v7634
  %v7731 = vsub.f32 3.1415927, %v7635
  %v7732 = vsub.f32 3.1415927, %v7636
  %v7733 = vsub.f32 3.1415927, %v7637
  %v7734 = vsub.f32 3.1415927, %v7638
  %v7735 = vsel %vm7671, %v7703, %v7607
  %v7736 = vsel %vm7672, %v7704, %v7608
  %v7737 = vsel %vm7673, %v7705, %v7609
  %v7738 = vsel %vm7674, %v7706, %v7610
  %v7739 = vsel %vm7675, %v7707, %v7611
  %v7740 = vsel %vm7676, %v7708, %v7612
  %v7741 = vsel %vm7677, %v7709, %v7613
  %v7742 = vsel %vm7678, %v7710, %v7614
  %v7743 = vsel %vm7679, %v7711, %v7615
  %v7744 = vsel %vm7680, %v7712, %v7616
  %v7745 = vsel %vm7681, %v7713, %v7617
  %v7746 = vsel %vm7682, %v7714, %v7618
  %v7747 = vsel %vm7683, %v7715, %v7619
  %v7748 = vsel %vm7684, %v7716, %v7620
  %v7749 = vsel %vm7685, %v7717, %v7621
  %v7750 = vsel %vm7686, %v7718, %v7622
  %v7751 = vsel %vm7687, %v7719, %v7623
  %v7752 = vsel %vm7688, %v7720, %v7624
  %v7753 = vsel %vm7689, %v7721, %v7625
  %v7754 = vsel %vm7690, %v7722, %v7626
  %v7755 = vsel %vm7691, %v7723, %v7627
  %v7756 = vsel %vm7692, %v7724, %v7628
  %v7757 = vsel %vm7693, %v7725, %v7629
  %v7758 = vsel %vm7694, %v7726, %v7630
  %v7759 = vsel %vm7695, %v7727, %v7631
  %v7760 = vsel %vm7696, %v7728, %v7632
  %v7761 = vsel %vm7697, %v7729, %v7633
  %v7762 = vsel %vm7698, %v7730, %v7634
  %v7763 = vsel %vm7699, %v7731, %v7635
  %v7764 = vsel %vm7700, %v7732, %v7636
  %v7765 = vsel %vm7701, %v7733, %v7637
  %v7766 = vsel %vm7702, %v7734, %v7638
  %vm7767 = vcmp.ge.f32.partialorder %v7735, 3.1415927
  %vm7768 = vcmp.ge.f32.partialorder %v7736, 3.1415927
  %vm7769 = vcmp.ge.f32.partialorder %v7737, 3.1415927
  %vm7770 = vcmp.ge.f32.partialorder %v7738, 3.1415927
  %vm7771 = vcmp.ge.f32.partialorder %v7739, 3.1415927
  %vm7772 = vcmp.ge.f32.partialorder %v7740, 3.1415927
  %vm7773 = vcmp.ge.f32.partialorder %v7741, 3.1415927
  %vm7774 = vcmp.ge.f32.partialorder %v7742, 3.1415927
  %vm7775 = vcmp.ge.f32.partialorder %v7743, 3.1415927
  %vm7776 = vcmp.ge.f32.partialorder %v7744, 3.1415927
  %vm7777 = vcmp.ge.f32.partialorder %v7745, 3.1415927
  %vm7778 = vcmp.ge.f32.partialorder %v7746, 3.1415927
  %vm7779 = vcmp.ge.f32.partialorder %v7747, 3.1415927
  %vm7780 = vcmp.ge.f32.partialorder %v7748, 3.1415927
  %vm7781 = vcmp.ge.f32.partialorder %v7749, 3.1415927
  %vm7782 = vcmp.ge.f32.partialorder %v7750, 3.1415927
  %vm7783 = vcmp.ge.f32.partialorder %v7751, 3.1415927
  %vm7784 = vcmp.ge.f32.partialorder %v7752, 3.1415927
  %vm7785 = vcmp.ge.f32.partialorder %v7753, 3.1415927
  %vm7786 = vcmp.ge.f32.partialorder %v7754, 3.1415927
  %vm7787 = vcmp.ge.f32.partialorder %v7755, 3.1415927
  %vm7788 = vcmp.ge.f32.partialorder %v7756, 3.1415927
  %vm7789 = vcmp.ge.f32.partialorder %v7757, 3.1415927
  %vm7790 = vcmp.ge.f32.partialorder %v7758, 3.1415927
  %vm7791 = vcmp.ge.f32.partialorder %v7759, 3.1415927
  %vm7792 = vcmp.ge.f32.partialorder %v7760, 3.1415927
  %vm7793 = vcmp.ge.f32.partialorder %v7761, 3.1415927
  %vm7794 = vcmp.ge.f32.partialorder %v7762, 3.1415927
  %vm7795 = vcmp.ge.f32.partialorder %v7763, 3.1415927
  %vm7796 = vcmp.ge.f32.partialorder %v7764, 3.1415927
  %vm7797 = vcmp.ge.f32.partialorder %v7765, 3.1415927
  %vm7798 = vcmp.ge.f32.partialorder %v7766, 3.1415927
  %v7799 = vsub.f32 %v7735, 3.1415927
  %v7800 = vsub.f32 %v7736, 3.1415927
  %v7801 = vsub.f32 %v7737, 3.1415927
  %v7802 = vsub.f32 %v7738, 3.1415927
  %v7803 = vsub.f32 %v7739, 3.1415927
  %v7804 = vsub.f32 %v7740, 3.1415927
  %v7805 = vsub.f32 %v7741, 3.1415927
  %v7806 = vsub.f32 %v7742, 3.1415927
  %v7807 = vsub.f32 %v7743, 3.1415927
  %v7808 = vsub.f32 %v7744, 3.1415927
  %v7809 = vsub.f32 %v7745, 3.1415927
  %v7810 = vsub.f32 %v7746, 3.1415927
  %v7811 = vsub.f32 %v7747, 3.1415927
  %v7812 = vsub.f32 %v7748, 3.1415927
  %v7813 = vsub.f32 %v7749, 3.1415927
  %v7814 = vsub.f32 %v7750, 3.1415927
  %v7815 = vsub.f32 %v7751, 3.1415927
  %v7816 = vsub.f32 %v7752, 3.1415927
  %v7817 = vsub.f32 %v7753, 3.1415927
  %v7818 = vsub.f32 %v7754, 3.1415927
  %v7819 = vsub.f32 %v7755, 3.1415927
  %v7820 = vsub.f32 %v7756, 3.1415927
  %v7821 = vsub.f32 %v7757, 3.1415927
  %v7822 = vsub.f32 %v7758, 3.1415927
  %v7823 = vsub.f32 %v7759, 3.1415927
  %v7824 = vsub.f32 %v7760, 3.1415927
  %v7825 = vsub.f32 %v7761, 3.1415927
  %v7826 = vsub.f32 %v7762, 3.1415927
  %v7827 = vsub.f32 %v7763, 3.1415927
  %v7828 = vsub.f32 %v7764, 3.1415927
  %v7829 = vsub.f32 %v7765, 3.1415927
  %v7830 = vsub.f32 %v7766, 3.1415927
  %v7831 = vsel %vm7767, %v7799, %v7735
  %v7832 = vsel %vm7768, %v7800, %v7736
  %v7833 = vsel %vm7769, %v7801, %v7737
  %v7834 = vsel %vm7770, %v7802, %v7738
  %v7835 = vsel %vm7771, %v7803, %v7739
  %v7836 = vsel %vm7772, %v7804, %v7740
  %v7837 = vsel %vm7773, %v7805, %v7741
  %v7838 = vsel %vm7774, %v7806, %v7742
  %v7839 = vsel %vm7775, %v7807, %v7743
  %v7840 = vsel %vm7776, %v7808, %v7744
  %v7841 = vsel %vm7777, %v7809, %v7745
  %v7842 = vsel %vm7778, %v7810, %v7746
  %v7843 = vsel %vm7779, %v7811, %v7747
  %v7844 = vsel %vm7780, %v7812, %v7748
  %v7845 = vsel %vm7781, %v7813, %v7749
  %v7846 = vsel %vm7782, %v7814, %v7750
  %v7847 = vsel %vm7783, %v7815, %v7751
  %v7848 = vsel %vm7784, %v7816, %v7752
  %v7849 = vsel %vm7785, %v7817, %v7753
  %v7850 = vsel %vm7786, %v7818, %v7754
  %v7851 = vsel %vm7787, %v7819, %v7755
  %v7852 = vsel %vm7788, %v7820, %v7756
  %v7853 = vsel %vm7789, %v7821, %v7757
  %v7854 = vsel %vm7790, %v7822, %v7758
  %v7855 = vsel %vm7791, %v7823, %v7759
  %v7856 = vsel %vm7792, %v7824, %v7760
  %v7857 = vsel %vm7793, %v7825, %v7761
  %v7858 = vsel %vm7794, %v7826, %v7762
  %v7859 = vsel %vm7795, %v7827, %v7763
  %v7860 = vsel %vm7796, %v7828, %v7764
  %v7861 = vsel %vm7797, %v7829, %v7765
  %v7862 = vsel %vm7798, %v7830, %v7766
  %v7863 = vmul.f32 %v7831, 2.864789
  %v7864 = vmul.f32 %v7832, 2.864789
  %v7865 = vmul.f32 %v7833, 2.864789
  %v7866 = vmul.f32 %v7834, 2.864789
  %v7867 = vmul.f32 %v7835, 2.864789
  %v7868 = vmul.f32 %v7836, 2.864789
  %v7869 = vmul.f32 %v7837, 2.864789
  %v7870 = vmul.f32 %v7838, 2.864789
  %v7871 = vmul.f32 %v7839, 2.864789
  %v7872 = vmul.f32 %v7840, 2.864789
  %v7873 = vmul.f32 %v7841, 2.864789
  %v7874 = vmul.f32 %v7842, 2.864789
  %v7875 = vmul.f32 %v7843, 2.864789
  %v7876 = vmul.f32 %v7844, 2.864789
  %v7877 = vmul.f32 %v7845, 2.864789
  %v7878 = vmul.f32 %v7846, 2.864789
  %v7879 = vmul.f32 %v7847, 2.864789
  %v7880 = vmul.f32 %v7848, 2.864789
  %v7881 = vmul.f32 %v7849, 2.864789
  %v7882 = vmul.f32 %v7850, 2.864789
  %v7883 = vmul.f32 %v7851, 2.864789
  %v7884 = vmul.f32 %v7852, 2.864789
  %v7885 = vmul.f32 %v7853, 2.864789
  %v7886 = vmul.f32 %v7854, 2.864789
  %v7887 = vmul.f32 %v7855, 2.864789
  %v7888 = vmul.f32 %v7856, 2.864789
  %v7889 = vmul.f32 %v7857, 2.864789
  %v7890 = vmul.f32 %v7858, 2.864789
  %v7891 = vmul.f32 %v7859, 2.864789
  %v7892 = vmul.f32 %v7860, 2.864789
  %v7893 = vmul.f32 %v7861, 2.864789
  %v7894 = vmul.f32 %v7862, 2.864789
  %v7895 = vsub.f32 %v7863, 0.5
  %v7896 = vsub.f32 %v7864, 0.5
  %v7897 = vsub.f32 %v7865, 0.5
  %v7898 = vsub.f32 %v7866, 0.5
  %v7899 = vsub.f32 %v7867, 0.5
  %v7900 = vsub.f32 %v7868, 0.5
  %v7901 = vsub.f32 %v7869, 0.5
  %v7902 = vsub.f32 %v7870, 0.5
  %v7903 = vsub.f32 %v7871, 0.5
  %v7904 = vsub.f32 %v7872, 0.5
  %v7905 = vsub.f32 %v7873, 0.5
  %v7906 = vsub.f32 %v7874, 0.5
  %v7907 = vsub.f32 %v7875, 0.5
  %v7908 = vsub.f32 %v7876, 0.5
  %v7909 = vsub.f32 %v7877, 0.5
  %v7910 = vsub.f32 %v7878, 0.5
  %v7911 = vsub.f32 %v7879, 0.5
  %v7912 = vsub.f32 %v7880, 0.5
  %v7913 = vsub.f32 %v7881, 0.5
  %v7914 = vsub.f32 %v7882, 0.5
  %v7915 = vsub.f32 %v7883, 0.5
  %v7916 = vsub.f32 %v7884, 0.5
  %v7917 = vsub.f32 %v7885, 0.5
  %v7918 = vsub.f32 %v7886, 0.5
  %v7919 = vsub.f32 %v7887, 0.5
  %v7920 = vsub.f32 %v7888, 0.5
  %v7921 = vsub.f32 %v7889, 0.5
  %v7922 = vsub.f32 %v7890, 0.5
  %v7923 = vsub.f32 %v7891, 0.5
  %v7924 = vsub.f32 %v7892, 0.5
  %v7925 = vsub.f32 %v7893, 0.5
  %v7926 = vsub.f32 %v7894, 0.5
  %v7927 = vfloor.f32 %v7895
  %v7928 = vfloor.f32 %v7896
  %v7929 = vfloor.f32 %v7897
  %v7930 = vfloor.f32 %v7898
  %v7931 = vfloor.f32 %v7899
  %v7932 = vfloor.f32 %v7900
  %v7933 = vfloor.f32 %v7901
  %v7934 = vfloor.f32 %v7902
  %v7935 = vfloor.f32 %v7903
  %v7936 = vfloor.f32 %v7904
  %v7937 = vfloor.f32 %v7905
  %v7938 = vfloor.f32 %v7906
  %v7939 = vfloor.f32 %v7907
  %v7940 = vfloor.f32 %v7908
  %v7941 = vfloor.f32 %v7909
  %v7942 = vfloor.f32 %v7910
  %v7943 = vfloor.f32 %v7911
  %v7944 = vfloor.f32 %v7912
  %v7945 = vfloor.f32 %v7913
  %v7946 = vfloor.f32 %v7914
  %v7947 = vfloor.f32 %v7915
  %v7948 = vfloor.f32 %v7916
  %v7949 = vfloor.f32 %v7917
  %v7950 = vfloor.f32 %v7918
  %v7951 = vfloor.f32 %v7919
  %v7952 = vfloor.f32 %v7920
  %v7953 = vfloor.f32 %v7921
  %v7954 = vfloor.f32 %v7922
  %v7955 = vfloor.f32 %v7923
  %v7956 = vfloor.f32 %v7924
  %v7957 = vfloor.f32 %v7925
  %v7958 = vfloor.f32 %v7926
  %v7959 = vsub.f32 %v7895, %v7927
  %v7960 = vsub.f32 %v7896, %v7928
  %v7961 = vsub.f32 %v7897, %v7929
  %v7962 = vsub.f32 %v7898, %v7930
  %v7963 = vsub.f32 %v7899, %v7931
  %v7964 = vsub.f32 %v7900, %v7932
  %v7965 = vsub.f32 %v7901, %v7933
  %v7966 = vsub.f32 %v7902, %v7934
  %v7967 = vsub.f32 %v7903, %v7935
  %v7968 = vsub.f32 %v7904, %v7936
  %v7969 = vsub.f32 %v7905, %v7937
  %v7970 = vsub.f32 %v7906, %v7938
  %v7971 = vsub.f32 %v7907, %v7939
  %v7972 = vsub.f32 %v7908, %v7940
  %v7973 = vsub.f32 %v7909, %v7941
  %v7974 = vsub.f32 %v7910, %v7942
  %v7975 = vsub.f32 %v7911, %v7943
  %v7976 = vsub.f32 %v7912, %v7944
  %v7977 = vsub.f32 %v7913, %v7945
  %v7978 = vsub.f32 %v7914, %v7946
  %v7979 = vsub.f32 %v7915, %v7947
  %v7980 = vsub.f32 %v7916, %v7948
  %v7981 = vsub.f32 %v7917, %v7949
  %v7982 = vsub.f32 %v7918, %v7950
  %v7983 = vsub.f32 %v7919, %v7951
  %v7984 = vsub.f32 %v7920, %v7952
  %v7985 = vsub.f32 %v7921, %v7953
  %v7986 = vsub.f32 %v7922, %v7954
  %v7987 = vsub.f32 %v7923, %v7955
  %v7988 = vsub.f32 %v7924, %v7956
  %v7989 = vsub.f32 %v7925, %v7957
  %v7990 = vsub.f32 %v7926, %v7958
  %v7991 = vmul.f32 %v6845, %v7959
  %v7992 = vmul.f32 %v6852, %v7960
  %v7993 = vmul.f32 %v6859, %v7961
  %v7994 = vmul.f32 %v6866, %v7962
  %v7995 = vmul.f32 %v6873, %v7963
  %v7996 = vmul.f32 %v6880, %v7964
  %v7997 = vmul.f32 %v6887, %v7965
  %v7998 = vmul.f32 %v6894, %v7966
  %v7999 = vmul.f32 %v6901, %v7967
  %v8000 = vmul.f32 %v6908, %v7968
  %v8001 = vmul.f32 %v6915, %v7969
  %v8002 = vmul.f32 %v6922, %v7970
  %v8003 = vmul.f32 %v6929, %v7971
  %v8004 = vmul.f32 %v6936, %v7972
  %v8005 = vmul.f32 %v6943, %v7973
  %v8006 = vmul.f32 %v6950, %v7974
  %v8007 = vmul.f32 %v6957, %v7975
  %v8008 = vmul.f32 %v6964, %v7976
  %v8009 = vmul.f32 %v6971, %v7977
  %v8010 = vmul.f32 %v6978, %v7978
  %v8011 = vmul.f32 %v6985, %v7979
  %v8012 = vmul.f32 %v6992, %v7980
  %v8013 = vmul.f32 %v6999, %v7981
  %v8014 = vmul.f32 %v7006, %v7982
  %v8015 = vmul.f32 %v7013, %v7983
  %v8016 = vmul.f32 %v7020, %v7984
  %v8017 = vmul.f32 %v7027, %v7985
  %v8018 = vmul.f32 %v7034, %v7986
  %v8019 = vmul.f32 %v7041, %v7987
  %v8020 = vmul.f32 %v7048, %v7988
  %v8021 = vmul.f32 %v7055, %v7989
  %v8022 = vmul.f32 %v7062, %v7990
  %v8023 = vsub.f32 %v6845, %v7991
  %v8024 = vsub.f32 %v6852, %v7992
  %v8025 = vsub.f32 %v6859, %v7993
  %v8026 = vsub.f32 %v6866, %v7994
  %v8027 = vsub.f32 %v6873, %v7995
  %v8028 = vsub.f32 %v6880, %v7996
  %v8029 = vsub.f32 %v6887, %v7997
  %v8030 = vsub.f32 %v6894, %v7998
  %v8031 = vsub.f32 %v6901, %v7999
  %v8032 = vsub.f32 %v6908, %v8000
  %v8033 = vsub.f32 %v6915, %v8001
  %v8034 = vsub.f32 %v6922, %v8002
  %v8035 = vsub.f32 %v6929, %v8003
  %v8036 = vsub.f32 %v6936, %v8004
  %v8037 = vsub.f32 %v6943, %v8005
  %v8038 = vsub.f32 %v6950, %v8006
  %v8039 = vsub.f32 %v6957, %v8007
  %v8040 = vsub.f32 %v6964, %v8008
  %v8041 = vsub.f32 %v6971, %v8009
  %v8042 = vsub.f32 %v6978, %v8010
  %v8043 = vsub.f32 %v6985, %v8011
  %v8044 = vsub.f32 %v6992, %v8012
  %v8045 = vsub.f32 %v6999, %v8013
  %v8046 = vsub.f32 %v7006, %v8014
  %v8047 = vsub.f32 %v7013, %v8015
  %v8048 = vsub.f32 %v7020, %v8016
  %v8049 = vsub.f32 %v7027, %v8017
  %v8050 = vsub.f32 %v7034, %v8018
  %v8051 = vsub.f32 %v7041, %v8019
  %v8052 = vsub.f32 %v7048, %v8020
  %v8053 = vsub.f32 %v7055, %v8021
  %v8054 = vsub.f32 %v7062, %v8022
  %v8055 = vcvt.f32.s32.to.zero.pseudo %v7927
  %v8056 = vcvt.f32.s32.to.zero.pseudo %v7928
  %v8057 = vcvt.f32.s32.to.zero.pseudo %v7929
  %v8058 = vcvt.f32.s32.to.zero.pseudo %v7930
  %v8059 = vcvt.f32.s32.to.zero.pseudo %v7931
  %v8060 = vcvt.f32.s32.to.zero.pseudo %v7932
  %v8061 = vcvt.f32.s32.to.zero.pseudo %v7933
  %v8062 = vcvt.f32.s32.to.zero.pseudo %v7934
  %v8063 = vcvt.f32.s32.to.zero.pseudo %v7935
  %v8064 = vcvt.f32.s32.to.zero.pseudo %v7936
  %v8065 = vcvt.f32.s32.to.zero.pseudo %v7937
  %v8066 = vcvt.f32.s32.to.zero.pseudo %v7938
  %v8067 = vcvt.f32.s32.to.zero.pseudo %v7939
  %v8068 = vcvt.f32.s32.to.zero.pseudo %v7940
  %v8069 = vcvt.f32.s32.to.zero.pseudo %v7941
  %v8070 = vcvt.f32.s32.to.zero.pseudo %v7942
  %v8071 = vcvt.f32.s32.to.zero.pseudo %v7943
  %v8072 = vcvt.f32.s32.to.zero.pseudo %v7944
  %v8073 = vcvt.f32.s32.to.zero.pseudo %v7945
  %v8074 = vcvt.f32.s32.to.zero.pseudo %v7946
  %v8075 = vcvt.f32.s32.to.zero.pseudo %v7947
  %v8076 = vcvt.f32.s32.to.zero.pseudo %v7948
  %v8077 = vcvt.f32.s32.to.zero.pseudo %v7949
  %v8078 = vcvt.f32.s32.to.zero.pseudo %v7950
  %v8079 = vcvt.f32.s32.to.zero.pseudo %v7951
  %v8080 = vcvt.f32.s32.to.zero.pseudo %v7952
  %v8081 = vcvt.f32.s32.to.zero.pseudo %v7953
  %v8082 = vcvt.f32.s32.to.zero.pseudo %v7954
  %v8083 = vcvt.f32.s32.to.zero.pseudo %v7955
  %v8084 = vcvt.f32.s32.to.zero.pseudo %v7956
  %v8085 = vcvt.f32.s32.to.zero.pseudo %v7957
  %v8086 = vcvt.f32.s32.to.zero.pseudo %v7958
  %vm8087 = vcmp.lt.s32.totalorder %v8055, 0
  %vm8088 = vcmp.lt.s32.totalorder %v8056, 0
  %vm8089 = vcmp.lt.s32.totalorder %v8057, 0
  %vm8090 = vcmp.lt.s32.totalorder %v8058, 0
  %vm8091 = vcmp.lt.s32.totalorder %v8059, 0
  %vm8092 = vcmp.lt.s32.totalorder %v8060, 0
  %vm8093 = vcmp.lt.s32.totalorder %v8061, 0
  %vm8094 = vcmp.lt.s32.totalorder %v8062, 0
  %vm8095 = vcmp.lt.s32.totalorder %v8063, 0
  %vm8096 = vcmp.lt.s32.totalorder %v8064, 0
  %vm8097 = vcmp.lt.s32.totalorder %v8065, 0
  %vm8098 = vcmp.lt.s32.totalorder %v8066, 0
  %vm8099 = vcmp.lt.s32.totalorder %v8067, 0
  %vm8100 = vcmp.lt.s32.totalorder %v8068, 0
  %vm8101 = vcmp.lt.s32.totalorder %v8069, 0
  %vm8102 = vcmp.lt.s32.totalorder %v8070, 0
  %vm8103 = vcmp.lt.s32.totalorder %v8071, 0
  %vm8104 = vcmp.lt.s32.totalorder %v8072, 0
  %vm8105 = vcmp.lt.s32.totalorder %v8073, 0
  %vm8106 = vcmp.lt.s32.totalorder %v8074, 0
  %vm8107 = vcmp.lt.s32.totalorder %v8075, 0
  %vm8108 = vcmp.lt.s32.totalorder %v8076, 0
  %vm8109 = vcmp.lt.s32.totalorder %v8077, 0
  %vm8110 = vcmp.lt.s32.totalorder %v8078, 0
  %vm8111 = vcmp.lt.s32.totalorder %v8079, 0
  %vm8112 = vcmp.lt.s32.totalorder %v8080, 0
  %vm8113 = vcmp.lt.s32.totalorder %v8081, 0
  %vm8114 = vcmp.lt.s32.totalorder %v8082, 0
  %vm8115 = vcmp.lt.s32.totalorder %v8083, 0
  %vm8116 = vcmp.lt.s32.totalorder %v8084, 0
  %vm8117 = vcmp.lt.s32.totalorder %v8085, 0
  %vm8118 = vcmp.lt.s32.totalorder %v8086, 0
  %v8119 = vadd.s32 %v8055, 9
  %v8120 = vadd.s32 %v8056, 9
  %v8121 = vadd.s32 %v8057, 9
  %v8122 = vadd.s32 %v8058, 9
  %v8123 = vadd.s32 %v8059, 9
  %v8124 = vadd.s32 %v8060, 9
  %v8125 = vadd.s32 %v8061, 9
  %v8126 = vadd.s32 %v8062, 9
  %v8127 = vadd.s32 %v8063, 9
  %v8128 = vadd.s32 %v8064, 9
  %v8129 = vadd.s32 %v8065, 9
  %v8130 = vadd.s32 %v8066, 9
  %v8131 = vadd.s32 %v8067, 9
  %v8132 = vadd.s32 %v8068, 9
  %v8133 = vadd.s32 %v8069, 9
  %v8134 = vadd.s32 %v8070, 9
  %v8135 = vadd.s32 %v8071, 9
  %v8136 = vadd.s32 %v8072, 9
  %v8137 = vadd.s32 %v8073, 9
  %v8138 = vadd.s32 %v8074, 9
  %v8139 = vadd.s32 %v8075, 9
  %v8140 = vadd.s32 %v8076, 9
  %v8141 = vadd.s32 %v8077, 9
  %v8142 = vadd.s32 %v8078, 9
  %v8143 = vadd.s32 %v8079, 9
  %v8144 = vadd.s32 %v8080, 9
  %v8145 = vadd.s32 %v8081, 9
  %v8146 = vadd.s32 %v8082, 9
  %v8147 = vadd.s32 %v8083, 9
  %v8148 = vadd.s32 %v8084, 9
  %v8149 = vadd.s32 %v8085, 9
  %v8150 = vadd.s32 %v8086, 9
  %v8151 = vsel %vm8087, %v8119, %v8055
  %v8152 = vsel %vm8088, %v8120, %v8056
  %v8153 = vsel %vm8089, %v8121, %v8057
  %v8154 = vsel %vm8090, %v8122, %v8058
  %v8155 = vsel %vm8091, %v8123, %v8059
  %v8156 = vsel %vm8092, %v8124, %v8060
  %v8157 = vsel %vm8093, %v8125, %v8061
  %v8158 = vsel %vm8094, %v8126, %v8062
  %v8159 = vsel %vm8095, %v8127, %v8063
  %v8160 = vsel %vm8096, %v8128, %v8064
  %v8161 = vsel %vm8097, %v8129, %v8065
  %v8162 = vsel %vm8098, %v8130, %v8066
  %v8163 = vsel %vm8099, %v8131, %v8067
  %v8164 = vsel %vm8100, %v8132, %v8068
  %v8165 = vsel %vm8101, %v8133, %v8069
  %v8166 = vsel %vm8102, %v8134, %v8070
  %v8167 = vsel %vm8103, %v8135, %v8071
  %v8168 = vsel %vm8104, %v8136, %v8072
  %v8169 = vsel %vm8105, %v8137, %v8073
  %v8170 = vsel %vm8106, %v8138, %v8074
  %v8171 = vsel %vm8107, %v8139, %v8075
  %v8172 = vsel %vm8108, %v8140, %v8076
  %v8173 = vsel %vm8109, %v8141, %v8077
  %v8174 = vsel %vm8110, %v8142, %v8078
  %v8175 = vsel %vm8111, %v8143, %v8079
  %v8176 = vsel %vm8112, %v8144, %v8080
  %v8177 = vsel %vm8113, %v8145, %v8081
  %v8178 = vsel %vm8114, %v8146, %v8082
  %v8179 = vsel %vm8115, %v8147, %v8083
  %v8180 = vsel %vm8116, %v8148, %v8084
  %v8181 = vsel %vm8117, %v8149, %v8085
  %v8182 = vsel %vm8118, %v8150, %v8086
  %vm8183 = vcmp.eq.s32.totalorder %v8151, 0
  %vm8184 = vcmp.eq.s32.totalorder %v8152, 0
  %vm8185 = vcmp.eq.s32.totalorder %v8153, 0
  %vm8186 = vcmp.eq.s32.totalorder %v8154, 0
  %vm8187 = vcmp.eq.s32.totalorder %v8155, 0
  %vm8188 = vcmp.eq.s32.totalorder %v8156, 0
  %vm8189 = vcmp.eq.s32.totalorder %v8157, 0
  %vm8190 = vcmp.eq.s32.totalorder %v8158, 0
  %vm8191 = vcmp.eq.s32.totalorder %v8159, 0
  %vm8192 = vcmp.eq.s32.totalorder %v8160, 0
  %vm8193 = vcmp.eq.s32.totalorder %v8161, 0
  %vm8194 = vcmp.eq.s32.totalorder %v8162, 0
  %vm8195 = vcmp.eq.s32.totalorder %v8163, 0
  %vm8196 = vcmp.eq.s32.totalorder %v8164, 0
  %vm8197 = vcmp.eq.s32.totalorder %v8165, 0
  %vm8198 = vcmp.eq.s32.totalorder %v8166, 0
  %vm8199 = vcmp.eq.s32.totalorder %v8167, 0
  %vm8200 = vcmp.eq.s32.totalorder %v8168, 0
  %vm8201 = vcmp.eq.s32.totalorder %v8169, 0
  %vm8202 = vcmp.eq.s32.totalorder %v8170, 0
  %vm8203 = vcmp.eq.s32.totalorder %v8171, 0
  %vm8204 = vcmp.eq.s32.totalorder %v8172, 0
  %vm8205 = vcmp.eq.s32.totalorder %v8173, 0
  %vm8206 = vcmp.eq.s32.totalorder %v8174, 0
  %vm8207 = vcmp.eq.s32.totalorder %v8175, 0
  %vm8208 = vcmp.eq.s32.totalorder %v8176, 0
  %vm8209 = vcmp.eq.s32.totalorder %v8177, 0
  %vm8210 = vcmp.eq.s32.totalorder %v8178, 0
  %vm8211 = vcmp.eq.s32.totalorder %v8179, 0
  %vm8212 = vcmp.eq.s32.totalorder %v8180, 0
  %vm8213 = vcmp.eq.s32.totalorder %v8181, 0
  %vm8214 = vcmp.eq.s32.totalorder %v8182, 0
  %v8215 = vsel %vm8183, %v8023, 0.0
  %v8216 = vsel %vm8184, %v8024, 0.0
  %v8217 = vsel %vm8185, %v8025, 0.0
  %v8218 = vsel %vm8186, %v8026, 0.0
  %v8219 = vsel %vm8187, %v8027, 0.0
  %v8220 = vsel %vm8188, %v8028, 0.0
  %v8221 = vsel %vm8189, %v8029, 0.0
  %v8222 = vsel %vm8190, %v8030, 0.0
  %v8223 = vsel %vm8191, %v8031, 0.0
  %v8224 = vsel %vm8192, %v8032, 0.0
  %v8225 = vsel %vm8193, %v8033, 0.0
  %v8226 = vsel %vm8194, %v8034, 0.0
  %v8227 = vsel %vm8195, %v8035, 0.0
  %v8228 = vsel %vm8196, %v8036, 0.0
  %v8229 = vsel %vm8197, %v8037, 0.0
  %v8230 = vsel %vm8198, %v8038, 0.0
  %v8231 = vsel %vm8199, %v8039, 0.0
  %v8232 = vsel %vm8200, %v8040, 0.0
  %v8233 = vsel %vm8201, %v8041, 0.0
  %v8234 = vsel %vm8202, %v8042, 0.0
  %v8235 = vsel %vm8203, %v8043, 0.0
  %v8236 = vsel %vm8204, %v8044, 0.0
  %v8237 = vsel %vm8205, %v8045, 0.0
  %v8238 = vsel %vm8206, %v8046, 0.0
  %v8239 = vsel %vm8207, %v8047, 0.0
  %v8240 = vsel %vm8208, %v8048, 0.0
  %v8241 = vsel %vm8209, %v8049, 0.0
  %v8242 = vsel %vm8210, %v8050, 0.0
  %v8243 = vsel %vm8211, %v8051, 0.0
  %v8244 = vsel %vm8212, %v8052, 0.0
  %v8245 = vsel %vm8213, %v8053, 0.0
  %v8246 = vsel %vm8214, %v8054, 0.0
  %vm8247 = vcmp.eq.s32.totalorder %v8151, 8
  %vm8248 = vcmp.eq.s32.totalorder %v8152, 8
  %vm8249 = vcmp.eq.s32.totalorder %v8153, 8
  %vm8250 = vcmp.eq.s32.totalorder %v8154, 8
  %vm8251 = vcmp.eq.s32.totalorder %v8155, 8
  %vm8252 = vcmp.eq.s32.totalorder %v8156, 8
  %vm8253 = vcmp.eq.s32.totalorder %v8157, 8
  %vm8254 = vcmp.eq.s32.totalorder %v8158, 8
  %vm8255 = vcmp.eq.s32.totalorder %v8159, 8
  %vm8256 = vcmp.eq.s32.totalorder %v8160, 8
  %vm8257 = vcmp.eq.s32.totalorder %v8161, 8
  %vm8258 = vcmp.eq.s32.totalorder %v8162, 8
  %vm8259 = vcmp.eq.s32.totalorder %v8163, 8
  %vm8260 = vcmp.eq.s32.totalorder %v8164, 8
  %vm8261 = vcmp.eq.s32.totalorder %v8165, 8
  %vm8262 = vcmp.eq.s32.totalorder %v8166, 8
  %vm8263 = vcmp.eq.s32.totalorder %v8167, 8
  %vm8264 = vcmp.eq.s32.totalorder %v8168, 8
  %vm8265 = vcmp.eq.s32.totalorder %v8169, 8
  %vm8266 = vcmp.eq.s32.totalorder %v8170, 8
  %vm8267 = vcmp.eq.s32.totalorder %v8171, 8
  %vm8268 = vcmp.eq.s32.totalorder %v8172, 8
  %vm8269 = vcmp.eq.s32.totalorder %v8173, 8
  %vm8270 = vcmp.eq.s32.totalorder %v8174, 8
  %vm8271 = vcmp.eq.s32.totalorder %v8175, 8
  %vm8272 = vcmp.eq.s32.totalorder %v8176, 8
  %vm8273 = vcmp.eq.s32.totalorder %v8177, 8
  %vm8274 = vcmp.eq.s32.totalorder %v8178, 8
  %vm8275 = vcmp.eq.s32.totalorder %v8179, 8
  %vm8276 = vcmp.eq.s32.totalorder %v8180, 8
  %vm8277 = vcmp.eq.s32.totalorder %v8181, 8
  %vm8278 = vcmp.eq.s32.totalorder %v8182, 8
  %v8279 = vsel %vm8247, %v7991, 0.0
  %v8280 = vsel %vm8248, %v7992, 0.0
  %v8281 = vsel %vm8249, %v7993, 0.0
  %v8282 = vsel %vm8250, %v7994, 0.0
  %v8283 = vsel %vm8251, %v7995, 0.0
  %v8284 = vsel %vm8252, %v7996, 0.0
  %v8285 = vsel %vm8253, %v7997, 0.0
  %v8286 = vsel %vm8254, %v7998, 0.0
  %v8287 = vsel %vm8255, %v7999, 0.0
  %v8288 = vsel %vm8256, %v8000, 0.0
  %v8289 = vsel %vm8257, %v8001, 0.0
  %v8290 = vsel %vm8258, %v8002, 0.0
  %v8291 = vsel %vm8259, %v8003, 0.0
  %v8292 = vsel %vm8260, %v8004, 0.0
  %v8293 = vsel %vm8261, %v8005, 0.0
  %v8294 = vsel %vm8262, %v8006, 0.0
  %v8295 = vsel %vm8263, %v8007, 0.0
  %v8296 = vsel %vm8264, %v8008, 0.0
  %v8297 = vsel %vm8265, %v8009, 0.0
  %v8298 = vsel %vm8266, %v8010, 0.0
  %v8299 = vsel %vm8267, %v8011, 0.0
  %v8300 = vsel %vm8268, %v8012, 0.0
  %v8301 = vsel %vm8269, %v8013, 0.0
  %v8302 = vsel %vm8270, %v8014, 0.0
  %v8303 = vsel %vm8271, %v8015, 0.0
  %v8304 = vsel %vm8272, %v8016, 0.0
  %v8305 = vsel %vm8273, %v8017, 0.0
  %v8306 = vsel %vm8274, %v8018, 0.0
  %v8307 = vsel %vm8275, %v8019, 0.0
  %v8308 = vsel %vm8276, %v8020, 0.0
  %v8309 = vsel %vm8277, %v8021, 0.0
  %v8310 = vsel %vm8278, %v8022, 0.0
  %v8311 = vadd.f32 %v8215, %v8279
  %v8312 = vadd.f32 %v8216, %v8280
  %v8313 = vadd.f32 %v8217, %v8281
  %v8314 = vadd.f32 %v8218, %v8282
  %v8315 = vadd.f32 %v8219, %v8283
  %v8316 = vadd.f32 %v8220, %v8284
  %v8317 = vadd.f32 %v8221, %v8285
  %v8318 = vadd.f32 %v8222, %v8286
  %v8319 = vadd.f32 %v8223, %v8287
  %v8320 = vadd.f32 %v8224, %v8288
  %v8321 = vadd.f32 %v8225, %v8289
  %v8322 = vadd.f32 %v8226, %v8290
  %v8323 = vadd.f32 %v8227, %v8291
  %v8324 = vadd.f32 %v8228, %v8292
  %v8325 = vadd.f32 %v8229, %v8293
  %v8326 = vadd.f32 %v8230, %v8294
  %v8327 = vadd.f32 %v8231, %v8295
  %v8328 = vadd.f32 %v8232, %v8296
  %v8329 = vadd.f32 %v8233, %v8297
  %v8330 = vadd.f32 %v8234, %v8298
  %v8331 = vadd.f32 %v8235, %v8299
  %v8332 = vadd.f32 %v8236, %v8300
  %v8333 = vadd.f32 %v8237, %v8301
  %v8334 = vadd.f32 %v8238, %v8302
  %v8335 = vadd.f32 %v8239, %v8303
  %v8336 = vadd.f32 %v8240, %v8304
  %v8337 = vadd.f32 %v8241, %v8305
  %v8338 = vadd.f32 %v8242, %v8306
  %v8339 = vadd.f32 %v8243, %v8307
  %v8340 = vadd.f32 %v8244, %v8308
  %v8341 = vadd.f32 %v8245, %v8309
  %v8342 = vadd.f32 %v8246, %v8310
  %v8343 = vpack.c.bf16 %v8312, %v8311
  %v8344 = vpack.c.bf16 %v8314, %v8313
  %v8345 = vpack.c.bf16 %v8316, %v8315
  %v8346 = vpack.c.bf16 %v8318, %v8317
  %v8347 = vpack.c.bf16 %v8320, %v8319
  %v8348 = vpack.c.bf16 %v8322, %v8321
  %v8349 = vpack.c.bf16 %v8324, %v8323
  %v8350 = vpack.c.bf16 %v8326, %v8325
  %v8351 = vpack.c.bf16 %v8328, %v8327
  %v8352 = vpack.c.bf16 %v8330, %v8329
  %v8353 = vpack.c.bf16 %v8332, %v8331
  %v8354 = vpack.c.bf16 %v8334, %v8333
  %v8355 = vpack.c.bf16 %v8336, %v8335
  %v8356 = vpack.c.bf16 %v8338, %v8337
  %v8357 = vpack.c.bf16 %v8340, %v8339
  %v8358 = vpack.c.bf16 %v8342, %v8341
  %8359 = vmatprep.subr.bf16.mxu0 0
  %8360 = vmatpush1.bf16.msra.mxu0 %v8343
  %8361 = vmatprep.subr.bf16.mxu0 0
  %8362 = vmatpush1.bf16.msra.mxu0 %v8344
  %8363 = vmatprep.subr.bf16.mxu0 0
  %8364 = vmatpush1.bf16.msra.mxu0 %v8345
  %8365 = vmatprep.subr.bf16.mxu0 0
  %8366 = vmatpush1.bf16.msra.mxu0 %v8346
  %8367 = vmatprep.subr.bf16.mxu0 0
  %8368 = vmatpush1.bf16.msra.mxu0 %v8347
  %8369 = vmatprep.subr.bf16.mxu0 0
  %8370 = vmatpush1.bf16.msra.mxu0 %v8348
  %8371 = vmatprep.subr.bf16.mxu0 0
  %8372 = vmatpush1.bf16.msra.mxu0 %v8349
  %8373 = vmatprep.subr.bf16.mxu0 0
  %8374 = vmatpush1.bf16.msra.mxu0 %v8350
  %8375 = vmatprep.subr.bf16.mxu0 0
  %8376 = vmatpush1.bf16.msra.mxu0 %v8351
  %8377 = vmatprep.subr.bf16.mxu0 0
  %8378 = vmatpush1.bf16.msra.mxu0 %v8352
  %8379 = vmatprep.subr.bf16.mxu0 0
  %8380 = vmatpush1.bf16.msra.mxu0 %v8353
  %8381 = vmatprep.subr.bf16.mxu0 0
  %8382 = vmatpush1.bf16.msra.mxu0 %v8354
  %8383 = vmatprep.subr.bf16.mxu0 0
  %8384 = vmatpush1.bf16.msra.mxu0 %v8355
  %8385 = vmatprep.subr.bf16.mxu0 0
  %8386 = vmatpush1.bf16.msra.mxu0 %v8356
  %8387 = vmatprep.subr.bf16.mxu0 0
  %8388 = vmatpush1.bf16.msra.mxu0 %v8357
  %8389 = vmatprep.subr.bf16.mxu0 0
  %8390 = vmatpush1.bf16.msra.mxu0 %v8358
  %8391 = vmatprep.mubr.bf16.mxu0 %v3174
  %8392 = vmatmul.mubr.bf16.gmra.mrb[0].mxu0 %v3173
  %v8393 = vpop.f32.mrb[0].mxu0
  %v8394 = vadd.f32 0.0, %v8393
  %v8395 = vpop.f32.mrb[0].mxu0
  %v8396 = vpop.f32.mrb[0].mxu0
  %v8397 = vadd.f32 0.0, %v8396
  %v8398 = vpop.f32.mrb[0].mxu0
  %8399 = vmatprep.mubr.bf16.mxu0 %v3176
  %8400 = vmatmul.mubr.bf16.gmra.mrb[0].mxu0 %v3175
  %v8401 = vpop.f32.mrb[0].mxu0
  %v8402 = vadd.f32 0.0, %v8401
  %v8403 = vpop.f32.mrb[0].mxu0
  %v8404 = vpop.f32.mrb[0].mxu0
  %v8405 = vadd.f32 0.0, %v8404
  %v8406 = vpop.f32.mrb[0].mxu0
  %8407 = vdwg.mxu0
  %v8408 = vpack.c.bf16 %v8397, %v8394
  %v8409 = vpack.c.bf16 %v8405, %v8402
  %vm8410 = vcmp.eq.s32.totalorder %v8151, 1
  %vm8411 = vcmp.eq.s32.totalorder %v8152, 1
  %vm8412 = vcmp.eq.s32.totalorder %v8153, 1
  %vm8413 = vcmp.eq.s32.totalorder %v8154, 1
  %vm8414 = vcmp.eq.s32.totalorder %v8155, 1
  %vm8415 = vcmp.eq.s32.totalorder %v8156, 1
  %vm8416 = vcmp.eq.s32.totalorder %v8157, 1
  %vm8417 = vcmp.eq.s32.totalorder %v8158, 1
  %vm8418 = vcmp.eq.s32.totalorder %v8159, 1
  %vm8419 = vcmp.eq.s32.totalorder %v8160, 1
  %vm8420 = vcmp.eq.s32.totalorder %v8161, 1
  %vm8421 = vcmp.eq.s32.totalorder %v8162, 1
  %vm8422 = vcmp.eq.s32.totalorder %v8163, 1
  %vm8423 = vcmp.eq.s32.totalorder %v8164, 1
  %vm8424 = vcmp.eq.s32.totalorder %v8165, 1
  %vm8425 = vcmp.eq.s32.totalorder %v8166, 1
  %vm8426 = vcmp.eq.s32.totalorder %v8167, 1
  %vm8427 = vcmp.eq.s32.totalorder %v8168, 1
  %vm8428 = vcmp.eq.s32.totalorder %v8169, 1
  %vm8429 = vcmp.eq.s32.totalorder %v8170, 1
  %vm8430 = vcmp.eq.s32.totalorder %v8171, 1
  %vm8431 = vcmp.eq.s32.totalorder %v8172, 1
  %vm8432 = vcmp.eq.s32.totalorder %v8173, 1
  %vm8433 = vcmp.eq.s32.totalorder %v8174, 1
  %vm8434 = vcmp.eq.s32.totalorder %v8175, 1
  %vm8435 = vcmp.eq.s32.totalorder %v8176, 1
  %vm8436 = vcmp.eq.s32.totalorder %v8177, 1
  %vm8437 = vcmp.eq.s32.totalorder %v8178, 1
  %vm8438 = vcmp.eq.s32.totalorder %v8179, 1
  %vm8439 = vcmp.eq.s32.totalorder %v8180, 1
  %vm8440 = vcmp.eq.s32.totalorder %v8181, 1
  %vm8441 = vcmp.eq.s32.totalorder %v8182, 1
  %v8442 = vsel %vm8410, %v8023, 0.0
  %v8443 = vsel %vm8411, %v8024, 0.0
  %v8444 = vsel %vm8412, %v8025, 0.0
  %v8445 = vsel %vm8413, %v8026, 0.0
  %v8446 = vsel %vm8414, %v8027, 0.0
  %v8447 = vsel %vm8415, %v8028, 0.0
  %v8448 = vsel %vm8416, %v8029, 0.0
  %v8449 = vsel %vm8417, %v8030, 0.0
  %v8450 = vsel %vm8418, %v8031, 0.0
  %v8451 = vsel %vm8419, %v8032, 0.0
  %v8452 = vsel %vm8420, %v8033, 0.0
  %v8453 = vsel %vm8421, %v8034, 0.0
  %v8454 = vsel %vm8422, %v8035, 0.0
  %v8455 = vsel %vm8423, %v8036, 0.0
  %v8456 = vsel %vm8424, %v8037, 0.0
  %v8457 = vsel %vm8425, %v8038, 0.0
  %v8458 = vsel %vm8426, %v8039, 0.0
  %v8459 = vsel %vm8427, %v8040, 0.0
  %v8460 = vsel %vm8428, %v8041, 0.0
  %v8461 = vsel %vm8429, %v8042, 0.0
  %v8462 = vsel %vm8430, %v8043, 0.0
  %v8463 = vsel %vm8431, %v8044, 0.0
  %v8464 = vsel %vm8432, %v8045, 0.0
  %v8465 = vsel %vm8433, %v8046, 0.0
  %v8466 = vsel %vm8434, %v8047, 0.0
  %v8467 = vsel %vm8435, %v8048, 0.0
  %v8468 = vsel %vm8436, %v8049, 0.0
  %v8469 = vsel %vm8437, %v8050, 0.0
  %v8470 = vsel %vm8438, %v8051, 0.0
  %v8471 = vsel %vm8439, %v8052, 0.0
  %v8472 = vsel %vm8440, %v8053, 0.0
  %v8473 = vsel %vm8441, %v8054, 0.0
  %v8474 = vsel %vm8183, %v7991, 0.0
  %v8475 = vsel %vm8184, %v7992, 0.0
  %v8476 = vsel %vm8185, %v7993, 0.0
  %v8477 = vsel %vm8186, %v7994, 0.0
  %v8478 = vsel %vm8187, %v7995, 0.0
  %v8479 = vsel %vm8188, %v7996, 0.0
  %v8480 = vsel %vm8189, %v7997, 0.0
  %v8481 = vsel %vm8190, %v7998, 0.0
  %v8482 = vsel %vm8191, %v7999, 0.0
  %v8483 = vsel %vm8192, %v8000, 0.0
  %v8484 = vsel %vm8193, %v8001, 0.0
  %v8485 = vsel %vm8194, %v8002, 0.0
  %v8486 = vsel %vm8195, %v8003, 0.0
  %v8487 = vsel %vm8196, %v8004, 0.0
  %v8488 = vsel %vm8197, %v8005, 0.0
  %v8489 = vsel %vm8198, %v8006, 0.0
  %v8490 = vsel %vm8199, %v8007, 0.0
  %v8491 = vsel %vm8200, %v8008, 0.0
  %v8492 = vsel %vm8201, %v8009, 0.0
  %v8493 = vsel %vm8202, %v8010, 0.0
  %v8494 = vsel %vm8203, %v8011, 0.0
  %v8495 = vsel %vm8204, %v8012, 0.0
  %v8496 = vsel %vm8205, %v8013, 0.0
  %v8497 = vsel %vm8206, %v8014, 0.0
  %v8498 = vsel %vm8207, %v8015, 0.0
  %v8499 = vsel %vm8208, %v8016, 0.0
  %v8500 = vsel %vm8209, %v8017, 0.0
  %v8501 = vsel %vm8210, %v8018, 0.0
  %v8502 = vsel %vm8211, %v8019, 0.0
  %v8503 = vsel %vm8212, %v8020, 0.0
  %v8504 = vsel %vm8213, %v8021, 0.0
  %v8505 = vsel %vm8214, %v8022, 0.0
  %v8506 = vadd.f32 %v8442, %v8474
  %v8507 = vadd.f32 %v8443, %v8475
  %v8508 = vadd.f32 %v8444, %v8476
  %v8509 = vadd.f32 %v8445, %v8477
  %v8510 = vadd.f32 %v8446, %v8478
  %v8511 = vadd.f32 %v8447, %v8479
  %v8512 = vadd.f32 %v8448, %v8480
  %v8513 = vadd.f32 %v8449, %v8481
  %v8514 = vadd.f32 %v8450, %v8482
  %v8515 = vadd.f32 %v8451, %v8483
  %v8516 = vadd.f32 %v8452, %v8484
  %v8517 = vadd.f32 %v8453, %v8485
  %v8518 = vadd.f32 %v8454, %v8486
  %v8519 = vadd.f32 %v8455, %v8487
  %v8520 = vadd.f32 %v8456, %v8488
  %v8521 = vadd.f32 %v8457, %v8489
  %v8522 = vadd.f32 %v8458, %v8490
  %v8523 = vadd.f32 %v8459, %v8491
  %v8524 = vadd.f32 %v8460, %v8492
  %v8525 = vadd.f32 %v8461, %v8493
  %v8526 = vadd.f32 %v8462, %v8494
  %v8527 = vadd.f32 %v8463, %v8495
  %v8528 = vadd.f32 %v8464, %v8496
  %v8529 = vadd.f32 %v8465, %v8497
  %v8530 = vadd.f32 %v8466, %v8498
  %v8531 = vadd.f32 %v8467, %v8499
  %v8532 = vadd.f32 %v8468, %v8500
  %v8533 = vadd.f32 %v8469, %v8501
  %v8534 = vadd.f32 %v8470, %v8502
  %v8535 = vadd.f32 %v8471, %v8503
  %v8536 = vadd.f32 %v8472, %v8504
  %v8537 = vadd.f32 %v8473, %v8505
  %v8538 = vpack.c.bf16 %v8507, %v8506
  %v8539 = vpack.c.bf16 %v8509, %v8508
  %v8540 = vpack.c.bf16 %v8511, %v8510
  %v8541 = vpack.c.bf16 %v8513, %v8512
  %v8542 = vpack.c.bf16 %v8515, %v8514
  %v8543 = vpack.c.bf16 %v8517, %v8516
  %v8544 = vpack.c.bf16 %v8519, %v8518
  %v8545 = vpack.c.bf16 %v8521, %v8520
  %v8546 = vpack.c.bf16 %v8523, %v8522
  %v8547 = vpack.c.bf16 %v8525, %v8524
  %v8548 = vpack.c.bf16 %v8527, %v8526
  %v8549 = vpack.c.bf16 %v8529, %v8528
  %v8550 = vpack.c.bf16 %v8531, %v8530
  %v8551 = vpack.c.bf16 %v8533, %v8532
  %v8552 = vpack.c.bf16 %v8535, %v8534
  %v8553 = vpack.c.bf16 %v8537, %v8536
  %8554 = vmatprep.subr.bf16.mxu0 0
  %8555 = vmatpush1.bf16.msra.mxu0 %v8538
  %8556 = vmatprep.subr.bf16.mxu0 0
  %8557 = vmatpush1.bf16.msra.mxu0 %v8539
  %8558 = vmatprep.subr.bf16.mxu0 0
  %8559 = vmatpush1.bf16.msra.mxu0 %v8540
  %8560 = vmatprep.subr.bf16.mxu0 0
  %8561 = vmatpush1.bf16.msra.mxu0 %v8541
  %8562 = vmatprep.subr.bf16.mxu0 0
  %8563 = vmatpush1.bf16.msra.mxu0 %v8542
  %8564 = vmatprep.subr.bf16.mxu0 0
  %8565 = vmatpush1.bf16.msra.mxu0 %v8543
  %8566 = vmatprep.subr.bf16.mxu0 0
  %8567 = vmatpush1.bf16.msra.mxu0 %v8544
  %8568 = vmatprep.subr.bf16.mxu0 0
  %8569 = vmatpush1.bf16.msra.mxu0 %v8545
  %8570 = vmatprep.subr.bf16.mxu0 0
  %8571 = vmatpush1.bf16.msra.mxu0 %v8546
  %8572 = vmatprep.subr.bf16.mxu0 0
  %8573 = vmatpush1.bf16.msra.mxu0 %v8547
  %8574 = vmatprep.subr.bf16.mxu0 0
  %8575 = vmatpush1.bf16.msra.mxu0 %v8548
  %8576 = vmatprep.subr.bf16.mxu0 0
  %8577 = vmatpush1.bf16.msra.mxu0 %v8549
  %8578 = vmatprep.subr.bf16.mxu0 0
  %8579 = vmatpush1.bf16.msra.mxu0 %v8550
  %8580 = vmatprep.subr.bf16.mxu0 0
  %8581 = vmatpush1.bf16.msra.mxu0 %v8551
  %8582 = vmatprep.subr.bf16.mxu0 0
  %8583 = vmatpush1.bf16.msra.mxu0 %v8552
  %8584 = vmatprep.subr.bf16.mxu0 0
  %8585 = vmatpush1.bf16.msra.mxu0 %v8553
  %8586 = vmatprep.mubr.bf16.mxu0 %v3174
  %8587 = vmatmul.mubr.bf16.gmra.mrb[0].mxu0 %v3173
  %v8588 = vpop.f32.mrb[0].mxu0
  %v8589 = vadd.f32 0.0, %v8588
  %v8590 = vpop.f32.mrb[0].mxu0
  %v8591 = vpop.f32.mrb[0].mxu0
  %v8592 = vadd.f32 0.0, %v8591
  %v8593 = vpop.f32.mrb[0].mxu0
  %8594 = vmatprep.mubr.bf16.mxu0 %v3176
  %8595 = vmatmul.mubr.bf16.gmra.mrb[0].mxu0 %v3175
  %v8596 = vpop.f32.mrb[0].mxu0
  %v8597 = vadd.f32 0.0, %v8596
  %v8598 = vpop.f32.mrb[0].mxu0
  %v8599 = vpop.f32.mrb[0].mxu0
  %v8600 = vadd.f32 0.0, %v8599
  %v8601 = vpop.f32.mrb[0].mxu0
  %8602 = vdwg.mxu0
  %v8603 = vpack.c.bf16 %v8592, %v8589
  %v8604 = vpack.c.bf16 %v8600, %v8597
  %vm8605 = vcmp.eq.s32.totalorder %v8151, 2
  %vm8606 = vcmp.eq.s32.totalorder %v8152, 2
  %vm8607 = vcmp.eq.s32.totalorder %v8153, 2
  %vm8608 = vcmp.eq.s32.totalorder %v8154, 2
  %vm8609 = vcmp.eq.s32.totalorder %v8155, 2
  %vm8610 = vcmp.eq.s32.totalorder %v8156, 2
  %vm8611 = vcmp.eq.s32.totalorder %v8157, 2
  %vm8612 = vcmp.eq.s32.totalorder %v8158, 2
  %vm8613 = vcmp.eq.s32.totalorder %v8159, 2
  %vm8614 = vcmp.eq.s32.totalorder %v8160, 2
  %vm8615 = vcmp.eq.s32.totalorder %v8161, 2
  %vm8616 = vcmp.eq.s32.totalorder %v8162, 2
  %vm8617 = vcmp.eq.s32.totalorder %v8163, 2
  %vm8618 = vcmp.eq.s32.totalorder %v8164, 2
  %vm8619 = vcmp.eq.s32.totalorder %v8165, 2
  %vm8620 = vcmp.eq.s32.totalorder %v8166, 2
  %vm8621 = vcmp.eq.s32.totalorder %v8167, 2
  %vm8622 = vcmp.eq.s32.totalorder %v8168, 2
  %vm8623 = vcmp.eq.s32.totalorder %v8169, 2
  %vm8624 = vcmp.eq.s32.totalorder %v8170, 2
  %vm8625 = vcmp.eq.s32.totalorder %v8171, 2
  %vm8626 = vcmp.eq.s32.totalorder %v8172, 2
  %vm8627 = vcmp.eq.s32.totalorder %v8173, 2
  %vm8628 = vcmp.eq.s32.totalorder %v8174, 2
  %vm8629 = vcmp.eq.s32.totalorder %v8175, 2
  %vm8630 = vcmp.eq.s32.totalorder %v8176, 2
  %vm8631 = vcmp.eq.s32.totalorder %v8177, 2
  %vm8632 = vcmp.eq.s32.totalorder %v8178, 2
  %vm8633 = vcmp.eq.s32.totalorder %v8179, 2
  %vm8634 = vcmp.eq.s32.totalorder %v8180, 2
  %vm8635 = vcmp.eq.s32.totalorder %v8181, 2
  %vm8636 = vcmp.eq.s32.totalorder %v8182, 2
  %v8637 = vsel %vm8605, %v8023, 0.0
  %v8638 = vsel %vm8606, %v8024, 0.0
  %v8639 = vsel %vm8607, %v8025, 0.0
  %v8640 = vsel %vm8608, %v8026, 0.0
  %v8641 = vsel %vm8609, %v8027, 0.0
  %v8642 = vsel %vm8610, %v8028, 0.0
  %v8643 = vsel %vm8611, %v8029, 0.0
  %v8644 = vsel %vm8612, %v8030, 0.0
  %v8645 = vsel %vm8613, %v8031, 0.0
  %v8646 = vsel %vm8614, %v8032, 0.0
  %v8647 = vsel %vm8615, %v8033, 0.0
  %v8648 = vsel %vm8616, %v8034, 0.0
  %v8649 = vsel %vm8617, %v8035, 0.0
  %v8650 = vsel %vm8618, %v8036, 0.0
  %v8651 = vsel %vm8619, %v8037, 0.0
  %v8652 = vsel %vm8620, %v8038, 0.0
  %v8653 = vsel %vm8621, %v8039, 0.0
  %v8654 = vsel %vm8622, %v8040, 0.0
  %v8655 = vsel %vm8623, %v8041, 0.0
  %v8656 = vsel %vm8624, %v8042, 0.0
  %v8657 = vsel %vm8625, %v8043, 0.0
  %v8658 = vsel %vm8626, %v8044, 0.0
  %v8659 = vsel %vm8627, %v8045, 0.0
  %v8660 = vsel %vm8628, %v8046, 0.0
  %v8661 = vsel %vm8629, %v8047, 0.0
  %v8662 = vsel %vm8630, %v8048, 0.0
  %v8663 = vsel %vm8631, %v8049, 0.0
  %v8664 = vsel %vm8632, %v8050, 0.0
  %v8665 = vsel %vm8633, %v8051, 0.0
  %v8666 = vsel %vm8634, %v8052, 0.0
  %v8667 = vsel %vm8635, %v8053, 0.0
  %v8668 = vsel %vm8636, %v8054, 0.0
  %v8669 = vsel %vm8410, %v7991, 0.0
  %v8670 = vsel %vm8411, %v7992, 0.0
  %v8671 = vsel %vm8412, %v7993, 0.0
  %v8672 = vsel %vm8413, %v7994, 0.0
  %v8673 = vsel %vm8414, %v7995, 0.0
  %v8674 = vsel %vm8415, %v7996, 0.0
  %v8675 = vsel %vm8416, %v7997, 0.0
  %v8676 = vsel %vm8417, %v7998, 0.0
  %v8677 = vsel %vm8418, %v7999, 0.0
  %v8678 = vsel %vm8419, %v8000, 0.0
  %v8679 = vsel %vm8420, %v8001, 0.0
  %v8680 = vsel %vm8421, %v8002, 0.0
  %v8681 = vsel %vm8422, %v8003, 0.0
  %v8682 = vsel %vm8423, %v8004, 0.0
  %v8683 = vsel %vm8424, %v8005, 0.0
  %v8684 = vsel %vm8425, %v8006, 0.0
  %v8685 = vsel %vm8426, %v8007, 0.0
  %v8686 = vsel %vm8427, %v8008, 0.0
  %v8687 = vsel %vm8428, %v8009, 0.0
  %v8688 = vsel %vm8429, %v8010, 0.0
  %v8689 = vsel %vm8430, %v8011, 0.0
  %v8690 = vsel %vm8431, %v8012, 0.0
  %v8691 = vsel %vm8432, %v8013, 0.0
  %v8692 = vsel %vm8433, %v8014, 0.0
  %v8693 = vsel %vm8434, %v8015, 0.0
  %v8694 = vsel %vm8435, %v8016, 0.0
  %v8695 = vsel %vm8436, %v8017, 0.0
  %v8696 = vsel %vm8437, %v8018, 0.0
  %v8697 = vsel %vm8438, %v8019, 0.0
  %v8698 = vsel %vm8439, %v8020, 0.0
  %v8699 = vsel %vm8440, %v8021, 0.0
  %v8700 = vsel %vm8441, %v8022, 0.0
  %v8701 = vadd.f32 %v8637, %v8669
  %v8702 = vadd.f32 %v8638, %v8670
  %v8703 = vadd.f32 %v8639, %v8671
  %v8704 = vadd.f32 %v8640, %v8672
  %v8705 = vadd.f32 %v8641, %v8673
  %v8706 = vadd.f32 %v8642, %v8674
  %v8707 = vadd.f32 %v8643, %v8675
  %v8708 = vadd.f32 %v8644, %v8676
  %v8709 = vadd.f32 %v8645, %v8677
  %v8710 = vadd.f32 %v8646, %v8678
  %v8711 = vadd.f32 %v8647, %v8679
  %v8712 = vadd.f32 %v8648, %v8680
  %v8713 = vadd.f32 %v8649, %v8681
  %v8714 = vadd.f32 %v8650, %v8682
  %v8715 = vadd.f32 %v8651, %v8683
  %v8716 = vadd.f32 %v8652, %v8684
  %v8717 = vadd.f32 %v8653, %v8685
  %v8718 = vadd.f32 %v8654, %v8686
  %v8719 = vadd.f32 %v8655, %v8687
  %v8720 = vadd.f32 %v8656, %v8688
  %v8721 = vadd.f32 %v8657, %v8689
  %v8722 = vadd.f32 %v8658, %v8690
  %v8723 = vadd.f32 %v8659, %v8691
  %v8724 = vadd.f32 %v8660, %v8692
  %v8725 = vadd.f32 %v8661, %v8693
  %v8726 = vadd.f32 %v8662, %v8694
  %v8727 = vadd.f32 %v8663, %v8695
  %v8728 = vadd.f32 %v8664, %v8696
  %v8729 = vadd.f32 %v8665, %v8697
  %v8730 = vadd.f32 %v8666, %v8698
  %v8731 = vadd.f32 %v8667, %v8699
  %v8732 = vadd.f32 %v8668, %v8700
  %v8733 = vpack.c.bf16 %v8702, %v8701
  %v8734 = vpack.c.bf16 %v8704, %v8703
  %v8735 = vpack.c.bf16 %v8706, %v8705
  %v8736 = vpack.c.bf16 %v8708, %v8707
  %v8737 = vpack.c.bf16 %v8710, %v8709
  %v8738 = vpack.c.bf16 %v8712, %v8711
  %v8739 = vpack.c.bf16 %v8714, %v8713
  %v8740 = vpack.c.bf16 %v8716, %v8715
  %v8741 = vpack.c.bf16 %v8718, %v8717
  %v8742 = vpack.c.bf16 %v8720, %v8719
  %v8743 = vpack.c.bf16 %v8722, %v8721
  %v8744 = vpack.c.bf16 %v8724, %v8723
  %v8745 = vpack.c.bf16 %v8726, %v8725
  %v8746 = vpack.c.bf16 %v8728, %v8727
  %v8747 = vpack.c.bf16 %v8730, %v8729
  %v8748 = vpack.c.bf16 %v8732, %v8731
  %8749 = vmatprep.subr.bf16.mxu0 0
  %8750 = vmatpush1.bf16.msra.mxu0 %v8733
  %8751 = vmatprep.subr.bf16.mxu0 0
  %8752 = vmatpush1.bf16.msra.mxu0 %v8734
  %8753 = vmatprep.subr.bf16.mxu0 0
  %8754 = vmatpush1.bf16.msra.mxu0 %v8735
  %8755 = vmatprep.subr.bf16.mxu0 0
  %8756 = vmatpush1.bf16.msra.mxu0 %v8736
  %8757 = vmatprep.subr.bf16.mxu0 0
  %8758 = vmatpush1.bf16.msra.mxu0 %v8737
  %8759 = vmatprep.subr.bf16.mxu0 0
  %8760 = vmatpush1.bf16.msra.mxu0 %v8738
  %8761 = vmatprep.subr.bf16.mxu0 0
  %8762 = vmatpush1.bf16.msra.mxu0 %v8739
  %8763 = vmatprep.subr.bf16.mxu0 0
  %8764 = vmatpush1.bf16.msra.mxu0 %v8740
  %8765 = vmatprep.subr.bf16.mxu0 0
  %8766 = vmatpush1.bf16.msra.mxu0 %v8741
  %8767 = vmatprep.subr.bf16.mxu0 0
  %8768 = vmatpush1.bf16.msra.mxu0 %v8742
  %8769 = vmatprep.subr.bf16.mxu0 0
  %8770 = vmatpush1.bf16.msra.mxu0 %v8743
  %8771 = vmatprep.subr.bf16.mxu0 0
  %8772 = vmatpush1.bf16.msra.mxu0 %v8744
  %8773 = vmatprep.subr.bf16.mxu0 0
  %8774 = vmatpush1.bf16.msra.mxu0 %v8745
  %8775 = vmatprep.subr.bf16.mxu0 0
  %8776 = vmatpush1.bf16.msra.mxu0 %v8746
  %8777 = vmatprep.subr.bf16.mxu0 0
  %8778 = vmatpush1.bf16.msra.mxu0 %v8747
  %8779 = vmatprep.subr.bf16.mxu0 0
  %8780 = vmatpush1.bf16.msra.mxu0 %v8748
  %8781 = vmatprep.mubr.bf16.mxu0 %v3174
  %8782 = vmatmul.mubr.bf16.gmra.mrb[0].mxu0 %v3173
  %v8783 = vpop.f32.mrb[0].mxu0
  %v8784 = vadd.f32 0.0, %v8783
  %v8785 = vpop.f32.mrb[0].mxu0
  %v8786 = vpop.f32.mrb[0].mxu0
  %v8787 = vadd.f32 0.0, %v8786
  %v8788 = vpop.f32.mrb[0].mxu0
  %8789 = vmatprep.mubr.bf16.mxu0 %v3176
  %8790 = vmatmul.mubr.bf16.gmra.mrb[0].mxu0 %v3175
  %v8791 = vpop.f32.mrb[0].mxu0
  %v8792 = vadd.f32 0.0, %v8791
  %v8793 = vpop.f32.mrb[0].mxu0
  %v8794 = vpop.f32.mrb[0].mxu0
  %v8795 = vadd.f32 0.0, %v8794
  %v8796 = vpop.f32.mrb[0].mxu0
  %8797 = vdwg.mxu0
  %v8798 = vpack.c.bf16 %v8787, %v8784
  %v8799 = vpack.c.bf16 %v8795, %v8792
  %vm8800 = vcmp.eq.s32.totalorder %v8151, 3
  %vm8801 = vcmp.eq.s32.totalorder %v8152, 3
  %vm8802 = vcmp.eq.s32.totalorder %v8153, 3
  %vm8803 = vcmp.eq.s32.totalorder %v8154, 3
  %vm8804 = vcmp.eq.s32.totalorder %v8155, 3
  %vm8805 = vcmp.eq.s32.totalorder %v8156, 3
  %vm8806 = vcmp.eq.s32.totalorder %v8157, 3
  %vm8807 = vcmp.eq.s32.totalorder %v8158, 3
  %vm8808 = vcmp.eq.s32.totalorder %v8159, 3
  %vm8809 = vcmp.eq.s32.totalorder %v8160, 3
  %vm8810 = vcmp.eq.s32.totalorder %v8161, 3
  %vm8811 = vcmp.eq.s32.totalorder %v8162, 3
  %vm8812 = vcmp.eq.s32.totalorder %v8163, 3
  %vm8813 = vcmp.eq.s32.totalorder %v8164, 3
  %vm8814 = vcmp.eq.s32.totalorder %v8165, 3
  %vm8815 = vcmp.eq.s32.totalorder %v8166, 3
  %vm8816 = vcmp.eq.s32.totalorder %v8167, 3
  %vm8817 = vcmp.eq.s32.totalorder %v8168, 3
  %vm8818 = vcmp.eq.s32.totalorder %v8169, 3
  %vm8819 = vcmp.eq.s32.totalorder %v8170, 3
  %vm8820 = vcmp.eq.s32.totalorder %v8171, 3
  %vm8821 = vcmp.eq.s32.totalorder %v8172, 3
  %vm8822 = vcmp.eq.s32.totalorder %v8173, 3
  %vm8823 = vcmp.eq.s32.totalorder %v8174, 3
  %vm8824 = vcmp.eq.s32.totalorder %v8175, 3
  %vm8825 = vcmp.eq.s32.totalorder %v8176, 3
  %vm8826 = vcmp.eq.s32.totalorder %v8177, 3
  %vm8827 = vcmp.eq.s32.totalorder %v8178, 3
  %vm8828 = vcmp.eq.s32.totalorder %v8179, 3
  %vm8829 = vcmp.eq.s32.totalorder %v8180, 3
  %vm8830 = vcmp.eq.s32.totalorder %v8181, 3
  %vm8831 = vcmp.eq.s32.totalorder %v8182, 3
  %v8832 = vsel %vm8800, %v8023, 0.0
  %v8833 = vsel %vm8801, %v8024, 0.0
  %v8834 = vsel %vm8802, %v8025, 0.0
  %v8835 = vsel %vm8803, %v8026, 0.0
  %v8836 = vsel %vm8804, %v8027, 0.0
  %v8837 = vsel %vm8805, %v8028, 0.0
  %v8838 = vsel %vm8806, %v8029, 0.0
  %v8839 = vsel %vm8807, %v8030, 0.0
  %v8840 = vsel %vm8808, %v8031, 0.0
  %v8841 = vsel %vm8809, %v8032, 0.0
  %v8842 = vsel %vm8810, %v8033, 0.0
  %v8843 = vsel %vm8811, %v8034, 0.0
  %v8844 = vsel %vm8812, %v8035, 0.0
  %v8845 = vsel %vm8813, %v8036, 0.0
  %v8846 = vsel %vm8814, %v8037, 0.0
  %v8847 = vsel %vm8815, %v8038, 0.0
  %v8848 = vsel %vm8816, %v8039, 0.0
  %v8849 = vsel %vm8817, %v8040, 0.0
  %v8850 = vsel %vm8818, %v8041, 0.0
  %v8851 = vsel %vm8819, %v8042, 0.0
  %v8852 = vsel %vm8820, %v8043, 0.0
  %v8853 = vsel %vm8821, %v8044, 0.0
  %v8854 = vsel %vm8822, %v8045, 0.0
  %v8855 = vsel %vm8823, %v8046, 0.0
  %v8856 = vsel %vm8824, %v8047, 0.0
  %v8857 = vsel %vm8825, %v8048, 0.0
  %v8858 = vsel %vm8826, %v8049, 0.0
  %v8859 = vsel %vm8827, %v8050, 0.0
  %v8860 = vsel %vm8828, %v8051, 0.0
  %v8861 = vsel %vm8829, %v8052, 0.0
  %v8862 = vsel %vm8830, %v8053, 0.0
  %v8863 = vsel %vm8831, %v8054, 0.0
  %v8864 = vsel %vm8605, %v7991, 0.0
  %v8865 = vsel %vm8606, %v7992, 0.0
  %v8866 = vsel %vm8607, %v7993, 0.0
  %v8867 = vsel %vm8608, %v7994, 0.0
  %v8868 = vsel %vm8609, %v7995, 0.0
  %v8869 = vsel %vm8610, %v7996, 0.0
  %v8870 = vsel %vm8611, %v7997, 0.0
  %v8871 = vsel %vm8612, %v7998, 0.0
  %v8872 = vsel %vm8613, %v7999, 0.0
  %v8873 = vsel %vm8614, %v8000, 0.0
  %v8874 = vsel %vm8615, %v8001, 0.0
  %v8875 = vsel %vm8616, %v8002, 0.0
  %v8876 = vsel %vm8617, %v8003, 0.0
  %v8877 = vsel %vm8618, %v8004, 0.0
  %v8878 = vsel %vm8619, %v8005, 0.0
  %v8879 = vsel %vm8620, %v8006, 0.0
  %v8880 = vsel %vm8621, %v8007, 0.0
  %v8881 = vsel %vm8622, %v8008, 0.0
  %v8882 = vsel %vm8623, %v8009, 0.0
  %v8883 = vsel %vm8624, %v8010, 0.0
  %v8884 = vsel %vm8625, %v8011, 0.0
  %v8885 = vsel %vm8626, %v8012, 0.0
  %v8886 = vsel %vm8627, %v8013, 0.0
  %v8887 = vsel %vm8628, %v8014, 0.0
  %v8888 = vsel %vm8629, %v8015, 0.0
  %v8889 = vsel %vm8630, %v8016, 0.0
  %v8890 = vsel %vm8631, %v8017, 0.0
  %v8891 = vsel %vm8632, %v8018, 0.0
  %v8892 = vsel %vm8633, %v8019, 0.0
  %v8893 = vsel %vm8634, %v8020, 0.0
  %v8894 = vsel %vm8635, %v8021, 0.0
  %v8895 = vsel %vm8636, %v8022, 0.0
  %v8896 = vadd.f32 %v8832, %v8864
  %v8897 = vadd.f32 %v8833, %v8865
  %v8898 = vadd.f32 %v8834, %v8866
  %v8899 = vadd.f32 %v8835, %v8867
  %v8900 = vadd.f32 %v8836, %v8868
  %v8901 = vadd.f32 %v8837, %v8869
  %v8902 = vadd.f32 %v8838, %v8870
  %v8903 = vadd.f32 %v8839, %v8871
  %v8904 = vadd.f32 %v8840, %v8872
  %v8905 = vadd.f32 %v8841, %v8873
  %v8906 = vadd.f32 %v8842, %v8874
  %v8907 = vadd.f32 %v8843, %v8875
  %v8908 = vadd.f32 %v8844, %v8876
  %v8909 = vadd.f32 %v8845, %v8877
  %v8910 = vadd.f32 %v8846, %v8878
  %v8911 = vadd.f32 %v8847, %v8879
  %v8912 = vadd.f32 %v8848, %v8880
  %v8913 = vadd.f32 %v8849, %v8881
  %v8914 = vadd.f32 %v8850, %v8882
  %v8915 = vadd.f32 %v8851, %v8883
  %v8916 = vadd.f32 %v8852, %v8884
  %v8917 = vadd.f32 %v8853, %v8885
  %v8918 = vadd.f32 %v8854, %v8886
  %v8919 = vadd.f32 %v8855, %v8887
  %v8920 = vadd.f32 %v8856, %v8888
  %v8921 = vadd.f32 %v8857, %v8889
  %v8922 = vadd.f32 %v8858, %v8890
  %v8923 = vadd.f32 %v8859, %v8891
  %v8924 = vadd.f32 %v8860, %v8892
  %v8925 = vadd.f32 %v8861, %v8893
  %v8926 = vadd.f32 %v8862, %v8894
  %v8927 = vadd.f32 %v8863, %v8895
  %v8928 = vpack.c.bf16 %v8897, %v8896
  %v8929 = vpack.c.bf16 %v8899, %v8898
  %v8930 = vpack.c.bf16 %v8901, %v8900
  %v8931 = vpack.c.bf16 %v8903, %v8902
  %v8932 = vpack.c.bf16 %v8905, %v8904
  %v8933 = vpack.c.bf16 %v8907, %v8906
  %v8934 = vpack.c.bf16 %v8909, %v8908
  %v8935 = vpack.c.bf16 %v8911, %v8910
  %v8936 = vpack.c.bf16 %v8913, %v8912
  %v8937 = vpack.c.bf16 %v8915, %v8914
  %v8938 = vpack.c.bf16 %v8917, %v8916
  %v8939 = vpack.c.bf16 %v8919, %v8918
  %v8940 = vpack.c.bf16 %v8921, %v8920
  %v8941 = vpack.c.bf16 %v8923, %v8922
  %v8942 = vpack.c.bf16 %v8925, %v8924
  %v8943 = vpack.c.bf16 %v8927, %v8926
  %8944 = vmatprep.subr.bf16.mxu0 0
  %8945 = vmatpush1.bf16.msra.mxu0 %v8928
  %8946 = vmatprep.subr.bf16.mxu0 0
  %8947 = vmatpush1.bf16.msra.mxu0 %v8929
  %8948 = vmatprep.subr.bf16.mxu0 0
  %8949 = vmatpush1.bf16.msra.mxu0 %v8930
  %8950 = vmatprep.subr.bf16.mxu0 0
  %8951 = vmatpush1.bf16.msra.mxu0 %v8931
  %8952 = vmatprep.subr.bf16.mxu0 0
  %8953 = vmatpush1.bf16.msra.mxu0 %v8932
  %8954 = vmatprep.subr.bf16.mxu0 0
  %8955 = vmatpush1.bf16.msra.mxu0 %v8933
  %8956 = vmatprep.subr.bf16.mxu0 0
  %8957 = vmatpush1.bf16.msra.mxu0 %v8934
  %8958 = vmatprep.subr.bf16.mxu0 0
  %8959 = vmatpush1.bf16.msra.mxu0 %v8935
  %8960 = vmatprep.subr.bf16.mxu0 0
  %8961 = vmatpush1.bf16.msra.mxu0 %v8936
  %8962 = vmatprep.subr.bf16.mxu0 0
  %8963 = vmatpush1.bf16.msra.mxu0 %v8937
  %8964 = vmatprep.subr.bf16.mxu0 0
  %8965 = vmatpush1.bf16.msra.mxu0 %v8938
  %8966 = vmatprep.subr.bf16.mxu0 0
  %8967 = vmatpush1.bf16.msra.mxu0 %v8939
  %8968 = vmatprep.subr.bf16.mxu0 0
  %8969 = vmatpush1.bf16.msra.mxu0 %v8940
  %8970 = vmatprep.subr.bf16.mxu0 0
  %8971 = vmatpush1.bf16.msra.mxu0 %v8941
  %8972 = vmatprep.subr.bf16.mxu0 0
  %8973 = vmatpush1.bf16.msra.mxu0 %v8942
  %8974 = vmatprep.subr.bf16.mxu0 0
  %8975 = vmatpush1.bf16.msra.mxu0 %v8943
  %8976 = vmatprep.mubr.bf16.mxu0 %v3174
  %8977 = vmatmul.mubr.bf16.gmra.mrb[0].mxu0 %v3173
  %v8978 = vpop.f32.mrb[0].mxu0
  %v8979 = vadd.f32 0.0, %v8978
  %v8980 = vpop.f32.mrb[0].mxu0
  %v8981 = vpop.f32.mrb[0].mxu0
  %v8982 = vadd.f32 0.0, %v8981
  %v8983 = vpop.f32.mrb[0].mxu0
  %8984 = vmatprep.mubr.bf16.mxu0 %v3176
  %8985 = vmatmul.mubr.bf16.gmra.mrb[0].mxu0 %v3175
  %v8986 = vpop.f32.mrb[0].mxu0
  %v8987 = vadd.f32 0.0, %v8986
  %v8988 = vpop.f32.mrb[0].mxu0
  %v8989 = vpop.f32.mrb[0].mxu0
  %v8990 = vadd.f32 0.0, %v8989
  %v8991 = vpop.f32.mrb[0].mxu0
  %8992 = vdwg.mxu0
  %v8993 = vpack.c.bf16 %v8982, %v8979
  %v8994 = vpack.c.bf16 %v8990, %v8987
  %vm8995 = vcmp.eq.s32.totalorder %v8151, 4
  %vm8996 = vcmp.eq.s32.totalorder %v8152, 4
  %vm8997 = vcmp.eq.s32.totalorder %v8153, 4
  %vm8998 = vcmp.eq.s32.totalorder %v8154, 4
  %vm8999 = vcmp.eq.s32.totalorder %v8155, 4
  %vm9000 = vcmp.eq.s32.totalorder %v8156, 4
  %vm9001 = vcmp.eq.s32.totalorder %v8157, 4
  %vm9002 = vcmp.eq.s32.totalorder %v8158, 4
  %vm9003 = vcmp.eq.s32.totalorder %v8159, 4
  %vm9004 = vcmp.eq.s32.totalorder %v8160, 4
  %vm9005 = vcmp.eq.s32.totalorder %v8161, 4
  %vm9006 = vcmp.eq.s32.totalorder %v8162, 4
  %vm9007 = vcmp.eq.s32.totalorder %v8163, 4
  %vm9008 = vcmp.eq.s32.totalorder %v8164, 4
  %vm9009 = vcmp.eq.s32.totalorder %v8165, 4
  %vm9010 = vcmp.eq.s32.totalorder %v8166, 4
  %vm9011 = vcmp.eq.s32.totalorder %v8167, 4
  %vm9012 = vcmp.eq.s32.totalorder %v8168, 4
  %vm9013 = vcmp.eq.s32.totalorder %v8169, 4
  %vm9014 = vcmp.eq.s32.totalorder %v8170, 4
  %vm9015 = vcmp.eq.s32.totalorder %v8171, 4
  %vm9016 = vcmp.eq.s32.totalorder %v8172, 4
  %vm9017 = vcmp.eq.s32.totalorder %v8173, 4
  %vm9018 = vcmp.eq.s32.totalorder %v8174, 4
  %vm9019 = vcmp.eq.s32.totalorder %v8175, 4
  %vm9020 = vcmp.eq.s32.totalorder %v8176, 4
  %vm9021 = vcmp.eq.s32.totalorder %v8177, 4
  %vm9022 = vcmp.eq.s32.totalorder %v8178, 4
  %vm9023 = vcmp.eq.s32.totalorder %v8179, 4
  %vm9024 = vcmp.eq.s32.totalorder %v8180, 4
  %vm9025 = vcmp.eq.s32.totalorder %v8181, 4
  %vm9026 = vcmp.eq.s32.totalorder %v8182, 4
  %v9027 = vsel %vm8995, %v8023, 0.0
  %v9028 = vsel %vm8996, %v8024, 0.0
  %v9029 = vsel %vm8997, %v8025, 0.0
  %v9030 = vsel %vm8998, %v8026, 0.0
  %v9031 = vsel %vm8999, %v8027, 0.0
  %v9032 = vsel %vm9000, %v8028, 0.0
  %v9033 = vsel %vm9001, %v8029, 0.0
  %v9034 = vsel %vm9002, %v8030, 0.0
  %v9035 = vsel %vm9003, %v8031, 0.0
  %v9036 = vsel %vm9004, %v8032, 0.0
  %v9037 = vsel %vm9005, %v8033, 0.0
  %v9038 = vsel %vm9006, %v8034, 0.0
  %v9039 = vsel %vm9007, %v8035, 0.0
  %v9040 = vsel %vm9008, %v8036, 0.0
  %v9041 = vsel %vm9009, %v8037, 0.0
  %v9042 = vsel %vm9010, %v8038, 0.0
  %v9043 = vsel %vm9011, %v8039, 0.0
  %v9044 = vsel %vm9012, %v8040, 0.0
  %v9045 = vsel %vm9013, %v8041, 0.0
  %v9046 = vsel %vm9014, %v8042, 0.0
  %v9047 = vsel %vm9015, %v8043, 0.0
  %v9048 = vsel %vm9016, %v8044, 0.0
  %v9049 = vsel %vm9017, %v8045, 0.0
  %v9050 = vsel %vm9018, %v8046, 0.0
  %v9051 = vsel %vm9019, %v8047, 0.0
  %v9052 = vsel %vm9020, %v8048, 0.0
  %v9053 = vsel %vm9021, %v8049, 0.0
  %v9054 = vsel %vm9022, %v8050, 0.0
  %v9055 = vsel %vm9023, %v8051, 0.0
  %v9056 = vsel %vm9024, %v8052, 0.0
  %v9057 = vsel %vm9025, %v8053, 0.0
  %v9058 = vsel %vm9026, %v8054, 0.0
  %v9059 = vsel %vm8800, %v7991, 0.0
  %v9060 = vsel %vm8801, %v7992, 0.0
  %v9061 = vsel %vm8802, %v7993, 0.0
  %v9062 = vsel %vm8803, %v7994, 0.0
  %v9063 = vsel %vm8804, %v7995, 0.0
  %v9064 = vsel %vm8805, %v7996, 0.0
  %v9065 = vsel %vm8806, %v7997, 0.0
  %v9066 = vsel %vm8807, %v7998, 0.0
  %v9067 = vsel %vm8808, %v7999, 0.0
  %v9068 = vsel %vm8809, %v8000, 0.0
  %v9069 = vsel %vm8810, %v8001, 0.0
  %v9070 = vsel %vm8811, %v8002, 0.0
  %v9071 = vsel %vm8812, %v8003, 0.0
  %v9072 = vsel %vm8813, %v8004, 0.0
  %v9073 = vsel %vm8814, %v8005, 0.0
  %v9074 = vsel %vm8815, %v8006, 0.0
  %v9075 = vsel %vm8816, %v8007, 0.0
  %v9076 = vsel %vm8817, %v8008, 0.0
  %v9077 = vsel %vm8818, %v8009, 0.0
  %v9078 = vsel %vm8819, %v8010, 0.0
  %v9079 = vsel %vm8820, %v8011, 0.0
  %v9080 = vsel %vm8821, %v8012, 0.0
  %v9081 = vsel %vm8822, %v8013, 0.0
  %v9082 = vsel %vm8823, %v8014, 0.0
  %v9083 = vsel %vm8824, %v8015, 0.0
  %v9084 = vsel %vm8825, %v8016, 0.0
  %v9085 = vsel %vm8826, %v8017, 0.0
  %v9086 = vsel %vm8827, %v8018, 0.0
  %v9087 = vsel %vm8828, %v8019, 0.0
  %v9088 = vsel %vm8829, %v8020, 0.0
  %v9089 = vsel %vm8830, %v8021, 0.0
  %v9090 = vsel %vm8831, %v8022, 0.0
  %v9091 = vadd.f32 %v9027, %v9059
  %v9092 = vadd.f32 %v9028, %v9060
  %v9093 = vadd.f32 %v9029, %v9061
  %v9094 = vadd.f32 %v9030, %v9062
  %v9095 = vadd.f32 %v9031, %v9063
  %v9096 = vadd.f32 %v9032, %v9064
  %v9097 = vadd.f32 %v9033, %v9065
  %v9098 = vadd.f32 %v9034, %v9066
  %v9099 = vadd.f32 %v9035, %v9067
  %v9100 = vadd.f32 %v9036, %v9068
  %v9101 = vadd.f32 %v9037, %v9069
  %v9102 = vadd.f32 %v9038, %v9070
  %v9103 = vadd.f32 %v9039, %v9071
  %v9104 = vadd.f32 %v9040, %v9072
  %v9105 = vadd.f32 %v9041, %v9073
  %v9106 = vadd.f32 %v9042, %v9074
  %v9107 = vadd.f32 %v9043, %v9075
  %v9108 = vadd.f32 %v9044, %v9076
  %v9109 = vadd.f32 %v9045, %v9077
  %v9110 = vadd.f32 %v9046, %v9078
  %v9111 = vadd.f32 %v9047, %v9079
  %v9112 = vadd.f32 %v9048, %v9080
  %v9113 = vadd.f32 %v9049, %v9081
  %v9114 = vadd.f32 %v9050, %v9082
  %v9115 = vadd.f32 %v9051, %v9083
  %v9116 = vadd.f32 %v9052, %v9084
  %v9117 = vadd.f32 %v9053, %v9085
  %v9118 = vadd.f32 %v9054, %v9086
  %v9119 = vadd.f32 %v9055, %v9087
  %v9120 = vadd.f32 %v9056, %v9088
  %v9121 = vadd.f32 %v9057, %v9089
  %v9122 = vadd.f32 %v9058, %v9090
  %v9123 = vpack.c.bf16 %v9092, %v9091
  %v9124 = vpack.c.bf16 %v9094, %v9093
  %v9125 = vpack.c.bf16 %v9096, %v9095
  %v9126 = vpack.c.bf16 %v9098, %v9097
  %v9127 = vpack.c.bf16 %v9100, %v9099
  %v9128 = vpack.c.bf16 %v9102, %v9101
  %v9129 = vpack.c.bf16 %v9104, %v9103
  %v9130 = vpack.c.bf16 %v9106, %v9105
  %v9131 = vpack.c.bf16 %v9108, %v9107
  %v9132 = vpack.c.bf16 %v9110, %v9109
  %v9133 = vpack.c.bf16 %v9112, %v9111
  %v9134 = vpack.c.bf16 %v9114, %v9113
  %v9135 = vpack.c.bf16 %v9116, %v9115
  %v9136 = vpack.c.bf16 %v9118, %v9117
  %v9137 = vpack.c.bf16 %v9120, %v9119
  %v9138 = vpack.c.bf16 %v9122, %v9121
  %9139 = vmatprep.subr.bf16.mxu0 0
  %9140 = vmatpush1.bf16.msra.mxu0 %v9123
  %9141 = vmatprep.subr.bf16.mxu0 0
  %9142 = vmatpush1.bf16.msra.mxu0 %v9124
  %9143 = vmatprep.subr.bf16.mxu0 0
  %9144 = vmatpush1.bf16.msra.mxu0 %v9125
  %9145 = vmatprep.subr.bf16.mxu0 0
  %9146 = vmatpush1.bf16.msra.mxu0 %v9126
  %9147 = vmatprep.subr.bf16.mxu0 0
  %9148 = vmatpush1.bf16.msra.mxu0 %v9127
  %9149 = vmatprep.subr.bf16.mxu0 0
  %9150 = vmatpush1.bf16.msra.mxu0 %v9128
  %9151 = vmatprep.subr.bf16.mxu0 0
  %9152 = vmatpush1.bf16.msra.mxu0 %v9129
  %9153 = vmatprep.subr.bf16.mxu0 0
  %9154 = vmatpush1.bf16.msra.mxu0 %v9130
  %9155 = vmatprep.subr.bf16.mxu0 0
  %9156 = vmatpush1.bf16.msra.mxu0 %v9131
  %9157 = vmatprep.subr.bf16.mxu0 0
  %9158 = vmatpush1.bf16.msra.mxu0 %v9132
  %9159 = vmatprep.subr.bf16.mxu0 0
  %9160 = vmatpush1.bf16.msra.mxu0 %v9133
  %9161 = vmatprep.subr.bf16.mxu0 0
  %9162 = vmatpush1.bf16.msra.mxu0 %v9134
  %9163 = vmatprep.subr.bf16.mxu0 0
  %9164 = vmatpush1.bf16.msra.mxu0 %v9135
  %9165 = vmatprep.subr.bf16.mxu0 0
  %9166 = vmatpush1.bf16.msra.mxu0 %v9136
  %9167 = vmatprep.subr.bf16.mxu0 0
  %9168 = vmatpush1.bf16.msra.mxu0 %v9137
  %9169 = vmatprep.subr.bf16.mxu0 0
  %9170 = vmatpush1.bf16.msra.mxu0 %v9138
  %9171 = vmatprep.mubr.bf16.mxu0 %v3174
  %9172 = vmatmul.mubr.bf16.gmra.mrb[0].mxu0 %v3173
  %v9173 = vpop.f32.mrb[0].mxu0
  %v9174 = vadd.f32 0.0, %v9173
  %v9175 = vpop.f32.mrb[0].mxu0
  %v9176 = vpop.f32.mrb[0].mxu0
  %v9177 = vadd.f32 0.0, %v9176
  %v9178 = vpop.f32.mrb[0].mxu0
  %9179 = vmatprep.mubr.bf16.mxu0 %v3176
  %9180 = vmatmul.mubr.bf16.gmra.mrb[0].mxu0 %v3175
  %v9181 = vpop.f32.mrb[0].mxu0
  %v9182 = vadd.f32 0.0, %v9181
  %v9183 = vpop.f32.mrb[0].mxu0
  %v9184 = vpop.f32.mrb[0].mxu0
  %v9185 = vadd.f32 0.0, %v9184
  %v9186 = vpop.f32.mrb[0].mxu0
  %9187 = vdwg.mxu0
  %v9188 = vpack.c.bf16 %v9177, %v9174
  %v9189 = vpack.c.bf16 %v9185, %v9182
  %vm9190 = vcmp.eq.s32.totalorder %v8151, 5
  %vm9191 = vcmp.eq.s32.totalorder %v8152, 5
  %vm9192 = vcmp.eq.s32.totalorder %v8153, 5
  %vm9193 = vcmp.eq.s32.totalorder %v8154, 5
  %vm9194 = vcmp.eq.s32.totalorder %v8155, 5
  %vm9195 = vcmp.eq.s32.totalorder %v8156, 5
  %vm9196 = vcmp.eq.s32.totalorder %v8157, 5
  %vm9197 = vcmp.eq.s32.totalorder %v8158, 5
  %vm9198 = vcmp.eq.s32.totalorder %v8159, 5
  %vm9199 = vcmp.eq.s32.totalorder %v8160, 5
  %vm9200 = vcmp.eq.s32.totalorder %v8161, 5
  %vm9201 = vcmp.eq.s32.totalorder %v8162, 5
  %vm9202 = vcmp.eq.s32.totalorder %v8163, 5
  %vm9203 = vcmp.eq.s32.totalorder %v8164, 5
  %vm9204 = vcmp.eq.s32.totalorder %v8165, 5
  %vm9205 = vcmp.eq.s32.totalorder %v8166, 5
  %vm9206 = vcmp.eq.s32.totalorder %v8167, 5
  %vm9207 = vcmp.eq.s32.totalorder %v8168, 5
  %vm9208 = vcmp.eq.s32.totalorder %v8169, 5
  %vm9209 = vcmp.eq.s32.totalorder %v8170, 5
  %vm9210 = vcmp.eq.s32.totalorder %v8171, 5
  %vm9211 = vcmp.eq.s32.totalorder %v8172, 5
  %vm9212 = vcmp.eq.s32.totalorder %v8173, 5
  %vm9213 = vcmp.eq.s32.totalorder %v8174, 5
  %vm9214 = vcmp.eq.s32.totalorder %v8175, 5
  %vm9215 = vcmp.eq.s32.totalorder %v8176, 5
  %vm9216 = vcmp.eq.s32.totalorder %v8177, 5
  %vm9217 = vcmp.eq.s32.totalorder %v8178, 5
  %vm9218 = vcmp.eq.s32.totalorder %v8179, 5
  %vm9219 = vcmp.eq.s32.totalorder %v8180, 5
  %vm9220 = vcmp.eq.s32.totalorder %v8181, 5
  %vm9221 = vcmp.eq.s32.totalorder %v8182, 5
  %v9222 = vsel %vm9190, %v8023, 0.0
  %v9223 = vsel %vm9191, %v8024, 0.0
  %v9224 = vsel %vm9192, %v8025, 0.0
  %v9225 = vsel %vm9193, %v8026, 0.0
  %v9226 = vsel %vm9194, %v8027, 0.0
  %v9227 = vsel %vm9195, %v8028, 0.0
  %v9228 = vsel %vm9196, %v8029, 0.0
  %v9229 = vsel %vm9197, %v8030, 0.0
  %v9230 = vsel %vm9198, %v8031, 0.0
  %v9231 = vsel %vm9199, %v8032, 0.0
  %v9232 = vsel %vm9200, %v8033, 0.0
  %v9233 = vsel %vm9201, %v8034, 0.0
  %v9234 = vsel %vm9202, %v8035, 0.0
  %v9235 = vsel %vm9203, %v8036, 0.0
  %v9236 = vsel %vm9204, %v8037, 0.0
  %v9237 = vsel %vm9205, %v8038, 0.0
  %v9238 = vsel %vm9206, %v8039, 0.0
  %v9239 = vsel %vm9207, %v8040, 0.0
  %v9240 = vsel %vm9208, %v8041, 0.0
  %v9241 = vsel %vm9209, %v8042, 0.0
  %v9242 = vsel %vm9210, %v8043, 0.0
  %v9243 = vsel %vm9211, %v8044, 0.0
  %v9244 = vsel %vm9212, %v8045, 0.0
  %v9245 = vsel %vm9213, %v8046, 0.0
  %v9246 = vsel %vm9214, %v8047, 0.0
  %v9247 = vsel %vm9215, %v8048, 0.0
  %v9248 = vsel %vm9216, %v8049, 0.0
  %v9249 = vsel %vm9217, %v8050, 0.0
  %v9250 = vsel %vm9218, %v8051, 0.0
  %v9251 = vsel %vm9219, %v8052, 0.0
  %v9252 = vsel %vm9220, %v8053, 0.0
  %v9253 = vsel %vm9221, %v8054, 0.0
  %v9254 = vsel %vm8995, %v7991, 0.0
  %v9255 = vsel %vm8996, %v7992, 0.0
  %v9256 = vsel %vm8997, %v7993, 0.0
  %v9257 = vsel %vm8998, %v7994, 0.0
  %v9258 = vsel %vm8999, %v7995, 0.0
  %v9259 = vsel %vm9000, %v7996, 0.0
  %v9260 = vsel %vm9001, %v7997, 0.0
  %v9261 = vsel %vm9002, %v7998, 0.0
  %v9262 = vsel %vm9003, %v7999, 0.0
  %v9263 = vsel %vm9004, %v8000, 0.0
  %v9264 = vsel %vm9005, %v8001, 0.0
  %v9265 = vsel %vm9006, %v8002, 0.0
  %v9266 = vsel %vm9007, %v8003, 0.0
  %v9267 = vsel %vm9008, %v8004, 0.0
  %v9268 = vsel %vm9009, %v8005, 0.0
  %v9269 = vsel %vm9010, %v8006, 0.0
  %v9270 = vsel %vm9011, %v8007, 0.0
  %v9271 = vsel %vm9012, %v8008, 0.0
  %v9272 = vsel %vm9013, %v8009, 0.0
  %v9273 = vsel %vm9014, %v8010, 0.0
  %v9274 = vsel %vm9015, %v8011, 0.0
  %v9275 = vsel %vm9016, %v8012, 0.0
  %v9276 = vsel %vm9017, %v8013, 0.0
  %v9277 = vsel %vm9018, %v8014, 0.0
  %v9278 = vsel %vm9019, %v8015, 0.0
  %v9279 = vsel %vm9020, %v8016, 0.0
  %v9280 = vsel %vm9021, %v8017, 0.0
  %v9281 = vsel %vm9022, %v8018, 0.0
  %v9282 = vsel %vm9023, %v8019, 0.0
  %v9283 = vsel %vm9024, %v8020, 0.0
  %v9284 = vsel %vm9025, %v8021, 0.0
  %v9285 = vsel %vm9026, %v8022, 0.0
  %v9286 = vadd.f32 %v9222, %v9254
  %v9287 = vadd.f32 %v9223, %v9255
  %v9288 = vadd.f32 %v9224, %v9256
  %v9289 = vadd.f32 %v9225, %v9257
  %v9290 = vadd.f32 %v9226, %v9258
  %v9291 = vadd.f32 %v9227, %v9259
  %v9292 = vadd.f32 %v9228, %v9260
  %v9293 = vadd.f32 %v9229, %v9261
  %v9294 = vadd.f32 %v9230, %v9262
  %v9295 = vadd.f32 %v9231, %v9263
  %v9296 = vadd.f32 %v9232, %v9264
  %v9297 = vadd.f32 %v9233, %v9265
  %v9298 = vadd.f32 %v9234, %v9266
  %v9299 = vadd.f32 %v9235, %v9267
  %v9300 = vadd.f32 %v9236, %v9268
  %v9301 = vadd.f32 %v9237, %v9269
  %v9302 = vadd.f32 %v9238, %v9270
  %v9303 = vadd.f32 %v9239, %v9271
  %v9304 = vadd.f32 %v9240, %v9272
  %v9305 = vadd.f32 %v9241, %v9273
  %v9306 = vadd.f32 %v9242, %v9274
  %v9307 = vadd.f32 %v9243, %v9275
  %v9308 = vadd.f32 %v9244, %v9276
  %v9309 = vadd.f32 %v9245, %v9277
  %v9310 = vadd.f32 %v9246, %v9278
  %v9311 = vadd.f32 %v9247, %v9279
  %v9312 = vadd.f32 %v9248, %v9280
  %v9313 = vadd.f32 %v9249, %v9281
  %v9314 = vadd.f32 %v9250, %v9282
  %v9315 = vadd.f32 %v9251, %v9283
  %v9316 = vadd.f32 %v9252, %v9284
  %v9317 = vadd.f32 %v9253, %v9285
  %v9318 = vpack.c.bf16 %v9287, %v9286
  %v9319 = vpack.c.bf16 %v9289, %v9288
  %v9320 = vpack.c.bf16 %v9291, %v9290
  %v9321 = vpack.c.bf16 %v9293, %v9292
  %v9322 = vpack.c.bf16 %v9295, %v9294
  %v9323 = vpack.c.bf16 %v9297, %v9296
  %v9324 = vpack.c.bf16 %v9299, %v9298
  %v9325 = vpack.c.bf16 %v9301, %v9300
  %v9326 = vpack.c.bf16 %v9303, %v9302
  %v9327 = vpack.c.bf16 %v9305, %v9304
  %v9328 = vpack.c.bf16 %v9307, %v9306
  %v9329 = vpack.c.bf16 %v9309, %v9308
  %v9330 = vpack.c.bf16 %v9311, %v9310
  %v9331 = vpack.c.bf16 %v9313, %v9312
  %v9332 = vpack.c.bf16 %v9315, %v9314
  %v9333 = vpack.c.bf16 %v9317, %v9316
  %9334 = vmatprep.subr.bf16.mxu0 0
  %9335 = vmatpush1.bf16.msra.mxu0 %v9318
  %9336 = vmatprep.subr.bf16.mxu0 0
  %9337 = vmatpush1.bf16.msra.mxu0 %v9319
  %9338 = vmatprep.subr.bf16.mxu0 0
  %9339 = vmatpush1.bf16.msra.mxu0 %v9320
  %9340 = vmatprep.subr.bf16.mxu0 0
  %9341 = vmatpush1.bf16.msra.mxu0 %v9321
  %9342 = vmatprep.subr.bf16.mxu0 0
  %9343 = vmatpush1.bf16.msra.mxu0 %v9322
  %9344 = vmatprep.subr.bf16.mxu0 0
  %9345 = vmatpush1.bf16.msra.mxu0 %v9323
  %9346 = vmatprep.subr.bf16.mxu0 0
  %9347 = vmatpush1.bf16.msra.mxu0 %v9324
  %9348 = vmatprep.subr.bf16.mxu0 0
  %9349 = vmatpush1.bf16.msra.mxu0 %v9325
  %9350 = vmatprep.subr.bf16.mxu0 0
  %9351 = vmatpush1.bf16.msra.mxu0 %v9326
  %9352 = vmatprep.subr.bf16.mxu0 0
  %9353 = vmatpush1.bf16.msra.mxu0 %v9327
  %9354 = vmatprep.subr.bf16.mxu0 0
  %9355 = vmatpush1.bf16.msra.mxu0 %v9328
  %9356 = vmatprep.subr.bf16.mxu0 0
  %9357 = vmatpush1.bf16.msra.mxu0 %v9329
  %9358 = vmatprep.subr.bf16.mxu0 0
  %9359 = vmatpush1.bf16.msra.mxu0 %v9330
  %9360 = vmatprep.subr.bf16.mxu0 0
  %9361 = vmatpush1.bf16.msra.mxu0 %v9331
  %9362 = vmatprep.subr.bf16.mxu0 0
  %9363 = vmatpush1.bf16.msra.mxu0 %v9332
  %9364 = vmatprep.subr.bf16.mxu0 0
  %9365 = vmatpush1.bf16.msra.mxu0 %v9333
  %9366 = vmatprep.mubr.bf16.mxu0 %v3174
  %9367 = vmatmul.mubr.bf16.gmra.mrb[0].mxu0 %v3173
  %v9368 = vpop.f32.mrb[0].mxu0
  %v9369 = vadd.f32 0.0, %v9368
  %v9370 = vpop.f32.mrb[0].mxu0
  %v9371 = vpop.f32.mrb[0].mxu0
  %v9372 = vadd.f32 0.0, %v9371
  %v9373 = vpop.f32.mrb[0].mxu0
  %9374 = vmatprep.mubr.bf16.mxu0 %v3176
  %9375 = vmatmul.mubr.bf16.gmra.mrb[0].mxu0 %v3175
  %v9376 = vpop.f32.mrb[0].mxu0
  %v9377 = vadd.f32 0.0, %v9376
  %v9378 = vpop.f32.mrb[0].mxu0
  %v9379 = vpop.f32.mrb[0].mxu0
  %v9380 = vadd.f32 0.0, %v9379
  %v9381 = vpop.f32.mrb[0].mxu0
  %9382 = vdwg.mxu0
  %v9383 = vpack.c.bf16 %v9372, %v9369
  %v9384 = vpack.c.bf16 %v9380, %v9377
  %vm9385 = vcmp.eq.s32.totalorder %v8151, 6
  %vm9386 = vcmp.eq.s32.totalorder %v8152, 6
  %vm9387 = vcmp.eq.s32.totalorder %v8153, 6
  %vm9388 = vcmp.eq.s32.totalorder %v8154, 6
  %vm9389 = vcmp.eq.s32.totalorder %v8155, 6
  %vm9390 = vcmp.eq.s32.totalorder %v8156, 6
  %vm9391 = vcmp.eq.s32.totalorder %v8157, 6
  %vm9392 = vcmp.eq.s32.totalorder %v8158, 6
  %vm9393 = vcmp.eq.s32.totalorder %v8159, 6
  %vm9394 = vcmp.eq.s32.totalorder %v8160, 6
  %vm9395 = vcmp.eq.s32.totalorder %v8161, 6
  %vm9396 = vcmp.eq.s32.totalorder %v8162, 6
  %vm9397 = vcmp.eq.s32.totalorder %v8163, 6
  %vm9398 = vcmp.eq.s32.totalorder %v8164, 6
  %vm9399 = vcmp.eq.s32.totalorder %v8165, 6
  %vm9400 = vcmp.eq.s32.totalorder %v8166, 6
  %vm9401 = vcmp.eq.s32.totalorder %v8167, 6
  %vm9402 = vcmp.eq.s32.totalorder %v8168, 6
  %vm9403 = vcmp.eq.s32.totalorder %v8169, 6
  %vm9404 = vcmp.eq.s32.totalorder %v8170, 6
  %vm9405 = vcmp.eq.s32.totalorder %v8171, 6
  %vm9406 = vcmp.eq.s32.totalorder %v8172, 6
  %vm9407 = vcmp.eq.s32.totalorder %v8173, 6
  %vm9408 = vcmp.eq.s32.totalorder %v8174, 6
  %vm9409 = vcmp.eq.s32.totalorder %v8175, 6
  %vm9410 = vcmp.eq.s32.totalorder %v8176, 6
  %vm9411 = vcmp.eq.s32.totalorder %v8177, 6
  %vm9412 = vcmp.eq.s32.totalorder %v8178, 6
  %vm9413 = vcmp.eq.s32.totalorder %v8179, 6
  %vm9414 = vcmp.eq.s32.totalorder %v8180, 6
  %vm9415 = vcmp.eq.s32.totalorder %v8181, 6
  %vm9416 = vcmp.eq.s32.totalorder %v8182, 6
  %v9417 = vsel %vm9385, %v8023, 0.0
  %v9418 = vsel %vm9386, %v8024, 0.0
  %v9419 = vsel %vm9387, %v8025, 0.0
  %v9420 = vsel %vm9388, %v8026, 0.0
  %v9421 = vsel %vm9389, %v8027, 0.0
  %v9422 = vsel %vm9390, %v8028, 0.0
  %v9423 = vsel %vm9391, %v8029, 0.0
  %v9424 = vsel %vm9392, %v8030, 0.0
  %v9425 = vsel %vm9393, %v8031, 0.0
  %v9426 = vsel %vm9394, %v8032, 0.0
  %v9427 = vsel %vm9395, %v8033, 0.0
  %v9428 = vsel %vm9396, %v8034, 0.0
  %v9429 = vsel %vm9397, %v8035, 0.0
  %v9430 = vsel %vm9398, %v8036, 0.0
  %v9431 = vsel %vm9399, %v8037, 0.0
  %v9432 = vsel %vm9400, %v8038, 0.0
  %v9433 = vsel %vm9401, %v8039, 0.0
  %v9434 = vsel %vm9402, %v8040, 0.0
  %v9435 = vsel %vm9403, %v8041, 0.0
  %v9436 = vsel %vm9404, %v8042, 0.0
  %v9437 = vsel %vm9405, %v8043, 0.0
  %v9438 = vsel %vm9406, %v8044, 0.0
  %v9439 = vsel %vm9407, %v8045, 0.0
  %v9440 = vsel %vm9408, %v8046, 0.0
  %v9441 = vsel %vm9409, %v8047, 0.0
  %v9442 = vsel %vm9410, %v8048, 0.0
  %v9443 = vsel %vm9411, %v8049, 0.0
  %v9444 = vsel %vm9412, %v8050, 0.0
  %v9445 = vsel %vm9413, %v8051, 0.0
  %v9446 = vsel %vm9414, %v8052, 0.0
  %v9447 = vsel %vm9415, %v8053, 0.0
  %v9448 = vsel %vm9416, %v8054, 0.0
  %v9449 = vsel %vm9190, %v7991, 0.0
  %v9450 = vsel %vm9191, %v7992, 0.0
  %v9451 = vsel %vm9192, %v7993, 0.0
  %v9452 = vsel %vm9193, %v7994, 0.0
  %v9453 = vsel %vm9194, %v7995, 0.0
  %v9454 = vsel %vm9195, %v7996, 0.0
  %v9455 = vsel %vm9196, %v7997, 0.0
  %v9456 = vsel %vm9197, %v7998, 0.0
  %v9457 = vsel %vm9198, %v7999, 0.0
  %v9458 = vsel %vm9199, %v8000, 0.0
  %v9459 = vsel %vm9200, %v8001, 0.0
  %v9460 = vsel %vm9201, %v8002, 0.0
  %v9461 = vsel %vm9202, %v8003, 0.0
  %v9462 = vsel %vm9203, %v8004, 0.0
  %v9463 = vsel %vm9204, %v8005, 0.0
  %v9464 = vsel %vm9205, %v8006, 0.0
  %v9465 = vsel %vm9206, %v8007, 0.0
  %v9466 = vsel %vm9207, %v8008, 0.0
  %v9467 = vsel %vm9208, %v8009, 0.0
  %v9468 = vsel %vm9209, %v8010, 0.0
  %v9469 = vsel %vm9210, %v8011, 0.0
  %v9470 = vsel %vm9211, %v8012, 0.0
  %v9471 = vsel %vm9212, %v8013, 0.0
  %v9472 = vsel %vm9213, %v8014, 0.0
  %v9473 = vsel %vm9214, %v8015, 0.0
  %v9474 = vsel %vm9215, %v8016, 0.0
  %v9475 = vsel %vm9216, %v8017, 0.0
  %v9476 = vsel %vm9217, %v8018, 0.0
  %v9477 = vsel %vm9218, %v8019, 0.0
  %v9478 = vsel %vm9219, %v8020, 0.0
  %v9479 = vsel %vm9220, %v8021, 0.0
  %v9480 = vsel %vm9221, %v8022, 0.0
  %v9481 = vadd.f32 %v9417, %v9449
  %v9482 = vadd.f32 %v9418, %v9450
  %v9483 = vadd.f32 %v9419, %v9451
  %v9484 = vadd.f32 %v9420, %v9452
  %v9485 = vadd.f32 %v9421, %v9453
  %v9486 = vadd.f32 %v9422, %v9454
  %v9487 = vadd.f32 %v9423, %v9455
  %v9488 = vadd.f32 %v9424, %v9456
  %v9489 = vadd.f32 %v9425, %v9457
  %v9490 = vadd.f32 %v9426, %v9458
  %v9491 = vadd.f32 %v9427, %v9459
  %v9492 = vadd.f32 %v9428, %v9460
  %v9493 = vadd.f32 %v9429, %v9461
  %v9494 = vadd.f32 %v9430, %v9462
  %v9495 = vadd.f32 %v9431, %v9463
  %v9496 = vadd.f32 %v9432, %v9464
  %v9497 = vadd.f32 %v9433, %v9465
  %v9498 = vadd.f32 %v9434, %v9466
  %v9499 = vadd.f32 %v9435, %v9467
  %v9500 = vadd.f32 %v9436, %v9468
  %v9501 = vadd.f32 %v9437, %v9469
  %v9502 = vadd.f32 %v9438, %v9470
  %v9503 = vadd.f32 %v9439, %v9471
  %v9504 = vadd.f32 %v9440, %v9472
  %v9505 = vadd.f32 %v9441, %v9473
  %v9506 = vadd.f32 %v9442, %v9474
  %v9507 = vadd.f32 %v9443, %v9475
  %v9508 = vadd.f32 %v9444, %v9476
  %v9509 = vadd.f32 %v9445, %v9477
  %v9510 = vadd.f32 %v9446, %v9478
  %v9511 = vadd.f32 %v9447, %v9479
  %v9512 = vadd.f32 %v9448, %v9480
  %v9513 = vpack.c.bf16 %v9482, %v9481
  %v9514 = vpack.c.bf16 %v9484, %v9483
  %v9515 = vpack.c.bf16 %v9486, %v9485
  %v9516 = vpack.c.bf16 %v9488, %v9487
  %v9517 = vpack.c.bf16 %v9490, %v9489
  %v9518 = vpack.c.bf16 %v9492, %v9491
  %v9519 = vpack.c.bf16 %v9494, %v9493
  %v9520 = vpack.c.bf16 %v9496, %v9495
  %v9521 = vpack.c.bf16 %v9498, %v9497
  %v9522 = vpack.c.bf16 %v9500, %v9499
  %v9523 = vpack.c.bf16 %v9502, %v9501
  %v9524 = vpack.c.bf16 %v9504, %v9503
  %v9525 = vpack.c.bf16 %v9506, %v9505
  %v9526 = vpack.c.bf16 %v9508, %v9507
  %v9527 = vpack.c.bf16 %v9510, %v9509
  %v9528 = vpack.c.bf16 %v9512, %v9511
  %9529 = vmatprep.subr.bf16.mxu0 0
  %9530 = vmatpush1.bf16.msra.mxu0 %v9513
  %9531 = vmatprep.subr.bf16.mxu0 0
  %9532 = vmatpush1.bf16.msra.mxu0 %v9514
  %9533 = vmatprep.subr.bf16.mxu0 0
  %9534 = vmatpush1.bf16.msra.mxu0 %v9515
  %9535 = vmatprep.subr.bf16.mxu0 0
  %9536 = vmatpush1.bf16.msra.mxu0 %v9516
  %9537 = vmatprep.subr.bf16.mxu0 0
  %9538 = vmatpush1.bf16.msra.mxu0 %v9517
  %9539 = vmatprep.subr.bf16.mxu0 0
  %9540 = vmatpush1.bf16.msra.mxu0 %v9518
  %9541 = vmatprep.subr.bf16.mxu0 0
  %9542 = vmatpush1.bf16.msra.mxu0 %v9519
  %9543 = vmatprep.subr.bf16.mxu0 0
  %9544 = vmatpush1.bf16.msra.mxu0 %v9520
  %9545 = vmatprep.subr.bf16.mxu0 0
  %9546 = vmatpush1.bf16.msra.mxu0 %v9521
  %9547 = vmatprep.subr.bf16.mxu0 0
  %9548 = vmatpush1.bf16.msra.mxu0 %v9522
  %9549 = vmatprep.subr.bf16.mxu0 0
  %9550 = vmatpush1.bf16.msra.mxu0 %v9523
  %9551 = vmatprep.subr.bf16.mxu0 0
  %9552 = vmatpush1.bf16.msra.mxu0 %v9524
  %9553 = vmatprep.subr.bf16.mxu0 0
  %9554 = vmatpush1.bf16.msra.mxu0 %v9525
  %9555 = vmatprep.subr.bf16.mxu0 0
  %9556 = vmatpush1.bf16.msra.mxu0 %v9526
  %9557 = vmatprep.subr.bf16.mxu0 0
  %9558 = vmatpush1.bf16.msra.mxu0 %v9527
  %9559 = vmatprep.subr.bf16.mxu0 0
  %9560 = vmatpush1.bf16.msra.mxu0 %v9528
  %9561 = vmatprep.mubr.bf16.mxu0 %v3174
  %9562 = vmatmul.mubr.bf16.gmra.mrb[0].mxu0 %v3173
  %v9563 = vpop.f32.mrb[0].mxu0
  %v9564 = vadd.f32 0.0, %v9563
  %v9565 = vpop.f32.mrb[0].mxu0
  %v9566 = vpop.f32.mrb[0].mxu0
  %v9567 = vadd.f32 0.0, %v9566
  %v9568 = vpop.f32.mrb[0].mxu0
  %9569 = vmatprep.mubr.bf16.mxu0 %v3176
  %9570 = vmatmul.mubr.bf16.gmra.mrb[0].mxu0 %v3175
  %v9571 = vpop.f32.mrb[0].mxu0
  %v9572 = vadd.f32 0.0, %v9571
  %v9573 = vpop.f32.mrb[0].mxu0
  %v9574 = vpop.f32.mrb[0].mxu0
  %v9575 = vadd.f32 0.0, %v9574
  %v9576 = vpop.f32.mrb[0].mxu0
  %9577 = vdwg.mxu0
  %v9578 = vpack.c.bf16 %v9567, %v9564
  %v9579 = vpack.c.bf16 %v9575, %v9572
  %vm9580 = vcmp.eq.s32.totalorder %v8151, 7
  %vm9581 = vcmp.eq.s32.totalorder %v8152, 7
  %vm9582 = vcmp.eq.s32.totalorder %v8153, 7
  %vm9583 = vcmp.eq.s32.totalorder %v8154, 7
  %vm9584 = vcmp.eq.s32.totalorder %v8155, 7
  %vm9585 = vcmp.eq.s32.totalorder %v8156, 7
  %vm9586 = vcmp.eq.s32.totalorder %v8157, 7
  %vm9587 = vcmp.eq.s32.totalorder %v8158, 7
  %vm9588 = vcmp.eq.s32.totalorder %v8159, 7
  %vm9589 = vcmp.eq.s32.totalorder %v8160, 7
  %vm9590 = vcmp.eq.s32.totalorder %v8161, 7
  %vm9591 = vcmp.eq.s32.totalorder %v8162, 7
  %vm9592 = vcmp.eq.s32.totalorder %v8163, 7
  %vm9593 = vcmp.eq.s32.totalorder %v8164, 7
  %vm9594 = vcmp.eq.s32.totalorder %v8165, 7
  %vm9595 = vcmp.eq.s32.totalorder %v8166, 7
  %vm9596 = vcmp.eq.s32.totalorder %v8167, 7
  %vm9597 = vcmp.eq.s32.totalorder %v8168, 7
  %vm9598 = vcmp.eq.s32.totalorder %v8169, 7
  %vm9599 = vcmp.eq.s32.totalorder %v8170, 7
  %vm9600 = vcmp.eq.s32.totalorder %v8171, 7
  %vm9601 = vcmp.eq.s32.totalorder %v8172, 7
  %vm9602 = vcmp.eq.s32.totalorder %v8173, 7
  %vm9603 = vcmp.eq.s32.totalorder %v8174, 7
  %vm9604 = vcmp.eq.s32.totalorder %v8175, 7
  %vm9605 = vcmp.eq.s32.totalorder %v8176, 7
  %vm9606 = vcmp.eq.s32.totalorder %v8177, 7
  %vm9607 = vcmp.eq.s32.totalorder %v8178, 7
  %vm9608 = vcmp.eq.s32.totalorder %v8179, 7
  %vm9609 = vcmp.eq.s32.totalorder %v8180, 7
  %vm9610 = vcmp.eq.s32.totalorder %v8181, 7
  %vm9611 = vcmp.eq.s32.totalorder %v8182, 7
  %v9612 = vsel %vm9580, %v8023, 0.0
  %v9613 = vsel %vm9581, %v8024, 0.0
  %v9614 = vsel %vm9582, %v8025, 0.0
  %v9615 = vsel %vm9583, %v8026, 0.0
  %v9616 = vsel %vm9584, %v8027, 0.0
  %v9617 = vsel %vm9585, %v8028, 0.0
  %v9618 = vsel %vm9586, %v8029, 0.0
  %v9619 = vsel %vm9587, %v8030, 0.0
  %v9620 = vsel %vm9588, %v8031, 0.0
  %v9621 = vsel %vm9589, %v8032, 0.0
  %v9622 = vsel %vm9590, %v8033, 0.0
  %v9623 = vsel %vm9591, %v8034, 0.0
  %v9624 = vsel %vm9592, %v8035, 0.0
  %v9625 = vsel %vm9593, %v8036, 0.0
  %v9626 = vsel %vm9594, %v8037, 0.0
  %v9627 = vsel %vm9595, %v8038, 0.0
  %v9628 = vsel %vm9596, %v8039, 0.0
  %v9629 = vsel %vm9597, %v8040, 0.0
  %v9630 = vsel %vm9598, %v8041, 0.0
  %v9631 = vsel %vm9599, %v8042, 0.0
  %v9632 = vsel %vm9600, %v8043, 0.0
  %v9633 = vsel %vm9601, %v8044, 0.0
  %v9634 = vsel %vm9602, %v8045, 0.0
  %v9635 = vsel %vm9603, %v8046, 0.0
  %v9636 = vsel %vm9604, %v8047, 0.0
  %v9637 = vsel %vm9605, %v8048, 0.0
  %v9638 = vsel %vm9606, %v8049, 0.0
  %v9639 = vsel %vm9607, %v8050, 0.0
  %v9640 = vsel %vm9608, %v8051, 0.0
  %v9641 = vsel %vm9609, %v8052, 0.0
  %v9642 = vsel %vm9610, %v8053, 0.0
  %v9643 = vsel %vm9611, %v8054, 0.0
  %v9644 = vsel %vm9385, %v7991, 0.0
  %v9645 = vsel %vm9386, %v7992, 0.0
  %v9646 = vsel %vm9387, %v7993, 0.0
  %v9647 = vsel %vm9388, %v7994, 0.0
  %v9648 = vsel %vm9389, %v7995, 0.0
  %v9649 = vsel %vm9390, %v7996, 0.0
  %v9650 = vsel %vm9391, %v7997, 0.0
  %v9651 = vsel %vm9392, %v7998, 0.0
  %v9652 = vsel %vm9393, %v7999, 0.0
  %v9653 = vsel %vm9394, %v8000, 0.0
  %v9654 = vsel %vm9395, %v8001, 0.0
  %v9655 = vsel %vm9396, %v8002, 0.0
  %v9656 = vsel %vm9397, %v8003, 0.0
  %v9657 = vsel %vm9398, %v8004, 0.0
  %v9658 = vsel %vm9399, %v8005, 0.0
  %v9659 = vsel %vm9400, %v8006, 0.0
  %v9660 = vsel %vm9401, %v8007, 0.0
  %v9661 = vsel %vm9402, %v8008, 0.0
  %v9662 = vsel %vm9403, %v8009, 0.0
  %v9663 = vsel %vm9404, %v8010, 0.0
  %v9664 = vsel %vm9405, %v8011, 0.0
  %v9665 = vsel %vm9406, %v8012, 0.0
  %v9666 = vsel %vm9407, %v8013, 0.0
  %v9667 = vsel %vm9408, %v8014, 0.0
  %v9668 = vsel %vm9409, %v8015, 0.0
  %v9669 = vsel %vm9410, %v8016, 0.0
  %v9670 = vsel %vm9411, %v8017, 0.0
  %v9671 = vsel %vm9412, %v8018, 0.0
  %v9672 = vsel %vm9413, %v8019, 0.0
  %v9673 = vsel %vm9414, %v8020, 0.0
  %v9674 = vsel %vm9415, %v8021, 0.0
  %v9675 = vsel %vm9416, %v8022, 0.0
  %v9676 = vadd.f32 %v9612, %v9644
  %v9677 = vadd.f32 %v9613, %v9645
  %v9678 = vadd.f32 %v9614, %v9646
  %v9679 = vadd.f32 %v9615, %v9647
  %v9680 = vadd.f32 %v9616, %v9648
  %v9681 = vadd.f32 %v9617, %v9649
  %v9682 = vadd.f32 %v9618, %v9650
  %v9683 = vadd.f32 %v9619, %v9651
  %v9684 = vadd.f32 %v9620, %v9652
  %v9685 = vadd.f32 %v9621, %v9653
  %v9686 = vadd.f32 %v9622, %v9654
  %v9687 = vadd.f32 %v9623, %v9655
  %v9688 = vadd.f32 %v9624, %v9656
  %v9689 = vadd.f32 %v9625, %v9657
  %v9690 = vadd.f32 %v9626, %v9658
  %v9691 = vadd.f32 %v9627, %v9659
  %v9692 = vadd.f32 %v9628, %v9660
  %v9693 = vadd.f32 %v9629, %v9661
  %v9694 = vadd.f32 %v9630, %v9662
  %v9695 = vadd.f32 %v9631, %v9663
  %v9696 = vadd.f32 %v9632, %v9664
  %v9697 = vadd.f32 %v9633, %v9665
  %v9698 = vadd.f32 %v9634, %v9666
  %v9699 = vadd.f32 %v9635, %v9667
  %v9700 = vadd.f32 %v9636, %v9668
  %v9701 = vadd.f32 %v9637, %v9669
  %v9702 = vadd.f32 %v9638, %v9670
  %v9703 = vadd.f32 %v9639, %v9671
  %v9704 = vadd.f32 %v9640, %v9672
  %v9705 = vadd.f32 %v9641, %v9673
  %v9706 = vadd.f32 %v9642, %v9674
  %v9707 = vadd.f32 %v9643, %v9675
  %v9708 = vpack.c.bf16 %v9677, %v9676
  %v9709 = vpack.c.bf16 %v9679, %v9678
  %v9710 = vpack.c.bf16 %v9681, %v9680
  %v9711 = vpack.c.bf16 %v9683, %v9682
  %v9712 = vpack.c.bf16 %v9685, %v9684
  %v9713 = vpack.c.bf16 %v9687, %v9686
  %v9714 = vpack.c.bf16 %v9689, %v9688
  %v9715 = vpack.c.bf16 %v9691, %v9690
  %v9716 = vpack.c.bf16 %v9693, %v9692
  %v9717 = vpack.c.bf16 %v9695, %v9694
  %v9718 = vpack.c.bf16 %v9697, %v9696
  %v9719 = vpack.c.bf16 %v9699, %v9698
  %v9720 = vpack.c.bf16 %v9701, %v9700
  %v9721 = vpack.c.bf16 %v9703, %v9702
  %v9722 = vpack.c.bf16 %v9705, %v9704
  %v9723 = vpack.c.bf16 %v9707, %v9706
  %9724 = vmatprep.subr.bf16.mxu0 0
  %9725 = vmatpush1.bf16.msra.mxu0 %v9708
  %9726 = vmatprep.subr.bf16.mxu0 0
  %9727 = vmatpush1.bf16.msra.mxu0 %v9709
  %9728 = vmatprep.subr.bf16.mxu0 0
  %9729 = vmatpush1.bf16.msra.mxu0 %v9710
  %9730 = vmatprep.subr.bf16.mxu0 0
  %9731 = vmatpush1.bf16.msra.mxu0 %v9711
  %9732 = vmatprep.subr.bf16.mxu0 0
  %9733 = vmatpush1.bf16.msra.mxu0 %v9712
  %9734 = vmatprep.subr.bf16.mxu0 0
  %9735 = vmatpush1.bf16.msra.mxu0 %v9713
  %9736 = vmatprep.subr.bf16.mxu0 0
  %9737 = vmatpush1.bf16.msra.mxu0 %v9714
  %9738 = vmatprep.subr.bf16.mxu0 0
  %9739 = vmatpush1.bf16.msra.mxu0 %v9715
  %9740 = vmatprep.subr.bf16.mxu0 0
  %9741 = vmatpush1.bf16.msra.mxu0 %v9716
  %9742 = vmatprep.subr.bf16.mxu0 0
  %9743 = vmatpush1.bf16.msra.mxu0 %v9717
  %9744 = vmatprep.subr.bf16.mxu0 0
  %9745 = vmatpush1.bf16.msra.mxu0 %v9718
  %9746 = vmatprep.subr.bf16.mxu0 0
  %9747 = vmatpush1.bf16.msra.mxu0 %v9719
  %9748 = vmatprep.subr.bf16.mxu0 0
  %9749 = vmatpush1.bf16.msra.mxu0 %v9720
  %9750 = vmatprep.subr.bf16.mxu0 0
  %9751 = vmatpush1.bf16.msra.mxu0 %v9721
  %9752 = vmatprep.subr.bf16.mxu0 0
  %9753 = vmatpush1.bf16.msra.mxu0 %v9722
  %9754 = vmatprep.subr.bf16.mxu0 0
  %9755 = vmatpush1.bf16.msra.mxu0 %v9723
  %9756 = vmatprep.mubr.bf16.mxu0 %v3174
  %9757 = vmatmul.mubr.bf16.gmra.mrb[0].mxu0 %v3173
  %v9758 = vpop.f32.mrb[0].mxu0
  %v9759 = vadd.f32 0.0, %v9758
  %v9760 = vpop.f32.mrb[0].mxu0
  %v9761 = vpop.f32.mrb[0].mxu0
  %v9762 = vadd.f32 0.0, %v9761
  %v9763 = vpop.f32.mrb[0].mxu0
  %9764 = vmatprep.mubr.bf16.mxu0 %v3176
  %9765 = vmatmul.mubr.bf16.gmra.mrb[0].mxu0 %v3175
  %v9766 = vpop.f32.mrb[0].mxu0
  %v9767 = vadd.f32 0.0, %v9766
  %v9768 = vpop.f32.mrb[0].mxu0
  %v9769 = vpop.f32.mrb[0].mxu0
  %v9770 = vadd.f32 0.0, %v9769
  %v9771 = vpop.f32.mrb[0].mxu0
  %9772 = vdwg.mxu0
  %v9773 = vpack.c.bf16 %v9762, %v9759
  %v9774 = vpack.c.bf16 %v9770, %v9767
  %v9775 = vsel %vm8247, %v8023, 0.0
  %v9776 = vsel %vm8248, %v8024, 0.0
  %v9777 = vsel %vm8249, %v8025, 0.0
  %v9778 = vsel %vm8250, %v8026, 0.0
  %v9779 = vsel %vm8251, %v8027, 0.0
  %v9780 = vsel %vm8252, %v8028, 0.0
  %v9781 = vsel %vm8253, %v8029, 0.0
  %v9782 = vsel %vm8254, %v8030, 0.0
  %v9783 = vsel %vm8255, %v8031, 0.0
  %v9784 = vsel %vm8256, %v8032, 0.0
  %v9785 = vsel %vm8257, %v8033, 0.0
  %v9786 = vsel %vm8258, %v8034, 0.0
  %v9787 = vsel %vm8259, %v8035, 0.0
  %v9788 = vsel %vm8260, %v8036, 0.0
  %v9789 = vsel %vm8261, %v8037, 0.0
  %v9790 = vsel %vm8262, %v8038, 0.0
  %v9791 = vsel %vm8263, %v8039, 0.0
  %v9792 = vsel %vm8264, %v8040, 0.0
  %v9793 = vsel %vm8265, %v8041, 0.0
  %v9794 = vsel %vm8266, %v8042, 0.0
  %v9795 = vsel %vm8267, %v8043, 0.0
  %v9796 = vsel %vm8268, %v8044, 0.0
  %v9797 = vsel %vm8269, %v8045, 0.0
  %v9798 = vsel %vm8270, %v8046, 0.0
  %v9799 = vsel %vm8271, %v8047, 0.0
  %v9800 = vsel %vm8272, %v8048, 0.0
  %v9801 = vsel %vm8273, %v8049, 0.0
  %v9802 = vsel %vm8274, %v8050, 0.0
  %v9803 = vsel %vm8275, %v8051, 0.0
  %v9804 = vsel %vm8276, %v8052, 0.0
  %v9805 = vsel %vm8277, %v8053, 0.0
  %v9806 = vsel %vm8278, %v8054, 0.0
  %v9807 = vsel %vm9580, %v7991, 0.0
  %v9808 = vsel %vm9581, %v7992, 0.0
  %v9809 = vsel %vm9582, %v7993, 0.0
  %v9810 = vsel %vm9583, %v7994, 0.0
  %v9811 = vsel %vm9584, %v7995, 0.0
  %v9812 = vsel %vm9585, %v7996, 0.0
  %v9813 = vsel %vm9586, %v7997, 0.0
  %v9814 = vsel %vm9587, %v7998, 0.0
  %v9815 = vsel %vm9588, %v7999, 0.0
  %v9816 = vsel %vm9589, %v8000, 0.0
  %v9817 = vsel %vm9590, %v8001, 0.0
  %v9818 = vsel %vm9591, %v8002, 0.0
  %v9819 = vsel %vm9592, %v8003, 0.0
  %v9820 = vsel %vm9593, %v8004, 0.0
  %v9821 = vsel %vm9594, %v8005, 0.0
  %v9822 = vsel %vm9595, %v8006, 0.0
  %v9823 = vsel %vm9596, %v8007, 0.0
  %v9824 = vsel %vm9597, %v8008, 0.0
  %v9825 = vsel %vm9598, %v8009, 0.0
  %v9826 = vsel %vm9599, %v8010, 0.0
  %v9827 = vsel %vm9600, %v8011, 0.0
  %v9828 = vsel %vm9601, %v8012, 0.0
  %v9829 = vsel %vm9602, %v8013, 0.0
  %v9830 = vsel %vm9603, %v8014, 0.0
  %v9831 = vsel %vm9604, %v8015, 0.0
  %v9832 = vsel %vm9605, %v8016, 0.0
  %v9833 = vsel %vm9606, %v8017, 0.0
  %v9834 = vsel %vm9607, %v8018, 0.0
  %v9835 = vsel %vm9608, %v8019, 0.0
  %v9836 = vsel %vm9609, %v8020, 0.0
  %v9837 = vsel %vm9610, %v8021, 0.0
  %v9838 = vsel %vm9611, %v8022, 0.0
  %v9839 = vadd.f32 %v9775, %v9807
  %v9840 = vadd.f32 %v9776, %v9808
  %v9841 = vadd.f32 %v9777, %v9809
  %v9842 = vadd.f32 %v9778, %v9810
  %v9843 = vadd.f32 %v9779, %v9811
  %v9844 = vadd.f32 %v9780, %v9812
  %v9845 = vadd.f32 %v9781, %v9813
  %v9846 = vadd.f32 %v9782, %v9814
  %v9847 = vadd.f32 %v9783, %v9815
  %v9848 = vadd.f32 %v9784, %v9816
  %v9849 = vadd.f32 %v9785, %v9817
  %v9850 = vadd.f32 %v9786, %v9818
  %v9851 = vadd.f32 %v9787, %v9819
  %v9852 = vadd.f32 %v9788, %v9820
  %v9853 = vadd.f32 %v9789, %v9821
  %v9854 = vadd.f32 %v9790, %v9822
  %v9855 = vadd.f32 %v9791, %v9823
  %v9856 = vadd.f32 %v9792, %v9824
  %v9857 = vadd.f32 %v9793, %v9825
  %v9858 = vadd.f32 %v9794, %v9826
  %v9859 = vadd.f32 %v9795, %v9827
  %v9860 = vadd.f32 %v9796, %v9828
  %v9861 = vadd.f32 %v9797, %v9829
  %v9862 = vadd.f32 %v9798, %v9830
  %v9863 = vadd.f32 %v9799, %v9831
  %v9864 = vadd.f32 %v9800, %v9832
  %v9865 = vadd.f32 %v9801, %v9833
  %v9866 = vadd.f32 %v9802, %v9834
  %v9867 = vadd.f32 %v9803, %v9835
  %v9868 = vadd.f32 %v9804, %v9836
  %v9869 = vadd.f32 %v9805, %v9837
  %v9870 = vadd.f32 %v9806, %v9838
  %v9871 = vpack.c.bf16 %v9840, %v9839
  %v9872 = vpack.c.bf16 %v9842, %v9841
  %v9873 = vpack.c.bf16 %v9844, %v9843
  %v9874 = vpack.c.bf16 %v9846, %v9845
  %v9875 = vpack.c.bf16 %v9848, %v9847
  %v9876 = vpack.c.bf16 %v9850, %v9849
  %v9877 = vpack.c.bf16 %v9852, %v9851
  %v9878 = vpack.c.bf16 %v9854, %v9853
  %v9879 = vpack.c.bf16 %v9856, %v9855
  %v9880 = vpack.c.bf16 %v9858, %v9857
  %v9881 = vpack.c.bf16 %v9860, %v9859
  %v9882 = vpack.c.bf16 %v9862, %v9861
  %v9883 = vpack.c.bf16 %v9864, %v9863
  %v9884 = vpack.c.bf16 %v9866, %v9865
  %v9885 = vpack.c.bf16 %v9868, %v9867
  %v9886 = vpack.c.bf16 %v9870, %v9869
  %9887 = vmatprep.subr.bf16.mxu0 0
  %9888 = vmatpush1.bf16.msra.mxu0 %v9871
  %9889 = vmatprep.subr.bf16.mxu0 0
  %9890 = vmatpush1.bf16.msra.mxu0 %v9872
  %9891 = vmatprep.subr.bf16.mxu0 0
  %9892 = vmatpush1.bf16.msra.mxu0 %v9873
  %9893 = vmatprep.subr.bf16.mxu0 0
  %9894 = vmatpush1.bf16.msra.mxu0 %v9874
  %9895 = vmatprep.subr.bf16.mxu0 0
  %9896 = vmatpush1.bf16.msra.mxu0 %v9875
  %9897 = vmatprep.subr.bf16.mxu0 0
  %9898 = vmatpush1.bf16.msra.mxu0 %v9876
  %9899 = vmatprep.subr.bf16.mxu0 0
  %9900 = vmatpush1.bf16.msra.mxu0 %v9877
  %9901 = vmatprep.subr.bf16.mxu0 0
  %9902 = vmatpush1.bf16.msra.mxu0 %v9878
  %9903 = vmatprep.subr.bf16.mxu0 0
  %9904 = vmatpush1.bf16.msra.mxu0 %v9879
  %9905 = vmatprep.subr.bf16.mxu0 0
  %9906 = vmatpush1.bf16.msra.mxu0 %v9880
  %9907 = vmatprep.subr.bf16.mxu0 0
  %9908 = vmatpush1.bf16.msra.mxu0 %v9881
  %9909 = vmatprep.subr.bf16.mxu0 0
  %9910 = vmatpush1.bf16.msra.mxu0 %v9882
  %9911 = vmatprep.subr.bf16.mxu0 0
  %9912 = vmatpush1.bf16.msra.mxu0 %v9883
  %9913 = vmatprep.subr.bf16.mxu0 0
  %9914 = vmatpush1.bf16.msra.mxu0 %v9884
  %9915 = vmatprep.subr.bf16.mxu0 0
  %9916 = vmatpush1.bf16.msra.mxu0 %v9885
  %9917 = vmatprep.subr.bf16.mxu0 0
  %9918 = vmatpush1.bf16.msra.mxu0 %v9886
  %9919 = vmatprep.mubr.bf16.mxu0 %v3174
  %9920 = vmatmul.mubr.bf16.gmra.mrb[0].mxu0 %v3173
  %v9921 = vpop.f32.mrb[0].mxu0
  %v9922 = vadd.f32 0.0, %v9921
  %v9923 = vpop.f32.mrb[0].mxu0
  %v9924 = vpop.f32.mrb[0].mxu0
  %v9925 = vadd.f32 0.0, %v9924
  %v9926 = vpop.f32.mrb[0].mxu0
  %9927 = vmatprep.mubr.bf16.mxu0 %v3176
  %9928 = vmatmul.mubr.bf16.gmra.mrb[0].mxu0 %v3175
  %v9929 = vpop.f32.mrb[0].mxu0
  %v9930 = vadd.f32 0.0, %v9929
  %v9931 = vpop.f32.mrb[0].mxu0
  %v9932 = vpop.f32.mrb[0].mxu0
  %v9933 = vadd.f32 0.0, %v9932
  %v9934 = vpop.f32.mrb[0].mxu0
  %9935 = vdwg.mxu0
  %v9936 = vpack.c.bf16 %v9925, %v9922
  %v9937 = vpack.c.bf16 %v9933, %v9930
  %9938 = vmatprep.subr.bf16.mxu0 0
  %9939 = vmatpush1.bf16.msra.mxu0 %v4792
  %9940 = vmatprep.subr.bf16.mxu0 0
  %9941 = vmatpush1.bf16.msra.mxu0 %v4793
  %9942 = vmatprep.subr.bf16.mxu0 0
  %9943 = vmatpush1.bf16.msra.mxu0 %v4794
  %9944 = vmatprep.subr.bf16.mxu0 0
  %9945 = vmatpush1.bf16.msra.mxu0 %v4795
  %9946 = vmatprep.subr.bf16.mxu0 0
  %9947 = vmatpush1.bf16.msra.mxu0 %v4796
  %9948 = vmatprep.subr.bf16.mxu0 0
  %9949 = vmatpush1.bf16.msra.mxu0 %v4797
  %9950 = vmatprep.subr.bf16.mxu0 0
  %9951 = vmatpush1.bf16.msra.mxu0 %v4798
  %9952 = vmatprep.subr.bf16.mxu0 0
  %9953 = vmatpush1.bf16.msra.mxu0 %v4799
  %9954 = vmatprep.subr.bf16.mxu0 0
  %9955 = vmatpush1.bf16.msra.mxu0 0
  %9956 = vmatprep.subr.bf16.mxu0 0
  %9957 = vmatpush1.bf16.msra.mxu0 0
  %9958 = vmatprep.subr.bf16.mxu0 0
  %9959 = vmatpush1.bf16.msra.mxu0 0
  %9960 = vmatprep.subr.bf16.mxu0 0
  %9961 = vmatpush1.bf16.msra.mxu0 0
  %9962 = vmatprep.subr.bf16.mxu0 0
  %9963 = vmatpush1.bf16.msra.mxu0 0
  %9964 = vmatprep.subr.bf16.mxu0 0
  %9965 = vmatpush1.bf16.msra.mxu0 0
  %9966 = vmatprep.subr.bf16.mxu0 0
  %9967 = vmatpush1.bf16.msra.mxu0 0
  %9968 = vmatprep.subr.bf16.mxu0 0
  %9969 = vmatpush1.bf16.msra.mxu0 0
  %9970 = vmatprep.mubr.bf16.mxu0 0
  %9971 = vmatmul.mubr.bf16.gmra.mrb[0].mxu0 %v8408
  %v9972 = vpop.f32.mrb[0].mxu0
  %v9973 = vadd.f32 0.0, %v9972
  %v9974 = vpop.f32.mrb[0].mxu0
  %v9975 = vpop.f32.mrb[0].mxu0
  %v9976 = vadd.f32 0.0, %v9975
  %v9977 = vpop.f32.mrb[0].mxu0
  %9978 = vmatprep.mubr.bf16.mxu0 0
  %9979 = vmatmul.mubr.bf16.gmra.mrb[0].mxu0 %v8409
  %v9980 = vpop.f32.mrb[0].mxu0
  %v9981 = vadd.f32 0.0, %v9980
  %v9982 = vpop.f32.mrb[0].mxu0
  %v9983 = vpop.f32.mrb[0].mxu0
  %v9984 = vadd.f32 0.0, %v9983
  %v9985 = vpop.f32.mrb[0].mxu0
  %9986 = vmatprep.mubr.bf16.mxu0 0
  %9987 = vmatmul.mubr.bf16.gmra.mrb[0].mxu0 %v8603
  %v9988 = vpop.f32.mrb[0].mxu0
  %v9989 = vadd.f32 0.0, %v9988
  %v9990 = vpop.f32.mrb[0].mxu0
  %v9991 = vpop.f32.mrb[0].mxu0
  %v9992 = vadd.f32 0.0, %v9991
  %v9993 = vpop.f32.mrb[0].mxu0
  %9994 = vmatprep.mubr.bf16.mxu0 0
  %9995 = vmatmul.mubr.bf16.gmra.mrb[0].mxu0 %v8604
  %v9996 = vpop.f32.mrb[0].mxu0
  %v9997 = vadd.f32 0.0, %v9996
  %v9998 = vpop.f32.mrb[0].mxu0
  %v9999 = vpop.f32.mrb[0].mxu0
  %v10000 = vadd.f32 0.0, %v9999
  %v10001 = vpop.f32.mrb[0].mxu0
  %10002 = vmatprep.mubr.bf16.mxu0 0
  %10003 = vmatmul.mubr.bf16.gmra.mrb[0].mxu0 %v8798
  %v10004 = vpop.f32.mrb[0].mxu0
  %v10005 = vadd.f32 0.0, %v10004
  %v10006 = vpop.f32.mrb[0].mxu0
  %v10007 = vpop.f32.mrb[0].mxu0
  %v10008 = vadd.f32 0.0, %v10007
  %v10009 = vpop.f32.mrb[0].mxu0
  %10010 = vmatprep.mubr.bf16.mxu0 0
  %10011 = vmatmul.mubr.bf16.gmra.mrb[0].mxu0 %v8799
  %v10012 = vpop.f32.mrb[0].mxu0
  %v10013 = vadd.f32 0.0, %v10012
  %v10014 = vpop.f32.mrb[0].mxu0
  %v10015 = vpop.f32.mrb[0].mxu0
  %v10016 = vadd.f32 0.0, %v10015
  %v10017 = vpop.f32.mrb[0].mxu0
  %10018 = vmatprep.mubr.bf16.mxu0 0
  %10019 = vmatmul.mubr.bf16.gmra.mrb[0].mxu0 %v8993
  %v10020 = vpop.f32.mrb[0].mxu0
  %v10021 = vadd.f32 0.0, %v10020
  %v10022 = vpop.f32.mrb[0].mxu0
  %v10023 = vpop.f32.mrb[0].mxu0
  %v10024 = vadd.f32 0.0, %v10023
  %v10025 = vpop.f32.mrb[0].mxu0
  %10026 = vmatprep.mubr.bf16.mxu0 0
  %10027 = vmatmul.mubr.bf16.gmra.mrb[0].mxu0 %v8994
  %v10028 = vpop.f32.mrb[0].mxu0
  %v10029 = vadd.f32 0.0, %v10028
  %v10030 = vpop.f32.mrb[0].mxu0
  %v10031 = vpop.f32.mrb[0].mxu0
  %v10032 = vadd.f32 0.0, %v10031
  %v10033 = vpop.f32.mrb[0].mxu0
  %10034 = vmatprep.mubr.bf16.mxu0 0
  %10035 = vmatmul.mubr.bf16.gmra.mrb[0].mxu0 %v9188
  %v10036 = vpop.f32.mrb[0].mxu0
  %v10037 = vadd.f32 0.0, %v10036
  %v10038 = vpop.f32.mrb[0].mxu0
  %v10039 = vpop.f32.mrb[0].mxu0
  %v10040 = vadd.f32 0.0, %v10039
  %v10041 = vpop.f32.mrb[0].mxu0
  %10042 = vmatprep.mubr.bf16.mxu0 0
  %10043 = vmatmul.mubr.bf16.gmra.mrb[0].mxu0 %v9189
  %v10044 = vpop.f32.mrb[0].mxu0
  %v10045 = vadd.f32 0.0, %v10044
  %v10046 = vpop.f32.mrb[0].mxu0
  %v10047 = vpop.f32.mrb[0].mxu0
  %v10048 = vadd.f32 0.0, %v10047
  %v10049 = vpop.f32.mrb[0].mxu0
  %10050 = vmatprep.mubr.bf16.mxu0 0
  %10051 = vmatmul.mubr.bf16.gmra.mrb[0].mxu0 %v9383
  %v10052 = vpop.f32.mrb[0].mxu0
  %v10053 = vadd.f32 0.0, %v10052
  %v10054 = vpop.f32.mrb[0].mxu0
  %v10055 = vpop.f32.mrb[0].mxu0
  %v10056 = vadd.f32 0.0, %v10055
  %v10057 = vpop.f32.mrb[0].mxu0
  %10058 = vmatprep.mubr.bf16.mxu0 0
  %10059 = vmatmul.mubr.bf16.gmra.mrb[0].mxu0 %v9384
  %v10060 = vpop.f32.mrb[0].mxu0
  %v10061 = vadd.f32 0.0, %v10060
  %v10062 = vpop.f32.mrb[0].mxu0
  %v10063 = vpop.f32.mrb[0].mxu0
  %v10064 = vadd.f32 0.0, %v10063
  %v10065 = vpop.f32.mrb[0].mxu0
  %10066 = vmatprep.mubr.bf16.mxu0 0
  %10067 = vmatmul.mubr.bf16.gmra.mrb[0].mxu0 %v9578
  %v10068 = vpop.f32.mrb[0].mxu0
  %v10069 = vadd.f32 0.0, %v10068
  %v10070 = vpop.f32.mrb[0].mxu0
  %v10071 = vpop.f32.mrb[0].mxu0
  %v10072 = vadd.f32 0.0, %v10071
  %v10073 = vpop.f32.mrb[0].mxu0
  %10074 = vmatprep.mubr.bf16.mxu0 0
  %10075 = vmatmul.mubr.bf16.gmra.mrb[0].mxu0 %v9579
  %v10076 = vpop.f32.mrb[0].mxu0
  %v10077 = vadd.f32 0.0, %v10076
  %v10078 = vpop.f32.mrb[0].mxu0
  %v10079 = vpop.f32.mrb[0].mxu0
  %v10080 = vadd.f32 0.0, %v10079
  %v10081 = vpop.f32.mrb[0].mxu0
  %10082 = vmatprep.mubr.bf16.mxu0 0
  %10083 = vmatmul.mubr.bf16.gmra.mrb[0].mxu0 %v9773
  %v10084 = vpop.f32.mrb[0].mxu0
  %v10085 = vadd.f32 0.0, %v10084
  %v10086 = vpop.f32.mrb[0].mxu0
  %v10087 = vpop.f32.mrb[0].mxu0
  %v10088 = vadd.f32 0.0, %v10087
  %v10089 = vpop.f32.mrb[0].mxu0
  %10090 = vmatprep.mubr.bf16.mxu0 0
  %10091 = vmatmul.mubr.bf16.gmra.mrb[0].mxu0 %v9774
  %v10092 = vpop.f32.mrb[0].mxu0
  %v10093 = vadd.f32 0.0, %v10092
  %v10094 = vpop.f32.mrb[0].mxu0
  %v10095 = vpop.f32.mrb[0].mxu0
  %v10096 = vadd.f32 0.0, %v10095
  %v10097 = vpop.f32.mrb[0].mxu0
  %10098 = vmatprep.mubr.bf16.mxu0 0
  %10099 = vmatmul.mubr.bf16.gmra.mrb[0].mxu0 %v9936
  %v10100 = vpop.f32.mrb[0].mxu0
  %v10101 = vadd.f32 0.0, %v10100
  %v10102 = vpop.f32.mrb[0].mxu0
  %v10103 = vpop.f32.mrb[0].mxu0
  %v10104 = vadd.f32 0.0, %v10103
  %v10105 = vpop.f32.mrb[0].mxu0
  %10106 = vmatprep.mubr.bf16.mxu0 0
  %10107 = vmatmul.mubr.bf16.gmra.mrb[0].mxu0 %v9937
  %v10108 = vpop.f32.mrb[0].mxu0
  %v10109 = vadd.f32 0.0, %v10108
  %v10110 = vpop.f32.mrb[0].mxu0
  %v10111 = vpop.f32.mrb[0].mxu0
  %v10112 = vadd.f32 0.0, %v10111
  %v10113 = vpop.f32.mrb[0].mxu0
  %10114 = vdwg.mxu0
  %10115 = vrot.lane.b32.xlu0 %v9989, 8
  %v10116 = vpop.permute.xlu0 %10115
  %10117 = vrot.lane.b32.xlu0 %v9992, 8
  %v10118 = vpop.permute.xlu0 %10117
  %v10119 = vadd.f32 %v9973, %v10116
  %v10120 = vadd.f32 %v9976, %v10118
  %10121 = vrot.lane.b32.xlu0 %v9997, 8
  %v10122 = vpop.permute.xlu0 %10121
  %10123 = vrot.lane.b32.xlu0 %v10000, 8
  %v10124 = vpop.permute.xlu0 %10123
  %v10125 = vadd.f32 %v9981, %v10122
  %v10126 = vadd.f32 %v9984, %v10124
  %10127 = vrot.lane.b32.xlu0 %v10005, 16
  %v10128 = vpop.permute.xlu0 %10127
  %10129 = vrot.lane.b32.xlu0 %v10008, 16
  %v10130 = vpop.permute.xlu0 %10129
  %v10131 = vadd.f32 %v10119, %v10128
  %v10132 = vadd.f32 %v10120, %v10130
  %10133 = vrot.lane.b32.xlu0 %v10013, 16
  %v10134 = vpop.permute.xlu0 %10133
  %10135 = vrot.lane.b32.xlu0 %v10016, 16
  %v10136 = vpop.permute.xlu0 %10135
  %v10137 = vadd.f32 %v10125, %v10134
  %v10138 = vadd.f32 %v10126, %v10136
  %10139 = vrot.lane.b32.xlu0 %v10021, 24
  %v10140 = vpop.permute.xlu0 %10139
  %10141 = vrot.lane.b32.xlu0 %v10024, 24
  %v10142 = vpop.permute.xlu0 %10141
  %v10143 = vadd.f32 %v10131, %v10140
  %v10144 = vadd.f32 %v10132, %v10142
  %10145 = vrot.lane.b32.xlu0 %v10029, 24
  %v10146 = vpop.permute.xlu0 %10145
  %10147 = vrot.lane.b32.xlu0 %v10032, 24
  %v10148 = vpop.permute.xlu0 %10147
  %v10149 = vadd.f32 %v10137, %v10146
  %v10150 = vadd.f32 %v10138, %v10148
  %10151 = vrot.lane.b32.xlu0 %v10037, 32
  %v10152 = vpop.permute.xlu0 %10151
  %10153 = vrot.lane.b32.xlu0 %v10040, 32
  %v10154 = vpop.permute.xlu0 %10153
  %v10155 = vadd.f32 %v10143, %v10152
  %v10156 = vadd.f32 %v10144, %v10154
  %10157 = vrot.lane.b32.xlu0 %v10045, 32
  %v10158 = vpop.permute.xlu0 %10157
  %10159 = vrot.lane.b32.xlu0 %v10048, 32
  %v10160 = vpop.permute.xlu0 %10159
  %v10161 = vadd.f32 %v10149, %v10158
  %v10162 = vadd.f32 %v10150, %v10160
  %10163 = vrot.lane.b32.xlu0 %v10053, 40
  %v10164 = vpop.permute.xlu0 %10163
  %10165 = vrot.lane.b32.xlu0 %v10056, 40
  %v10166 = vpop.permute.xlu0 %10165
  %v10167 = vadd.f32 %v10155, %v10164
  %v10168 = vadd.f32 %v10156, %v10166
  %10169 = vrot.lane.b32.xlu0 %v10061, 40
  %v10170 = vpop.permute.xlu0 %10169
  %10171 = vrot.lane.b32.xlu0 %v10064, 40
  %v10172 = vpop.permute.xlu0 %10171
  %v10173 = vadd.f32 %v10161, %v10170
  %v10174 = vadd.f32 %v10162, %v10172
  %10175 = vrot.lane.b32.xlu0 %v10069, 48
  %v10176 = vpop.permute.xlu0 %10175
  %10177 = vrot.lane.b32.xlu0 %v10072, 48
  %v10178 = vpop.permute.xlu0 %10177
  %v10179 = vadd.f32 %v10167, %v10176
  %v10180 = vadd.f32 %v10168, %v10178
  %10181 = vrot.lane.b32.xlu0 %v10077, 48
  %v10182 = vpop.permute.xlu0 %10181
  %10183 = vrot.lane.b32.xlu0 %v10080, 48
  %v10184 = vpop.permute.xlu0 %10183
  %v10185 = vadd.f32 %v10173, %v10182
  %v10186 = vadd.f32 %v10174, %v10184
  %10187 = vrot.lane.b32.xlu0 %v10085, 56
  %v10188 = vpop.permute.xlu0 %10187
  %10189 = vrot.lane.b32.xlu0 %v10088, 56
  %v10190 = vpop.permute.xlu0 %10189
  %v10191 = vadd.f32 %v10179, %v10188
  %v10192 = vadd.f32 %v10180, %v10190
  %10193 = vrot.lane.b32.xlu0 %v10093, 56
  %v10194 = vpop.permute.xlu0 %10193
  %10195 = vrot.lane.b32.xlu0 %v10096, 56
  %v10196 = vpop.permute.xlu0 %10195
  %v10197 = vadd.f32 %v10185, %v10194
  %v10198 = vadd.f32 %v10186, %v10196
  %10199 = vrot.lane.b32.xlu0 %v10101, 64
  %v10200 = vpop.permute.xlu0 %10199
  %10201 = vrot.lane.b32.xlu0 %v10104, 64
  %v10202 = vpop.permute.xlu0 %10201
  %v10203 = vadd.f32 %v10191, %v10200
  %v10204 = vadd.f32 %v10192, %v10202
  %10205 = vrot.lane.b32.xlu0 %v10109, 64
  %v10206 = vpop.permute.xlu0 %10205
  %10207 = vrot.lane.b32.xlu0 %v10112, 64
  %v10208 = vpop.permute.xlu0 %10207
  %v10209 = vadd.f32 %v10197, %v10206
  %v10210 = vadd.f32 %v10198, %v10208
  %10211 = vrot.lane.b32.xlu0 %v10203, 127
  %v10212 = vpop.permute.xlu0 %10211
  %10213 = vrot.lane.b32.xlu0 %v10204, 127
  %v10214 = vpop.permute.xlu0 %10213
  %10215 = vrot.lane.b32.xlu0 %v10209, 127
  %v10216 = vpop.permute.xlu0 %10215
  %10217 = vrot.lane.b32.xlu0 %v10210, 127
  %v10218 = vpop.permute.xlu0 %10217
  %v10219 = vmul.f32 %v10203, %v10203
  %v10220 = vmul.f32 %v10204, %v10204
  %v10221 = vmul.f32 %v10212, %v10212
  %v10222 = vmul.f32 %v10214, %v10214
  %v10223 = vadd.f32 %v10219, %v10221
  %v10224 = vadd.f32 %v10220, %v10222
  %v10225 = vmul.f32 %v10209, %v10209
  %v10226 = vmul.f32 %v10210, %v10210
  %v10227 = vadd.f32 %v10223, %v10225
  %v10228 = vadd.f32 %v10224, %v10226
  %v10229 = vmul.f32 %v10216, %v10216
  %v10230 = vmul.f32 %v10218, %v10218
  %v10231 = vadd.f32 %v10227, %v10229
  %v10232 = vadd.f32 %v10228, %v10230
  %10233 = vrot.lane.b32.xlu0 %v10231, 120
  %v10234 = vpop.permute.xlu0 %10233
  %10235 = vrot.lane.b32.xlu0 %v10232, 120
  %v10236 = vpop.permute.xlu0 %10235
  %v10237 = vadd.f32 %v10231, %v10234
  %v10238 = vadd.f32 %v10232, %v10236
  %10239 = vrot.lane.b32.xlu0 %v10237, 112
  %v10240 = vpop.permute.xlu0 %10239
  %10241 = vrot.lane.b32.xlu0 %v10238, 112
  %v10242 = vpop.permute.xlu0 %10241
  %v10243 = vadd.f32 %v10237, %v10240
  %v10244 = vadd.f32 %v10238, %v10242
  %10245 = vrot.lane.b32.xlu0 %v10243, 96
  %v10246 = vpop.permute.xlu0 %10245
  %10247 = vrot.lane.b32.xlu0 %v10244, 96
  %v10248 = vpop.permute.xlu0 %10247
  %v10249 = vadd.f32 %v10243, %v10246
  %v10250 = vadd.f32 %v10244, %v10248
  %10251 = vrot.lane.b32.xlu0 %v10249, 64
  %v10252 = vpop.permute.xlu0 %10251
  %10253 = vrot.lane.b32.xlu0 %v10250, 64
  %v10254 = vpop.permute.xlu0 %10253
  %v10255 = vadd.f32 %v10249, %v10252
  %v10256 = vadd.f32 %v10250, %v10254
  %v10257 = vrsqrt.pop %v10255
  %v10258 = vmul.f32 %v10255, %v10257
  %vm10259 = vcmp.eq.f32.partialorder %v10255, inf
  %v10260 = vsel %vm10259, %v10255, %v10258
  %vm10261 = vcmp.eq.f32.partialorder %v10255, 0.0
  %v10262 = vand.u32 %v10255, 2147483648
  %v10263 = vsel %vm10261, %v10262, %v10260
  %v10264 = vrsqrt.pop %v10256
  %v10265 = vmul.f32 %v10256, %v10264
  %vm10266 = vcmp.eq.f32.partialorder %v10256, inf
  %v10267 = vsel %vm10266, %v10256, %v10265
  %vm10268 = vcmp.eq.f32.partialorder %v10256, 0.0
  %v10269 = vand.u32 %v10256, 2147483648
  %v10270 = vsel %vm10268, %v10269, %v10267
  %v10271 = vadd.f32 %v10263, 3.6
  %v10272 = vadd.f32 %v10270, 3.6
  %v10273 = vrcp.pop %v10271
  %v10274 = vrcp.pop %v10272
  %v10275 = vmul.f32 %v10203, %v10273
  %v10276 = vmul.f32 %v10204, %v10274
  %v10277 = vmin.f32 %v10275, 0.2
  %v10278 = vmin.f32 %v10276, 0.2
  %v10279 = vmul.f32 %v10212, %v10273
  %v10280 = vmul.f32 %v10214, %v10274
  %v10281 = vmin.f32 %v10279, 0.2
  %v10282 = vmin.f32 %v10280, 0.2
  %v10283 = vmul.f32 %v10209, %v10273
  %v10284 = vmul.f32 %v10210, %v10274
  %v10285 = vmin.f32 %v10283, 0.2
  %v10286 = vmin.f32 %v10284, 0.2
  %v10287 = vmul.f32 %v10216, %v10273
  %v10288 = vmul.f32 %v10218, %v10274
  %v10289 = vmin.f32 %v10287, 0.2
  %v10290 = vmin.f32 %v10288, 0.2
  %v10291 = vmul.f32 %v10277, %v10277
  %v10292 = vmul.f32 %v10278, %v10278
  %v10293 = vmul.f32 %v10281, %v10281
  %v10294 = vmul.f32 %v10282, %v10282
  %v10295 = vadd.f32 %v10291, %v10293
  %v10296 = vadd.f32 %v10292, %v10294
  %v10297 = vmul.f32 %v10285, %v10285
  %v10298 = vmul.f32 %v10286, %v10286
  %v10299 = vadd.f32 %v10295, %v10297
  %v10300 = vadd.f32 %v10296, %v10298
  %v10301 = vmul.f32 %v10289, %v10289
  %v10302 = vmul.f32 %v10290, %v10290
  %v10303 = vadd.f32 %v10299, %v10301
  %v10304 = vadd.f32 %v10300, %v10302
  %10305 = vrot.lane.b32.xlu0 %v10303, 120
  %v10306 = vpop.permute.xlu0 %10305
  %10307 = vrot.lane.b32.xlu0 %v10304, 120
  %v10308 = vpop.permute.xlu0 %10307
  %v10309 = vadd.f32 %v10303, %v10306
  %v10310 = vadd.f32 %v10304, %v10308
  %10311 = vrot.lane.b32.xlu0 %v10309, 112
  %v10312 = vpop.permute.xlu0 %10311
  %10313 = vrot.lane.b32.xlu0 %v10310, 112
  %v10314 = vpop.permute.xlu0 %10313
  %v10315 = vadd.f32 %v10309, %v10312
  %v10316 = vadd.f32 %v10310, %v10314
  %10317 = vrot.lane.b32.xlu0 %v10315, 96
  %v10318 = vpop.permute.xlu0 %10317
  %10319 = vrot.lane.b32.xlu0 %v10316, 96
  %v10320 = vpop.permute.xlu0 %10319
  %v10321 = vadd.f32 %v10315, %v10318
  %v10322 = vadd.f32 %v10316, %v10320
  %10323 = vrot.lane.b32.xlu0 %v10321, 64
  %v10324 = vpop.permute.xlu0 %10323
  %10325 = vrot.lane.b32.xlu0 %v10322, 64
  %v10326 = vpop.permute.xlu0 %10325
  %v10327 = vadd.f32 %v10321, %v10324
  %v10328 = vadd.f32 %v10322, %v10326
  %v10329 = vrsqrt.pop %v10327
  %v10330 = vmul.f32 %v10327, %v10329
  %vm10331 = vcmp.eq.f32.partialorder %v10327, inf
  %v10332 = vsel %vm10331, %v10327, %v10330
  %vm10333 = vcmp.eq.f32.partialorder %v10327, 0.0
  %v10334 = vand.u32 %v10327, 2147483648
  %v10335 = vsel %vm10333, %v10334, %v10332
  %v10336 = vrsqrt.pop %v10328
  %v10337 = vmul.f32 %v10328, %v10336
  %vm10338 = vcmp.eq.f32.partialorder %v10328, inf
  %v10339 = vsel %vm10338, %v10328, %v10337
  %vm10340 = vcmp.eq.f32.partialorder %v10328, 0.0
  %v10341 = vand.u32 %v10328, 2147483648
  %v10342 = vsel %vm10340, %v10341, %v10339
  %v10343 = vadd.f32 %v10335, 0.001
  %v10344 = vadd.f32 %v10342, 0.001
  %v10345 = vrcp.pop %v10343
  %v10346 = vrcp.pop %v10344
  %v10347 = vmul.f32 %v10277, %v10345
  %v10348 = vmul.f32 %v10278, %v10346
  %s10349 = scalar_lea.vmem %s3, 64
  %10350 = vst [vmem:[%s10349] sm:$0xff] %v10347
  %10351 = vst [vmem:[%s10349 + $0x8] sm:$0xff] %v10348
  %v10352 = vmul.f32 %v10281, %v10345
  %v10353 = vmul.f32 %v10282, %v10346
  %s10354 = scalar_lea.vmem %s3, 80
  %10355 = vst [vmem:[%s10354] sm:$0xff] %v10352
  %10356 = vst [vmem:[%s10354 + $0x8] sm:$0xff] %v10353
  %v10357 = vmul.f32 %v10285, %v10345
  %v10358 = vmul.f32 %v10286, %v10346
  %s10359 = scalar_lea.vmem %s3, 96
  %10360 = vst [vmem:[%s10359] sm:$0xff] %v10357
  %10361 = vst [vmem:[%s10359 + $0x8] sm:$0xff] %v10358
  %v10362 = vmul.f32 %v10289, %v10345
  %v10363 = vmul.f32 %v10290, %v10346
  %s10364 = scalar_lea.vmem %s3, 112
  %10365 = vst [vmem:[%s10364] sm:$0xff] %v10362
  %10366 = vst [vmem:[%s10364 + $0x8] sm:$0xff] %v10363
  // Predicated region
  $region14: #{hog_features.1} parent=0 // pred_check
    _
  $region15: #{hog_features.1} parent=0 // pred_check_branch
    %10368 = sbr.rel (0) target = $region17
  $region16: #{hog_features.1} parent=0 // pred_region
    _
  $region17: #{hog_features.1} parent=0 // pred_fallthru
    _
  // Predicated region
  $region18: #{hog_features.1} parent=0 // pred_check
    _
  $region19: #{hog_features.1} parent=0 // pred_check_branch
    %10370 = sbr.rel (0) target = $region21
  $region20: #{hog_features.1} parent=0 // pred_region
    _
  $region21: #{hog_features.1} parent=0 // pred_fallthru
    _

</llo_original>
